<compile_context>
chip_gen: v6e
topology: v6e:2x2x1
jax: 0.10.0
libtpu: 0.0.40
codegen_flags: <defaults>
</compile_context>

<pallas_src>
import jax
import jax.numpy as jnp
from jax.experimental import pallas as pl
from jax.experimental.pallas import tpu as pltpu

_VMEM_LIMIT = 32 * 1024 * 1024  # <= v7x's 64 MiB physical VMEM


# ------------------------------------------------------------------ kernels --
def _linear_kernel(c_ref, w_ref, b_ref, o_ref):
    # (B, 24) @ (24, 4096) + (1, 4096); bf16 operands, f32 accumulate.
    y = jnp.dot(c_ref[...], w_ref[...], preferred_element_type=jnp.float32)
    o_ref[...] = (y + b_ref[...]).astype(o_ref.dtype)


def _conv_lrelu_kernel(p_ref, w_ref, o_ref):
    # One M-tile of: conv-as-matmul -> LeakyReLU(0.2).
    y = jnp.dot(p_ref[...], w_ref[...], preferred_element_type=jnp.float32)
    o_ref[...] = jnp.where(y >= 0.0, y, 0.2 * y).astype(o_ref.dtype)


def _conv_bn_lrelu_kernel(p_ref, w_ref, g_ref, b_ref, o_ref, acc_ref):
    # Grid = (n_tiles, k_tiles); this body sees one (M, tn) output-channel tile.
    # K axis (innermost, "arbitrary"): accumulate partial matmuls into an f32
    # VMEM scratch; on the last K step apply BatchNorm2d with batch statistics
    # (module default .train() mode) + LeakyReLU(0.2).
    # Rows of acc are exactly the (N, H, W) positions of each output channel,
    # so per-column stats == per-channel BN stats.  Correct ONLY because the
    # full M (row) extent lives in this single block (never tile M here).
    k = pl.program_id(1)

    @pl.when(k == 0)
    def _():
        acc_ref[...] = jnp.zeros_like(acc_ref)

    acc_ref[...] += jnp.dot(p_ref[...], w_ref[...],
                            preferred_element_type=jnp.float32)

    @pl.when(k == pl.num_programs(1) - 1)
    def _():
        y = acc_ref[...]
        mean = jnp.mean(y, axis=0, keepdims=True)
        # single-pass biased variance (matches torch), clamped for safety
        var = jnp.maximum(jnp.mean(y * y, axis=0, keepdims=True) - mean * mean, 0.0)
        z = (y - mean) * jax.lax.rsqrt(var + 1e-5) * g_ref[...] + b_ref[...]
        o_ref[...] = jnp.where(z >= 0.0, z, 0.2 * z).astype(o_ref.dtype)


def _final_logit_kernel(h_ref, w_ref, o_ref):
    # Cout = 1 final conv: VPU multiply + lane reduce against the real (1, K)
    # weight (no zero-padded weight DMA, no N=1 MXU matmul), then exact sigmoid
    # (keeps the [0, 1] bound).
    y = jnp.sum(h_ref[...].astype(jnp.float32) * w_ref[...].astype(jnp.float32),
                axis=-1, keepdims=True)
    o_ref[...] = 1.0 / (1.0 + jnp.exp(-y))


# -------------------------------------------------------------------- glue ---
def _cparams(*sems):
    return pltpu.CompilerParams(dimension_semantics=sems,
                                vmem_limit_bytes=_VMEM_LIMIT)


def _pick_tile(m, preferred=512):
    for t in (preferred, 256, 128, 64, 32, 16, 8):
        if m % t == 0:
            return t
    return m


def _im2col_nhwc(x, kh, kw, stride, pad):
    """NHWC x -> (B*Ho*Wo, kh*kw*C) patches via contiguous strided slices.
    K index order is (i*kw + j)*C + c, matching the packed weight layout."""
    B, H, W, C = x.shape
    if pad:
        x = jnp.pad(x, ((0, 0), (pad, pad), (pad, pad), (0, 0)))
    Ho = (H + 2 * pad - kh) // stride + 1
    Wo = (W + 2 * pad - kw) // stride + 1
    slabs = []
    for i in range(kh):
        for j in range(kw):
            slabs.append(jax.lax.slice(
                x, (0, i, j, 0),
                (B, i + (Ho - 1) * stride + 1, j + (Wo - 1) * stride + 1, C),
                (1, stride, stride, 1)))
    patches = jnp.concatenate(slabs, axis=-1)           # (B, Ho, Wo, kh*kw*C)
    return patches.reshape(B * Ho * Wo, kh * kw * C), Ho, Wo


def _linear(c, w, b):
    B, K = c.shape
    N = w.shape[1]
    return pl.pallas_call(
        _linear_kernel,
        out_shape=jax.ShapeDtypeStruct((B, N), jnp.bfloat16),
        grid=(1,),
        in_specs=[pl.BlockSpec((B, K), lambda i: (0, 0)),
                  pl.BlockSpec((K, N), lambda i: (0, 0)),
                  pl.BlockSpec((1, N), lambda i: (0, 0))],
        out_specs=pl.BlockSpec((B, N), lambda i: (0, 0)),
        compiler_params=_cparams("arbitrary"),
    )(c, w, b)


def _conv_lrelu(x, wm, *, stride, pad):
    # Layer 1: K=64, N=64 -- memory/store-bound, so keep it a simple M-tiled
    # ("parallel") matmul; no point chasing MXU utilization here.
    B = x.shape[0]
    patches, Ho, Wo = _im2col_nhwc(x, 4, 4, stride, pad)   # (M, K) bf16
    M, K = patches.shape
    N = wm.shape[1]
    tm = _pick_tile(M)
    y = pl.pallas_call(
        _conv_lrelu_kernel,
        out_shape=jax.ShapeDtypeStruct((M, N), jnp.bfloat16),
        grid=(M // tm,),
        in_specs=[pl.BlockSpec((tm, K), lambda i: (i, 0)),
                  pl.BlockSpec((K, N), lambda i: (0, 0))],
        out_specs=pl.BlockSpec((tm, N), lambda i: (i, 0)),
        compiler_params=_cparams("parallel"),
    )(patches, wm)
    return y.reshape(B, Ho, Wo, N)


def _conv_bn_lrelu(x, wm, gamma, beta, *, stride, pad, tn=128, tk=512):
    B = x.shape[0]
    patches, Ho, Wo = _im2col_nhwc(x, 4, 4, stride, pad)   # (M, K) bf16
    M, K = patches.shape
    N = wm.shape[1]
    tn = min(tn, N)
    tk = tk if K % tk == 0 else K
    assert N % tn == 0 and K % tk == 0
    # NOTE: the LHS / output / scratch blocks intentionally span the FULL M
    # extent -- required for correct batch statistics inside the kernel.
    y = pl.pallas_call(
        _conv_bn_lrelu_kernel,
        out_shape=jax.ShapeDtypeStruct((M, N), jnp.bfloat16),
        grid=(N // tn, K // tk),                           # (parallel, reduction-last)
        in_specs=[pl.BlockSpec((M, tk), lambda n, k: (0, k)),
                  pl.BlockSpec((tk, tn), lambda n, k: (k, n)),
                  pl.BlockSpec((1, tn), lambda n, k: (0, n)),
                  pl.BlockSpec((1, tn), lambda n, k: (0, n))],
        out_specs=pl.BlockSpec((M, tn), lambda n, k: (0, n)),
        scratch_shapes=[pltpu.VMEM((M, tn), jnp.float32)],
        compiler_params=_cparams("parallel", "arbitrary"),
    )(patches, wm, gamma, beta)
    return y.reshape(B, Ho, Wo, N)


def _final_logit(h, w):
    # 4x4 valid stride-1 conv over a 4x4 map == dot over all taps & channels;
    # the im2col is a pure reshape (row-major NHWC matches the packed weight
    # K ordering), so no patch extraction / HBM round trip is needed.
    B = h.shape[0]
    hf = h.reshape(B, -1)                                  # (B, 4*4*512) bf16
    K = hf.shape[1]
    return pl.pallas_call(
        _final_logit_kernel,
        out_shape=jax.ShapeDtypeStruct((B, 1), jnp.float32),
        grid=(1,),
        in_specs=[pl.BlockSpec((B, K), lambda i: (0, 0)),
                  pl.BlockSpec((1, K), lambda i: (0, 0))],
        out_specs=pl.BlockSpec((B, 1), lambda i: (0, 0)),
        compiler_params=_cparams("arbitrary"),
    )(hf, w)


def discriminator_forward(params, x, c):
    """x: (B, 3, 64, 64) NCHW f32, c: (B, 24) f32 -> (B, 1) f32."""
    B = x.shape[0]
    # conditionToInput: Linear(24, 64*64) -> one 64x64 condition plane.
    c_img = _linear(c.astype(jnp.bfloat16), params["lin_w"], params["lin_b"])
    c_img = c_img.reshape(B, 64, 64, 1)
    # single boundary transpose NCHW -> NHWC, then lane-dim channel concat.
    x_nhwc = jnp.transpose(x, (0, 2, 3, 1)).astype(jnp.bfloat16)
    h = jnp.concatenate([x_nhwc, c_img], axis=-1)                        # (B,64,64,4)

    h = _conv_lrelu(h, params["w1"], stride=2, pad=1)                    # (B,32,32, 64)
    h = _conv_bn_lrelu(h, params["w2"], params["g2"], params["b2"],
                       stride=2, pad=1)                                  # (B,16,16,128)
    h = _conv_bn_lrelu(h, params["w3"], params["g3"], params["b3"],
                       stride=2, pad=1)                                  # (B, 8, 8,256)
    h = _conv_bn_lrelu(h, params["w4"], params["g4"], params["b4"],
                       stride=2, pad=1)                                  # (B, 4, 4,512)
    out = _final_logit(h, params["w5"])                                  # (B, 1)
    return out.reshape(B, 1)


# --------------------------------------------------------- param construction --
def _pack_conv_w(w):
    # torch layout (Cout, Cin, kh, kw) -> matmul layout (kh*kw*Cin, Cout), bf16.
    co, ci, kh, kw = w.shape
    return jnp.transpose(w, (2, 3, 1, 0)).reshape(kh * kw * ci, co).astype(jnp.bfloat16)


def init_params(key):
    ks = jax.random.split(key, 13)
    n = lambda k, s, std=0.02: std * jax.random.normal(k, s, jnp.float32)
    raw = {
        "lin_w": n(ks[0], (64 * 64, 24), 0.05),   # torch nn.Linear: (out, in)
        "lin_b": n(ks[1], (64 * 64,), 0.05),
        "w1": n(ks[2], (64, 4, 4, 4)),
        "w2": n(ks[3], (128, 64, 4, 4)),
        "g2": 1.0 + n(ks[4], (128,)), "b2": n(ks[5], (128,)),
        "w3": n(ks[6], (256, 128, 4, 4)),
        "g3": 1.0 + n(ks[7], (256,)), "b3": n(ks[8], (256,)),
        "w4": n(ks[9], (512, 256, 4, 4)),
        "g4": 1.0 + n(ks[10], (512,)), "b4": n(ks[11], (512,)),
        "w5": n(ks[12], (1, 512, 4, 4)),
    }
    # Pack once, outside the traced forward (no per-step weight shuffling).
    p = {
        "lin_w": jnp.transpose(raw["lin_w"]).astype(jnp.bfloat16),       # (24, 4096)
        "lin_b": raw["lin_b"].reshape(1, -1).astype(jnp.float32),
        "w1": _pack_conv_w(raw["w1"]),                                   # (  64,  64)
        "w2": _pack_conv_w(raw["w2"]),                                   # (1024, 128)
        "w3": _pack_conv_w(raw["w3"]),                                   # (2048, 256)
        "w4": _pack_conv_w(raw["w4"]),                                   # (4096, 512)
        # final layer kept un-padded: (1, 8192) row vector for VPU reduce.
        "w5": jnp.transpose(_pack_conv_w(raw["w5"])),                    # (1, 8192)
    }
    for i in (2, 3, 4):
        p[f"g{i}"] = raw[f"g{i}"].reshape(1, -1).astype(jnp.float32)
        p[f"b{i}"] = raw[f"b{i}"].reshape(1, -1).astype(jnp.float32)
    return p


if __name__ == "__main__":
    key = jax.random.PRNGKey(0)
    kx, kc, kp = jax.random.split(key, 3)
    B = 2
    x = jax.random.normal(kx, (B, 3, 64, 64), jnp.float32)   # image (spatial size fixed at 64 by arch)
    c = jax.random.normal(kc, (B, 24), jnp.float32)          # condition vector
    params = init_params(kp)

    fwd = jax.jit(discriminator_forward)
    out = jax.block_until_ready(fwd(params, x, c))
    assert out.shape == (B, 1), out.shape
    assert bool(jnp.all(jnp.isfinite(out)))
    assert bool(jnp.all((out >= 0.0) & (out <= 1.0)))        # post-sigmoid range
    print("KERNEL_OK")
</pallas_src>

<mosaic_0001>
module attributes {stable_mosaic.version = 11 : i64} {
  func.func @_linear_kernel(%arg0: i32, %arg1: memref<2x24xbf16, #tpu.memory_space<vmem>>, %arg2: memref<24x4096xbf16, #tpu.memory_space<vmem>>, %arg3: memref<1x4096xf32, #tpu.memory_space<vmem>>, %arg4: memref<2x4096xbf16, #tpu.memory_space<vmem>>) attributes {dimension_semantics = [#tpu.dimension_semantics<arbitrary>], iteration_bounds = array<i64: 1>, scalar_prefetch = 0 : i64, scratch_operands = 0 : i64, tpu.core_type = #tpu.core_type<tc>, window_params = [{pipeline_mode = #tpu.pipeline_mode<synchronous>, transform_indices = @transform_0, window_bounds = array<i64: 2, 24>}, {pipeline_mode = #tpu.pipeline_mode<synchronous>, transform_indices = @transform_1, window_bounds = array<i64: 24, 4096>}, {pipeline_mode = #tpu.pipeline_mode<synchronous>, transform_indices = @transform_2, window_bounds = array<i64: 1, 4096>}, {pipeline_mode = #tpu.pipeline_mode<synchronous>, transform_indices = @transform_3, window_bounds = array<i64: 2, 4096>}]} {
    %c0 = arith.constant 0 : index
    %c0_0 = arith.constant 0 : index
    %0 = vector.load %arg1[%c0, %c0_0] : memref<2x24xbf16, #tpu.memory_space<vmem>>, vector<2x24xbf16>
    %c0_1 = arith.constant 0 : index
    %c0_2 = arith.constant 0 : index
    %1 = vector.load %arg2[%c0_1, %c0_2] : memref<24x4096xbf16, #tpu.memory_space<vmem>>, vector<24x4096xbf16>
    %cst = arith.constant dense<0.000000e+00> : vector<2x4096xf32>
    %2 = tpu.matmul %0, %1, %cst {dimension_numbers = #tpu.dot_dimension_numbers<[1], [0], [0], [1], [0, 0, 1, 1], [], []>} : vector<2x24xbf16>, vector<24x4096xbf16>, vector<2x4096xf32> -> vector<2x4096xf32>
    %c0_3 = arith.constant 0 : index
    %c0_4 = arith.constant 0 : index
    %3 = vector.load %arg3[%c0_3, %c0_4] : memref<1x4096xf32, #tpu.memory_space<vmem>>, vector<1x4096xf32>
    %4 = vector.broadcast %3 : vector<1x4096xf32> to vector<2x4096xf32>
    %5 = arith.addf %2, %4 : vector<2x4096xf32>
    %6 = arith.truncf %5 : vector<2x4096xf32> to vector<2x4096xbf16>
    %c0_5 = arith.constant 0 : index
    %c0_6 = arith.constant 0 : index
    %7 = vector.load %arg4[%c0_5, %c0_6] : memref<2x4096xbf16, #tpu.memory_space<vmem>>, vector<2x4096xbf16>
    tpu.vector_store %arg4[%c0_5, %c0_6], %6 {strides = array<i32>} : memref<2x4096xbf16, #tpu.memory_space<vmem>>, vector<2x4096xbf16>,
    return
  }
  func.func @transform_0(%arg0: i32) -> (i32, i32) {
    %c0_i32 = arith.constant 0 : i32
    %c0_i32_0 = arith.constant 0 : i32
    %c0_i32_1 = arith.constant 0 : i32
    return %c0_i32, %c0_i32_0 : i32, i32
  }
  func.func @transform_1(%arg0: i32) -> (i32, i32) {
    %c0_i32 = arith.constant 0 : i32
    %c0_i32_0 = arith.constant 0 : i32
    %c0_i32_1 = arith.constant 0 : i32
    return %c0_i32, %c0_i32_0 : i32, i32
  }
  func.func @transform_2(%arg0: i32) -> (i32, i32) {
    %c0_i32 = arith.constant 0 : i32
    %c0_i32_0 = arith.constant 0 : i32
    %c0_i32_1 = arith.constant 0 : i32
    return %c0_i32, %c0_i32_0 : i32, i32
  }
  func.func @transform_3(%arg0: i32) -> (i32, i32) {
    %c0_i32 = arith.constant 0 : i32
    %c0_i32_0 = arith.constant 0 : i32
    %c0_i32_1 = arith.constant 0 : i32
    return %c0_i32, %c0_i32_0 : i32, i32
  }
}

module attributes {stable_mosaic.version = 11 : i64} {
  func.func @_conv_lrelu_kernel(%arg0: i32, %arg1: memref<512x64xbf16, #tpu.memory_space<vmem>>, %arg2: memref<64x64xbf16, #tpu.memory_space<vmem>>, %arg3: memref<512x64xbf16, #tpu.memory_space<vmem>>) attributes {dimension_semantics = [#tpu.dimension_semantics<parallel>], iteration_bounds = array<i64: 4>, scalar_prefetch = 0 : i64, scratch_operands = 0 : i64, tpu.core_type = #tpu.core_type<tc>, window_params = [{transform_indices = @transform_0, window_bounds = array<i64: 512, 64>}, {pipeline_mode = #tpu.pipeline_mode<synchronous>, transform_indices = @transform_1, window_bounds = array<i64: 64, 64>}, {transform_indices = @transform_2, window_bounds = array<i64: 512, 64>}]} {
    %c0 = arith.constant 0 : index
    %c0_0 = arith.constant 0 : index
    %0 = vector.load %arg1[%c0, %c0_0] : memref<512x64xbf16, #tpu.memory_space<vmem>>, vector<512x64xbf16>
    %c0_1 = arith.constant 0 : index
    %c0_2 = arith.constant 0 : index
    %1 = vector.load %arg2[%c0_1, %c0_2] : memref<64x64xbf16, #tpu.memory_space<vmem>>, vector<64x64xbf16>
    %cst = arith.constant dense<0.000000e+00> : vector<512x64xf32>
    %2 = tpu.matmul %0, %1, %cst {dimension_numbers = #tpu.dot_dimension_numbers<[1], [0], [0], [1], [0, 0, 1, 1], [], []>} : vector<512x64xbf16>, vector<64x64xbf16>, vector<512x64xf32> -> vector<512x64xf32>
    %cst_3 = arith.constant 0.000000e+00 : f32
    %3 = vector.broadcast %cst_3 : f32 to vector<512x64xf32>
    %4 = arith.cmpf oge, %2, %3 : vector<512x64xf32>
    %cst_4 = arith.constant 2.000000e-01 : f32
    %5 = vector.broadcast %cst_4 : f32 to vector<512x64xf32>
    %6 = arith.mulf %5, %2 : vector<512x64xf32>
    %7 = arith.select %4, %2, %6 : vector<512x64xi1>, vector<512x64xf32>
    %8 = arith.truncf %7 : vector<512x64xf32> to vector<512x64xbf16>
    %c0_5 = arith.constant 0 : index
    %c0_6 = arith.constant 0 : index
    %9 = vector.load %arg3[%c0_5, %c0_6] : memref<512x64xbf16, #tpu.memory_space<vmem>>, vector<512x64xbf16>
    tpu.vector_store %arg3[%c0_5, %c0_6], %8 {strides = array<i32>} : memref<512x64xbf16, #tpu.memory_space<vmem>>, vector<512x64xbf16>,
    return
  }
  func.func @transform_0(%arg0: i32) -> (i32, i32) {
    %c0_i32 = arith.constant 0 : i32
    %c0_i32_0 = arith.constant 0 : i32
    return %arg0, %c0_i32 : i32, i32
  }
  func.func @transform_1(%arg0: i32) -> (i32, i32) {
    %c0_i32 = arith.constant 0 : i32
    %c0_i32_0 = arith.constant 0 : i32
    %c0_i32_1 = arith.constant 0 : i32
    return %c0_i32, %c0_i32_0 : i32, i32
  }
  func.func @transform_2(%arg0: i32) -> (i32, i32) {
    %c0_i32 = arith.constant 0 : i32
    %c0_i32_0 = arith.constant 0 : i32
    return %arg0, %c0_i32 : i32, i32
  }
}

module attributes {stable_mosaic.version = 11 : i64} {
  func.func @_conv_bn_lrelu_kernel(%arg0: i32, %arg1: i32, %arg2: memref<512x512xbf16, #tpu.memory_space<vmem>>, %arg3: memref<512x128xbf16, #tpu.memory_space<vmem>>, %arg4: memref<1x128xf32, #tpu.memory_space<vmem>>, %arg5: memref<1x128xf32, #tpu.memory_space<vmem>>, %arg6: memref<512x128xbf16, #tpu.memory_space<vmem>>, %arg7: memref<512x128xf32, #tpu.memory_space<vmem>>) attributes {dimension_semantics = [#tpu.dimension_semantics<parallel>, #tpu.dimension_semantics<arbitrary>], iteration_bounds = array<i64: 1, 2>, scalar_prefetch = 0 : i64, scratch_operands = 1 : i64, tpu.core_type = #tpu.core_type<tc>, window_params = [{transform_indices = @transform_0, window_bounds = array<i64: 512, 512>}, {transform_indices = @transform_1, window_bounds = array<i64: 512, 128>}, {transform_indices = @transform_2, window_bounds = array<i64: 1, 128>}, {transform_indices = @transform_3, window_bounds = array<i64: 1, 128>}, {transform_indices = @transform_4, window_bounds = array<i64: 512, 128>}]} {
    %c0_i32 = arith.constant 0 : i32
    %0 = arith.cmpi eq, %arg1, %c0_i32 : i32
    %1 = arith.extui %0 : i1 to i32
    %c0_i32_0 = arith.constant 0 : i32
    %2 = arith.cmpi ne, %1, %c0_i32_0 : i32
    scf.if %2 {
      %cst_9 = arith.constant 0.000000e+00 : f32
      %12 = vector.broadcast %cst_9 : f32 to vector<512x128xf32>
      %c0_10 = arith.constant 0 : index
      %c0_11 = arith.constant 0 : index
      %13 = vector.load %arg7[%c0_10, %c0_11] : memref<512x128xf32, #tpu.memory_space<vmem>>, vector<512x128xf32>
      tpu.vector_store %arg7[%c0_10, %c0_11], %12 {strides = array<i32>} : memref<512x128xf32, #tpu.memory_space<vmem>>, vector<512x128xf32>,
    } else {
    }
    %c0 = arith.constant 0 : index
    %c0_1 = arith.constant 0 : index
    %3 = vector.load %arg7[%c0, %c0_1] : memref<512x128xf32, #tpu.memory_space<vmem>>, vector<512x128xf32>
    %c0_2 = arith.constant 0 : index
    %c0_3 = arith.constant 0 : index
    %4 = vector.load %arg2[%c0_2, %c0_3] : memref<512x512xbf16, #tpu.memory_space<vmem>>, vector<512x512xbf16>
    %c0_4 = arith.constant 0 : index
    %c0_5 = arith.constant 0 : index
    %5 = vector.load %arg3[%c0_4, %c0_5] : memref<512x128xbf16, #tpu.memory_space<vmem>>, vector<512x128xbf16>
    %cst = arith.constant dense<0.000000e+00> : vector<512x128xf32>
    %6 = tpu.matmul %4, %5, %cst {dimension_numbers = #tpu.dot_dimension_numbers<[1], [0], [0], [1], [0, 0, 1, 1], [], []>} : vector<512x512xbf16>, vector<512x128xbf16>, vector<512x128xf32> -> vector<512x128xf32>
    %7 = arith.addf %3, %6 : vector<512x128xf32>
    %c0_6 = arith.constant 0 : index
    %c0_7 = arith.constant 0 : index
    %8 = vector.load %arg7[%c0_6, %c0_7] : memref<512x128xf32, #tpu.memory_space<vmem>>, vector<512x128xf32>
    tpu.vector_store %arg7[%c0_6, %c0_7], %7 {strides = array<i32>} : memref<512x128xf32, #tpu.memory_space<vmem>>, vector<512x128xf32>,
    %c1_i32 = arith.constant 1 : i32
    %9 = arith.cmpi eq, %arg1, %c1_i32 : i32
    %10 = arith.extui %9 : i1 to i32
    %c0_i32_8 = arith.constant 0 : i32
    %11 = arith.cmpi ne, %10, %c0_i32_8 : i32
    scf.if %11 {
      %c0_9 = arith.constant 0 : index
      %c0_10 = arith.constant 0 : index
      %12 = vector.load %arg7[%c0_9, %c0_10] : memref<512x128xf32, #tpu.memory_space<vmem>>, vector<512x128xf32>
      %cst_11 = arith.constant dense<0.000000e+00> : vector<128xf32>
      %13 = vector.multi_reduction <add>, %12, %cst_11 [0] : vector<512x128xf32> to vector<128xf32>
      %14 = vector.shape_cast %13 : vector<128xf32> to vector<1x128xf32>
      %cst_12 = arith.constant 5.120000e+02 : f32
      %15 = vector.broadcast %cst_12 : f32 to vector<1x128xf32>
      %16 = arith.divf %14, %15 : vector<1x128xf32>
      %17 = arith.mulf %12, %12 : vector<512x128xf32>
      %cst_13 = arith.constant dense<0.000000e+00> : vector<128xf32>
      %18 = vector.multi_reduction <add>, %17, %cst_13 [0] : vector<512x128xf32> to vector<128xf32>
      %19 = vector.shape_cast %18 : vector<128xf32> to vector<1x128xf32>
      %cst_14 = arith.constant 5.120000e+02 : f32
      %20 = vector.broadcast %cst_14 : f32 to vector<1x128xf32>
      %21 = arith.divf %19, %20 : vector<1x128xf32>
      %22 = arith.mulf %16, %16 : vector<1x128xf32>
      %23 = arith.subf %21, %22 : vector<1x128xf32>
      %cst_15 = arith.constant 0.000000e+00 : f32
      %24 = vector.broadcast %cst_15 : f32 to vector<1x128xf32>
      %25 = arith.maximumf %23, %24 : vector<1x128xf32>
      %26 = vector.broadcast %16 : vector<1x128xf32> to vector<512x128xf32>
      %27 = arith.subf %12, %26 : vector<512x128xf32>
      %cst_16 = arith.constant 9.99999974E-6 : f32
      %28 = vector.broadcast %cst_16 : f32 to vector<1x128xf32>
      %29 = arith.addf %25, %28 : vector<1x128xf32>
      %30 = math.rsqrt %29 : vector<1x128xf32>
      %31 = vector.broadcast %30 : vector<1x128xf32> to vector<512x128xf32>
      %32 = arith.mulf %27, %31 : vector<512x128xf32>
      %c0_17 = arith.constant 0 : index
      %c0_18 = arith.constant 0 : index
      %33 = vector.load %arg4[%c0_17, %c0_18] : memref<1x128xf32, #tpu.memory_space<vmem>>, vector<1x128xf32>
      %34 = vector.broadcast %33 : vector<1x128xf32> to vector<512x128xf32>
      %35 = arith.mulf %32, %34 : vector<512x128xf32>
      %c0_19 = arith.constant 0 : index
      %c0_20 = arith.constant 0 : index
      %36 = vector.load %arg5[%c0_19, %c0_20] : memref<1x128xf32, #tpu.memory_space<vmem>>, vector<1x128xf32>
      %37 = vector.broadcast %36 : vector<1x128xf32> to vector<512x128xf32>
      %38 = arith.addf %35, %37 : vector<512x128xf32>
      %cst_21 = arith.constant 0.000000e+00 : f32
      %39 = vector.broadcast %cst_21 : f32 to vector<512x128xf32>
      %40 = arith.cmpf oge, %38, %39 : vector<512x128xf32>
      %cst_22 = arith.constant 2.000000e-01 : f32
      %41 = vector.broadcast %cst_22 : f32 to vector<512x128xf32>
      %42 = arith.mulf %41, %38 : vector<512x128xf32>
      %43 = arith.select %40, %38, %42 : vector<512x128xi1>, vector<512x128xf32>
      %44 = arith.truncf %43 : vector<512x128xf32> to vector<512x128xbf16>
      %c0_23 = arith.constant 0 : index
      %c0_24 = arith.constant 0 : index
      %45 = vector.load %arg6[%c0_23, %c0_24] : memref<512x128xbf16, #tpu.memory_space<vmem>>, vector<512x128xbf16>
      tpu.vector_store %arg6[%c0_23, %c0_24], %44 {strides = array<i32>} : memref<512x128xbf16, #tpu.memory_space<vmem>>, vector<512x128xbf16>,
    } else {
    }
    return
  }
  func.func @transform_0(%arg0: i32, %arg1: i32) -> (i32, i32) {
    %c0_i32 = arith.constant 0 : i32
    %c0_i32_0 = arith.constant 0 : i32
    return %c0_i32, %arg1 : i32, i32
  }
  func.func @transform_1(%arg0: i32, %arg1: i32) -> (i32, i32) {
    %c0_i32 = arith.constant 0 : i32
    return %arg1, %arg0 : i32, i32
  }
  func.func @transform_2(%arg0: i32, %arg1: i32) -> (i32, i32) {
    %c0_i32 = arith.constant 0 : i32
    %c0_i32_0 = arith.constant 0 : i32
    return %c0_i32, %arg0 : i32, i32
  }
  func.func @transform_3(%arg0: i32, %arg1: i32) -> (i32, i32) {
    %c0_i32 = arith.constant 0 : i32
    %c0_i32_0 = arith.constant 0 : i32
    return %c0_i32, %arg0 : i32, i32
  }
  func.func @transform_4(%arg0: i32, %arg1: i32) -> (i32, i32) {
    %c0_i32 = arith.constant 0 : i32
    %c0_i32_0 = arith.constant 0 : i32
    return %c0_i32, %arg0 : i32, i32
  }
}

module attributes {stable_mosaic.version = 11 : i64} {
  func.func @_conv_bn_lrelu_kernel(%arg0: i32, %arg1: i32, %arg2: memref<128x512xbf16, #tpu.memory_space<vmem>>, %arg3: memref<512x128xbf16, #tpu.memory_space<vmem>>, %arg4: memref<1x128xf32, #tpu.memory_space<vmem>>, %arg5: memref<1x128xf32, #tpu.memory_space<vmem>>, %arg6: memref<128x128xbf16, #tpu.memory_space<vmem>>, %arg7: memref<128x128xf32, #tpu.memory_space<vmem>>) attributes {dimension_semantics = [#tpu.dimension_semantics<parallel>, #tpu.dimension_semantics<arbitrary>], iteration_bounds = array<i64: 2, 4>, scalar_prefetch = 0 : i64, scratch_operands = 1 : i64, tpu.core_type = #tpu.core_type<tc>, window_params = [{transform_indices = @transform_0, window_bounds = array<i64: 128, 512>}, {transform_indices = @transform_1, window_bounds = array<i64: 512, 128>}, {transform_indices = @transform_2, window_bounds = array<i64: 1, 128>}, {transform_indices = @transform_3, window_bounds = array<i64: 1, 128>}, {transform_indices = @transform_4, window_bounds = array<i64: 128, 128>}]} {
    %c0_i32 = arith.constant 0 : i32
    %0 = arith.cmpi eq, %arg1, %c0_i32 : i32
    %1 = arith.extui %0 : i1 to i32
    %c0_i32_0 = arith.constant 0 : i32
    %2 = arith.cmpi ne, %1, %c0_i32_0 : i32
    scf.if %2 {
      %cst_9 = arith.constant 0.000000e+00 : f32
      %12 = vector.broadcast %cst_9 : f32 to vector<128x128xf32>
      %c0_10 = arith.constant 0 : index
      %c0_11 = arith.constant 0 : index
      %13 = vector.load %arg7[%c0_10, %c0_11] : memref<128x128xf32, #tpu.memory_space<vmem>>, vector<128x128xf32>
      tpu.vector_store %arg7[%c0_10, %c0_11], %12 {strides = array<i32>} : memref<128x128xf32, #tpu.memory_space<vmem>>, vector<128x128xf32>,
    } else {
    }
    %c0 = arith.constant 0 : index
    %c0_1 = arith.constant 0 : index
    %3 = vector.load %arg7[%c0, %c0_1] : memref<128x128xf32, #tpu.memory_space<vmem>>, vector<128x128xf32>
    %c0_2 = arith.constant 0 : index
    %c0_3 = arith.constant 0 : index
    %4 = vector.load %arg2[%c0_2, %c0_3] : memref<128x512xbf16, #tpu.memory_space<vmem>>, vector<128x512xbf16>
    %c0_4 = arith.constant 0 : index
    %c0_5 = arith.constant 0 : index
    %5 = vector.load %arg3[%c0_4, %c0_5] : memref<512x128xbf16, #tpu.memory_space<vmem>>, vector<512x128xbf16>
    %cst = arith.constant dense<0.000000e+00> : vector<128x128xf32>
    %6 = tpu.matmul %4, %5, %cst {dimension_numbers = #tpu.dot_dimension_numbers<[1], [0], [0], [1], [0, 0, 1, 1], [], []>} : vector<128x512xbf16>, vector<512x128xbf16>, vector<128x128xf32> -> vector<128x128xf32>
    %7 = arith.addf %3, %6 : vector<128x128xf32>
    %c0_6 = arith.constant 0 : index
    %c0_7 = arith.constant 0 : index
    %8 = vector.load %arg7[%c0_6, %c0_7] : memref<128x128xf32, #tpu.memory_space<vmem>>, vector<128x128xf32>
    tpu.vector_store %arg7[%c0_6, %c0_7], %7 {strides = array<i32>} : memref<128x128xf32, #tpu.memory_space<vmem>>, vector<128x128xf32>,
    %c3_i32 = arith.constant 3 : i32
    %9 = arith.cmpi eq, %arg1, %c3_i32 : i32
    %10 = arith.extui %9 : i1 to i32
    %c0_i32_8 = arith.constant 0 : i32
    %11 = arith.cmpi ne, %10, %c0_i32_8 : i32
    scf.if %11 {
      %c0_9 = arith.constant 0 : index
      %c0_10 = arith.constant 0 : index
      %12 = vector.load %arg7[%c0_9, %c0_10] : memref<128x128xf32, #tpu.memory_space<vmem>>, vector<128x128xf32>
      %cst_11 = arith.constant dense<0.000000e+00> : vector<128xf32>
      %13 = vector.multi_reduction <add>, %12, %cst_11 [0] : vector<128x128xf32> to vector<128xf32>
      %14 = vector.shape_cast %13 : vector<128xf32> to vector<1x128xf32>
      %cst_12 = arith.constant 1.280000e+02 : f32
      %15 = vector.broadcast %cst_12 : f32 to vector<1x128xf32>
      %16 = arith.divf %14, %15 : vector<1x128xf32>
      %17 = arith.mulf %12, %12 : vector<128x128xf32>
      %cst_13 = arith.constant dense<0.000000e+00> : vector<128xf32>
      %18 = vector.multi_reduction <add>, %17, %cst_13 [0] : vector<128x128xf32> to vector<128xf32>
      %19 = vector.shape_cast %18 : vector<128xf32> to vector<1x128xf32>
      %cst_14 = arith.constant 1.280000e+02 : f32
      %20 = vector.broadcast %cst_14 : f32 to vector<1x128xf32>
      %21 = arith.divf %19, %20 : vector<1x128xf32>
      %22 = arith.mulf %16, %16 : vector<1x128xf32>
      %23 = arith.subf %21, %22 : vector<1x128xf32>
      %cst_15 = arith.constant 0.000000e+00 : f32
      %24 = vector.broadcast %cst_15 : f32 to vector<1x128xf32>
      %25 = arith.maximumf %23, %24 : vector<1x128xf32>
      %26 = vector.broadcast %16 : vector<1x128xf32> to vector<128x128xf32>
      %27 = arith.subf %12, %26 : vector<128x128xf32>
      %cst_16 = arith.constant 9.99999974E-6 : f32
      %28 = vector.broadcast %cst_16 : f32 to vector<1x128xf32>
      %29 = arith.addf %25, %28 : vector<1x128xf32>
      %30 = math.rsqrt %29 : vector<1x128xf32>
      %31 = vector.broadcast %30 : vector<1x128xf32> to vector<128x128xf32>
      %32 = arith.mulf %27, %31 : vector<128x128xf32>
      %c0_17 = arith.constant 0 : index
      %c0_18 = arith.constant 0 : index
      %33 = vector.load %arg4[%c0_17, %c0_18] : memref<1x128xf32, #tpu.memory_space<vmem>>, vector<1x128xf32>
      %34 = vector.broadcast %33 : vector<1x128xf32> to vector<128x128xf32>
      %35 = arith.mulf %32, %34 : vector<128x128xf32>
      %c0_19 = arith.constant 0 : index
      %c0_20 = arith.constant 0 : index
      %36 = vector.load %arg5[%c0_19, %c0_20] : memref<1x128xf32, #tpu.memory_space<vmem>>, vector<1x128xf32>
      %37 = vector.broadcast %36 : vector<1x128xf32> to vector<128x128xf32>
      %38 = arith.addf %35, %37 : vector<128x128xf32>
      %cst_21 = arith.constant 0.000000e+00 : f32
      %39 = vector.broadcast %cst_21 : f32 to vector<128x128xf32>
      %40 = arith.cmpf oge, %38, %39 : vector<128x128xf32>
      %cst_22 = arith.constant 2.000000e-01 : f32
      %41 = vector.broadcast %cst_22 : f32 to vector<128x128xf32>
      %42 = arith.mulf %41, %38 : vector<128x128xf32>
      %43 = arith.select %40, %38, %42 : vector<128x128xi1>, vector<128x128xf32>
      %44 = arith.truncf %43 : vector<128x128xf32> to vector<128x128xbf16>
      %c0_23 = arith.constant 0 : index
      %c0_24 = arith.constant 0 : index
      %45 = vector.load %arg6[%c0_23, %c0_24] : memref<128x128xbf16, #tpu.memory_space<vmem>>, vector<128x128xbf16>
      tpu.vector_store %arg6[%c0_23, %c0_24], %44 {strides = array<i32>} : memref<128x128xbf16, #tpu.memory_space<vmem>>, vector<128x128xbf16>,
    } else {
    }
    return
  }
  func.func @transform_0(%arg0: i32, %arg1: i32) -> (i32, i32) {
    %c0_i32 = arith.constant 0 : i32
    %c0_i32_0 = arith.constant 0 : i32
    return %c0_i32, %arg1 : i32, i32
  }
  func.func @transform_1(%arg0: i32, %arg1: i32) -> (i32, i32) {
    %c0_i32 = arith.constant 0 : i32
    return %arg1, %arg0 : i32, i32
  }
  func.func @transform_2(%arg0: i32, %arg1: i32) -> (i32, i32) {
    %c0_i32 = arith.constant 0 : i32
    %c0_i32_0 = arith.constant 0 : i32
    return %c0_i32, %arg0 : i32, i32
  }
  func.func @transform_3(%arg0: i32, %arg1: i32) -> (i32, i32) {
    %c0_i32 = arith.constant 0 : i32
    %c0_i32_0 = arith.constant 0 : i32
    return %c0_i32, %arg0 : i32, i32
  }
  func.func @transform_4(%arg0: i32, %arg1: i32) -> (i32, i32) {
    %c0_i32 = arith.constant 0 : i32
    %c0_i32_0 = arith.constant 0 : i32
    return %c0_i32, %arg0 : i32, i32
  }
}

module attributes {stable_mosaic.version = 11 : i64} {
  func.func @_conv_bn_lrelu_kernel(%arg0: i32, %arg1: i32, %arg2: memref<32x512xbf16, #tpu.memory_space<vmem>>, %arg3: memref<512x128xbf16, #tpu.memory_space<vmem>>, %arg4: memref<1x128xf32, #tpu.memory_space<vmem>>, %arg5: memref<1x128xf32, #tpu.memory_space<vmem>>, %arg6: memref<32x128xbf16, #tpu.memory_space<vmem>>, %arg7: memref<32x128xf32, #tpu.memory_space<vmem>>) attributes {dimension_semantics = [#tpu.dimension_semantics<parallel>, #tpu.dimension_semantics<arbitrary>], iteration_bounds = array<i64: 4, 8>, scalar_prefetch = 0 : i64, scratch_operands = 1 : i64, tpu.core_type = #tpu.core_type<tc>, window_params = [{transform_indices = @transform_0, window_bounds = array<i64: 32, 512>}, {transform_indices = @transform_1, window_bounds = array<i64: 512, 128>}, {transform_indices = @transform_2, window_bounds = array<i64: 1, 128>}, {transform_indices = @transform_3, window_bounds = array<i64: 1, 128>}, {transform_indices = @transform_4, window_bounds = array<i64: 32, 128>}]} {
    %c0_i32 = arith.constant 0 : i32
    %0 = arith.cmpi eq, %arg1, %c0_i32 : i32
    %1 = arith.extui %0 : i1 to i32
    %c0_i32_0 = arith.constant 0 : i32
    %2 = arith.cmpi ne, %1, %c0_i32_0 : i32
    scf.if %2 {
      %cst_9 = arith.constant 0.000000e+00 : f32
      %12 = vector.broadcast %cst_9 : f32 to vector<32x128xf32>
      %c0_10 = arith.constant 0 : index
      %c0_11 = arith.constant 0 : index
      %13 = vector.load %arg7[%c0_10, %c0_11] : memref<32x128xf32, #tpu.memory_space<vmem>>, vector<32x128xf32>
      tpu.vector_store %arg7[%c0_10, %c0_11], %12 {strides = array<i32>} : memref<32x128xf32, #tpu.memory_space<vmem>>, vector<32x128xf32>,
    } else {
    }
    %c0 = arith.constant 0 : index
    %c0_1 = arith.constant 0 : index
    %3 = vector.load %arg7[%c0, %c0_1] : memref<32x128xf32, #tpu.memory_space<vmem>>, vector<32x128xf32>
    %c0_2 = arith.constant 0 : index
    %c0_3 = arith.constant 0 : index
    %4 = vector.load %arg2[%c0_2, %c0_3] : memref<32x512xbf16, #tpu.memory_space<vmem>>, vector<32x512xbf16>
    %c0_4 = arith.constant 0 : index
    %c0_5 = arith.constant 0 : index
    %5 = vector.load %arg3[%c0_4, %c0_5] : memref<512x128xbf16, #tpu.memory_space<vmem>>, vector<512x128xbf16>
    %cst = arith.constant dense<0.000000e+00> : vector<32x128xf32>
    %6 = tpu.matmul %4, %5, %cst {dimension_numbers = #tpu.dot_dimension_numbers<[1], [0], [0], [1], [0, 0, 1, 1], [], []>} : vector<32x512xbf16>, vector<512x128xbf16>, vector<32x128xf32> -> vector<32x128xf32>
    %7 = arith.addf %3, %6 : vector<32x128xf32>
    %c0_6 = arith.constant 0 : index
    %c0_7 = arith.constant 0 : index
    %8 = vector.load %arg7[%c0_6, %c0_7] : memref<32x128xf32, #tpu.memory_space<vmem>>, vector<32x128xf32>
    tpu.vector_store %arg7[%c0_6, %c0_7], %7 {strides = array<i32>} : memref<32x128xf32, #tpu.memory_space<vmem>>, vector<32x128xf32>,
    %c7_i32 = arith.constant 7 : i32
    %9 = arith.cmpi eq, %arg1, %c7_i32 : i32
    %10 = arith.extui %9 : i1 to i32
    %c0_i32_8 = arith.constant 0 : i32
    %11 = arith.cmpi ne, %10, %c0_i32_8 : i32
    scf.if %11 {
      %c0_9 = arith.constant 0 : index
      %c0_10 = arith.constant 0 : index
      %12 = vector.load %arg7[%c0_9, %c0_10] : memref<32x128xf32, #tpu.memory_space<vmem>>, vector<32x128xf32>
      %cst_11 = arith.constant dense<0.000000e+00> : vector<128xf32>
      %13 = vector.multi_reduction <add>, %12, %cst_11 [0] : vector<32x128xf32> to vector<128xf32>
      %14 = vector.shape_cast %13 : vector<128xf32> to vector<1x128xf32>
      %cst_12 = arith.constant 3.200000e+01 : f32
      %15 = vector.broadcast %cst_12 : f32 to vector<1x128xf32>
      %16 = arith.divf %14, %15 : vector<1x128xf32>
      %17 = arith.mulf %12, %12 : vector<32x128xf32>
      %cst_13 = arith.constant dense<0.000000e+00> : vector<128xf32>
      %18 = vector.multi_reduction <add>, %17, %cst_13 [0] : vector<32x128xf32> to vector<128xf32>
      %19 = vector.shape_cast %18 : vector<128xf32> to vector<1x128xf32>
      %cst_14 = arith.constant 3.200000e+01 : f32
      %20 = vector.broadcast %cst_14 : f32 to vector<1x128xf32>
      %21 = arith.divf %19, %20 : vector<1x128xf32>
      %22 = arith.mulf %16, %16 : vector<1x128xf32>
      %23 = arith.subf %21, %22 : vector<1x128xf32>
      %cst_15 = arith.constant 0.000000e+00 : f32
      %24 = vector.broadcast %cst_15 : f32 to vector<1x128xf32>
      %25 = arith.maximumf %23, %24 : vector<1x128xf32>
      %26 = vector.broadcast %16 : vector<1x128xf32> to vector<32x128xf32>
      %27 = arith.subf %12, %26 : vector<32x128xf32>
      %cst_16 = arith.constant 9.99999974E-6 : f32
      %28 = vector.broadcast %cst_16 : f32 to vector<1x128xf32>
      %29 = arith.addf %25, %28 : vector<1x128xf32>
      %30 = math.rsqrt %29 : vector<1x128xf32>
      %31 = vector.broadcast %30 : vector<1x128xf32> to vector<32x128xf32>
      %32 = arith.mulf %27, %31 : vector<32x128xf32>
      %c0_17 = arith.constant 0 : index
      %c0_18 = arith.constant 0 : index
      %33 = vector.load %arg4[%c0_17, %c0_18] : memref<1x128xf32, #tpu.memory_space<vmem>>, vector<1x128xf32>
      %34 = vector.broadcast %33 : vector<1x128xf32> to vector<32x128xf32>
      %35 = arith.mulf %32, %34 : vector<32x128xf32>
      %c0_19 = arith.constant 0 : index
      %c0_20 = arith.constant 0 : index
      %36 = vector.load %arg5[%c0_19, %c0_20] : memref<1x128xf32, #tpu.memory_space<vmem>>, vector<1x128xf32>
      %37 = vector.broadcast %36 : vector<1x128xf32> to vector<32x128xf32>
      %38 = arith.addf %35, %37 : vector<32x128xf32>
      %cst_21 = arith.constant 0.000000e+00 : f32
      %39 = vector.broadcast %cst_21 : f32 to vector<32x128xf32>
      %40 = arith.cmpf oge, %38, %39 : vector<32x128xf32>
      %cst_22 = arith.constant 2.000000e-01 : f32
      %41 = vector.broadcast %cst_22 : f32 to vector<32x128xf32>
      %42 = arith.mulf %41, %38 : vector<32x128xf32>
      %43 = arith.select %40, %38, %42 : vector<32x128xi1>, vector<32x128xf32>
      %44 = arith.truncf %43 : vector<32x128xf32> to vector<32x128xbf16>
      %c0_23 = arith.constant 0 : index
      %c0_24 = arith.constant 0 : index
      %45 = vector.load %arg6[%c0_23, %c0_24] : memref<32x128xbf16, #tpu.memory_space<vmem>>, vector<32x128xbf16>
      tpu.vector_store %arg6[%c0_23, %c0_24], %44 {strides = array<i32>} : memref<32x128xbf16, #tpu.memory_space<vmem>>, vector<32x128xbf16>,
    } else {
    }
    return
  }
  func.func @transform_0(%arg0: i32, %arg1: i32) -> (i32, i32) {
    %c0_i32 = arith.constant 0 : i32
    %c0_i32_0 = arith.constant 0 : i32
    return %c0_i32, %arg1 : i32, i32
  }
  func.func @transform_1(%arg0: i32, %arg1: i32) -> (i32, i32) {
    %c0_i32 = arith.constant 0 : i32
    return %arg1, %arg0 : i32, i32
  }
  func.func @transform_2(%arg0: i32, %arg1: i32) -> (i32, i32) {
    %c0_i32 = arith.constant 0 : i32
    %c0_i32_0 = arith.constant 0 : i32
    return %c0_i32, %arg0 : i32, i32
  }
  func.func @transform_3(%arg0: i32, %arg1: i32) -> (i32, i32) {
    %c0_i32 = arith.constant 0 : i32
    %c0_i32_0 = arith.constant 0 : i32
    return %c0_i32, %arg0 : i32, i32
  }
  func.func @transform_4(%arg0: i32, %arg1: i32) -> (i32, i32) {
    %c0_i32 = arith.constant 0 : i32
    %c0_i32_0 = arith.constant 0 : i32
    return %c0_i32, %arg0 : i32, i32
  }
}

module attributes {stable_mosaic.version = 11 : i64} {
  func.func @_final_logit_kernel(%arg0: i32, %arg1: memref<2x8192xbf16, #tpu.memory_space<vmem>>, %arg2: memref<1x8192xbf16, #tpu.memory_space<vmem>>, %arg3: memref<2x1xf32, #tpu.memory_space<vmem>>) attributes {dimension_semantics = [#tpu.dimension_semantics<arbitrary>], iteration_bounds = array<i64: 1>, scalar_prefetch = 0 : i64, scratch_operands = 0 : i64, tpu.core_type = #tpu.core_type<tc>, window_params = [{pipeline_mode = #tpu.pipeline_mode<synchronous>, transform_indices = @transform_0, window_bounds = array<i64: 2, 8192>}, {pipeline_mode = #tpu.pipeline_mode<synchronous>, transform_indices = @transform_1, window_bounds = array<i64: 1, 8192>}, {pipeline_mode = #tpu.pipeline_mode<synchronous>, transform_indices = @transform_2, window_bounds = array<i64: 2, 1>}]} {
    %c0 = arith.constant 0 : index
    %c0_0 = arith.constant 0 : index
    %0 = vector.load %arg1[%c0, %c0_0] : memref<2x8192xbf16, #tpu.memory_space<vmem>>, vector<2x8192xbf16>
    %1 = arith.extf %0 : vector<2x8192xbf16> to vector<2x8192xf32>
    %c0_1 = arith.constant 0 : index
    %c0_2 = arith.constant 0 : index
    %2 = vector.load %arg2[%c0_1, %c0_2] : memref<1x8192xbf16, #tpu.memory_space<vmem>>, vector<1x8192xbf16>
    %3 = arith.extf %2 : vector<1x8192xbf16> to vector<1x8192xf32>
    %4 = vector.broadcast %3 : vector<1x8192xf32> to vector<2x8192xf32>
    %5 = arith.mulf %1, %4 : vector<2x8192xf32>
    %cst = arith.constant dense<0.000000e+00> : vector<2xf32>
    %6 = vector.multi_reduction <add>, %5, %cst [1] : vector<2x8192xf32> to vector<2xf32>
    %7 = vector.shape_cast %6 : vector<2xf32> to vector<2x1xf32>
    %cst_3 = arith.constant 0.000000e+00 : f32
    %8 = vector.broadcast %cst_3 : f32 to vector<2x1xf32>
    %9 = arith.subf %8, %7 : vector<2x1xf32>
    %10 = math.exp %9 : vector<2x1xf32>
    %cst_4 = arith.constant 1.000000e+00 : f32
    %11 = vector.broadcast %cst_4 : f32 to vector<2x1xf32>
    %12 = arith.addf %11, %10 : vector<2x1xf32>
    %cst_5 = arith.constant 1.000000e+00 : f32
    %13 = vector.broadcast %cst_5 : f32 to vector<2x1xf32>
    %14 = arith.divf %13, %12 : vector<2x1xf32>
    %c0_6 = arith.constant 0 : index
    %c0_7 = arith.constant 0 : index
    %15 = vector.load %arg3[%c0_6, %c0_7] : memref<2x1xf32, #tpu.memory_space<vmem>>, vector<2x1xf32>
    tpu.vector_store %arg3[%c0_6, %c0_7], %14 {strides = array<i32>} : memref<2x1xf32, #tpu.memory_space<vmem>>, vector<2x1xf32>,
    return
  }
  func.func @transform_0(%arg0: i32) -> (i32, i32) {
    %c0_i32 = arith.constant 0 : i32
    %c0_i32_0 = arith.constant 0 : i32
    %c0_i32_1 = arith.constant 0 : i32
    return %c0_i32, %c0_i32_0 : i32, i32
  }
  func.func @transform_1(%arg0: i32) -> (i32, i32) {
    %c0_i32 = arith.constant 0 : i32
    %c0_i32_0 = arith.constant 0 : i32
    %c0_i32_1 = arith.constant 0 : i32
    return %c0_i32, %c0_i32_0 : i32, i32
  }
  func.func @transform_2(%arg0: i32) -> (i32, i32) {
    %c0_i32 = arith.constant 0 : i32
    %c0_i32_0 = arith.constant 0 : i32
    %c0_i32_1 = arith.constant 0 : i32
    return %c0_i32, %c0_i32_0 : i32, i32
  }
}

</mosaic_0001>

<llo_original>
// kernel: discriminator_forward.6
$region0: #{discriminator_forward.6}
  #allocation0 [shape = 'u32[]', space=smem, size = 0x4, offset = 0x4, fixed_abs, tag = 'smem constant byte address 0x4 - core index']
  #allocation1 [shape = 'u32[144,128]{1,0:T(1,128)}', space=vmem, size = 0x12000, scoped, tag = 'internal scratch']
  %s0 = inlined_call_operand.vmem [shape: bf16[2,24], index: 0, kind: input, shape index: {}]
  %s1 = inlined_call_operand.hbm [shape: bf16[24,4096], index: 1, kind: input, shape index: {}]
  %s2 = inlined_call_operand.hbm [shape: f32[1,4096], index: 2, kind: input, shape index: {}]
  %s3 = inlined_call_operand.vmem [shape: bf16[2,4096], index: 3, kind: output, shape index: {}]
  %s4 = sld [smem:[#allocation0]]
  $region30: #{discriminator_forward.6} parent=0
    _
  %s6 = ssub.s32 1, %s4
  %s7 = scalar_select 0, %s6, %s4
  $region1: #{discriminator_forward.6} parent=0
    #allocation2 [shape = 'u8[196608]{0}', space=vmem, size = 0x30000, scoped, tag = 'input window, operand 1, single buffered']
    #allocation3 [shape = 's32[1]{0}', space=sflag, size = 0x4, scoped, tag = 'scoped memory for discriminator_forward.6']
    #allocation4 [shape = 'u8[16384]{0}', space=vmem, size = 0x4000, scoped, tag = 'input window, operand 2, single buffered']
    #allocation5 [shape = 's32[1]{0}', space=sflag, size = 0x4, scoped, tag = 'scoped memory for discriminator_forward.6']
    %8 = vsyncpa [#allocation3], 0
    %9 = vsyncpa [#allocation5], 0
    // Predicated region
    $region2: #{discriminator_forward.6} parent=1 // pred_check
      _
    $region3: #{discriminator_forward.6} parent=1 // pred_check_branch
      %11 = sbr.rel (0) target = $region5
    $region4: #{discriminator_forward.6} parent=1 // pred_region
      _
    $region5: #{discriminator_forward.6} parent=1 // pred_fallthru
      _
    // Predicated region
    $region6: #{discriminator_forward.6} parent=1 // pred_check
      _
    $region7: #{discriminator_forward.6} parent=1 // pred_check_branch
      %13 = sbr.rel (0) target = $region9
    $region8: #{discriminator_forward.6} parent=1 // pred_region
      %s15 = ssub.s32 6144, 6144
      %16 = vsyncadd [#allocation3], %s15
      %s17 = sshll.u32 [#allocation2], 4
      %s18 = int_to_ptr.vmem [resolvable:$true] %s17
      %23 = dma.hbm_to_vmem [thread:$0]  %s1, 6144, %s18, [#allocation3], 2048, 2048, 128
    $region9: #{discriminator_forward.6} parent=1 // pred_fallthru
      _
    // Predicated region
    $region10: #{discriminator_forward.6} parent=1 // pred_check
      _
    $region11: #{discriminator_forward.6} parent=1 // pred_check_branch
      %25 = sbr.rel (0) target = $region13
    $region12: #{discriminator_forward.6} parent=1 // pred_region
      %s27 = ssub.s32 512, 512
      %28 = vsyncadd [#allocation5], %s27
      %s30 = sshll.u32 [#allocation4], 4
      %s31 = int_to_ptr.vmem [resolvable:$true] %s30
      %33 = dma.hbm_to_vmem [thread:$0]  %s2, 512, %s31, [#allocation5]
    $region13: #{discriminator_forward.6} parent=1 // pred_fallthru
      _
    // Predicated region
    $region14: #{discriminator_forward.6} parent=1 // pred_check
      _
    $region15: #{discriminator_forward.6} parent=1 // pred_check_branch
      %35 = sbr.rel (0) target = $region17
    $region16: #{discriminator_forward.6} parent=1 // pred_region
      %36 = dma.done [#allocation3], 6144
    $region17: #{discriminator_forward.6} parent=1 // pred_fallthru
      _
    // Predicated region
    $region18: #{discriminator_forward.6} parent=1 // pred_check
      _
    $region19: #{discriminator_forward.6} parent=1 // pred_check_branch
      %38 = sbr.rel (0) target = $region21
    $region20: #{discriminator_forward.6} parent=1 // pred_region
      %39 = dma.done [#allocation5], 512
    $region21: #{discriminator_forward.6} parent=1 // pred_fallthru
      _
    %v41 = vld [vmem:[%s0] sm:$0x1]
    %v42 = vld [vmem:[#allocation2] sm:$0xff]
    %v43 = vld [vmem:[#allocation2 + $0x8] sm:$0xff]
    %v44 = vld [vmem:[#allocation2 + $0x10] sm:$0xff]
    %v45 = vld [vmem:[#allocation2 + $0x18] sm:$0xff]
    %v46 = vld [vmem:[#allocation2 + $0x20] sm:$0xff]
    %v47 = vld [vmem:[#allocation2 + $0x28] sm:$0xff]
    %v48 = vld [vmem:[#allocation2 + $0x30] sm:$0xff]
    %v49 = vld [vmem:[#allocation2 + $0x38] sm:$0xff]
    %v50 = vld [vmem:[#allocation2 + $0x40] sm:$0xff]
    %v51 = vld [vmem:[#allocation2 + $0x48] sm:$0xff]
    %v52 = vld [vmem:[#allocation2 + $0x50] sm:$0xff]
    %v53 = vld [vmem:[#allocation2 + $0x58] sm:$0xff]
    %v54 = vld [vmem:[#allocation2 + $0x60] sm:$0xff]
    %v55 = vld [vmem:[#allocation2 + $0x68] sm:$0xff]
    %v56 = vld [vmem:[#allocation2 + $0x70] sm:$0xff]
    %v57 = vld [vmem:[#allocation2 + $0x78] sm:$0xff]
    %v58 = vld [vmem:[#allocation2 + $0x80] sm:$0xff]
    %v59 = vld [vmem:[#allocation2 + $0x88] sm:$0xff]
    %v60 = vld [vmem:[#allocation2 + $0x90] sm:$0xff]
    %v61 = vld [vmem:[#allocation2 + $0x98] sm:$0xff]
    %v62 = vld [vmem:[#allocation2 + $0xa0] sm:$0xff]
    %v63 = vld [vmem:[#allocation2 + $0xa8] sm:$0xff]
    %v64 = vld [vmem:[#allocation2 + $0xb0] sm:$0xff]
    %v65 = vld [vmem:[#allocation2 + $0xb8] sm:$0xff]
    %v66 = vld [vmem:[#allocation2 + $0xc0] sm:$0xff]
    %v67 = vld [vmem:[#allocation2 + $0xc8] sm:$0xff]
    %v68 = vld [vmem:[#allocation2 + $0xd0] sm:$0xff]
    %v69 = vld [vmem:[#allocation2 + $0xd8] sm:$0xff]
    %v70 = vld [vmem:[#allocation2 + $0xe0] sm:$0xff]
    %v71 = vld [vmem:[#allocation2 + $0xe8] sm:$0xff]
    %v72 = vld [vmem:[#allocation2 + $0xf0] sm:$0xff]
    %v73 = vld [vmem:[#allocation2 + $0xf8] sm:$0xff]
    %v74 = vld [vmem:[#allocation2 + $0x100] sm:$0xff]
    %v75 = vld [vmem:[#allocation2 + $0x108] sm:$0xff]
    %v76 = vld [vmem:[#allocation2 + $0x110] sm:$0xff]
    %v77 = vld [vmem:[#allocation2 + $0x118] sm:$0xff]
    %v78 = vld [vmem:[#allocation2 + $0x120] sm:$0xff]
    %v79 = vld [vmem:[#allocation2 + $0x128] sm:$0xff]
    %v80 = vld [vmem:[#allocation2 + $0x130] sm:$0xff]
    %v81 = vld [vmem:[#allocation2 + $0x138] sm:$0xff]
    %v82 = vld [vmem:[#allocation2 + $0x140] sm:$0xff]
    %v83 = vld [vmem:[#allocation2 + $0x148] sm:$0xff]
    %v84 = vld [vmem:[#allocation2 + $0x150] sm:$0xff]
    %v85 = vld [vmem:[#allocation2 + $0x158] sm:$0xff]
    %v86 = vld [vmem:[#allocation2 + $0x160] sm:$0xff]
    %v87 = vld [vmem:[#allocation2 + $0x168] sm:$0xff]
    %v88 = vld [vmem:[#allocation2 + $0x170] sm:$0xff]
    %v89 = vld [vmem:[#allocation2 + $0x178] sm:$0xff]
    %v90 = vld [vmem:[#allocation4] sm:$0xff]
    %v91 = vld [vmem:[#allocation4 + $0x8] sm:$0xff]
    %v92 = vld [vmem:[#allocation4 + $0x10] sm:$0xff]
    %v93 = vld [vmem:[#allocation4 + $0x18] sm:$0xff]
    %v98 = vlaneseq
    %v99 = vshrl.u32 %v98, 7
    %v100 = vsub.s32 0, %v99
    %v101 = vrot.slane %v90, %v100
    %v102 = vlaneseq
    %v103 = vshrl.u32 %v102, 7
    %v104 = vsub.s32 1, %v103
    %v105 = vrot.slane %v90, %v104
    %v106 = vlaneseq
    %v107 = vshrl.u32 %v106, 7
    %v108 = vsub.s32 2, %v107
    %v109 = vrot.slane %v90, %v108
    %v110 = vlaneseq
    %v111 = vshrl.u32 %v110, 7
    %v112 = vsub.s32 3, %v111
    %v113 = vrot.slane %v90, %v112
    %v114 = vlaneseq
    %v115 = vshrl.u32 %v114, 7
    %v116 = vsub.s32 4, %v115
    %v117 = vrot.slane %v90, %v116
    %v118 = vlaneseq
    %v119 = vshrl.u32 %v118, 7
    %v120 = vsub.s32 5, %v119
    %v121 = vrot.slane %v90, %v120
    %v122 = vlaneseq
    %v123 = vshrl.u32 %v122, 7
    %v124 = vsub.s32 6, %v123
    %v125 = vrot.slane %v90, %v124
    %v126 = vlaneseq
    %v127 = vshrl.u32 %v126, 7
    %v128 = vsub.s32 7, %v127
    %v129 = vrot.slane %v90, %v128
    %v130 = vlaneseq
    %v131 = vshrl.u32 %v130, 7
    %v132 = vsub.s32 0, %v131
    %v133 = vrot.slane %v91, %v132
    %v134 = vlaneseq
    %v135 = vshrl.u32 %v134, 7
    %v136 = vsub.s32 1, %v135
    %v137 = vrot.slane %v91, %v136
    %v138 = vlaneseq
    %v139 = vshrl.u32 %v138, 7
    %v140 = vsub.s32 2, %v139
    %v141 = vrot.slane %v91, %v140
    %v142 = vlaneseq
    %v143 = vshrl.u32 %v142, 7
    %v144 = vsub.s32 3, %v143
    %v145 = vrot.slane %v91, %v144
    %v146 = vlaneseq
    %v147 = vshrl.u32 %v146, 7
    %v148 = vsub.s32 4, %v147
    %v149 = vrot.slane %v91, %v148
    %v150 = vlaneseq
    %v151 = vshrl.u32 %v150, 7
    %v152 = vsub.s32 5, %v151
    %v153 = vrot.slane %v91, %v152
    %v154 = vlaneseq
    %v155 = vshrl.u32 %v154, 7
    %v156 = vsub.s32 6, %v155
    %v157 = vrot.slane %v91, %v156
    %v158 = vlaneseq
    %v159 = vshrl.u32 %v158, 7
    %v160 = vsub.s32 7, %v159
    %v161 = vrot.slane %v91, %v160
    %v162 = vlaneseq
    %v163 = vshrl.u32 %v162, 7
    %v164 = vsub.s32 0, %v163
    %v165 = vrot.slane %v92, %v164
    %v166 = vlaneseq
    %v167 = vshrl.u32 %v166, 7
    %v168 = vsub.s32 1, %v167
    %v169 = vrot.slane %v92, %v168
    %v170 = vlaneseq
    %v171 = vshrl.u32 %v170, 7
    %v172 = vsub.s32 2, %v171
    %v173 = vrot.slane %v92, %v172
    %v174 = vlaneseq
    %v175 = vshrl.u32 %v174, 7
    %v176 = vsub.s32 3, %v175
    %v177 = vrot.slane %v92, %v176
    %v178 = vlaneseq
    %v179 = vshrl.u32 %v178, 7
    %v180 = vsub.s32 4, %v179
    %v181 = vrot.slane %v92, %v180
    %v182 = vlaneseq
    %v183 = vshrl.u32 %v182, 7
    %v184 = vsub.s32 5, %v183
    %v185 = vrot.slane %v92, %v184
    %v186 = vlaneseq
    %v187 = vshrl.u32 %v186, 7
    %v188 = vsub.s32 6, %v187
    %v189 = vrot.slane %v92, %v188
    %v190 = vlaneseq
    %v191 = vshrl.u32 %v190, 7
    %v192 = vsub.s32 7, %v191
    %v193 = vrot.slane %v92, %v192
    %v194 = vlaneseq
    %v195 = vshrl.u32 %v194, 7
    %v196 = vsub.s32 0, %v195
    %v197 = vrot.slane %v93, %v196
    %v198 = vlaneseq
    %v199 = vshrl.u32 %v198, 7
    %v200 = vsub.s32 1, %v199
    %v201 = vrot.slane %v93, %v200
    %v202 = vlaneseq
    %v203 = vshrl.u32 %v202, 7
    %v204 = vsub.s32 2, %v203
    %v205 = vrot.slane %v93, %v204
    %v206 = vlaneseq
    %v207 = vshrl.u32 %v206, 7
    %v208 = vsub.s32 3, %v207
    %v209 = vrot.slane %v93, %v208
    %v210 = vlaneseq
    %v211 = vshrl.u32 %v210, 7
    %v212 = vsub.s32 4, %v211
    %v213 = vrot.slane %v93, %v212
    %v214 = vlaneseq
    %v215 = vshrl.u32 %v214, 7
    %v216 = vsub.s32 5, %v215
    %v217 = vrot.slane %v93, %v216
    %v218 = vlaneseq
    %v219 = vshrl.u32 %v218, 7
    %v220 = vsub.s32 6, %v219
    %v221 = vrot.slane %v93, %v220
    %v222 = vlaneseq
    %v223 = vshrl.u32 %v222, 7
    %v224 = vsub.s32 7, %v223
    %v225 = vrot.slane %v93, %v224
    %v306 = vunpack.c.l.b16 %v42
    %v307 = vunpack.c.h.b16 %v42
    %v308 = vunpack.c.l.b16 %v43
    %v309 = vunpack.c.h.b16 %v43
    %v310 = vunpack.c.l.b16 %v44
    %v311 = vunpack.c.h.b16 %v44
    %v312 = vunpack.c.l.b16 %v45
    %v313 = vunpack.c.h.b16 %v45
    %v314 = vunpack.c.l.b16 %v46
    %v315 = vunpack.c.h.b16 %v46
    %v316 = vunpack.c.l.b16 %v47
    %v317 = vunpack.c.h.b16 %v47
    %v318 = vunpack.c.l.b16 %v48
    %v319 = vunpack.c.h.b16 %v48
    %v320 = vunpack.c.l.b16 %v49
    %v321 = vunpack.c.h.b16 %v49
    %v322 = vunpack.c.l.b16 %v50
    %v323 = vunpack.c.h.b16 %v50
    %v324 = vunpack.c.l.b16 %v51
    %v325 = vunpack.c.h.b16 %v51
    %v326 = vunpack.c.l.b16 %v52
    %v327 = vunpack.c.h.b16 %v52
    %v328 = vunpack.c.l.b16 %v53
    %v329 = vunpack.c.h.b16 %v53
    %v330 = vunpack.c.l.b16 %v54
    %v331 = vunpack.c.h.b16 %v54
    %v332 = vunpack.c.l.b16 %v55
    %v333 = vunpack.c.h.b16 %v55
    %v334 = vunpack.c.l.b16 %v56
    %v335 = vunpack.c.h.b16 %v56
    %v336 = vunpack.c.l.b16 %v57
    %v337 = vunpack.c.h.b16 %v57
    %v338 = vunpack.c.l.b16 %v58
    %v339 = vunpack.c.h.b16 %v58
    %v340 = vunpack.c.l.b16 %v59
    %v341 = vunpack.c.h.b16 %v59
    %v342 = vunpack.c.l.b16 %v60
    %v343 = vunpack.c.h.b16 %v60
    %v344 = vunpack.c.l.b16 %v61
    %v345 = vunpack.c.h.b16 %v61
    %v346 = vunpack.c.l.b16 %v62
    %v347 = vunpack.c.h.b16 %v62
    %v348 = vunpack.c.l.b16 %v63
    %v349 = vunpack.c.h.b16 %v63
    %v350 = vunpack.c.l.b16 %v64
    %v351 = vunpack.c.h.b16 %v64
    %v352 = vunpack.c.l.b16 %v65
    %v353 = vunpack.c.h.b16 %v65
    %v354 = vunpack.c.l.b16 %v66
    %v355 = vunpack.c.h.b16 %v66
    %v356 = vunpack.c.l.b16 %v67
    %v357 = vunpack.c.h.b16 %v67
    %v358 = vunpack.c.l.b16 %v68
    %v359 = vunpack.c.h.b16 %v68
    %v360 = vunpack.c.l.b16 %v69
    %v361 = vunpack.c.h.b16 %v69
    %v362 = vunpack.c.l.b16 %v70
    %v363 = vunpack.c.h.b16 %v70
    %v364 = vunpack.c.l.b16 %v71
    %v365 = vunpack.c.h.b16 %v71
    %v366 = vunpack.c.l.b16 %v72
    %v367 = vunpack.c.h.b16 %v72
    %v368 = vunpack.c.l.b16 %v73
    %v369 = vunpack.c.h.b16 %v73
    %v370 = vunpack.c.l.b16 %v74
    %v371 = vunpack.c.h.b16 %v74
    %v372 = vunpack.c.l.b16 %v75
    %v373 = vunpack.c.h.b16 %v75
    %v374 = vunpack.c.l.b16 %v76
    %v375 = vunpack.c.h.b16 %v76
    %v376 = vunpack.c.l.b16 %v77
    %v377 = vunpack.c.h.b16 %v77
    %v378 = vunpack.c.l.b16 %v78
    %v379 = vunpack.c.h.b16 %v78
    %v380 = vunpack.c.l.b16 %v79
    %v381 = vunpack.c.h.b16 %v79
    %v382 = vunpack.c.l.b16 %v80
    %v383 = vunpack.c.h.b16 %v80
    %v384 = vunpack.c.l.b16 %v81
    %v385 = vunpack.c.h.b16 %v81
    %v386 = vunpack.c.l.b16 %v82
    %v387 = vunpack.c.h.b16 %v82
    %v388 = vunpack.c.l.b16 %v83
    %v389 = vunpack.c.h.b16 %v83
    %v390 = vunpack.c.l.b16 %v84
    %v391 = vunpack.c.h.b16 %v84
    %v392 = vunpack.c.l.b16 %v85
    %v393 = vunpack.c.h.b16 %v85
    %v394 = vunpack.c.l.b16 %v86
    %v395 = vunpack.c.h.b16 %v86
    %v396 = vunpack.c.l.b16 %v87
    %v397 = vunpack.c.h.b16 %v87
    %v398 = vunpack.c.l.b16 %v88
    %v399 = vunpack.c.h.b16 %v88
    %v400 = vunpack.c.l.b16 %v89
    %v401 = vunpack.c.h.b16 %v89
    %v402 = vpack.c.b16 %v338, %v306
    %v403 = vpack.c.b16 %v339, %v307
    %v404 = vpack.c.b16 %v340, %v308
    %v405 = vpack.c.b16 %v341, %v309
    %v406 = vpack.c.b16 %v342, %v310
    %v407 = vpack.c.b16 %v343, %v311
    %v408 = vpack.c.b16 %v344, %v312
    %v409 = vpack.c.b16 %v345, %v313
    %v410 = vpack.c.b16 %v346, %v314
    %v411 = vpack.c.b16 %v347, %v315
    %v412 = vpack.c.b16 %v348, %v316
    %v413 = vpack.c.b16 %v349, %v317
    %v414 = vpack.c.b16 %v350, %v318
    %v415 = vpack.c.b16 %v351, %v319
    %v416 = vpack.c.b16 %v352, %v320
    %v417 = vpack.c.b16 %v353, %v321
    %v418 = vpack.c.b16 %v354, %v322
    %v419 = vpack.c.b16 %v355, %v323
    %v420 = vpack.c.b16 %v356, %v324
    %v421 = vpack.c.b16 %v357, %v325
    %v422 = vpack.c.b16 %v358, %v326
    %v423 = vpack.c.b16 %v359, %v327
    %v424 = vpack.c.b16 %v360, %v328
    %v425 = vpack.c.b16 %v361, %v329
    %v426 = vpack.c.b16 %v362, %v330
    %v427 = vpack.c.b16 %v363, %v331
    %v428 = vpack.c.b16 %v364, %v332
    %v429 = vpack.c.b16 %v365, %v333
    %v430 = vpack.c.b16 %v366, %v334
    %v431 = vpack.c.b16 %v367, %v335
    %v432 = vpack.c.b16 %v368, %v336
    %v433 = vpack.c.b16 %v369, %v337
    %v434 = vpack.c.b16 %v370, %v370
    %v435 = vpack.c.b16 %v371, %v371
    %v436 = vpack.c.b16 %v372, %v372
    %v437 = vpack.c.b16 %v373, %v373
    %v438 = vpack.c.b16 %v374, %v374
    %v439 = vpack.c.b16 %v375, %v375
    %v440 = vpack.c.b16 %v376, %v376
    %v441 = vpack.c.b16 %v377, %v377
    %v442 = vpack.c.b16 %v378, %v378
    %v443 = vpack.c.b16 %v379, %v379
    %v444 = vpack.c.b16 %v380, %v380
    %v445 = vpack.c.b16 %v381, %v381
    %v446 = vpack.c.b16 %v382, %v382
    %v447 = vpack.c.b16 %v383, %v383
    %v448 = vpack.c.b16 %v384, %v384
    %v449 = vpack.c.b16 %v385, %v385
    %v450 = vpack.c.b16 %v386, %v386
    %v451 = vpack.c.b16 %v387, %v387
    %v452 = vpack.c.b16 %v388, %v388
    %v453 = vpack.c.b16 %v389, %v389
    %v454 = vpack.c.b16 %v390, %v390
    %v455 = vpack.c.b16 %v391, %v391
    %v456 = vpack.c.b16 %v392, %v392
    %v457 = vpack.c.b16 %v393, %v393
    %v458 = vpack.c.b16 %v394, %v394
    %v459 = vpack.c.b16 %v395, %v395
    %v460 = vpack.c.b16 %v396, %v396
    %v461 = vpack.c.b16 %v397, %v397
    %v462 = vpack.c.b16 %v398, %v398
    %v463 = vpack.c.b16 %v399, %v399
    %v464 = vpack.c.b16 %v400, %v400
    %v465 = vpack.c.b16 %v401, %v401
    %vm498 = vcmask 195584
    %v500 = vsel %vm498, %v41, 0
    %vm502 = vcmask 1043456
    %v504 = vsel %vm502, %v434, 0
    %v507 = vsel %vm502, %v435, 0
    %v510 = vsel %vm502, %v436, 0
    %v513 = vsel %vm502, %v437, 0
    %v516 = vsel %vm502, %v438, 0
    %v519 = vsel %vm502, %v439, 0
    %v522 = vsel %vm502, %v440, 0
    %v525 = vsel %vm502, %v441, 0
    %v528 = vsel %vm502, %v442, 0
    %v531 = vsel %vm502, %v443, 0
    %v534 = vsel %vm502, %v444, 0
    %v537 = vsel %vm502, %v445, 0
    %v540 = vsel %vm502, %v446, 0
    %v543 = vsel %vm502, %v447, 0
    %v546 = vsel %vm502, %v448, 0
    %v549 = vsel %vm502, %v449, 0
    %v552 = vsel %vm502, %v450, 0
    %v555 = vsel %vm502, %v451, 0
    %v558 = vsel %vm502, %v452, 0
    %v561 = vsel %vm502, %v453, 0
    %v564 = vsel %vm502, %v454, 0
    %v567 = vsel %vm502, %v455, 0
    %v570 = vsel %vm502, %v456, 0
    %v573 = vsel %vm502, %v457, 0
    %v576 = vsel %vm502, %v458, 0
    %v579 = vsel %vm502, %v459, 0
    %v582 = vsel %vm502, %v460, 0
    %v585 = vsel %vm502, %v461, 0
    %v588 = vsel %vm502, %v462, 0
    %v591 = vsel %vm502, %v463, 0
    %v594 = vsel %vm502, %v464, 0
    %v597 = vsel %vm502, %v465, 0
    %599 = vmatprep.subr.bf16.mxu0 0
    %600 = vmatpush1.bf16.msra.mxu0 0
    %601 = vmatprep.subr.bf16.mxu0 0
    %602 = vmatpush1.bf16.msra.mxu0 0
    %603 = vmatprep.subr.bf16.mxu0 0
    %604 = vmatpush1.bf16.msra.mxu0 0
    %605 = vmatprep.subr.bf16.mxu0 0
    %606 = vmatpush1.bf16.msra.mxu0 0
    %607 = vmatprep.subr.bf16.mxu0 0
    %608 = vmatpush1.bf16.msra.mxu0 0
    %609 = vmatprep.subr.bf16.mxu0 0
    %610 = vmatpush1.bf16.msra.mxu0 0
    %611 = vmatprep.subr.bf16.mxu0 %v507
    %612 = vmatpush1.bf16.msra.mxu0 %v504
    %613 = vmatprep.subr.bf16.mxu0 %v403
    %614 = vmatpush1.bf16.msra.mxu0 %v402
    %615 = vmatprep.subr.bf16.mxu0 0
    %616 = vmatpush2.bf16.msra.mxu0 0
    %617 = vmatprep.subr.bf16.mxu0 0
    %618 = vmatpush2.bf16.msra.mxu0 0
    %619 = vmatprep.subr.bf16.mxu0 0
    %620 = vmatpush2.bf16.msra.mxu0 0
    %621 = vmatprep.subr.bf16.mxu0 0
    %622 = vmatpush2.bf16.msra.mxu0 0
    %623 = vmatprep.subr.bf16.mxu0 0
    %624 = vmatpush2.bf16.msra.mxu0 0
    %625 = vmatprep.subr.bf16.mxu0 0
    %626 = vmatpush2.bf16.msra.mxu0 0
    %627 = vmatprep.subr.bf16.mxu0 0
    %628 = vmatpush2.bf16.msra.mxu0 0
    %629 = vmatprep.subr.bf16.mxu0 0
    %630 = vmatpush2.bf16.msra.mxu0 0
    %631 = vmatprep.mubr.bf16.mxu0 0
    %632 = vmatmul.mubr.bf16.gmra.mxu0 %v500
    %v633 = vpop.f32.mrf.mxu0
    %v634 = vadd.f32 %v101, %v633
    %v635 = vpop.f32.mrf.mxu0
    %v636 = vadd.f32 %v105, %v635
    %v637 = vpop.f32.mrf.mxu0
    %v638 = vpop.f32.mrf.mxu0
    %639 = vdwg.mxu0
    %640 = vmatprep.subr.bf16.mxu0 0
    %641 = vmatpush1.bf16.msra.mxu0 0
    %642 = vmatprep.subr.bf16.mxu0 0
    %643 = vmatpush1.bf16.msra.mxu0 0
    %644 = vmatprep.subr.bf16.mxu0 0
    %645 = vmatpush1.bf16.msra.mxu0 0
    %646 = vmatprep.subr.bf16.mxu0 0
    %647 = vmatpush1.bf16.msra.mxu0 0
    %648 = vmatprep.subr.bf16.mxu0 0
    %649 = vmatpush1.bf16.msra.mxu0 0
    %650 = vmatprep.subr.bf16.mxu0 0
    %651 = vmatpush1.bf16.msra.mxu0 0
    %652 = vmatprep.subr.bf16.mxu0 %v513
    %653 = vmatpush1.bf16.msra.mxu0 %v510
    %654 = vmatprep.subr.bf16.mxu0 %v405
    %655 = vmatpush1.bf16.msra.mxu0 %v404
    %656 = vmatprep.subr.bf16.mxu0 0
    %657 = vmatpush2.bf16.msra.mxu0 0
    %658 = vmatprep.subr.bf16.mxu0 0
    %659 = vmatpush2.bf16.msra.mxu0 0
    %660 = vmatprep.subr.bf16.mxu0 0
    %661 = vmatpush2.bf16.msra.mxu0 0
    %662 = vmatprep.subr.bf16.mxu0 0
    %663 = vmatpush2.bf16.msra.mxu0 0
    %664 = vmatprep.subr.bf16.mxu0 0
    %665 = vmatpush2.bf16.msra.mxu0 0
    %666 = vmatprep.subr.bf16.mxu0 0
    %667 = vmatpush2.bf16.msra.mxu0 0
    %668 = vmatprep.subr.bf16.mxu0 0
    %669 = vmatpush2.bf16.msra.mxu0 0
    %670 = vmatprep.subr.bf16.mxu0 0
    %671 = vmatpush2.bf16.msra.mxu0 0
    %672 = vmatprep.mubr.bf16.mxu0 0
    %673 = vmatmul.mubr.bf16.gmra.mxu0 %v500
    %v674 = vpop.f32.mrf.mxu0
    %v675 = vadd.f32 %v109, %v674
    %v676 = vpop.f32.mrf.mxu0
    %v677 = vadd.f32 %v113, %v676
    %v678 = vpop.f32.mrf.mxu0
    %v679 = vpop.f32.mrf.mxu0
    %680 = vdwg.mxu0
    %681 = vmatprep.subr.bf16.mxu0 0
    %682 = vmatpush1.bf16.msra.mxu0 0
    %683 = vmatprep.subr.bf16.mxu0 0
    %684 = vmatpush1.bf16.msra.mxu0 0
    %685 = vmatprep.subr.bf16.mxu0 0
    %686 = vmatpush1.bf16.msra.mxu0 0
    %687 = vmatprep.subr.bf16.mxu0 0
    %688 = vmatpush1.bf16.msra.mxu0 0
    %689 = vmatprep.subr.bf16.mxu0 0
    %690 = vmatpush1.bf16.msra.mxu0 0
    %691 = vmatprep.subr.bf16.mxu0 0
    %692 = vmatpush1.bf16.msra.mxu0 0
    %693 = vmatprep.subr.bf16.mxu0 %v519
    %694 = vmatpush1.bf16.msra.mxu0 %v516
    %695 = vmatprep.subr.bf16.mxu0 %v407
    %696 = vmatpush1.bf16.msra.mxu0 %v406
    %697 = vmatprep.subr.bf16.mxu0 0
    %698 = vmatpush2.bf16.msra.mxu0 0
    %699 = vmatprep.subr.bf16.mxu0 0
    %700 = vmatpush2.bf16.msra.mxu0 0
    %701 = vmatprep.subr.bf16.mxu0 0
    %702 = vmatpush2.bf16.msra.mxu0 0
    %703 = vmatprep.subr.bf16.mxu0 0
    %704 = vmatpush2.bf16.msra.mxu0 0
    %705 = vmatprep.subr.bf16.mxu0 0
    %706 = vmatpush2.bf16.msra.mxu0 0
    %707 = vmatprep.subr.bf16.mxu0 0
    %708 = vmatpush2.bf16.msra.mxu0 0
    %709 = vmatprep.subr.bf16.mxu0 0
    %710 = vmatpush2.bf16.msra.mxu0 0
    %711 = vmatprep.subr.bf16.mxu0 0
    %712 = vmatpush2.bf16.msra.mxu0 0
    %713 = vmatprep.mubr.bf16.mxu0 0
    %714 = vmatmul.mubr.bf16.gmra.mxu0 %v500
    %v715 = vpop.f32.mrf.mxu0
    %v716 = vadd.f32 %v117, %v715
    %v717 = vpop.f32.mrf.mxu0
    %v718 = vadd.f32 %v121, %v717
    %v719 = vpop.f32.mrf.mxu0
    %v720 = vpop.f32.mrf.mxu0
    %721 = vdwg.mxu0
    %722 = vmatprep.subr.bf16.mxu0 0
    %723 = vmatpush1.bf16.msra.mxu0 0
    %724 = vmatprep.subr.bf16.mxu0 0
    %725 = vmatpush1.bf16.msra.mxu0 0
    %726 = vmatprep.subr.bf16.mxu0 0
    %727 = vmatpush1.bf16.msra.mxu0 0
    %728 = vmatprep.subr.bf16.mxu0 0
    %729 = vmatpush1.bf16.msra.mxu0 0
    %730 = vmatprep.subr.bf16.mxu0 0
    %731 = vmatpush1.bf16.msra.mxu0 0
    %732 = vmatprep.subr.bf16.mxu0 0
    %733 = vmatpush1.bf16.msra.mxu0 0
    %734 = vmatprep.subr.bf16.mxu0 %v525
    %735 = vmatpush1.bf16.msra.mxu0 %v522
    %736 = vmatprep.subr.bf16.mxu0 %v409
    %737 = vmatpush1.bf16.msra.mxu0 %v408
    %738 = vmatprep.subr.bf16.mxu0 0
    %739 = vmatpush2.bf16.msra.mxu0 0
    %740 = vmatprep.subr.bf16.mxu0 0
    %741 = vmatpush2.bf16.msra.mxu0 0
    %742 = vmatprep.subr.bf16.mxu0 0
    %743 = vmatpush2.bf16.msra.mxu0 0
    %744 = vmatprep.subr.bf16.mxu0 0
    %745 = vmatpush2.bf16.msra.mxu0 0
    %746 = vmatprep.subr.bf16.mxu0 0
    %747 = vmatpush2.bf16.msra.mxu0 0
    %748 = vmatprep.subr.bf16.mxu0 0
    %749 = vmatpush2.bf16.msra.mxu0 0
    %750 = vmatprep.subr.bf16.mxu0 0
    %751 = vmatpush2.bf16.msra.mxu0 0
    %752 = vmatprep.subr.bf16.mxu0 0
    %753 = vmatpush2.bf16.msra.mxu0 0
    %754 = vmatprep.mubr.bf16.mxu0 0
    %755 = vmatmul.mubr.bf16.gmra.mxu0 %v500
    %v756 = vpop.f32.mrf.mxu0
    %v757 = vadd.f32 %v125, %v756
    %v758 = vpop.f32.mrf.mxu0
    %v759 = vadd.f32 %v129, %v758
    %v760 = vpop.f32.mrf.mxu0
    %v761 = vpop.f32.mrf.mxu0
    %762 = vdwg.mxu0
    %763 = vmatprep.subr.bf16.mxu0 0
    %764 = vmatpush1.bf16.msra.mxu0 0
    %765 = vmatprep.subr.bf16.mxu0 0
    %766 = vmatpush1.bf16.msra.mxu0 0
    %767 = vmatprep.subr.bf16.mxu0 0
    %768 = vmatpush1.bf16.msra.mxu0 0
    %769 = vmatprep.subr.bf16.mxu0 0
    %770 = vmatpush1.bf16.msra.mxu0 0
    %771 = vmatprep.subr.bf16.mxu0 0
    %772 = vmatpush1.bf16.msra.mxu0 0
    %773 = vmatprep.subr.bf16.mxu0 0
    %774 = vmatpush1.bf16.msra.mxu0 0
    %775 = vmatprep.subr.bf16.mxu0 %v531
    %776 = vmatpush1.bf16.msra.mxu0 %v528
    %777 = vmatprep.subr.bf16.mxu0 %v411
    %778 = vmatpush1.bf16.msra.mxu0 %v410
    %779 = vmatprep.subr.bf16.mxu0 0
    %780 = vmatpush2.bf16.msra.mxu0 0
    %781 = vmatprep.subr.bf16.mxu0 0
    %782 = vmatpush2.bf16.msra.mxu0 0
    %783 = vmatprep.subr.bf16.mxu0 0
    %784 = vmatpush2.bf16.msra.mxu0 0
    %785 = vmatprep.subr.bf16.mxu0 0
    %786 = vmatpush2.bf16.msra.mxu0 0
    %787 = vmatprep.subr.bf16.mxu0 0
    %788 = vmatpush2.bf16.msra.mxu0 0
    %789 = vmatprep.subr.bf16.mxu0 0
    %790 = vmatpush2.bf16.msra.mxu0 0
    %791 = vmatprep.subr.bf16.mxu0 0
    %792 = vmatpush2.bf16.msra.mxu0 0
    %793 = vmatprep.subr.bf16.mxu0 0
    %794 = vmatpush2.bf16.msra.mxu0 0
    %795 = vmatprep.mubr.bf16.mxu0 0
    %796 = vmatmul.mubr.bf16.gmra.mxu0 %v500
    %v797 = vpop.f32.mrf.mxu0
    %v798 = vadd.f32 %v133, %v797
    %v799 = vpop.f32.mrf.mxu0
    %v800 = vadd.f32 %v137, %v799
    %v801 = vpop.f32.mrf.mxu0
    %v802 = vpop.f32.mrf.mxu0
    %803 = vdwg.mxu0
    %804 = vmatprep.subr.bf16.mxu0 0
    %805 = vmatpush1.bf16.msra.mxu0 0
    %806 = vmatprep.subr.bf16.mxu0 0
    %807 = vmatpush1.bf16.msra.mxu0 0
    %808 = vmatprep.subr.bf16.mxu0 0
    %809 = vmatpush1.bf16.msra.mxu0 0
    %810 = vmatprep.subr.bf16.mxu0 0
    %811 = vmatpush1.bf16.msra.mxu0 0
    %812 = vmatprep.subr.bf16.mxu0 0
    %813 = vmatpush1.bf16.msra.mxu0 0
    %814 = vmatprep.subr.bf16.mxu0 0
    %815 = vmatpush1.bf16.msra.mxu0 0
    %816 = vmatprep.subr.bf16.mxu0 %v537
    %817 = vmatpush1.bf16.msra.mxu0 %v534
    %818 = vmatprep.subr.bf16.mxu0 %v413
    %819 = vmatpush1.bf16.msra.mxu0 %v412
    %820 = vmatprep.subr.bf16.mxu0 0
    %821 = vmatpush2.bf16.msra.mxu0 0
    %822 = vmatprep.subr.bf16.mxu0 0
    %823 = vmatpush2.bf16.msra.mxu0 0
    %824 = vmatprep.subr.bf16.mxu0 0
    %825 = vmatpush2.bf16.msra.mxu0 0
    %826 = vmatprep.subr.bf16.mxu0 0
    %827 = vmatpush2.bf16.msra.mxu0 0
    %828 = vmatprep.subr.bf16.mxu0 0
    %829 = vmatpush2.bf16.msra.mxu0 0
    %830 = vmatprep.subr.bf16.mxu0 0
    %831 = vmatpush2.bf16.msra.mxu0 0
    %832 = vmatprep.subr.bf16.mxu0 0
    %833 = vmatpush2.bf16.msra.mxu0 0
    %834 = vmatprep.subr.bf16.mxu0 0
    %835 = vmatpush2.bf16.msra.mxu0 0
    %836 = vmatprep.mubr.bf16.mxu0 0
    %837 = vmatmul.mubr.bf16.gmra.mxu0 %v500
    %v838 = vpop.f32.mrf.mxu0
    %v839 = vadd.f32 %v141, %v838
    %v840 = vpop.f32.mrf.mxu0
    %v841 = vadd.f32 %v145, %v840
    %v842 = vpop.f32.mrf.mxu0
    %v843 = vpop.f32.mrf.mxu0
    %844 = vdwg.mxu0
    %845 = vmatprep.subr.bf16.mxu0 0
    %846 = vmatpush1.bf16.msra.mxu0 0
    %847 = vmatprep.subr.bf16.mxu0 0
    %848 = vmatpush1.bf16.msra.mxu0 0
    %849 = vmatprep.subr.bf16.mxu0 0
    %850 = vmatpush1.bf16.msra.mxu0 0
    %851 = vmatprep.subr.bf16.mxu0 0
    %852 = vmatpush1.bf16.msra.mxu0 0
    %853 = vmatprep.subr.bf16.mxu0 0
    %854 = vmatpush1.bf16.msra.mxu0 0
    %855 = vmatprep.subr.bf16.mxu0 0
    %856 = vmatpush1.bf16.msra.mxu0 0
    %857 = vmatprep.subr.bf16.mxu0 %v543
    %858 = vmatpush1.bf16.msra.mxu0 %v540
    %859 = vmatprep.subr.bf16.mxu0 %v415
    %860 = vmatpush1.bf16.msra.mxu0 %v414
    %861 = vmatprep.subr.bf16.mxu0 0
    %862 = vmatpush2.bf16.msra.mxu0 0
    %863 = vmatprep.subr.bf16.mxu0 0
    %864 = vmatpush2.bf16.msra.mxu0 0
    %865 = vmatprep.subr.bf16.mxu0 0
    %866 = vmatpush2.bf16.msra.mxu0 0
    %867 = vmatprep.subr.bf16.mxu0 0
    %868 = vmatpush2.bf16.msra.mxu0 0
    %869 = vmatprep.subr.bf16.mxu0 0
    %870 = vmatpush2.bf16.msra.mxu0 0
    %871 = vmatprep.subr.bf16.mxu0 0
    %872 = vmatpush2.bf16.msra.mxu0 0
    %873 = vmatprep.subr.bf16.mxu0 0
    %874 = vmatpush2.bf16.msra.mxu0 0
    %875 = vmatprep.subr.bf16.mxu0 0
    %876 = vmatpush2.bf16.msra.mxu0 0
    %877 = vmatprep.mubr.bf16.mxu0 0
    %878 = vmatmul.mubr.bf16.gmra.mxu0 %v500
    %v879 = vpop.f32.mrf.mxu0
    %v880 = vadd.f32 %v149, %v879
    %v881 = vpop.f32.mrf.mxu0
    %v882 = vadd.f32 %v153, %v881
    %v883 = vpop.f32.mrf.mxu0
    %v884 = vpop.f32.mrf.mxu0
    %885 = vdwg.mxu0
    %886 = vmatprep.subr.bf16.mxu0 0
    %887 = vmatpush1.bf16.msra.mxu0 0
    %888 = vmatprep.subr.bf16.mxu0 0
    %889 = vmatpush1.bf16.msra.mxu0 0
    %890 = vmatprep.subr.bf16.mxu0 0
    %891 = vmatpush1.bf16.msra.mxu0 0
    %892 = vmatprep.subr.bf16.mxu0 0
    %893 = vmatpush1.bf16.msra.mxu0 0
    %894 = vmatprep.subr.bf16.mxu0 0
    %895 = vmatpush1.bf16.msra.mxu0 0
    %896 = vmatprep.subr.bf16.mxu0 0
    %897 = vmatpush1.bf16.msra.mxu0 0
    %898 = vmatprep.subr.bf16.mxu0 %v549
    %899 = vmatpush1.bf16.msra.mxu0 %v546
    %900 = vmatprep.subr.bf16.mxu0 %v417
    %901 = vmatpush1.bf16.msra.mxu0 %v416
    %902 = vmatprep.subr.bf16.mxu0 0
    %903 = vmatpush2.bf16.msra.mxu0 0
    %904 = vmatprep.subr.bf16.mxu0 0
    %905 = vmatpush2.bf16.msra.mxu0 0
    %906 = vmatprep.subr.bf16.mxu0 0
    %907 = vmatpush2.bf16.msra.mxu0 0
    %908 = vmatprep.subr.bf16.mxu0 0
    %909 = vmatpush2.bf16.msra.mxu0 0
    %910 = vmatprep.subr.bf16.mxu0 0
    %911 = vmatpush2.bf16.msra.mxu0 0
    %912 = vmatprep.subr.bf16.mxu0 0
    %913 = vmatpush2.bf16.msra.mxu0 0
    %914 = vmatprep.subr.bf16.mxu0 0
    %915 = vmatpush2.bf16.msra.mxu0 0
    %916 = vmatprep.subr.bf16.mxu0 0
    %917 = vmatpush2.bf16.msra.mxu0 0
    %918 = vmatprep.mubr.bf16.mxu0 0
    %919 = vmatmul.mubr.bf16.gmra.mxu0 %v500
    %v920 = vpop.f32.mrf.mxu0
    %v921 = vadd.f32 %v157, %v920
    %v922 = vpop.f32.mrf.mxu0
    %v923 = vadd.f32 %v161, %v922
    %v924 = vpop.f32.mrf.mxu0
    %v925 = vpop.f32.mrf.mxu0
    %926 = vdwg.mxu0
    %927 = vmatprep.subr.bf16.mxu0 0
    %928 = vmatpush1.bf16.msra.mxu0 0
    %929 = vmatprep.subr.bf16.mxu0 0
    %930 = vmatpush1.bf16.msra.mxu0 0
    %931 = vmatprep.subr.bf16.mxu0 0
    %932 = vmatpush1.bf16.msra.mxu0 0
    %933 = vmatprep.subr.bf16.mxu0 0
    %934 = vmatpush1.bf16.msra.mxu0 0
    %935 = vmatprep.subr.bf16.mxu0 0
    %936 = vmatpush1.bf16.msra.mxu0 0
    %937 = vmatprep.subr.bf16.mxu0 0
    %938 = vmatpush1.bf16.msra.mxu0 0
    %939 = vmatprep.subr.bf16.mxu0 %v555
    %940 = vmatpush1.bf16.msra.mxu0 %v552
    %941 = vmatprep.subr.bf16.mxu0 %v419
    %942 = vmatpush1.bf16.msra.mxu0 %v418
    %943 = vmatprep.subr.bf16.mxu0 0
    %944 = vmatpush2.bf16.msra.mxu0 0
    %945 = vmatprep.subr.bf16.mxu0 0
    %946 = vmatpush2.bf16.msra.mxu0 0
    %947 = vmatprep.subr.bf16.mxu0 0
    %948 = vmatpush2.bf16.msra.mxu0 0
    %949 = vmatprep.subr.bf16.mxu0 0
    %950 = vmatpush2.bf16.msra.mxu0 0
    %951 = vmatprep.subr.bf16.mxu0 0
    %952 = vmatpush2.bf16.msra.mxu0 0
    %953 = vmatprep.subr.bf16.mxu0 0
    %954 = vmatpush2.bf16.msra.mxu0 0
    %955 = vmatprep.subr.bf16.mxu0 0
    %956 = vmatpush2.bf16.msra.mxu0 0
    %957 = vmatprep.subr.bf16.mxu0 0
    %958 = vmatpush2.bf16.msra.mxu0 0
    %959 = vmatprep.mubr.bf16.mxu0 0
    %960 = vmatmul.mubr.bf16.gmra.mxu0 %v500
    %v961 = vpop.f32.mrf.mxu0
    %v962 = vadd.f32 %v165, %v961
    %v963 = vpop.f32.mrf.mxu0
    %v964 = vadd.f32 %v169, %v963
    %v965 = vpop.f32.mrf.mxu0
    %v966 = vpop.f32.mrf.mxu0
    %967 = vdwg.mxu0
    %968 = vmatprep.subr.bf16.mxu0 0
    %969 = vmatpush1.bf16.msra.mxu0 0
    %970 = vmatprep.subr.bf16.mxu0 0
    %971 = vmatpush1.bf16.msra.mxu0 0
    %972 = vmatprep.subr.bf16.mxu0 0
    %973 = vmatpush1.bf16.msra.mxu0 0
    %974 = vmatprep.subr.bf16.mxu0 0
    %975 = vmatpush1.bf16.msra.mxu0 0
    %976 = vmatprep.subr.bf16.mxu0 0
    %977 = vmatpush1.bf16.msra.mxu0 0
    %978 = vmatprep.subr.bf16.mxu0 0
    %979 = vmatpush1.bf16.msra.mxu0 0
    %980 = vmatprep.subr.bf16.mxu0 %v561
    %981 = vmatpush1.bf16.msra.mxu0 %v558
    %982 = vmatprep.subr.bf16.mxu0 %v421
    %983 = vmatpush1.bf16.msra.mxu0 %v420
    %984 = vmatprep.subr.bf16.mxu0 0
    %985 = vmatpush2.bf16.msra.mxu0 0
    %986 = vmatprep.subr.bf16.mxu0 0
    %987 = vmatpush2.bf16.msra.mxu0 0
    %988 = vmatprep.subr.bf16.mxu0 0
    %989 = vmatpush2.bf16.msra.mxu0 0
    %990 = vmatprep.subr.bf16.mxu0 0
    %991 = vmatpush2.bf16.msra.mxu0 0
    %992 = vmatprep.subr.bf16.mxu0 0
    %993 = vmatpush2.bf16.msra.mxu0 0
    %994 = vmatprep.subr.bf16.mxu0 0
    %995 = vmatpush2.bf16.msra.mxu0 0
    %996 = vmatprep.subr.bf16.mxu0 0
    %997 = vmatpush2.bf16.msra.mxu0 0
    %998 = vmatprep.subr.bf16.mxu0 0
    %999 = vmatpush2.bf16.msra.mxu0 0
    %1000 = vmatprep.mubr.bf16.mxu0 0
    %1001 = vmatmul.mubr.bf16.gmra.mxu0 %v500
    %v1002 = vpop.f32.mrf.mxu0
    %v1003 = vadd.f32 %v173, %v1002
    %v1004 = vpop.f32.mrf.mxu0
    %v1005 = vadd.f32 %v177, %v1004
    %v1006 = vpop.f32.mrf.mxu0
    %v1007 = vpop.f32.mrf.mxu0
    %1008 = vdwg.mxu0
    %1009 = vmatprep.subr.bf16.mxu0 0
    %1010 = vmatpush1.bf16.msra.mxu0 0
    %1011 = vmatprep.subr.bf16.mxu0 0
    %1012 = vmatpush1.bf16.msra.mxu0 0
    %1013 = vmatprep.subr.bf16.mxu0 0
    %1014 = vmatpush1.bf16.msra.mxu0 0
    %1015 = vmatprep.subr.bf16.mxu0 0
    %1016 = vmatpush1.bf16.msra.mxu0 0
    %1017 = vmatprep.subr.bf16.mxu0 0
    %1018 = vmatpush1.bf16.msra.mxu0 0
    %1019 = vmatprep.subr.bf16.mxu0 0
    %1020 = vmatpush1.bf16.msra.mxu0 0
    %1021 = vmatprep.subr.bf16.mxu0 %v567
    %1022 = vmatpush1.bf16.msra.mxu0 %v564
    %1023 = vmatprep.subr.bf16.mxu0 %v423
    %1024 = vmatpush1.bf16.msra.mxu0 %v422
    %1025 = vmatprep.subr.bf16.mxu0 0
    %1026 = vmatpush2.bf16.msra.mxu0 0
    %1027 = vmatprep.subr.bf16.mxu0 0
    %1028 = vmatpush2.bf16.msra.mxu0 0
    %1029 = vmatprep.subr.bf16.mxu0 0
    %1030 = vmatpush2.bf16.msra.mxu0 0
    %1031 = vmatprep.subr.bf16.mxu0 0
    %1032 = vmatpush2.bf16.msra.mxu0 0
    %1033 = vmatprep.subr.bf16.mxu0 0
    %1034 = vmatpush2.bf16.msra.mxu0 0
    %1035 = vmatprep.subr.bf16.mxu0 0
    %1036 = vmatpush2.bf16.msra.mxu0 0
    %1037 = vmatprep.subr.bf16.mxu0 0
    %1038 = vmatpush2.bf16.msra.mxu0 0
    %1039 = vmatprep.subr.bf16.mxu0 0
    %1040 = vmatpush2.bf16.msra.mxu0 0
    %1041 = vmatprep.mubr.bf16.mxu0 0
    %1042 = vmatmul.mubr.bf16.gmra.mxu0 %v500
    %v1043 = vpop.f32.mrf.mxu0
    %v1044 = vadd.f32 %v181, %v1043
    %v1045 = vpop.f32.mrf.mxu0
    %v1046 = vadd.f32 %v185, %v1045
    %v1047 = vpop.f32.mrf.mxu0
    %v1048 = vpop.f32.mrf.mxu0
    %1049 = vdwg.mxu0
    %1050 = vmatprep.subr.bf16.mxu0 0
    %1051 = vmatpush1.bf16.msra.mxu0 0
    %1052 = vmatprep.subr.bf16.mxu0 0
    %1053 = vmatpush1.bf16.msra.mxu0 0
    %1054 = vmatprep.subr.bf16.mxu0 0
    %1055 = vmatpush1.bf16.msra.mxu0 0
    %1056 = vmatprep.subr.bf16.mxu0 0
    %1057 = vmatpush1.bf16.msra.mxu0 0
    %1058 = vmatprep.subr.bf16.mxu0 0
    %1059 = vmatpush1.bf16.msra.mxu0 0
    %1060 = vmatprep.subr.bf16.mxu0 0
    %1061 = vmatpush1.bf16.msra.mxu0 0
    %1062 = vmatprep.subr.bf16.mxu0 %v573
    %1063 = vmatpush1.bf16.msra.mxu0 %v570
    %1064 = vmatprep.subr.bf16.mxu0 %v425
    %1065 = vmatpush1.bf16.msra.mxu0 %v424
    %1066 = vmatprep.subr.bf16.mxu0 0
    %1067 = vmatpush2.bf16.msra.mxu0 0
    %1068 = vmatprep.subr.bf16.mxu0 0
    %1069 = vmatpush2.bf16.msra.mxu0 0
    %1070 = vmatprep.subr.bf16.mxu0 0
    %1071 = vmatpush2.bf16.msra.mxu0 0
    %1072 = vmatprep.subr.bf16.mxu0 0
    %1073 = vmatpush2.bf16.msra.mxu0 0
    %1074 = vmatprep.subr.bf16.mxu0 0
    %1075 = vmatpush2.bf16.msra.mxu0 0
    %1076 = vmatprep.subr.bf16.mxu0 0
    %1077 = vmatpush2.bf16.msra.mxu0 0
    %1078 = vmatprep.subr.bf16.mxu0 0
    %1079 = vmatpush2.bf16.msra.mxu0 0
    %1080 = vmatprep.subr.bf16.mxu0 0
    %1081 = vmatpush2.bf16.msra.mxu0 0
    %1082 = vmatprep.mubr.bf16.mxu0 0
    %1083 = vmatmul.mubr.bf16.gmra.mxu0 %v500
    %v1084 = vpop.f32.mrf.mxu0
    %v1085 = vadd.f32 %v189, %v1084
    %v1086 = vpop.f32.mrf.mxu0
    %v1087 = vadd.f32 %v193, %v1086
    %v1088 = vpop.f32.mrf.mxu0
    %v1089 = vpop.f32.mrf.mxu0
    %1090 = vdwg.mxu0
    %1091 = vmatprep.subr.bf16.mxu0 0
    %1092 = vmatpush1.bf16.msra.mxu0 0
    %1093 = vmatprep.subr.bf16.mxu0 0
    %1094 = vmatpush1.bf16.msra.mxu0 0
    %1095 = vmatprep.subr.bf16.mxu0 0
    %1096 = vmatpush1.bf16.msra.mxu0 0
    %1097 = vmatprep.subr.bf16.mxu0 0
    %1098 = vmatpush1.bf16.msra.mxu0 0
    %1099 = vmatprep.subr.bf16.mxu0 0
    %1100 = vmatpush1.bf16.msra.mxu0 0
    %1101 = vmatprep.subr.bf16.mxu0 0
    %1102 = vmatpush1.bf16.msra.mxu0 0
    %1103 = vmatprep.subr.bf16.mxu0 %v579
    %1104 = vmatpush1.bf16.msra.mxu0 %v576
    %1105 = vmatprep.subr.bf16.mxu0 %v427
    %1106 = vmatpush1.bf16.msra.mxu0 %v426
    %1107 = vmatprep.subr.bf16.mxu0 0
    %1108 = vmatpush2.bf16.msra.mxu0 0
    %1109 = vmatprep.subr.bf16.mxu0 0
    %1110 = vmatpush2.bf16.msra.mxu0 0
    %1111 = vmatprep.subr.bf16.mxu0 0
    %1112 = vmatpush2.bf16.msra.mxu0 0
    %1113 = vmatprep.subr.bf16.mxu0 0
    %1114 = vmatpush2.bf16.msra.mxu0 0
    %1115 = vmatprep.subr.bf16.mxu0 0
    %1116 = vmatpush2.bf16.msra.mxu0 0
    %1117 = vmatprep.subr.bf16.mxu0 0
    %1118 = vmatpush2.bf16.msra.mxu0 0
    %1119 = vmatprep.subr.bf16.mxu0 0
    %1120 = vmatpush2.bf16.msra.mxu0 0
    %1121 = vmatprep.subr.bf16.mxu0 0
    %1122 = vmatpush2.bf16.msra.mxu0 0
    %1123 = vmatprep.mubr.bf16.mxu0 0
    %1124 = vmatmul.mubr.bf16.gmra.mxu0 %v500
    %v1125 = vpop.f32.mrf.mxu0
    %v1126 = vadd.f32 %v197, %v1125
    %v1127 = vpop.f32.mrf.mxu0
    %v1128 = vadd.f32 %v201, %v1127
    %v1129 = vpop.f32.mrf.mxu0
    %v1130 = vpop.f32.mrf.mxu0
    %1131 = vdwg.mxu0
    %1132 = vmatprep.subr.bf16.mxu0 0
    %1133 = vmatpush1.bf16.msra.mxu0 0
    %1134 = vmatprep.subr.bf16.mxu0 0
    %1135 = vmatpush1.bf16.msra.mxu0 0
    %1136 = vmatprep.subr.bf16.mxu0 0
    %1137 = vmatpush1.bf16.msra.mxu0 0
    %1138 = vmatprep.subr.bf16.mxu0 0
    %1139 = vmatpush1.bf16.msra.mxu0 0
    %1140 = vmatprep.subr.bf16.mxu0 0
    %1141 = vmatpush1.bf16.msra.mxu0 0
    %1142 = vmatprep.subr.bf16.mxu0 0
    %1143 = vmatpush1.bf16.msra.mxu0 0
    %1144 = vmatprep.subr.bf16.mxu0 %v585
    %1145 = vmatpush1.bf16.msra.mxu0 %v582
    %1146 = vmatprep.subr.bf16.mxu0 %v429
    %1147 = vmatpush1.bf16.msra.mxu0 %v428
    %1148 = vmatprep.subr.bf16.mxu0 0
    %1149 = vmatpush2.bf16.msra.mxu0 0
    %1150 = vmatprep.subr.bf16.mxu0 0
    %1151 = vmatpush2.bf16.msra.mxu0 0
    %1152 = vmatprep.subr.bf16.mxu0 0
    %1153 = vmatpush2.bf16.msra.mxu0 0
    %1154 = vmatprep.subr.bf16.mxu0 0
    %1155 = vmatpush2.bf16.msra.mxu0 0
    %1156 = vmatprep.subr.bf16.mxu0 0
    %1157 = vmatpush2.bf16.msra.mxu0 0
    %1158 = vmatprep.subr.bf16.mxu0 0
    %1159 = vmatpush2.bf16.msra.mxu0 0
    %1160 = vmatprep.subr.bf16.mxu0 0
    %1161 = vmatpush2.bf16.msra.mxu0 0
    %1162 = vmatprep.subr.bf16.mxu0 0
    %1163 = vmatpush2.bf16.msra.mxu0 0
    %1164 = vmatprep.mubr.bf16.mxu0 0
    %1165 = vmatmul.mubr.bf16.gmra.mxu0 %v500
    %v1166 = vpop.f32.mrf.mxu0
    %v1167 = vadd.f32 %v205, %v1166
    %v1168 = vpop.f32.mrf.mxu0
    %v1169 = vadd.f32 %v209, %v1168
    %v1170 = vpop.f32.mrf.mxu0
    %v1171 = vpop.f32.mrf.mxu0
    %1172 = vdwg.mxu0
    %1173 = vmatprep.subr.bf16.mxu0 0
    %1174 = vmatpush1.bf16.msra.mxu0 0
    %1175 = vmatprep.subr.bf16.mxu0 0
    %1176 = vmatpush1.bf16.msra.mxu0 0
    %1177 = vmatprep.subr.bf16.mxu0 0
    %1178 = vmatpush1.bf16.msra.mxu0 0
    %1179 = vmatprep.subr.bf16.mxu0 0
    %1180 = vmatpush1.bf16.msra.mxu0 0
    %1181 = vmatprep.subr.bf16.mxu0 0
    %1182 = vmatpush1.bf16.msra.mxu0 0
    %1183 = vmatprep.subr.bf16.mxu0 0
    %1184 = vmatpush1.bf16.msra.mxu0 0
    %1185 = vmatprep.subr.bf16.mxu0 %v591
    %1186 = vmatpush1.bf16.msra.mxu0 %v588
    %1187 = vmatprep.subr.bf16.mxu0 %v431
    %1188 = vmatpush1.bf16.msra.mxu0 %v430
    %1189 = vmatprep.subr.bf16.mxu0 0
    %1190 = vmatpush2.bf16.msra.mxu0 0
    %1191 = vmatprep.subr.bf16.mxu0 0
    %1192 = vmatpush2.bf16.msra.mxu0 0
    %1193 = vmatprep.subr.bf16.mxu0 0
    %1194 = vmatpush2.bf16.msra.mxu0 0
    %1195 = vmatprep.subr.bf16.mxu0 0
    %1196 = vmatpush2.bf16.msra.mxu0 0
    %1197 = vmatprep.subr.bf16.mxu0 0
    %1198 = vmatpush2.bf16.msra.mxu0 0
    %1199 = vmatprep.subr.bf16.mxu0 0
    %1200 = vmatpush2.bf16.msra.mxu0 0
    %1201 = vmatprep.subr.bf16.mxu0 0
    %1202 = vmatpush2.bf16.msra.mxu0 0
    %1203 = vmatprep.subr.bf16.mxu0 0
    %1204 = vmatpush2.bf16.msra.mxu0 0
    %1205 = vmatprep.mubr.bf16.mxu0 0
    %1206 = vmatmul.mubr.bf16.gmra.mxu0 %v500
    %v1207 = vpop.f32.mrf.mxu0
    %v1208 = vadd.f32 %v213, %v1207
    %v1209 = vpop.f32.mrf.mxu0
    %v1210 = vadd.f32 %v217, %v1209
    %v1211 = vpop.f32.mrf.mxu0
    %v1212 = vpop.f32.mrf.mxu0
    %1213 = vdwg.mxu0
    %1214 = vmatprep.subr.bf16.mxu0 0
    %1215 = vmatpush1.bf16.msra.mxu0 0
    %1216 = vmatprep.subr.bf16.mxu0 0
    %1217 = vmatpush1.bf16.msra.mxu0 0
    %1218 = vmatprep.subr.bf16.mxu0 0
    %1219 = vmatpush1.bf16.msra.mxu0 0
    %1220 = vmatprep.subr.bf16.mxu0 0
    %1221 = vmatpush1.bf16.msra.mxu0 0
    %1222 = vmatprep.subr.bf16.mxu0 0
    %1223 = vmatpush1.bf16.msra.mxu0 0
    %1224 = vmatprep.subr.bf16.mxu0 0
    %1225 = vmatpush1.bf16.msra.mxu0 0
    %1226 = vmatprep.subr.bf16.mxu0 %v597
    %1227 = vmatpush1.bf16.msra.mxu0 %v594
    %1228 = vmatprep.subr.bf16.mxu0 %v433
    %1229 = vmatpush1.bf16.msra.mxu0 %v432
    %1230 = vmatprep.subr.bf16.mxu0 0
    %1231 = vmatpush2.bf16.msra.mxu0 0
    %1232 = vmatprep.subr.bf16.mxu0 0
    %1233 = vmatpush2.bf16.msra.mxu0 0
    %1234 = vmatprep.subr.bf16.mxu0 0
    %1235 = vmatpush2.bf16.msra.mxu0 0
    %1236 = vmatprep.subr.bf16.mxu0 0
    %1237 = vmatpush2.bf16.msra.mxu0 0
    %1238 = vmatprep.subr.bf16.mxu0 0
    %1239 = vmatpush2.bf16.msra.mxu0 0
    %1240 = vmatprep.subr.bf16.mxu0 0
    %1241 = vmatpush2.bf16.msra.mxu0 0
    %1242 = vmatprep.subr.bf16.mxu0 0
    %1243 = vmatpush2.bf16.msra.mxu0 0
    %1244 = vmatprep.subr.bf16.mxu0 0
    %1245 = vmatpush2.bf16.msra.mxu0 0
    %1246 = vmatprep.mubr.bf16.mxu0 0
    %1247 = vmatmul.mubr.bf16.gmra.mxu0 %v500
    %v1248 = vpop.f32.mrf.mxu0
    %v1249 = vadd.f32 %v221, %v1248
    %v1250 = vpop.f32.mrf.mxu0
    %v1251 = vadd.f32 %v225, %v1250
    %v1252 = vpop.f32.mrf.mxu0
    %v1253 = vpop.f32.mrf.mxu0
    %1254 = vdwg.mxu0
    %v1255 = vpack.c.bf16 %v634, %v634
    %v1256 = vpack.c.bf16 %v636, %v636
    %v1257 = vpack.c.bf16 %v675, %v675
    %v1258 = vpack.c.bf16 %v677, %v677
    %v1259 = vpack.c.bf16 %v716, %v716
    %v1260 = vpack.c.bf16 %v718, %v718
    %v1261 = vpack.c.bf16 %v757, %v757
    %v1262 = vpack.c.bf16 %v759, %v759
    %v1263 = vpack.c.bf16 %v798, %v798
    %v1264 = vpack.c.bf16 %v800, %v800
    %v1265 = vpack.c.bf16 %v839, %v839
    %v1266 = vpack.c.bf16 %v841, %v841
    %v1267 = vpack.c.bf16 %v880, %v880
    %v1268 = vpack.c.bf16 %v882, %v882
    %v1269 = vpack.c.bf16 %v921, %v921
    %v1270 = vpack.c.bf16 %v923, %v923
    %v1271 = vpack.c.bf16 %v962, %v962
    %v1272 = vpack.c.bf16 %v964, %v964
    %v1273 = vpack.c.bf16 %v1003, %v1003
    %v1274 = vpack.c.bf16 %v1005, %v1005
    %v1275 = vpack.c.bf16 %v1044, %v1044
    %v1276 = vpack.c.bf16 %v1046, %v1046
    %v1277 = vpack.c.bf16 %v1085, %v1085
    %v1278 = vpack.c.bf16 %v1087, %v1087
    %v1279 = vpack.c.bf16 %v1126, %v1126
    %v1280 = vpack.c.bf16 %v1128, %v1128
    %v1281 = vpack.c.bf16 %v1167, %v1167
    %v1282 = vpack.c.bf16 %v1169, %v1169
    %v1283 = vpack.c.bf16 %v1208, %v1208
    %v1284 = vpack.c.bf16 %v1210, %v1210
    %v1285 = vpack.c.bf16 %v1249, %v1249
    %v1286 = vpack.c.bf16 %v1251, %v1251
    %v1319 = vcombine.low %v1255, %v1256
    %v1320 = vcombine.low %v1257, %v1258
    %v1321 = vcombine.low %v1259, %v1260
    %v1322 = vcombine.low %v1261, %v1262
    %v1324 = vunpack.c.l.s4 1966171168
    %v1325 = vunpack.c.0.s8 %v1324
    %v1326 = vlaneseq
    %v1327 = vshrl.u32 %v1326, 7
    %v1328 = vsub.s32 %v1325, %v1327
    %v1329 = vrot.slane %v1319, %v1328
    %v1331 = vunpack.c.l.s4 1966171168
    %v1332 = vunpack.c.0.s8 %v1331
    %v1333 = vlaneseq
    %v1334 = vshrl.u32 %v1333, 7
    %v1335 = vsub.s32 %v1332, %v1334
    %v1336 = vrot.slane %v1320, %v1335
    %v1338 = vunpack.c.l.s4 1966171168
    %v1339 = vunpack.c.0.s8 %v1338
    %v1340 = vlaneseq
    %v1341 = vshrl.u32 %v1340, 7
    %v1342 = vsub.s32 %v1339, %v1341
    %v1343 = vrot.slane %v1321, %v1342
    %v1345 = vunpack.c.l.s4 1966171168
    %v1346 = vunpack.c.0.s8 %v1345
    %v1347 = vlaneseq
    %v1348 = vshrl.u32 %v1347, 7
    %v1349 = vsub.s32 %v1346, %v1348
    %v1350 = vrot.slane %v1322, %v1349
    %v1351 = vcombine.low %v1329, %v1336
    %v1352 = vcombine.low %v1343, %v1350
    %v1354 = vunpack.c.l.s4 1966171168
    %v1355 = vunpack.c.0.s8 %v1354
    %v1356 = vlaneseq
    %v1357 = vshrl.u32 %v1356, 7
    %v1358 = vsub.s32 %v1355, %v1357
    %v1359 = vrot.slane %v1351, %v1358
    %v1361 = vunpack.c.l.s4 1966171168
    %v1362 = vunpack.c.0.s8 %v1361
    %v1363 = vlaneseq
    %v1364 = vshrl.u32 %v1363, 7
    %v1365 = vsub.s32 %v1362, %v1364
    %v1366 = vrot.slane %v1352, %v1365
    %v1367 = vcombine.low %v1359, %v1366
    %v1368 = vcombine.low %v1263, %v1264
    %v1369 = vcombine.low %v1265, %v1266
    %v1370 = vcombine.low %v1267, %v1268
    %v1371 = vcombine.low %v1269, %v1270
    %v1373 = vunpack.c.l.s4 1966171168
    %v1374 = vunpack.c.0.s8 %v1373
    %v1375 = vlaneseq
    %v1376 = vshrl.u32 %v1375, 7
    %v1377 = vsub.s32 %v1374, %v1376
    %v1378 = vrot.slane %v1368, %v1377
    %v1380 = vunpack.c.l.s4 1966171168
    %v1381 = vunpack.c.0.s8 %v1380
    %v1382 = vlaneseq
    %v1383 = vshrl.u32 %v1382, 7
    %v1384 = vsub.s32 %v1381, %v1383
    %v1385 = vrot.slane %v1369, %v1384
    %v1387 = vunpack.c.l.s4 1966171168
    %v1388 = vunpack.c.0.s8 %v1387
    %v1389 = vlaneseq
    %v1390 = vshrl.u32 %v1389, 7
    %v1391 = vsub.s32 %v1388, %v1390
    %v1392 = vrot.slane %v1370, %v1391
    %v1394 = vunpack.c.l.s4 1966171168
    %v1395 = vunpack.c.0.s8 %v1394
    %v1396 = vlaneseq
    %v1397 = vshrl.u32 %v1396, 7
    %v1398 = vsub.s32 %v1395, %v1397
    %v1399 = vrot.slane %v1371, %v1398
    %v1400 = vcombine.low %v1378, %v1385
    %v1401 = vcombine.low %v1392, %v1399
    %v1403 = vunpack.c.l.s4 1966171168
    %v1404 = vunpack.c.0.s8 %v1403
    %v1405 = vlaneseq
    %v1406 = vshrl.u32 %v1405, 7
    %v1407 = vsub.s32 %v1404, %v1406
    %v1408 = vrot.slane %v1400, %v1407
    %v1410 = vunpack.c.l.s4 1966171168
    %v1411 = vunpack.c.0.s8 %v1410
    %v1412 = vlaneseq
    %v1413 = vshrl.u32 %v1412, 7
    %v1414 = vsub.s32 %v1411, %v1413
    %v1415 = vrot.slane %v1401, %v1414
    %v1416 = vcombine.low %v1408, %v1415
    %v1417 = vcombine.low %v1271, %v1272
    %v1418 = vcombine.low %v1273, %v1274
    %v1419 = vcombine.low %v1275, %v1276
    %v1420 = vcombine.low %v1277, %v1278
    %v1422 = vunpack.c.l.s4 1966171168
    %v1423 = vunpack.c.0.s8 %v1422
    %v1424 = vlaneseq
    %v1425 = vshrl.u32 %v1424, 7
    %v1426 = vsub.s32 %v1423, %v1425
    %v1427 = vrot.slane %v1417, %v1426
    %v1429 = vunpack.c.l.s4 1966171168
    %v1430 = vunpack.c.0.s8 %v1429
    %v1431 = vlaneseq
    %v1432 = vshrl.u32 %v1431, 7
    %v1433 = vsub.s32 %v1430, %v1432
    %v1434 = vrot.slane %v1418, %v1433
    %v1436 = vunpack.c.l.s4 1966171168
    %v1437 = vunpack.c.0.s8 %v1436
    %v1438 = vlaneseq
    %v1439 = vshrl.u32 %v1438, 7
    %v1440 = vsub.s32 %v1437, %v1439
    %v1441 = vrot.slane %v1419, %v1440
    %v1443 = vunpack.c.l.s4 1966171168
    %v1444 = vunpack.c.0.s8 %v1443
    %v1445 = vlaneseq
    %v1446 = vshrl.u32 %v1445, 7
    %v1447 = vsub.s32 %v1444, %v1446
    %v1448 = vrot.slane %v1420, %v1447
    %v1449 = vcombine.low %v1427, %v1434
    %v1450 = vcombine.low %v1441, %v1448
    %v1452 = vunpack.c.l.s4 1966171168
    %v1453 = vunpack.c.0.s8 %v1452
    %v1454 = vlaneseq
    %v1455 = vshrl.u32 %v1454, 7
    %v1456 = vsub.s32 %v1453, %v1455
    %v1457 = vrot.slane %v1449, %v1456
    %v1459 = vunpack.c.l.s4 1966171168
    %v1460 = vunpack.c.0.s8 %v1459
    %v1461 = vlaneseq
    %v1462 = vshrl.u32 %v1461, 7
    %v1463 = vsub.s32 %v1460, %v1462
    %v1464 = vrot.slane %v1450, %v1463
    %v1465 = vcombine.low %v1457, %v1464
    %v1466 = vcombine.low %v1279, %v1280
    %v1467 = vcombine.low %v1281, %v1282
    %v1468 = vcombine.low %v1283, %v1284
    %v1469 = vcombine.low %v1285, %v1286
    %v1471 = vunpack.c.l.s4 1966171168
    %v1472 = vunpack.c.0.s8 %v1471
    %v1473 = vlaneseq
    %v1474 = vshrl.u32 %v1473, 7
    %v1475 = vsub.s32 %v1472, %v1474
    %v1476 = vrot.slane %v1466, %v1475
    %v1478 = vunpack.c.l.s4 1966171168
    %v1479 = vunpack.c.0.s8 %v1478
    %v1480 = vlaneseq
    %v1481 = vshrl.u32 %v1480, 7
    %v1482 = vsub.s32 %v1479, %v1481
    %v1483 = vrot.slane %v1467, %v1482
    %v1485 = vunpack.c.l.s4 1966171168
    %v1486 = vunpack.c.0.s8 %v1485
    %v1487 = vlaneseq
    %v1488 = vshrl.u32 %v1487, 7
    %v1489 = vsub.s32 %v1486, %v1488
    %v1490 = vrot.slane %v1468, %v1489
    %v1492 = vunpack.c.l.s4 1966171168
    %v1493 = vunpack.c.0.s8 %v1492
    %v1494 = vlaneseq
    %v1495 = vshrl.u32 %v1494, 7
    %v1496 = vsub.s32 %v1493, %v1495
    %v1497 = vrot.slane %v1469, %v1496
    %v1498 = vcombine.low %v1476, %v1483
    %v1499 = vcombine.low %v1490, %v1497
    %v1501 = vunpack.c.l.s4 1966171168
    %v1502 = vunpack.c.0.s8 %v1501
    %v1503 = vlaneseq
    %v1504 = vshrl.u32 %v1503, 7
    %v1505 = vsub.s32 %v1502, %v1504
    %v1506 = vrot.slane %v1498, %v1505
    %v1508 = vunpack.c.l.s4 1966171168
    %v1509 = vunpack.c.0.s8 %v1508
    %v1510 = vlaneseq
    %v1511 = vshrl.u32 %v1510, 7
    %v1512 = vsub.s32 %v1509, %v1511
    %v1513 = vrot.slane %v1499, %v1512
    %v1514 = vcombine.low %v1506, %v1513
    %1519 = vst [vmem:[%s3] sm:$0xff] %v1367
    %1520 = vst [vmem:[%s3 + $0x8] sm:$0xff] %v1416
    %1521 = vst [vmem:[%s3 + $0x10] sm:$0xff] %v1465
    %1522 = vst [vmem:[%s3 + $0x18] sm:$0xff] %v1514
    // Predicated region
    $region22: #{discriminator_forward.6} parent=1 // pred_check
      _
    $region23: #{discriminator_forward.6} parent=1 // pred_check_branch
      %1524 = sbr.rel (0) target = $region25
    $region24: #{discriminator_forward.6} parent=1 // pred_region
      _
    $region25: #{discriminator_forward.6} parent=1 // pred_fallthru
      _
    // Predicated region
    $region26: #{discriminator_forward.6} parent=1 // pred_check
      _
    $region27: #{discriminator_forward.6} parent=1 // pred_check_branch
      %1526 = sbr.rel (0) target = $region29
    $region28: #{discriminator_forward.6} parent=1 // pred_region
      _
    $region29: #{discriminator_forward.6} parent=1 // pred_fallthru
      _
    %1527 = vsyncpa [#allocation3], 1
    %1528 = vsyncpa [#allocation5], 1

// kernel: discriminator_forward.7
$region0: #{discriminator_forward.7}
  #allocation0 [shape = 'u32[]', space=smem, size = 0x4, offset = 0x4, fixed_abs, tag = 'smem constant byte address 0x4 - core index']
  #allocation1 [shape = 'u32[144,128]{1,0:T(1,128)}', space=vmem, size = 0x12000, scoped, tag = 'internal scratch']
  %s0 = inlined_call_operand.vmem [shape: bf16[2048,64], index: 0, kind: input, shape index: {}]
  %s1 = inlined_call_operand.vmem [shape: bf16[64,64], index: 1, kind: input, shape index: {}]
  %s2 = inlined_call_operand.vmem [shape: bf16[2048,64], index: 2, kind: output, shape index: {}]
  %s3 = sld [smem:[#allocation0]]
  $region41: #{discriminator_forward.7} parent=0
    _
  %s5 = ssub.s32 1, %s3
  %s6 = scalar_select 0, %s5, %s3
  loop: start=0, step=1, limit=6
  $region2: #{discriminator_forward.7} parent=0 // loop_pre_header
    _
  $region3: #{discriminator_forward.7} parent=0 // loop_header
    %s8 = sphi 0, %s12
    %p9 = scmp.ge.s32.totalorder %s8, 6
    %s18 = sphi 0, %s20
    %s21 = sphi 0, %s18
    %s22 = sphi 0, %s21
    %s38 = sphi 0, %s22
    %s42 = sphi 0, %s42
    %s44 = sphi 0, %s42
    %s45 = sphi 0, %s44
    %s59 = sphi 0, %s45
    %s65 = sphi 0, %s67
    %s68 = sphi 0, %s65
    %s69 = sphi 0, %s68
    %s85 = sphi 0, %s69
  $region4: #{discriminator_forward.7} parent=0 // loop_header_branch
    %11 = sbr.rel (%p9) target = $region8
  $region5: #{discriminator_forward.7} parent=0 // loop_body
    %s13 = ssub.s32 %s8, 1
    %s14 = ssub.s32 %s8, 2
    %s15 = sadd.s32 %s8, 1
    %s16 = ssub.s32 %s8, %s15
    %p17 = scmp.eq.s32.totalorder %s16, 0
    %s19 = sadd.s32 %s18, 1
    %s20 = scalar_select %p17, %s18, %s19
    %p23 = pneg %p17
    %p24 = scmp.eq.s32.totalorder %s8, 3
    %p25 = por %p23, %p24
    %p26 = scmp.ne.s32.totalorder %s18, %s21
    %p27 = scmp.eq.s32.totalorder %s8, 0
    %p28 = por %p26, %p27
    %p29 = scmp.ne.s32.totalorder %s18, %s21
    %p30 = scmp.eq.s32.totalorder %s13, 3
    %p31 = por %p29, %p30
    %p32 = scmp.ne.s32.totalorder %s21, %s22
    %p33 = scmp.eq.s32.totalorder %s13, 0
    %p34 = por %p32, %p33
    %p35 = scmp.ne.s32.totalorder %s21, %s22
    %p36 = scmp.eq.s32.totalorder %s14, 3
    %p37 = por %p35, %p36
    %p39 = scmp.ne.s32.totalorder %s22, %s38
    %p40 = scmp.eq.s32.totalorder %s14, 0
    %p41 = por %p39, %p40
    %s43 = sadd.s32 %s42, 1
    %p46 = scmp.eq.s32.totalorder %s8, 3
    %p47 = scmp.ne.s32.totalorder %s42, %s44
    %p48 = scmp.eq.s32.totalorder %s8, 0
    %p49 = por %p47, %p48
    %p50 = scmp.ne.s32.totalorder %s42, %s44
    %p51 = scmp.eq.s32.totalorder %s13, 3
    %p52 = por %p50, %p51
    %p53 = scmp.ne.s32.totalorder %s44, %s45
    %p54 = scmp.eq.s32.totalorder %s13, 0
    %p55 = por %p53, %p54
    %p56 = scmp.ne.s32.totalorder %s44, %s45
    %p57 = scmp.eq.s32.totalorder %s14, 3
    %p58 = por %p56, %p57
    %p60 = scmp.ne.s32.totalorder %s45, %s59
    %p61 = scmp.eq.s32.totalorder %s14, 0
    %p62 = por %p60, %p61
    %s63 = ssub.s32 %s8, %s15
    %p64 = scmp.eq.s32.totalorder %s63, 0
    %s66 = sadd.s32 %s65, 1
    %s67 = scalar_select %p64, %s65, %s66
    %p70 = pneg %p64
    %p71 = scmp.eq.s32.totalorder %s8, 3
    %p72 = por %p70, %p71
    %p73 = scmp.ne.s32.totalorder %s65, %s68
    %p74 = scmp.eq.s32.totalorder %s8, 0
    %p75 = por %p73, %p74
    %p76 = scmp.ne.s32.totalorder %s65, %s68
    %p77 = scmp.eq.s32.totalorder %s13, 3
    %p78 = por %p76, %p77
    %p79 = scmp.ne.s32.totalorder %s68, %s69
    %p80 = scmp.eq.s32.totalorder %s13, 0
    %p81 = por %p79, %p80
    %p82 = scmp.ne.s32.totalorder %s68, %s69
    %p83 = scmp.eq.s32.totalorder %s14, 3
    %p84 = por %p82, %p83
    %p86 = scmp.ne.s32.totalorder %s69, %s85
    %p87 = scmp.eq.s32.totalorder %s14, 0
    %p88 = por %p86, %p87
    %p89 = scmp.le.s32.totalorder 1, %s8
    %p90 = scmp.lt.s32.totalorder %s8, 5
    %p91 = pnand %p89, %p90
    %p92 = pneg %p91
    // Predicated region
    $region9: #{discriminator_forward.7} parent=5 // pred_check
      _
    $region10: #{discriminator_forward.7} parent=5 // pred_check_branch
      %94 = sbr.rel (%p91) target = $region12
    $region11: #{discriminator_forward.7} parent=5 // pred_region
      %s95 = ssub.s32 %s8, 1
      // Predicated region
      $region13: #{discriminator_forward.7} parent=11 // pred_check
        %p96 = pneg %p55
      $region14: #{discriminator_forward.7} parent=11 // pred_check_branch
        %98 = sbr.rel (%p96) target = $region16
      $region15: #{discriminator_forward.7} parent=11 // pred_region
        _
      $region16: #{discriminator_forward.7} parent=11 // pred_fallthru
        _
    $region12: #{discriminator_forward.7} parent=5 // pred_fallthru
      _
    %p99 = scmp.lt.s32.totalorder %s8, 4
    // Predicated region
    $region17: #{discriminator_forward.7} parent=5 // pred_check
      %p100 = pneg %p99
    $region18: #{discriminator_forward.7} parent=5 // pred_check_branch
      %102 = sbr.rel (%p100) target = $region20
    $region19: #{discriminator_forward.7} parent=5 // pred_region
      // Predicated region
      $region21: #{discriminator_forward.7} parent=19 // pred_check
        %p103 = pneg %p28
      $region22: #{discriminator_forward.7} parent=19 // pred_check_branch
        %105 = sbr.rel (%p103) target = $region24
      $region23: #{discriminator_forward.7} parent=19 // pred_region
        %s106 = smul.u32 64, %s8
        %p107 = scmp.lt.s32.totalorder %s106, 255
        %s108 = scalar_select %p107, %s106, 255
        %s109 = smul.addr %s108, 4
        %s110 = scalar_lea.vmem %s0, %s109
        %s111 = smul.u32 64, %s8
      $region24: #{discriminator_forward.7} parent=19 // pred_fallthru
        _
    $region20: #{discriminator_forward.7} parent=5 // pred_fallthru
      _
    %p112 = scmp.le.s32.totalorder 1, %s8
    %p113 = scmp.lt.s32.totalorder %s8, 5
    %p114 = pnand %p112, %p113
    %p115 = pneg %p114
    // Predicated region
    $region25: #{discriminator_forward.7} parent=5 // pred_check
      _
    $region26: #{discriminator_forward.7} parent=5 // pred_check_branch
      %117 = sbr.rel (%p114) target = $region28
    $region27: #{discriminator_forward.7} parent=5 // pred_region
      %s118 = ssub.s32 %s8, 1
      %s119 = smul.u32 64, %s13
      %p120 = scmp.lt.s32.totalorder %s119, 255
      %s121 = scalar_select %p120, %s119, 255
      %s122 = smul.addr %s121, 4
      %s123 = scalar_lea.vmem %s0, %s122
      %p124 = pneg %p34
      %p125 = pneg %p31
      %p126 = pneg %p55
      %p127 = pneg %p52
      %p128 = pneg %p81
      %p129 = pneg %p78
      %s130 = smul.u32 64, %s13
      %p131 = scmp.lt.s32.totalorder %s130, 255
      %s132 = scalar_select %p131, %s130, 255
      %s133 = smul.addr %s132, 4
      %s134 = scalar_lea.vmem %s2, %s133
      %s135 = smul.u32 64, %s13
      %p136 = scmp.lt.s32.totalorder %s135, 255
      %s137 = scalar_select %p136, %s135, 255
      %s138 = smul.addr %s137, 4
      %s139 = scalar_lea.vmem %s0, %s138
      %s140 = smul.u32 64, %s13
      %s141 = smul.u32 64, %s13
      %p142 = scmp.lt.s32.totalorder %s141, 255
      %s143 = scalar_select %p142, %s141, 255
      %s144 = smul.addr %s143, 4
      %s145 = scalar_lea.vmem %s2, %s144
      %s146 = smul.u32 64, %s13
      %v148 = vld [vmem:[%s139] sm:$0xf]
      %v149 = vld [vmem:[%s139 + $0x4] sm:$0xf]
      %v150 = vld [vmem:[%s139 + $0x8] sm:$0xf]
      %v151 = vld [vmem:[%s139 + $0xc] sm:$0xf]
      %v152 = vld [vmem:[%s139 + $0x10] sm:$0xf]
      %v153 = vld [vmem:[%s139 + $0x14] sm:$0xf]
      %v154 = vld [vmem:[%s139 + $0x18] sm:$0xf]
      %v155 = vld [vmem:[%s139 + $0x1c] sm:$0xf]
      %v156 = vld [vmem:[%s139 + $0x20] sm:$0xf]
      %v157 = vld [vmem:[%s139 + $0x24] sm:$0xf]
      %v158 = vld [vmem:[%s139 + $0x28] sm:$0xf]
      %v159 = vld [vmem:[%s139 + $0x2c] sm:$0xf]
      %v160 = vld [vmem:[%s139 + $0x30] sm:$0xf]
      %v161 = vld [vmem:[%s139 + $0x34] sm:$0xf]
      %v162 = vld [vmem:[%s139 + $0x38] sm:$0xf]
      %v163 = vld [vmem:[%s139 + $0x3c] sm:$0xf]
      %v164 = vld [vmem:[%s139 + $0x40] sm:$0xf]
      %v165 = vld [vmem:[%s139 + $0x44] sm:$0xf]
      %v166 = vld [vmem:[%s139 + $0x48] sm:$0xf]
      %v167 = vld [vmem:[%s139 + $0x4c] sm:$0xf]
      %v168 = vld [vmem:[%s139 + $0x50] sm:$0xf]
      %v169 = vld [vmem:[%s139 + $0x54] sm:$0xf]
      %v170 = vld [vmem:[%s139 + $0x58] sm:$0xf]
      %v171 = vld [vmem:[%s139 + $0x5c] sm:$0xf]
      %v172 = vld [vmem:[%s139 + $0x60] sm:$0xf]
      %v173 = vld [vmem:[%s139 + $0x64] sm:$0xf]
      %v174 = vld [vmem:[%s139 + $0x68] sm:$0xf]
      %v175 = vld [vmem:[%s139 + $0x6c] sm:$0xf]
      %v176 = vld [vmem:[%s139 + $0x70] sm:$0xf]
      %v177 = vld [vmem:[%s139 + $0x74] sm:$0xf]
      %v178 = vld [vmem:[%s139 + $0x78] sm:$0xf]
      %v179 = vld [vmem:[%s139 + $0x7c] sm:$0xf]
      %v180 = vld [vmem:[%s139 + $0x80] sm:$0xf]
      %v181 = vld [vmem:[%s139 + $0x84] sm:$0xf]
      %v182 = vld [vmem:[%s139 + $0x88] sm:$0xf]
      %v183 = vld [vmem:[%s139 + $0x8c] sm:$0xf]
      %v184 = vld [vmem:[%s139 + $0x90] sm:$0xf]
      %v185 = vld [vmem:[%s139 + $0x94] sm:$0xf]
      %v186 = vld [vmem:[%s139 + $0x98] sm:$0xf]
      %v187 = vld [vmem:[%s139 + $0x9c] sm:$0xf]
      %v188 = vld [vmem:[%s139 + $0xa0] sm:$0xf]
      %v189 = vld [vmem:[%s139 + $0xa4] sm:$0xf]
      %v190 = vld [vmem:[%s139 + $0xa8] sm:$0xf]
      %v191 = vld [vmem:[%s139 + $0xac] sm:$0xf]
      %v192 = vld [vmem:[%s139 + $0xb0] sm:$0xf]
      %v193 = vld [vmem:[%s139 + $0xb4] sm:$0xf]
      %v194 = vld [vmem:[%s139 + $0xb8] sm:$0xf]
      %v195 = vld [vmem:[%s139 + $0xbc] sm:$0xf]
      %v196 = vld [vmem:[%s139 + $0xc0] sm:$0xf]
      %v197 = vld [vmem:[%s139 + $0xc4] sm:$0xf]
      %v198 = vld [vmem:[%s139 + $0xc8] sm:$0xf]
      %v199 = vld [vmem:[%s139 + $0xcc] sm:$0xf]
      %v200 = vld [vmem:[%s139 + $0xd0] sm:$0xf]
      %v201 = vld [vmem:[%s139 + $0xd4] sm:$0xf]
      %v202 = vld [vmem:[%s139 + $0xd8] sm:$0xf]
      %v203 = vld [vmem:[%s139 + $0xdc] sm:$0xf]
      %v204 = vld [vmem:[%s139 + $0xe0] sm:$0xf]
      %v205 = vld [vmem:[%s139 + $0xe4] sm:$0xf]
      %v206 = vld [vmem:[%s139 + $0xe8] sm:$0xf]
      %v207 = vld [vmem:[%s139 + $0xec] sm:$0xf]
      %v208 = vld [vmem:[%s139 + $0xf0] sm:$0xf]
      %v209 = vld [vmem:[%s139 + $0xf4] sm:$0xf]
      %v210 = vld [vmem:[%s139 + $0xf8] sm:$0xf]
      %v211 = vld [vmem:[%s139 + $0xfc] sm:$0xf]
      %v212 = vld [vmem:[%s1] sm:$0xf]
      %v213 = vld [vmem:[%s1 + $0x4] sm:$0xf]
      %v214 = vld [vmem:[%s1 + $0x8] sm:$0xf]
      %v215 = vld [vmem:[%s1 + $0xc] sm:$0xf]
      %v216 = vld [vmem:[%s1 + $0x10] sm:$0xf]
      %v217 = vld [vmem:[%s1 + $0x14] sm:$0xf]
      %v218 = vld [vmem:[%s1 + $0x18] sm:$0xf]
      %v219 = vld [vmem:[%s1 + $0x1c] sm:$0xf]
      %v284 = vunpack.c.l.b16 %v148
      %v285 = vunpack.c.l.b16 %v149
      %v286 = vunpack.c.l.b16 %v150
      %v287 = vunpack.c.l.b16 %v151
      %v288 = vunpack.c.l.b16 %v152
      %v289 = vunpack.c.l.b16 %v153
      %v290 = vunpack.c.l.b16 %v154
      %v291 = vunpack.c.l.b16 %v155
      %v292 = vunpack.c.l.b16 %v156
      %v293 = vunpack.c.l.b16 %v157
      %v294 = vunpack.c.l.b16 %v158
      %v295 = vunpack.c.l.b16 %v159
      %v296 = vunpack.c.l.b16 %v160
      %v297 = vunpack.c.l.b16 %v161
      %v298 = vunpack.c.l.b16 %v162
      %v299 = vunpack.c.l.b16 %v163
      %v300 = vunpack.c.l.b16 %v164
      %v301 = vunpack.c.l.b16 %v165
      %v302 = vunpack.c.l.b16 %v166
      %v303 = vunpack.c.l.b16 %v167
      %v304 = vunpack.c.l.b16 %v168
      %v305 = vunpack.c.l.b16 %v169
      %v306 = vunpack.c.l.b16 %v170
      %v307 = vunpack.c.l.b16 %v171
      %v308 = vunpack.c.l.b16 %v172
      %v309 = vunpack.c.l.b16 %v173
      %v310 = vunpack.c.l.b16 %v174
      %v311 = vunpack.c.l.b16 %v175
      %v312 = vunpack.c.l.b16 %v176
      %v313 = vunpack.c.l.b16 %v177
      %v314 = vunpack.c.l.b16 %v178
      %v315 = vunpack.c.l.b16 %v179
      %v316 = vunpack.c.l.b16 %v180
      %v317 = vunpack.c.l.b16 %v181
      %v318 = vunpack.c.l.b16 %v182
      %v319 = vunpack.c.l.b16 %v183
      %v320 = vunpack.c.l.b16 %v184
      %v321 = vunpack.c.l.b16 %v185
      %v322 = vunpack.c.l.b16 %v186
      %v323 = vunpack.c.l.b16 %v187
      %v324 = vunpack.c.l.b16 %v188
      %v325 = vunpack.c.l.b16 %v189
      %v326 = vunpack.c.l.b16 %v190
      %v327 = vunpack.c.l.b16 %v191
      %v328 = vunpack.c.l.b16 %v192
      %v329 = vunpack.c.l.b16 %v193
      %v330 = vunpack.c.l.b16 %v194
      %v331 = vunpack.c.l.b16 %v195
      %v332 = vunpack.c.l.b16 %v196
      %v333 = vunpack.c.l.b16 %v197
      %v334 = vunpack.c.l.b16 %v198
      %v335 = vunpack.c.l.b16 %v199
      %v336 = vunpack.c.l.b16 %v200
      %v337 = vunpack.c.l.b16 %v201
      %v338 = vunpack.c.l.b16 %v202
      %v339 = vunpack.c.l.b16 %v203
      %v340 = vunpack.c.l.b16 %v204
      %v341 = vunpack.c.l.b16 %v205
      %v342 = vunpack.c.l.b16 %v206
      %v343 = vunpack.c.l.b16 %v207
      %v344 = vunpack.c.l.b16 %v208
      %v345 = vunpack.c.l.b16 %v209
      %v346 = vunpack.c.l.b16 %v210
      %v347 = vunpack.c.l.b16 %v211
      %v348 = vpack.c.b16 %v285, %v284
      %v349 = vpack.c.b16 %v287, %v286
      %v350 = vpack.c.b16 %v289, %v288
      %v351 = vpack.c.b16 %v291, %v290
      %v352 = vpack.c.b16 %v293, %v292
      %v353 = vpack.c.b16 %v295, %v294
      %v354 = vpack.c.b16 %v297, %v296
      %v355 = vpack.c.b16 %v299, %v298
      %v356 = vpack.c.b16 %v301, %v300
      %v357 = vpack.c.b16 %v303, %v302
      %v358 = vpack.c.b16 %v305, %v304
      %v359 = vpack.c.b16 %v307, %v306
      %v360 = vpack.c.b16 %v309, %v308
      %v361 = vpack.c.b16 %v311, %v310
      %v362 = vpack.c.b16 %v313, %v312
      %v363 = vpack.c.b16 %v315, %v314
      %v364 = vpack.c.b16 %v317, %v316
      %v365 = vpack.c.b16 %v319, %v318
      %v366 = vpack.c.b16 %v321, %v320
      %v367 = vpack.c.b16 %v323, %v322
      %v368 = vpack.c.b16 %v325, %v324
      %v369 = vpack.c.b16 %v327, %v326
      %v370 = vpack.c.b16 %v329, %v328
      %v371 = vpack.c.b16 %v331, %v330
      %v372 = vpack.c.b16 %v333, %v332
      %v373 = vpack.c.b16 %v335, %v334
      %v374 = vpack.c.b16 %v337, %v336
      %v375 = vpack.c.b16 %v339, %v338
      %v376 = vpack.c.b16 %v341, %v340
      %v377 = vpack.c.b16 %v343, %v342
      %v378 = vpack.c.b16 %v345, %v344
      %v379 = vpack.c.b16 %v347, %v346
      %v388 = vunpack.c.l.b16 %v212
      %v389 = vunpack.c.l.b16 %v213
      %v390 = vunpack.c.l.b16 %v214
      %v391 = vunpack.c.l.b16 %v215
      %v392 = vunpack.c.l.b16 %v216
      %v393 = vunpack.c.l.b16 %v217
      %v394 = vunpack.c.l.b16 %v218
      %v395 = vunpack.c.l.b16 %v219
      %v396 = vpack.c.b16 %v389, %v388
      %v397 = vpack.c.b16 %v391, %v390
      %v398 = vpack.c.b16 %v393, %v392
      %v399 = vpack.c.b16 %v395, %v394
      %vm404 = vcmask 523264
      %v406 = vsel %vm404, %v348, 0
      %v409 = vsel %vm404, %v349, 0
      %v412 = vsel %vm404, %v350, 0
      %v415 = vsel %vm404, %v351, 0
      %v418 = vsel %vm404, %v352, 0
      %v421 = vsel %vm404, %v353, 0
      %v424 = vsel %vm404, %v354, 0
      %v427 = vsel %vm404, %v355, 0
      %v430 = vsel %vm404, %v356, 0
      %v433 = vsel %vm404, %v357, 0
      %v436 = vsel %vm404, %v358, 0
      %v439 = vsel %vm404, %v359, 0
      %v442 = vsel %vm404, %v360, 0
      %v445 = vsel %vm404, %v361, 0
      %v448 = vsel %vm404, %v362, 0
      %v451 = vsel %vm404, %v363, 0
      %v454 = vsel %vm404, %v364, 0
      %v457 = vsel %vm404, %v365, 0
      %v460 = vsel %vm404, %v366, 0
      %v463 = vsel %vm404, %v367, 0
      %v466 = vsel %vm404, %v368, 0
      %v469 = vsel %vm404, %v369, 0
      %v472 = vsel %vm404, %v370, 0
      %v475 = vsel %vm404, %v371, 0
      %v478 = vsel %vm404, %v372, 0
      %v481 = vsel %vm404, %v373, 0
      %v484 = vsel %vm404, %v374, 0
      %v487 = vsel %vm404, %v375, 0
      %v490 = vsel %vm404, %v376, 0
      %v493 = vsel %vm404, %v377, 0
      %v496 = vsel %vm404, %v378, 0
      %v499 = vsel %vm404, %v379, 0
      %501 = vmatprep.subr.bf16.mxu0 0
      %502 = vmatpush1.bf16.msra.mxu0 0
      %503 = vmatprep.subr.bf16.mxu0 0
      %504 = vmatpush1.bf16.msra.mxu0 0
      %505 = vmatprep.subr.bf16.mxu0 0
      %506 = vmatpush1.bf16.msra.mxu0 0
      %507 = vmatprep.subr.bf16.mxu0 0
      %508 = vmatpush1.bf16.msra.mxu0 0
      %509 = vmatprep.subr.bf16.mxu0 0
      %510 = vmatpush1.bf16.msra.mxu0 %v399
      %511 = vmatprep.subr.bf16.mxu0 0
      %512 = vmatpush1.bf16.msra.mxu0 %v398
      %513 = vmatprep.subr.bf16.mxu0 0
      %514 = vmatpush1.bf16.msra.mxu0 %v397
      %515 = vmatprep.subr.bf16.mxu0 0
      %516 = vmatpush1.bf16.msra.mxu0 %v396
      %517 = vmatprep.subr.bf16.mxu0 0
      %518 = vmatpush2.bf16.msra.mxu0 0
      %519 = vmatprep.subr.bf16.mxu0 0
      %520 = vmatpush2.bf16.msra.mxu0 0
      %521 = vmatprep.subr.bf16.mxu0 0
      %522 = vmatpush2.bf16.msra.mxu0 0
      %523 = vmatprep.subr.bf16.mxu0 0
      %524 = vmatpush2.bf16.msra.mxu0 0
      %525 = vmatprep.subr.bf16.mxu0 0
      %526 = vmatpush2.bf16.msra.mxu0 0
      %527 = vmatprep.subr.bf16.mxu0 0
      %528 = vmatpush2.bf16.msra.mxu0 0
      %529 = vmatprep.subr.bf16.mxu0 0
      %530 = vmatpush2.bf16.msra.mxu0 0
      %531 = vmatprep.subr.bf16.mxu0 0
      %532 = vmatpush2.bf16.msra.mxu0 0
      %533 = vmatprep.mubr.bf16.mxu0 0
      %534 = vmatmul.mubr.bf16.gmra.mxu0 %v406
      %v535 = vpop.f32.mrf.mxu0
      %v536 = vadd.f32 0.0, %v535
      %v537 = vpop.f32.mrf.mxu0
      %v538 = vpop.f32.mrf.mxu0
      %v539 = vadd.f32 0.0, %v538
      %v540 = vpop.f32.mrf.mxu0
      %541 = vmatprep.mubr.bf16.mxu0 0
      %542 = vmatmul.mubr.bf16.gmra.mxu0 %v409
      %v543 = vpop.f32.mrf.mxu0
      %v544 = vadd.f32 0.0, %v543
      %v545 = vpop.f32.mrf.mxu0
      %v546 = vpop.f32.mrf.mxu0
      %v547 = vadd.f32 0.0, %v546
      %v548 = vpop.f32.mrf.mxu0
      %549 = vmatprep.mubr.bf16.mxu0 0
      %550 = vmatmul.mubr.bf16.gmra.mxu0 %v412
      %v551 = vpop.f32.mrf.mxu0
      %v552 = vadd.f32 0.0, %v551
      %v553 = vpop.f32.mrf.mxu0
      %v554 = vpop.f32.mrf.mxu0
      %v555 = vadd.f32 0.0, %v554
      %v556 = vpop.f32.mrf.mxu0
      %557 = vmatprep.mubr.bf16.mxu0 0
      %558 = vmatmul.mubr.bf16.gmra.mxu0 %v415
      %v559 = vpop.f32.mrf.mxu0
      %v560 = vadd.f32 0.0, %v559
      %v561 = vpop.f32.mrf.mxu0
      %v562 = vpop.f32.mrf.mxu0
      %v563 = vadd.f32 0.0, %v562
      %v564 = vpop.f32.mrf.mxu0
      %565 = vmatprep.mubr.bf16.mxu0 0
      %566 = vmatmul.mubr.bf16.gmra.mxu0 %v418
      %v567 = vpop.f32.mrf.mxu0
      %v568 = vadd.f32 0.0, %v567
      %v569 = vpop.f32.mrf.mxu0
      %v570 = vpop.f32.mrf.mxu0
      %v571 = vadd.f32 0.0, %v570
      %v572 = vpop.f32.mrf.mxu0
      %573 = vmatprep.mubr.bf16.mxu0 0
      %574 = vmatmul.mubr.bf16.gmra.mxu0 %v421
      %v575 = vpop.f32.mrf.mxu0
      %v576 = vadd.f32 0.0, %v575
      %v577 = vpop.f32.mrf.mxu0
      %v578 = vpop.f32.mrf.mxu0
      %v579 = vadd.f32 0.0, %v578
      %v580 = vpop.f32.mrf.mxu0
      %581 = vmatprep.mubr.bf16.mxu0 0
      %582 = vmatmul.mubr.bf16.gmra.mxu0 %v424
      %v583 = vpop.f32.mrf.mxu0
      %v584 = vadd.f32 0.0, %v583
      %v585 = vpop.f32.mrf.mxu0
      %v586 = vpop.f32.mrf.mxu0
      %v587 = vadd.f32 0.0, %v586
      %v588 = vpop.f32.mrf.mxu0
      %589 = vmatprep.mubr.bf16.mxu0 0
      %590 = vmatmul.mubr.bf16.gmra.mxu0 %v427
      %v591 = vpop.f32.mrf.mxu0
      %v592 = vadd.f32 0.0, %v591
      %v593 = vpop.f32.mrf.mxu0
      %v594 = vpop.f32.mrf.mxu0
      %v595 = vadd.f32 0.0, %v594
      %v596 = vpop.f32.mrf.mxu0
      %597 = vmatprep.mubr.bf16.mxu0 0
      %598 = vmatmul.mubr.bf16.gmra.mxu0 %v430
      %v599 = vpop.f32.mrf.mxu0
      %v600 = vadd.f32 0.0, %v599
      %v601 = vpop.f32.mrf.mxu0
      %v602 = vpop.f32.mrf.mxu0
      %v603 = vadd.f32 0.0, %v602
      %v604 = vpop.f32.mrf.mxu0
      %605 = vmatprep.mubr.bf16.mxu0 0
      %606 = vmatmul.mubr.bf16.gmra.mxu0 %v433
      %v607 = vpop.f32.mrf.mxu0
      %v608 = vadd.f32 0.0, %v607
      %v609 = vpop.f32.mrf.mxu0
      %v610 = vpop.f32.mrf.mxu0
      %v611 = vadd.f32 0.0, %v610
      %v612 = vpop.f32.mrf.mxu0
      %613 = vmatprep.mubr.bf16.mxu0 0
      %614 = vmatmul.mubr.bf16.gmra.mxu0 %v436
      %v615 = vpop.f32.mrf.mxu0
      %v616 = vadd.f32 0.0, %v615
      %v617 = vpop.f32.mrf.mxu0
      %v618 = vpop.f32.mrf.mxu0
      %v619 = vadd.f32 0.0, %v618
      %v620 = vpop.f32.mrf.mxu0
      %621 = vmatprep.mubr.bf16.mxu0 0
      %622 = vmatmul.mubr.bf16.gmra.mxu0 %v439
      %v623 = vpop.f32.mrf.mxu0
      %v624 = vadd.f32 0.0, %v623
      %v625 = vpop.f32.mrf.mxu0
      %v626 = vpop.f32.mrf.mxu0
      %v627 = vadd.f32 0.0, %v626
      %v628 = vpop.f32.mrf.mxu0
      %629 = vmatprep.mubr.bf16.mxu0 0
      %630 = vmatmul.mubr.bf16.gmra.mxu0 %v442
      %v631 = vpop.f32.mrf.mxu0
      %v632 = vadd.f32 0.0, %v631
      %v633 = vpop.f32.mrf.mxu0
      %v634 = vpop.f32.mrf.mxu0
      %v635 = vadd.f32 0.0, %v634
      %v636 = vpop.f32.mrf.mxu0
      %637 = vmatprep.mubr.bf16.mxu0 0
      %638 = vmatmul.mubr.bf16.gmra.mxu0 %v445
      %v639 = vpop.f32.mrf.mxu0
      %v640 = vadd.f32 0.0, %v639
      %v641 = vpop.f32.mrf.mxu0
      %v642 = vpop.f32.mrf.mxu0
      %v643 = vadd.f32 0.0, %v642
      %v644 = vpop.f32.mrf.mxu0
      %645 = vmatprep.mubr.bf16.mxu0 0
      %646 = vmatmul.mubr.bf16.gmra.mxu0 %v448
      %v647 = vpop.f32.mrf.mxu0
      %v648 = vadd.f32 0.0, %v647
      %v649 = vpop.f32.mrf.mxu0
      %v650 = vpop.f32.mrf.mxu0
      %v651 = vadd.f32 0.0, %v650
      %v652 = vpop.f32.mrf.mxu0
      %653 = vmatprep.mubr.bf16.mxu0 0
      %654 = vmatmul.mubr.bf16.gmra.mxu0 %v451
      %v655 = vpop.f32.mrf.mxu0
      %v656 = vadd.f32 0.0, %v655
      %v657 = vpop.f32.mrf.mxu0
      %v658 = vpop.f32.mrf.mxu0
      %v659 = vadd.f32 0.0, %v658
      %v660 = vpop.f32.mrf.mxu0
      %661 = vmatprep.mubr.bf16.mxu0 0
      %662 = vmatmul.mubr.bf16.gmra.mxu0 %v454
      %v663 = vpop.f32.mrf.mxu0
      %v664 = vadd.f32 0.0, %v663
      %v665 = vpop.f32.mrf.mxu0
      %v666 = vpop.f32.mrf.mxu0
      %v667 = vadd.f32 0.0, %v666
      %v668 = vpop.f32.mrf.mxu0
      %669 = vmatprep.mubr.bf16.mxu0 0
      %670 = vmatmul.mubr.bf16.gmra.mxu0 %v457
      %v671 = vpop.f32.mrf.mxu0
      %v672 = vadd.f32 0.0, %v671
      %v673 = vpop.f32.mrf.mxu0
      %v674 = vpop.f32.mrf.mxu0
      %v675 = vadd.f32 0.0, %v674
      %v676 = vpop.f32.mrf.mxu0
      %677 = vmatprep.mubr.bf16.mxu0 0
      %678 = vmatmul.mubr.bf16.gmra.mxu0 %v460
      %v679 = vpop.f32.mrf.mxu0
      %v680 = vadd.f32 0.0, %v679
      %v681 = vpop.f32.mrf.mxu0
      %v682 = vpop.f32.mrf.mxu0
      %v683 = vadd.f32 0.0, %v682
      %v684 = vpop.f32.mrf.mxu0
      %685 = vmatprep.mubr.bf16.mxu0 0
      %686 = vmatmul.mubr.bf16.gmra.mxu0 %v463
      %v687 = vpop.f32.mrf.mxu0
      %v688 = vadd.f32 0.0, %v687
      %v689 = vpop.f32.mrf.mxu0
      %v690 = vpop.f32.mrf.mxu0
      %v691 = vadd.f32 0.0, %v690
      %v692 = vpop.f32.mrf.mxu0
      %693 = vmatprep.mubr.bf16.mxu0 0
      %694 = vmatmul.mubr.bf16.gmra.mxu0 %v466
      %v695 = vpop.f32.mrf.mxu0
      %v696 = vadd.f32 0.0, %v695
      %v697 = vpop.f32.mrf.mxu0
      %v698 = vpop.f32.mrf.mxu0
      %v699 = vadd.f32 0.0, %v698
      %v700 = vpop.f32.mrf.mxu0
      %701 = vmatprep.mubr.bf16.mxu0 0
      %702 = vmatmul.mubr.bf16.gmra.mxu0 %v469
      %v703 = vpop.f32.mrf.mxu0
      %v704 = vadd.f32 0.0, %v703
      %v705 = vpop.f32.mrf.mxu0
      %v706 = vpop.f32.mrf.mxu0
      %v707 = vadd.f32 0.0, %v706
      %v708 = vpop.f32.mrf.mxu0
      %709 = vmatprep.mubr.bf16.mxu0 0
      %710 = vmatmul.mubr.bf16.gmra.mxu0 %v472
      %v711 = vpop.f32.mrf.mxu0
      %v712 = vadd.f32 0.0, %v711
      %v713 = vpop.f32.mrf.mxu0
      %v714 = vpop.f32.mrf.mxu0
      %v715 = vadd.f32 0.0, %v714
      %v716 = vpop.f32.mrf.mxu0
      %717 = vmatprep.mubr.bf16.mxu0 0
      %718 = vmatmul.mubr.bf16.gmra.mxu0 %v475
      %v719 = vpop.f32.mrf.mxu0
      %v720 = vadd.f32 0.0, %v719
      %v721 = vpop.f32.mrf.mxu0
      %v722 = vpop.f32.mrf.mxu0
      %v723 = vadd.f32 0.0, %v722
      %v724 = vpop.f32.mrf.mxu0
      %725 = vmatprep.mubr.bf16.mxu0 0
      %726 = vmatmul.mubr.bf16.gmra.mxu0 %v478
      %v727 = vpop.f32.mrf.mxu0
      %v728 = vadd.f32 0.0, %v727
      %v729 = vpop.f32.mrf.mxu0
      %v730 = vpop.f32.mrf.mxu0
      %v731 = vadd.f32 0.0, %v730
      %v732 = vpop.f32.mrf.mxu0
      %733 = vmatprep.mubr.bf16.mxu0 0
      %734 = vmatmul.mubr.bf16.gmra.mxu0 %v481
      %v735 = vpop.f32.mrf.mxu0
      %v736 = vadd.f32 0.0, %v735
      %v737 = vpop.f32.mrf.mxu0
      %v738 = vpop.f32.mrf.mxu0
      %v739 = vadd.f32 0.0, %v738
      %v740 = vpop.f32.mrf.mxu0
      %741 = vmatprep.mubr.bf16.mxu0 0
      %742 = vmatmul.mubr.bf16.gmra.mxu0 %v484
      %v743 = vpop.f32.mrf.mxu0
      %v744 = vadd.f32 0.0, %v743
      %v745 = vpop.f32.mrf.mxu0
      %v746 = vpop.f32.mrf.mxu0
      %v747 = vadd.f32 0.0, %v746
      %v748 = vpop.f32.mrf.mxu0
      %749 = vmatprep.mubr.bf16.mxu0 0
      %750 = vmatmul.mubr.bf16.gmra.mxu0 %v487
      %v751 = vpop.f32.mrf.mxu0
      %v752 = vadd.f32 0.0, %v751
      %v753 = vpop.f32.mrf.mxu0
      %v754 = vpop.f32.mrf.mxu0
      %v755 = vadd.f32 0.0, %v754
      %v756 = vpop.f32.mrf.mxu0
      %757 = vmatprep.mubr.bf16.mxu0 0
      %758 = vmatmul.mubr.bf16.gmra.mxu0 %v490
      %v759 = vpop.f32.mrf.mxu0
      %v760 = vadd.f32 0.0, %v759
      %v761 = vpop.f32.mrf.mxu0
      %v762 = vpop.f32.mrf.mxu0
      %v763 = vadd.f32 0.0, %v762
      %v764 = vpop.f32.mrf.mxu0
      %765 = vmatprep.mubr.bf16.mxu0 0
      %766 = vmatmul.mubr.bf16.gmra.mxu0 %v493
      %v767 = vpop.f32.mrf.mxu0
      %v768 = vadd.f32 0.0, %v767
      %v769 = vpop.f32.mrf.mxu0
      %v770 = vpop.f32.mrf.mxu0
      %v771 = vadd.f32 0.0, %v770
      %v772 = vpop.f32.mrf.mxu0
      %773 = vmatprep.mubr.bf16.mxu0 0
      %774 = vmatmul.mubr.bf16.gmra.mxu0 %v496
      %v775 = vpop.f32.mrf.mxu0
      %v776 = vadd.f32 0.0, %v775
      %v777 = vpop.f32.mrf.mxu0
      %v778 = vpop.f32.mrf.mxu0
      %v779 = vadd.f32 0.0, %v778
      %v780 = vpop.f32.mrf.mxu0
      %781 = vmatprep.mubr.bf16.mxu0 0
      %782 = vmatmul.mubr.bf16.gmra.mxu0 %v499
      %v783 = vpop.f32.mrf.mxu0
      %v784 = vadd.f32 0.0, %v783
      %v785 = vpop.f32.mrf.mxu0
      %v786 = vpop.f32.mrf.mxu0
      %v787 = vadd.f32 0.0, %v786
      %v788 = vpop.f32.mrf.mxu0
      %789 = vdwg.mxu0
      %vm790 = vcmp.ge.f32.partialorder %v536, 0.0
      %vm791 = vcmp.ge.f32.partialorder %v539, 0.0
      %vm792 = vcmp.ge.f32.partialorder %v544, 0.0
      %vm793 = vcmp.ge.f32.partialorder %v547, 0.0
      %vm794 = vcmp.ge.f32.partialorder %v552, 0.0
      %vm795 = vcmp.ge.f32.partialorder %v555, 0.0
      %vm796 = vcmp.ge.f32.partialorder %v560, 0.0
      %vm797 = vcmp.ge.f32.partialorder %v563, 0.0
      %vm798 = vcmp.ge.f32.partialorder %v568, 0.0
      %vm799 = vcmp.ge.f32.partialorder %v571, 0.0
      %vm800 = vcmp.ge.f32.partialorder %v576, 0.0
      %vm801 = vcmp.ge.f32.partialorder %v579, 0.0
      %vm802 = vcmp.ge.f32.partialorder %v584, 0.0
      %vm803 = vcmp.ge.f32.partialorder %v587, 0.0
      %vm804 = vcmp.ge.f32.partialorder %v592, 0.0
      %vm805 = vcmp.ge.f32.partialorder %v595, 0.0
      %vm806 = vcmp.ge.f32.partialorder %v600, 0.0
      %vm807 = vcmp.ge.f32.partialorder %v603, 0.0
      %vm808 = vcmp.ge.f32.partialorder %v608, 0.0
      %vm809 = vcmp.ge.f32.partialorder %v611, 0.0
      %vm810 = vcmp.ge.f32.partialorder %v616, 0.0
      %vm811 = vcmp.ge.f32.partialorder %v619, 0.0
      %vm812 = vcmp.ge.f32.partialorder %v624, 0.0
      %vm813 = vcmp.ge.f32.partialorder %v627, 0.0
      %vm814 = vcmp.ge.f32.partialorder %v632, 0.0
      %vm815 = vcmp.ge.f32.partialorder %v635, 0.0
      %vm816 = vcmp.ge.f32.partialorder %v640, 0.0
      %vm817 = vcmp.ge.f32.partialorder %v643, 0.0
      %vm818 = vcmp.ge.f32.partialorder %v648, 0.0
      %vm819 = vcmp.ge.f32.partialorder %v651, 0.0
      %vm820 = vcmp.ge.f32.partialorder %v656, 0.0
      %vm821 = vcmp.ge.f32.partialorder %v659, 0.0
      %vm822 = vcmp.ge.f32.partialorder %v664, 0.0
      %vm823 = vcmp.ge.f32.partialorder %v667, 0.0
      %vm824 = vcmp.ge.f32.partialorder %v672, 0.0
      %vm825 = vcmp.ge.f32.partialorder %v675, 0.0
      %vm826 = vcmp.ge.f32.partialorder %v680, 0.0
      %vm827 = vcmp.ge.f32.partialorder %v683, 0.0
      %vm828 = vcmp.ge.f32.partialorder %v688, 0.0
      %vm829 = vcmp.ge.f32.partialorder %v691, 0.0
      %vm830 = vcmp.ge.f32.partialorder %v696, 0.0
      %vm831 = vcmp.ge.f32.partialorder %v699, 0.0
      %vm832 = vcmp.ge.f32.partialorder %v704, 0.0
      %vm833 = vcmp.ge.f32.partialorder %v707, 0.0
      %vm834 = vcmp.ge.f32.partialorder %v712, 0.0
      %vm835 = vcmp.ge.f32.partialorder %v715, 0.0
      %vm836 = vcmp.ge.f32.partialorder %v720, 0.0
      %vm837 = vcmp.ge.f32.partialorder %v723, 0.0
      %vm838 = vcmp.ge.f32.partialorder %v728, 0.0
      %vm839 = vcmp.ge.f32.partialorder %v731, 0.0
      %vm840 = vcmp.ge.f32.partialorder %v736, 0.0
      %vm841 = vcmp.ge.f32.partialorder %v739, 0.0
      %vm842 = vcmp.ge.f32.partialorder %v744, 0.0
      %vm843 = vcmp.ge.f32.partialorder %v747, 0.0
      %vm844 = vcmp.ge.f32.partialorder %v752, 0.0
      %vm845 = vcmp.ge.f32.partialorder %v755, 0.0
      %vm846 = vcmp.ge.f32.partialorder %v760, 0.0
      %vm847 = vcmp.ge.f32.partialorder %v763, 0.0
      %vm848 = vcmp.ge.f32.partialorder %v768, 0.0
      %vm849 = vcmp.ge.f32.partialorder %v771, 0.0
      %vm850 = vcmp.ge.f32.partialorder %v776, 0.0
      %vm851 = vcmp.ge.f32.partialorder %v779, 0.0
      %vm852 = vcmp.ge.f32.partialorder %v784, 0.0
      %vm853 = vcmp.ge.f32.partialorder %v787, 0.0
      %v854 = vmul.f32 %v536, 0.2
      %v855 = vmul.f32 %v539, 0.2
      %v856 = vmul.f32 %v544, 0.2
      %v857 = vmul.f32 %v547, 0.2
      %v858 = vmul.f32 %v552, 0.2
      %v859 = vmul.f32 %v555, 0.2
      %v860 = vmul.f32 %v560, 0.2
      %v861 = vmul.f32 %v563, 0.2
      %v862 = vmul.f32 %v568, 0.2
      %v863 = vmul.f32 %v571, 0.2
      %v864 = vmul.f32 %v576, 0.2
      %v865 = vmul.f32 %v579, 0.2
      %v866 = vmul.f32 %v584, 0.2
      %v867 = vmul.f32 %v587, 0.2
      %v868 = vmul.f32 %v592, 0.2
      %v869 = vmul.f32 %v595, 0.2
      %v870 = vmul.f32 %v600, 0.2
      %v871 = vmul.f32 %v603, 0.2
      %v872 = vmul.f32 %v608, 0.2
      %v873 = vmul.f32 %v611, 0.2
      %v874 = vmul.f32 %v616, 0.2
      %v875 = vmul.f32 %v619, 0.2
      %v876 = vmul.f32 %v624, 0.2
      %v877 = vmul.f32 %v627, 0.2
      %v878 = vmul.f32 %v632, 0.2
      %v879 = vmul.f32 %v635, 0.2
      %v880 = vmul.f32 %v640, 0.2
      %v881 = vmul.f32 %v643, 0.2
      %v882 = vmul.f32 %v648, 0.2
      %v883 = vmul.f32 %v651, 0.2
      %v884 = vmul.f32 %v656, 0.2
      %v885 = vmul.f32 %v659, 0.2
      %v886 = vmul.f32 %v664, 0.2
      %v887 = vmul.f32 %v667, 0.2
      %v888 = vmul.f32 %v672, 0.2
      %v889 = vmul.f32 %v675, 0.2
      %v890 = vmul.f32 %v680, 0.2
      %v891 = vmul.f32 %v683, 0.2
      %v892 = vmul.f32 %v688, 0.2
      %v893 = vmul.f32 %v691, 0.2
      %v894 = vmul.f32 %v696, 0.2
      %v895 = vmul.f32 %v699, 0.2
      %v896 = vmul.f32 %v704, 0.2
      %v897 = vmul.f32 %v707, 0.2
      %v898 = vmul.f32 %v712, 0.2
      %v899 = vmul.f32 %v715, 0.2
      %v900 = vmul.f32 %v720, 0.2
      %v901 = vmul.f32 %v723, 0.2
      %v902 = vmul.f32 %v728, 0.2
      %v903 = vmul.f32 %v731, 0.2
      %v904 = vmul.f32 %v736, 0.2
      %v905 = vmul.f32 %v739, 0.2
      %v906 = vmul.f32 %v744, 0.2
      %v907 = vmul.f32 %v747, 0.2
      %v908 = vmul.f32 %v752, 0.2
      %v909 = vmul.f32 %v755, 0.2
      %v910 = vmul.f32 %v760, 0.2
      %v911 = vmul.f32 %v763, 0.2
      %v912 = vmul.f32 %v768, 0.2
      %v913 = vmul.f32 %v771, 0.2
      %v914 = vmul.f32 %v776, 0.2
      %v915 = vmul.f32 %v779, 0.2
      %v916 = vmul.f32 %v784, 0.2
      %v917 = vmul.f32 %v787, 0.2
      %v918 = vsel %vm790, %v536, %v854
      %v919 = vsel %vm791, %v539, %v855
      %v920 = vsel %vm792, %v544, %v856
      %v921 = vsel %vm793, %v547, %v857
      %v922 = vsel %vm794, %v552, %v858
      %v923 = vsel %vm795, %v555, %v859
      %v924 = vsel %vm796, %v560, %v860
      %v925 = vsel %vm797, %v563, %v861
      %v926 = vsel %vm798, %v568, %v862
      %v927 = vsel %vm799, %v571, %v863
      %v928 = vsel %vm800, %v576, %v864
      %v929 = vsel %vm801, %v579, %v865
      %v930 = vsel %vm802, %v584, %v866
      %v931 = vsel %vm803, %v587, %v867
      %v932 = vsel %vm804, %v592, %v868
      %v933 = vsel %vm805, %v595, %v869
      %v934 = vsel %vm806, %v600, %v870
      %v935 = vsel %vm807, %v603, %v871
      %v936 = vsel %vm808, %v608, %v872
      %v937 = vsel %vm809, %v611, %v873
      %v938 = vsel %vm810, %v616, %v874
      %v939 = vsel %vm811, %v619, %v875
      %v940 = vsel %vm812, %v624, %v876
      %v941 = vsel %vm813, %v627, %v877
      %v942 = vsel %vm814, %v632, %v878
      %v943 = vsel %vm815, %v635, %v879
      %v944 = vsel %vm816, %v640, %v880
      %v945 = vsel %vm817, %v643, %v881
      %v946 = vsel %vm818, %v648, %v882
      %v947 = vsel %vm819, %v651, %v883
      %v948 = vsel %vm820, %v656, %v884
      %v949 = vsel %vm821, %v659, %v885
      %v950 = vsel %vm822, %v664, %v886
      %v951 = vsel %vm823, %v667, %v887
      %v952 = vsel %vm824, %v672, %v888
      %v953 = vsel %vm825, %v675, %v889
      %v954 = vsel %vm826, %v680, %v890
      %v955 = vsel %vm827, %v683, %v891
      %v956 = vsel %vm828, %v688, %v892
      %v957 = vsel %vm829, %v691, %v893
      %v958 = vsel %vm830, %v696, %v894
      %v959 = vsel %vm831, %v699, %v895
      %v960 = vsel %vm832, %v704, %v896
      %v961 = vsel %vm833, %v707, %v897
      %v962 = vsel %vm834, %v712, %v898
      %v963 = vsel %vm835, %v715, %v899
      %v964 = vsel %vm836, %v720, %v900
      %v965 = vsel %vm837, %v723, %v901
      %v966 = vsel %vm838, %v728, %v902
      %v967 = vsel %vm839, %v731, %v903
      %v968 = vsel %vm840, %v736, %v904
      %v969 = vsel %vm841, %v739, %v905
      %v970 = vsel %vm842, %v744, %v906
      %v971 = vsel %vm843, %v747, %v907
      %v972 = vsel %vm844, %v752, %v908
      %v973 = vsel %vm845, %v755, %v909
      %v974 = vsel %vm846, %v760, %v910
      %v975 = vsel %vm847, %v763, %v911
      %v976 = vsel %vm848, %v768, %v912
      %v977 = vsel %vm849, %v771, %v913
      %v978 = vsel %vm850, %v776, %v914
      %v979 = vsel %vm851, %v779, %v915
      %v980 = vsel %vm852, %v784, %v916
      %v981 = vsel %vm853, %v787, %v917
      %v982 = vpack.c.bf16 %v919, %v918
      %v983 = vpack.c.bf16 %v921, %v920
      %v984 = vpack.c.bf16 %v923, %v922
      %v985 = vpack.c.bf16 %v925, %v924
      %v986 = vpack.c.bf16 %v927, %v926
      %v987 = vpack.c.bf16 %v929, %v928
      %v988 = vpack.c.bf16 %v931, %v930
      %v989 = vpack.c.bf16 %v933, %v932
      %v990 = vpack.c.bf16 %v935, %v934
      %v991 = vpack.c.bf16 %v937, %v936
      %v992 = vpack.c.bf16 %v939, %v938
      %v993 = vpack.c.bf16 %v941, %v940
      %v994 = vpack.c.bf16 %v943, %v942
      %v995 = vpack.c.bf16 %v945, %v944
      %v996 = vpack.c.bf16 %v947, %v946
      %v997 = vpack.c.bf16 %v949, %v948
      %v998 = vpack.c.bf16 %v951, %v950
      %v999 = vpack.c.bf16 %v953, %v952
      %v1000 = vpack.c.bf16 %v955, %v954
      %v1001 = vpack.c.bf16 %v957, %v956
      %v1002 = vpack.c.bf16 %v959, %v958
      %v1003 = vpack.c.bf16 %v961, %v960
      %v1004 = vpack.c.bf16 %v963, %v962
      %v1005 = vpack.c.bf16 %v965, %v964
      %v1006 = vpack.c.bf16 %v967, %v966
      %v1007 = vpack.c.bf16 %v969, %v968
      %v1008 = vpack.c.bf16 %v971, %v970
      %v1009 = vpack.c.bf16 %v973, %v972
      %v1010 = vpack.c.bf16 %v975, %v974
      %v1011 = vpack.c.bf16 %v977, %v976
      %v1012 = vpack.c.bf16 %v979, %v978
      %v1013 = vpack.c.bf16 %v981, %v980
      %v1046 = vunpack.c.l.b16 %v982
      %v1047 = vunpack.c.h.b16 %v982
      %v1048 = vunpack.c.l.b16 %v983
      %v1049 = vunpack.c.h.b16 %v983
      %v1050 = vunpack.c.l.b16 %v984
      %v1051 = vunpack.c.h.b16 %v984
      %v1052 = vunpack.c.l.b16 %v985
      %v1053 = vunpack.c.h.b16 %v985
      %v1054 = vunpack.c.l.b16 %v986
      %v1055 = vunpack.c.h.b16 %v986
      %v1056 = vunpack.c.l.b16 %v987
      %v1057 = vunpack.c.h.b16 %v987
      %v1058 = vunpack.c.l.b16 %v988
      %v1059 = vunpack.c.h.b16 %v988
      %v1060 = vunpack.c.l.b16 %v989
      %v1061 = vunpack.c.h.b16 %v989
      %v1062 = vunpack.c.l.b16 %v990
      %v1063 = vunpack.c.h.b16 %v990
      %v1064 = vunpack.c.l.b16 %v991
      %v1065 = vunpack.c.h.b16 %v991
      %v1066 = vunpack.c.l.b16 %v992
      %v1067 = vunpack.c.h.b16 %v992
      %v1068 = vunpack.c.l.b16 %v993
      %v1069 = vunpack.c.h.b16 %v993
      %v1070 = vunpack.c.l.b16 %v994
      %v1071 = vunpack.c.h.b16 %v994
      %v1072 = vunpack.c.l.b16 %v995
      %v1073 = vunpack.c.h.b16 %v995
      %v1074 = vunpack.c.l.b16 %v996
      %v1075 = vunpack.c.h.b16 %v996
      %v1076 = vunpack.c.l.b16 %v997
      %v1077 = vunpack.c.h.b16 %v997
      %v1078 = vunpack.c.l.b16 %v998
      %v1079 = vunpack.c.h.b16 %v998
      %v1080 = vunpack.c.l.b16 %v999
      %v1081 = vunpack.c.h.b16 %v999
      %v1082 = vunpack.c.l.b16 %v1000
      %v1083 = vunpack.c.h.b16 %v1000
      %v1084 = vunpack.c.l.b16 %v1001
      %v1085 = vunpack.c.h.b16 %v1001
      %v1086 = vunpack.c.l.b16 %v1002
      %v1087 = vunpack.c.h.b16 %v1002
      %v1088 = vunpack.c.l.b16 %v1003
      %v1089 = vunpack.c.h.b16 %v1003
      %v1090 = vunpack.c.l.b16 %v1004
      %v1091 = vunpack.c.h.b16 %v1004
      %v1092 = vunpack.c.l.b16 %v1005
      %v1093 = vunpack.c.h.b16 %v1005
      %v1094 = vunpack.c.l.b16 %v1006
      %v1095 = vunpack.c.h.b16 %v1006
      %v1096 = vunpack.c.l.b16 %v1007
      %v1097 = vunpack.c.h.b16 %v1007
      %v1098 = vunpack.c.l.b16 %v1008
      %v1099 = vunpack.c.h.b16 %v1008
      %v1100 = vunpack.c.l.b16 %v1009
      %v1101 = vunpack.c.h.b16 %v1009
      %v1102 = vunpack.c.l.b16 %v1010
      %v1103 = vunpack.c.h.b16 %v1010
      %v1104 = vunpack.c.l.b16 %v1011
      %v1105 = vunpack.c.h.b16 %v1011
      %v1106 = vunpack.c.l.b16 %v1012
      %v1107 = vunpack.c.h.b16 %v1012
      %v1108 = vunpack.c.l.b16 %v1013
      %v1109 = vunpack.c.h.b16 %v1013
      %v1110 = vpack.c.b16 %v1046, %v1046
      %v1111 = vpack.c.b16 %v1047, %v1047
      %v1112 = vpack.c.b16 %v1048, %v1048
      %v1113 = vpack.c.b16 %v1049, %v1049
      %v1114 = vpack.c.b16 %v1050, %v1050
      %v1115 = vpack.c.b16 %v1051, %v1051
      %v1116 = vpack.c.b16 %v1052, %v1052
      %v1117 = vpack.c.b16 %v1053, %v1053
      %v1118 = vpack.c.b16 %v1054, %v1054
      %v1119 = vpack.c.b16 %v1055, %v1055
      %v1120 = vpack.c.b16 %v1056, %v1056
      %v1121 = vpack.c.b16 %v1057, %v1057
      %v1122 = vpack.c.b16 %v1058, %v1058
      %v1123 = vpack.c.b16 %v1059, %v1059
      %v1124 = vpack.c.b16 %v1060, %v1060
      %v1125 = vpack.c.b16 %v1061, %v1061
      %v1126 = vpack.c.b16 %v1062, %v1062
      %v1127 = vpack.c.b16 %v1063, %v1063
      %v1128 = vpack.c.b16 %v1064, %v1064
      %v1129 = vpack.c.b16 %v1065, %v1065
      %v1130 = vpack.c.b16 %v1066, %v1066
      %v1131 = vpack.c.b16 %v1067, %v1067
      %v1132 = vpack.c.b16 %v1068, %v1068
      %v1133 = vpack.c.b16 %v1069, %v1069
      %v1134 = vpack.c.b16 %v1070, %v1070
      %v1135 = vpack.c.b16 %v1071, %v1071
      %v1136 = vpack.c.b16 %v1072, %v1072
      %v1137 = vpack.c.b16 %v1073, %v1073
      %v1138 = vpack.c.b16 %v1074, %v1074
      %v1139 = vpack.c.b16 %v1075, %v1075
      %v1140 = vpack.c.b16 %v1076, %v1076
      %v1141 = vpack.c.b16 %v1077, %v1077
      %v1142 = vpack.c.b16 %v1078, %v1078
      %v1143 = vpack.c.b16 %v1079, %v1079
      %v1144 = vpack.c.b16 %v1080, %v1080
      %v1145 = vpack.c.b16 %v1081, %v1081
      %v1146 = vpack.c.b16 %v1082, %v1082
      %v1147 = vpack.c.b16 %v1083, %v1083
      %v1148 = vpack.c.b16 %v1084, %v1084
      %v1149 = vpack.c.b16 %v1085, %v1085
      %v1150 = vpack.c.b16 %v1086, %v1086
      %v1151 = vpack.c.b16 %v1087, %v1087
      %v1152 = vpack.c.b16 %v1088, %v1088
      %v1153 = vpack.c.b16 %v1089, %v1089
      %v1154 = vpack.c.b16 %v1090, %v1090
      %v1155 = vpack.c.b16 %v1091, %v1091
      %v1156 = vpack.c.b16 %v1092, %v1092
      %v1157 = vpack.c.b16 %v1093, %v1093
      %v1158 = vpack.c.b16 %v1094, %v1094
      %v1159 = vpack.c.b16 %v1095, %v1095
      %v1160 = vpack.c.b16 %v1096, %v1096
      %v1161 = vpack.c.b16 %v1097, %v1097
      %v1162 = vpack.c.b16 %v1098, %v1098
      %v1163 = vpack.c.b16 %v1099, %v1099
      %v1164 = vpack.c.b16 %v1100, %v1100
      %v1165 = vpack.c.b16 %v1101, %v1101
      %v1166 = vpack.c.b16 %v1102, %v1102
      %v1167 = vpack.c.b16 %v1103, %v1103
      %v1168 = vpack.c.b16 %v1104, %v1104
      %v1169 = vpack.c.b16 %v1105, %v1105
      %v1170 = vpack.c.b16 %v1106, %v1106
      %v1171 = vpack.c.b16 %v1107, %v1107
      %v1172 = vpack.c.b16 %v1108, %v1108
      %v1173 = vpack.c.b16 %v1109, %v1109
      %vm1238 = vcmask 519168
      %1239 = vst.msk [vmem:[%s145] sm:$0xf] %vm1238, %v1110
      %1240 = vst.msk [vmem:[%s145 + $0x4] sm:$0xf] %vm1238, %v1111
      %1241 = vst.msk [vmem:[%s145 + $0x8] sm:$0xf] %vm1238, %v1112
      %1242 = vst.msk [vmem:[%s145 + $0xc] sm:$0xf] %vm1238, %v1113
      %1243 = vst.msk [vmem:[%s145 + $0x10] sm:$0xf] %vm1238, %v1114
      %1244 = vst.msk [vmem:[%s145 + $0x14] sm:$0xf] %vm1238, %v1115
      %1245 = vst.msk [vmem:[%s145 + $0x18] sm:$0xf] %vm1238, %v1116
      %1246 = vst.msk [vmem:[%s145 + $0x1c] sm:$0xf] %vm1238, %v1117
      %1247 = vst.msk [vmem:[%s145 + $0x20] sm:$0xf] %vm1238, %v1118
      %1248 = vst.msk [vmem:[%s145 + $0x24] sm:$0xf] %vm1238, %v1119
      %1249 = vst.msk [vmem:[%s145 + $0x28] sm:$0xf] %vm1238, %v1120
      %1250 = vst.msk [vmem:[%s145 + $0x2c] sm:$0xf] %vm1238, %v1121
      %1251 = vst.msk [vmem:[%s145 + $0x30] sm:$0xf] %vm1238, %v1122
      %1252 = vst.msk [vmem:[%s145 + $0x34] sm:$0xf] %vm1238, %v1123
      %1253 = vst.msk [vmem:[%s145 + $0x38] sm:$0xf] %vm1238, %v1124
      %1254 = vst.msk [vmem:[%s145 + $0x3c] sm:$0xf] %vm1238, %v1125
      %1255 = vst.msk [vmem:[%s145 + $0x40] sm:$0xf] %vm1238, %v1126
      %1256 = vst.msk [vmem:[%s145 + $0x44] sm:$0xf] %vm1238, %v1127
      %1257 = vst.msk [vmem:[%s145 + $0x48] sm:$0xf] %vm1238, %v1128
      %1258 = vst.msk [vmem:[%s145 + $0x4c] sm:$0xf] %vm1238, %v1129
      %1259 = vst.msk [vmem:[%s145 + $0x50] sm:$0xf] %vm1238, %v1130
      %1260 = vst.msk [vmem:[%s145 + $0x54] sm:$0xf] %vm1238, %v1131
      %1261 = vst.msk [vmem:[%s145 + $0x58] sm:$0xf] %vm1238, %v1132
      %1262 = vst.msk [vmem:[%s145 + $0x5c] sm:$0xf] %vm1238, %v1133
      %1263 = vst.msk [vmem:[%s145 + $0x60] sm:$0xf] %vm1238, %v1134
      %1264 = vst.msk [vmem:[%s145 + $0x64] sm:$0xf] %vm1238, %v1135
      %1265 = vst.msk [vmem:[%s145 + $0x68] sm:$0xf] %vm1238, %v1136
      %1266 = vst.msk [vmem:[%s145 + $0x6c] sm:$0xf] %vm1238, %v1137
      %1267 = vst.msk [vmem:[%s145 + $0x70] sm:$0xf] %vm1238, %v1138
      %1268 = vst.msk [vmem:[%s145 + $0x74] sm:$0xf] %vm1238, %v1139
      %1269 = vst.msk [vmem:[%s145 + $0x78] sm:$0xf] %vm1238, %v1140
      %1270 = vst.msk [vmem:[%s145 + $0x7c] sm:$0xf] %vm1238, %v1141
      %1271 = vst.msk [vmem:[%s145 + $0x80] sm:$0xf] %vm1238, %v1142
      %1272 = vst.msk [vmem:[%s145 + $0x84] sm:$0xf] %vm1238, %v1143
      %1273 = vst.msk [vmem:[%s145 + $0x88] sm:$0xf] %vm1238, %v1144
      %1274 = vst.msk [vmem:[%s145 + $0x8c] sm:$0xf] %vm1238, %v1145
      %1275 = vst.msk [vmem:[%s145 + $0x90] sm:$0xf] %vm1238, %v1146
      %1276 = vst.msk [vmem:[%s145 + $0x94] sm:$0xf] %vm1238, %v1147
      %1277 = vst.msk [vmem:[%s145 + $0x98] sm:$0xf] %vm1238, %v1148
      %1278 = vst.msk [vmem:[%s145 + $0x9c] sm:$0xf] %vm1238, %v1149
      %1279 = vst.msk [vmem:[%s145 + $0xa0] sm:$0xf] %vm1238, %v1150
      %1280 = vst.msk [vmem:[%s145 + $0xa4] sm:$0xf] %vm1238, %v1151
      %1281 = vst.msk [vmem:[%s145 + $0xa8] sm:$0xf] %vm1238, %v1152
      %1282 = vst.msk [vmem:[%s145 + $0xac] sm:$0xf] %vm1238, %v1153
      %1283 = vst.msk [vmem:[%s145 + $0xb0] sm:$0xf] %vm1238, %v1154
      %1284 = vst.msk [vmem:[%s145 + $0xb4] sm:$0xf] %vm1238, %v1155
      %1285 = vst.msk [vmem:[%s145 + $0xb8] sm:$0xf] %vm1238, %v1156
      %1286 = vst.msk [vmem:[%s145 + $0xbc] sm:$0xf] %vm1238, %v1157
      %1287 = vst.msk [vmem:[%s145 + $0xc0] sm:$0xf] %vm1238, %v1158
      %1288 = vst.msk [vmem:[%s145 + $0xc4] sm:$0xf] %vm1238, %v1159
      %1289 = vst.msk [vmem:[%s145 + $0xc8] sm:$0xf] %vm1238, %v1160
      %1290 = vst.msk [vmem:[%s145 + $0xcc] sm:$0xf] %vm1238, %v1161
      %1291 = vst.msk [vmem:[%s145 + $0xd0] sm:$0xf] %vm1238, %v1162
      %1292 = vst.msk [vmem:[%s145 + $0xd4] sm:$0xf] %vm1238, %v1163
      %1293 = vst.msk [vmem:[%s145 + $0xd8] sm:$0xf] %vm1238, %v1164
      %1294 = vst.msk [vmem:[%s145 + $0xdc] sm:$0xf] %vm1238, %v1165
      %1295 = vst.msk [vmem:[%s145 + $0xe0] sm:$0xf] %vm1238, %v1166
      %1296 = vst.msk [vmem:[%s145 + $0xe4] sm:$0xf] %vm1238, %v1167
      %1297 = vst.msk [vmem:[%s145 + $0xe8] sm:$0xf] %vm1238, %v1168
      %1298 = vst.msk [vmem:[%s145 + $0xec] sm:$0xf] %vm1238, %v1169
      %1299 = vst.msk [vmem:[%s145 + $0xf0] sm:$0xf] %vm1238, %v1170
      %1300 = vst.msk [vmem:[%s145 + $0xf4] sm:$0xf] %vm1238, %v1171
      %1301 = vst.msk [vmem:[%s145 + $0xf8] sm:$0xf] %vm1238, %v1172
      %1302 = vst.msk [vmem:[%s145 + $0xfc] sm:$0xf] %vm1238, %v1173
      %s1303 = smul.u32 64, %s13
      %p1304 = scmp.lt.s32.totalorder %s1303, 255
      %s1305 = scalar_select %p1304, %s1303, 255
      %s1306 = smul.addr %s1305, 4
      %s1307 = scalar_lea.vmem %s2, %s1306
      // Predicated region
      $region29: #{discriminator_forward.7} parent=27 // pred_check
        %p1308 = pneg %p78
      $region30: #{discriminator_forward.7} parent=27 // pred_check_branch
        %1310 = sbr.rel (%p1308) target = $region32
      $region31: #{discriminator_forward.7} parent=27 // pred_region
        %s1311 = smul.u32 64, %s13
      $region32: #{discriminator_forward.7} parent=27 // pred_fallthru
        _
    $region28: #{discriminator_forward.7} parent=5 // pred_fallthru
      _
    %p1312 = scmp.le.s32.totalorder 2, %s8
    // Predicated region
    $region33: #{discriminator_forward.7} parent=5 // pred_check
      %p1313 = pneg %p1312
    $region34: #{discriminator_forward.7} parent=5 // pred_check_branch
      %1315 = sbr.rel (%p1313) target = $region36
    $region35: #{discriminator_forward.7} parent=5 // pred_region
      %s1316 = ssub.s32 %s8, 2
      // Predicated region
      $region37: #{discriminator_forward.7} parent=35 // pred_check
        %p1317 = pneg %p84
      $region38: #{discriminator_forward.7} parent=35 // pred_check_branch
        %1319 = sbr.rel (%p1317) target = $region40
      $region39: #{discriminator_forward.7} parent=35 // pred_region
        %s1320 = smul.u32 64, %s14
        %p1321 = scmp.lt.s32.totalorder %s1320, 255
        %s1322 = scalar_select %p1321, %s1320, 255
        %s1323 = smul.addr %s1322, 4
        %s1324 = scalar_lea.vmem %s2, %s1323
      $region40: #{discriminator_forward.7} parent=35 // pred_fallthru
        _
    $region36: #{discriminator_forward.7} parent=5 // pred_fallthru
      _
  $region6: #{discriminator_forward.7} parent=0 // loop_footer
    %s12 = sadd.s32 1, %s8
  $region7: #{discriminator_forward.7} parent=0 // loop_footer_branch
    %7 = sbr.rel target = $region3
  $region8: #{discriminator_forward.7} parent=0 // loop_exit
    _

// kernel: discriminator_forward.8
$region0: #{discriminator_forward.8}
  #allocation0 [shape = 'u32[]', space=smem, size = 0x4, offset = 0x4, fixed_abs, tag = 'smem constant byte address 0x4 - core index']
  #allocation1 [shape = 'u32[144,128]{1,0:T(1,128)}', space=vmem, size = 0x12000, scoped, tag = 'internal scratch']
  #allocation2 [shape = 'f32[512,128]{1,0:T(8,128)}', space=vmem, size = 0x40000, scoped, tag = 'scratch operand']
  %s0 = inlined_call_operand.vmem [shape: bf16[512,1024], index: 0, kind: input, shape index: {}]
  %s1 = inlined_call_operand.vmem [shape: bf16[1024,128], index: 1, kind: input, shape index: {}]
  %s2 = inlined_call_operand.vmem [shape: f32[1,128], index: 2, kind: input, shape index: {}]
  %s3 = inlined_call_operand.vmem [shape: f32[1,128], index: 3, kind: input, shape index: {}]
  %s4 = inlined_call_operand.vmem [shape: bf16[512,128], index: 4, kind: output, shape index: {}]
  %s5 = sld [smem:[#allocation0]]
  $region80: #{discriminator_forward.8} parent=0
    _
  %s7 = ssub.s32 1, %s5
  %s8 = scalar_select 0, %s7, %s5
  $region1: #{discriminator_forward.8} parent=0
    #allocation3 [shape = 'u8[1048576]{0}', space=vmem, size = 0x100000, scoped, tag = 'input window, operand 0']
    loop: start=0, step=1, limit=4
    $region2: #{discriminator_forward.8} parent=1 // loop_pre_header
      _
    $region3: #{discriminator_forward.8} parent=1 // loop_header
      %s10 = sphi 0, %s14
      %p11 = scmp.ge.s32.totalorder %s10, 4
      %s17 = sphi 0, %s29
      %s18 = sphi 0, %s25
      %s19 = sphi 0, %s17
      %s20 = sphi 0, %s18
      %s21 = sphi 0, %s19
      %s22 = sphi 0, %s20
      %s32 = sphi 0, %s34
      %s35 = sphi 0, %s32
      %s36 = sphi 0, %s35
      %s52 = sphi 0, %s36
      %s60 = sphi 0, %s62
      %s63 = sphi 0, %s60
      %s64 = sphi 0, %s63
      %s80 = sphi 0, %s64
      %s86 = sphi 0, %s88
      %s89 = sphi 0, %s86
      %s90 = sphi 0, %s89
      %s106 = sphi 0, %s90
      %s112 = sphi 0, %s114
      %s115 = sphi 0, %s112
      %s116 = sphi 0, %s115
      %s132 = sphi 0, %s116
      %s138 = sphi 0, %s140
      %s141 = sphi 0, %s138
      %s142 = sphi 0, %s141
      %s158 = sphi 0, %s142
    $region4: #{discriminator_forward.8} parent=1 // loop_header_branch
      %13 = sbr.rel (%p11) target = $region8
    $region5: #{discriminator_forward.8} parent=1 // loop_body
      %s15 = ssub.s32 %s10, 1
      %s16 = ssub.s32 %s10, 2
      %s23 = sadd.s32 1, %s18
      %p24 = scmp.ge.s32.totalorder %s23, 2
      %s25 = scalar_select %p24, 0, %s23
      %s26 = sadd.s32 1, %s17
      %s27 = scalar_select %p24, %s26, %s17
      %p28 = scmp.ge.s32.totalorder %s27, 1
      %s29 = scalar_select %p28, 0, %s27
      %s30 = ssub.s32 %s18, %s25
      %p31 = scmp.eq.s32.totalorder %s30, 0
      %s33 = sadd.s32 %s32, 1
      %s34 = scalar_select %p31, %s32, %s33
      %p37 = pneg %p31
      %p38 = scmp.eq.s32.totalorder %s10, 1
      %p39 = por %p37, %p38
      %p40 = scmp.ne.s32.totalorder %s32, %s35
      %p41 = scmp.eq.s32.totalorder %s10, 0
      %p42 = por %p40, %p41
      %p43 = scmp.ne.s32.totalorder %s32, %s35
      %p44 = scmp.eq.s32.totalorder %s15, 1
      %p45 = por %p43, %p44
      %p46 = scmp.ne.s32.totalorder %s35, %s36
      %p47 = scmp.eq.s32.totalorder %s15, 0
      %p48 = por %p46, %p47
      %p49 = scmp.ne.s32.totalorder %s35, %s36
      %p50 = scmp.eq.s32.totalorder %s16, 1
      %p51 = por %p49, %p50
      %p53 = scmp.ne.s32.totalorder %s36, %s52
      %p54 = scmp.eq.s32.totalorder %s16, 0
      %p55 = por %p53, %p54
      %s56 = ssub.s32 %s18, %s25
      %s57 = ssub.s32 %s17, %s29
      %s58 = sor.u32 %s56, %s57
      %p59 = scmp.eq.s32.totalorder %s58, 0
      %s61 = sadd.s32 %s60, 1
      %s62 = scalar_select %p59, %s60, %s61
      %p65 = pneg %p59
      %p66 = scmp.eq.s32.totalorder %s10, 1
      %p67 = por %p65, %p66
      %p68 = scmp.ne.s32.totalorder %s60, %s63
      %p69 = scmp.eq.s32.totalorder %s10, 0
      %p70 = por %p68, %p69
      %p71 = scmp.ne.s32.totalorder %s60, %s63
      %p72 = scmp.eq.s32.totalorder %s15, 1
      %p73 = por %p71, %p72
      %p74 = scmp.ne.s32.totalorder %s63, %s64
      %p75 = scmp.eq.s32.totalorder %s15, 0
      %p76 = por %p74, %p75
      %p77 = scmp.ne.s32.totalorder %s63, %s64
      %p78 = scmp.eq.s32.totalorder %s16, 1
      %p79 = por %p77, %p78
      %p81 = scmp.ne.s32.totalorder %s64, %s80
      %p82 = scmp.eq.s32.totalorder %s16, 0
      %p83 = por %p81, %p82
      %s84 = ssub.s32 %s17, %s29
      %p85 = scmp.eq.s32.totalorder %s84, 0
      %s87 = sadd.s32 %s86, 1
      %s88 = scalar_select %p85, %s86, %s87
      %p91 = pneg %p85
      %p92 = scmp.eq.s32.totalorder %s10, 1
      %p93 = por %p91, %p92
      %p94 = scmp.ne.s32.totalorder %s86, %s89
      %p95 = scmp.eq.s32.totalorder %s10, 0
      %p96 = por %p94, %p95
      %p97 = scmp.ne.s32.totalorder %s86, %s89
      %p98 = scmp.eq.s32.totalorder %s15, 1
      %p99 = por %p97, %p98
      %p100 = scmp.ne.s32.totalorder %s89, %s90
      %p101 = scmp.eq.s32.totalorder %s15, 0
      %p102 = por %p100, %p101
      %p103 = scmp.ne.s32.totalorder %s89, %s90
      %p104 = scmp.eq.s32.totalorder %s16, 1
      %p105 = por %p103, %p104
      %p107 = scmp.ne.s32.totalorder %s90, %s106
      %p108 = scmp.eq.s32.totalorder %s16, 0
      %p109 = por %p107, %p108
      %s110 = ssub.s32 %s17, %s29
      %p111 = scmp.eq.s32.totalorder %s110, 0
      %s113 = sadd.s32 %s112, 1
      %s114 = scalar_select %p111, %s112, %s113
      %p117 = pneg %p111
      %p118 = scmp.eq.s32.totalorder %s10, 1
      %p119 = por %p117, %p118
      %p120 = scmp.ne.s32.totalorder %s112, %s115
      %p121 = scmp.eq.s32.totalorder %s10, 0
      %p122 = por %p120, %p121
      %p123 = scmp.ne.s32.totalorder %s112, %s115
      %p124 = scmp.eq.s32.totalorder %s15, 1
      %p125 = por %p123, %p124
      %p126 = scmp.ne.s32.totalorder %s115, %s116
      %p127 = scmp.eq.s32.totalorder %s15, 0
      %p128 = por %p126, %p127
      %p129 = scmp.ne.s32.totalorder %s115, %s116
      %p130 = scmp.eq.s32.totalorder %s16, 1
      %p131 = por %p129, %p130
      %p133 = scmp.ne.s32.totalorder %s116, %s132
      %p134 = scmp.eq.s32.totalorder %s16, 0
      %p135 = por %p133, %p134
      %s136 = ssub.s32 %s17, %s29
      %p137 = scmp.eq.s32.totalorder %s136, 0
      %s139 = sadd.s32 %s138, 1
      %s140 = scalar_select %p137, %s138, %s139
      %p143 = pneg %p137
      %p144 = scmp.eq.s32.totalorder %s10, 1
      %p145 = por %p143, %p144
      %p146 = scmp.ne.s32.totalorder %s138, %s141
      %p147 = scmp.eq.s32.totalorder %s10, 0
      %p148 = por %p146, %p147
      %p149 = scmp.ne.s32.totalorder %s138, %s141
      %p150 = scmp.eq.s32.totalorder %s15, 1
      %p151 = por %p149, %p150
      %p152 = scmp.ne.s32.totalorder %s141, %s142
      %p153 = scmp.eq.s32.totalorder %s15, 0
      %p154 = por %p152, %p153
      %p155 = scmp.ne.s32.totalorder %s141, %s142
      %p156 = scmp.eq.s32.totalorder %s16, 1
      %p157 = por %p155, %p156
      %p159 = scmp.ne.s32.totalorder %s142, %s158
      %p160 = scmp.eq.s32.totalorder %s16, 0
      %p161 = por %p159, %p160
      %p162 = scmp.le.s32.totalorder 1, %s10
      %p163 = scmp.lt.s32.totalorder %s10, 3
      %p164 = pnand %p162, %p163
      %p165 = pneg %p164
      // Predicated region
      $region9: #{discriminator_forward.8} parent=5 // pred_check
        _
      $region10: #{discriminator_forward.8} parent=5 // pred_check_branch
        %167 = sbr.rel (%p164) target = $region12
      $region11: #{discriminator_forward.8} parent=5 // pred_region
        %s168 = ssub.s32 %s10, 1
        // Predicated region
        $region13: #{discriminator_forward.8} parent=11 // pred_check
          %p169 = pneg %p102
        $region14: #{discriminator_forward.8} parent=11 // pred_check_branch
          %171 = sbr.rel (%p169) target = $region16
        $region15: #{discriminator_forward.8} parent=11 // pred_region
          %p172 = scmp.lt.s32.totalorder %s19, 0
          %s173 = scalar_select %p172, %s19, 0
          %s174 = scalar_lea.vmem %s2, %s173
        $region16: #{discriminator_forward.8} parent=11 // pred_fallthru
          _
        // Predicated region
        $region17: #{discriminator_forward.8} parent=11 // pred_check
          %p175 = pneg %p128
        $region18: #{discriminator_forward.8} parent=11 // pred_check_branch
          %177 = sbr.rel (%p175) target = $region20
        $region19: #{discriminator_forward.8} parent=11 // pred_region
          %p178 = scmp.lt.s32.totalorder %s19, 0
          %s179 = scalar_select %p178, %s19, 0
          %s180 = scalar_lea.vmem %s3, %s179
        $region20: #{discriminator_forward.8} parent=11 // pred_fallthru
          _
      $region12: #{discriminator_forward.8} parent=5 // pred_fallthru
        _
      %p181 = scmp.lt.s32.totalorder %s10, 2
      // Predicated region
      $region21: #{discriminator_forward.8} parent=5 // pred_check
        %p182 = pneg %p181
      $region22: #{discriminator_forward.8} parent=5 // pred_check_branch
        %184 = sbr.rel (%p182) target = $region24
      $region23: #{discriminator_forward.8} parent=5 // pred_region
        // Predicated region
        $region25: #{discriminator_forward.8} parent=23 // pred_check
          %p185 = pneg %p42
        $region26: #{discriminator_forward.8} parent=23 // pred_check_branch
          %187 = sbr.rel (%p185) target = $region28
        $region27: #{discriminator_forward.8} parent=23 // pred_region
          %s188 = sand.u32 %s32, 1
          %s189 = sand.u32 %s32, 1
          %s190 = smul.addr %s189, 1024
          %s191 = scalar_lea.vmem [#allocation3], %s190
          %s192 = smul.u32 4, %s18
          %s193 = smul.addr %s192, 4
          %s194 = scalar_lea.vmem %s0, %s193
          // Predicated region
          $region29: #{discriminator_forward.8} parent=27 // pred_check
            _
          $region30: #{discriminator_forward.8} parent=27 // pred_check_branch
            %196 = sbr.rel (0) target = $region32
          $region31: #{discriminator_forward.8} parent=27 // pred_region
            // Predicated region
            $region33: #{discriminator_forward.8} parent=31 // pred_check
              _
            $region34: #{discriminator_forward.8} parent=31 // pred_check_branch
              %198 = sbr.rel (0) target = $region36
            $region35: #{discriminator_forward.8} parent=31 // pred_region
              loop: start=0, step=1, limit=1
              $region37: #{discriminator_forward.8} parent=35 // loop_pre_header
                _
              $region38: #{discriminator_forward.8} parent=35 // loop_header
                %s200 = sphi 0, %s204
                %p201 = scmp.ge.s32.totalorder %s200, 1
                %s205 = sphi %s194, %s194
                %s206 = sphi %s191, %s191
              $region39: #{discriminator_forward.8} parent=35 // loop_header_branch
                %203 = sbr.rel (%p201) target = $region43
              $region40: #{discriminator_forward.8} parent=35 // loop_body
                %v207 = vld [vmem:[%s205] sm:$0xff]
                %208 = vst [vmem:[%s206] sm:$0xff] %v207
                %v209 = vld [vmem:[%s205 + $0x8] sm:$0xff]
                %210 = vst [vmem:[%s206 + $0x8] sm:$0xff] %v209
                %v211 = vld [vmem:[%s205 + $0x20] sm:$0xff]
                %212 = vst [vmem:[%s206 + $0x10] sm:$0xff] %v211
                %v213 = vld [vmem:[%s205 + $0x28] sm:$0xff]
                %214 = vst [vmem:[%s206 + $0x18] sm:$0xff] %v213
                %v215 = vld [vmem:[%s205 + $0x40] sm:$0xff]
                %216 = vst [vmem:[%s206 + $0x20] sm:$0xff] %v215
                %v217 = vld [vmem:[%s205 + $0x48] sm:$0xff]
                %218 = vst [vmem:[%s206 + $0x28] sm:$0xff] %v217
                %v219 = vld [vmem:[%s205 + $0x60] sm:$0xff]
                %220 = vst [vmem:[%s206 + $0x30] sm:$0xff] %v219
                %v221 = vld [vmem:[%s205 + $0x68] sm:$0xff]
                %222 = vst [vmem:[%s206 + $0x38] sm:$0xff] %v221
                %v223 = vld [vmem:[%s205 + $0x80] sm:$0xff]
                %224 = vst [vmem:[%s206 + $0x40] sm:$0xff] %v223
                %v225 = vld [vmem:[%s205 + $0x88] sm:$0xff]
                %226 = vst [vmem:[%s206 + $0x48] sm:$0xff] %v225
                %v227 = vld [vmem:[%s205 + $0xa0] sm:$0xff]
                %228 = vst [vmem:[%s206 + $0x50] sm:$0xff] %v227
                %v229 = vld [vmem:[%s205 + $0xa8] sm:$0xff]
                %230 = vst [vmem:[%s206 + $0x58] sm:$0xff] %v229
                %v231 = vld [vmem:[%s205 + $0xc0] sm:$0xff]
                %232 = vst [vmem:[%s206 + $0x60] sm:$0xff] %v231
                %v233 = vld [vmem:[%s205 + $0xc8] sm:$0xff]
                %234 = vst [vmem:[%s206 + $0x68] sm:$0xff] %v233
                %v235 = vld [vmem:[%s205 + $0xe0] sm:$0xff]
                %236 = vst [vmem:[%s206 + $0x70] sm:$0xff] %v235
                %v237 = vld [vmem:[%s205 + $0xe8] sm:$0xff]
                %238 = vst [vmem:[%s206 + $0x78] sm:$0xff] %v237
                %v239 = vld [vmem:[%s205 + $0x100] sm:$0xff]
                %240 = vst [vmem:[%s206 + $0x80] sm:$0xff] %v239
                %v241 = vld [vmem:[%s205 + $0x108] sm:$0xff]
                %242 = vst [vmem:[%s206 + $0x88] sm:$0xff] %v241
                %v243 = vld [vmem:[%s205 + $0x120] sm:$0xff]
                %244 = vst [vmem:[%s206 + $0x90] sm:$0xff] %v243
                %v245 = vld [vmem:[%s205 + $0x128] sm:$0xff]
                %246 = vst [vmem:[%s206 + $0x98] sm:$0xff] %v245
                %v247 = vld [vmem:[%s205 + $0x140] sm:$0xff]
                %248 = vst [vmem:[%s206 + $0xa0] sm:$0xff] %v247
                %v249 = vld [vmem:[%s205 + $0x148] sm:$0xff]
                %250 = vst [vmem:[%s206 + $0xa8] sm:$0xff] %v249
                %v251 = vld [vmem:[%s205 + $0x160] sm:$0xff]
                %252 = vst [vmem:[%s206 + $0xb0] sm:$0xff] %v251
                %v253 = vld [vmem:[%s205 + $0x168] sm:$0xff]
                %254 = vst [vmem:[%s206 + $0xb8] sm:$0xff] %v253
                %v255 = vld [vmem:[%s205 + $0x180] sm:$0xff]
                %256 = vst [vmem:[%s206 + $0xc0] sm:$0xff] %v255
                %v257 = vld [vmem:[%s205 + $0x188] sm:$0xff]
                %258 = vst [vmem:[%s206 + $0xc8] sm:$0xff] %v257
                %v259 = vld [vmem:[%s205 + $0x1a0] sm:$0xff]
                %260 = vst [vmem:[%s206 + $0xd0] sm:$0xff] %v259
                %v261 = vld [vmem:[%s205 + $0x1a8] sm:$0xff]
                %262 = vst [vmem:[%s206 + $0xd8] sm:$0xff] %v261
                %v263 = vld [vmem:[%s205 + $0x1c0] sm:$0xff]
                %264 = vst [vmem:[%s206 + $0xe0] sm:$0xff] %v263
                %v265 = vld [vmem:[%s205 + $0x1c8] sm:$0xff]
                %266 = vst [vmem:[%s206 + $0xe8] sm:$0xff] %v265
                %v267 = vld [vmem:[%s205 + $0x1e0] sm:$0xff]
                %268 = vst [vmem:[%s206 + $0xf0] sm:$0xff] %v267
                %v269 = vld [vmem:[%s205 + $0x1e8] sm:$0xff]
                %270 = vst [vmem:[%s206 + $0xf8] sm:$0xff] %v269
                %v271 = vld [vmem:[%s205 + $0x200] sm:$0xff]
                %272 = vst [vmem:[%s206 + $0x100] sm:$0xff] %v271
                %v273 = vld [vmem:[%s205 + $0x208] sm:$0xff]
                %274 = vst [vmem:[%s206 + $0x108] sm:$0xff] %v273
                %v275 = vld [vmem:[%s205 + $0x220] sm:$0xff]
                %276 = vst [vmem:[%s206 + $0x110] sm:$0xff] %v275
                %v277 = vld [vmem:[%s205 + $0x228] sm:$0xff]
                %278 = vst [vmem:[%s206 + $0x118] sm:$0xff] %v277
                %v279 = vld [vmem:[%s205 + $0x240] sm:$0xff]
                %280 = vst [vmem:[%s206 + $0x120] sm:$0xff] %v279
                %v281 = vld [vmem:[%s205 + $0x248] sm:$0xff]
                %282 = vst [vmem:[%s206 + $0x128] sm:$0xff] %v281
                %v283 = vld [vmem:[%s205 + $0x260] sm:$0xff]
                %284 = vst [vmem:[%s206 + $0x130] sm:$0xff] %v283
                %v285 = vld [vmem:[%s205 + $0x268] sm:$0xff]
                %286 = vst [vmem:[%s206 + $0x138] sm:$0xff] %v285
                %v287 = vld [vmem:[%s205 + $0x280] sm:$0xff]
                %288 = vst [vmem:[%s206 + $0x140] sm:$0xff] %v287
                %v289 = vld [vmem:[%s205 + $0x288] sm:$0xff]
                %290 = vst [vmem:[%s206 + $0x148] sm:$0xff] %v289
                %v291 = vld [vmem:[%s205 + $0x2a0] sm:$0xff]
                %292 = vst [vmem:[%s206 + $0x150] sm:$0xff] %v291
                %v293 = vld [vmem:[%s205 + $0x2a8] sm:$0xff]
                %294 = vst [vmem:[%s206 + $0x158] sm:$0xff] %v293
                %v295 = vld [vmem:[%s205 + $0x2c0] sm:$0xff]
                %296 = vst [vmem:[%s206 + $0x160] sm:$0xff] %v295
                %v297 = vld [vmem:[%s205 + $0x2c8] sm:$0xff]
                %298 = vst [vmem:[%s206 + $0x168] sm:$0xff] %v297
                %v299 = vld [vmem:[%s205 + $0x2e0] sm:$0xff]
                %300 = vst [vmem:[%s206 + $0x170] sm:$0xff] %v299
                %v301 = vld [vmem:[%s205 + $0x2e8] sm:$0xff]
                %302 = vst [vmem:[%s206 + $0x178] sm:$0xff] %v301
                %v303 = vld [vmem:[%s205 + $0x300] sm:$0xff]
                %304 = vst [vmem:[%s206 + $0x180] sm:$0xff] %v303
                %v305 = vld [vmem:[%s205 + $0x308] sm:$0xff]
                %306 = vst [vmem:[%s206 + $0x188] sm:$0xff] %v305
                %v307 = vld [vmem:[%s205 + $0x320] sm:$0xff]
                %308 = vst [vmem:[%s206 + $0x190] sm:$0xff] %v307
                %v309 = vld [vmem:[%s205 + $0x328] sm:$0xff]
                %310 = vst [vmem:[%s206 + $0x198] sm:$0xff] %v309
                %v311 = vld [vmem:[%s205 + $0x340] sm:$0xff]
                %312 = vst [vmem:[%s206 + $0x1a0] sm:$0xff] %v311
                %v313 = vld [vmem:[%s205 + $0x348] sm:$0xff]
                %314 = vst [vmem:[%s206 + $0x1a8] sm:$0xff] %v313
                %v315 = vld [vmem:[%s205 + $0x360] sm:$0xff]
                %316 = vst [vmem:[%s206 + $0x1b0] sm:$0xff] %v315
                %v317 = vld [vmem:[%s205 + $0x368] sm:$0xff]
                %318 = vst [vmem:[%s206 + $0x1b8] sm:$0xff] %v317
                %v319 = vld [vmem:[%s205 + $0x380] sm:$0xff]
                %320 = vst [vmem:[%s206 + $0x1c0] sm:$0xff] %v319
                %v321 = vld [vmem:[%s205 + $0x388] sm:$0xff]
                %322 = vst [vmem:[%s206 + $0x1c8] sm:$0xff] %v321
                %v323 = vld [vmem:[%s205 + $0x3a0] sm:$0xff]
                %324 = vst [vmem:[%s206 + $0x1d0] sm:$0xff] %v323
                %v325 = vld [vmem:[%s205 + $0x3a8] sm:$0xff]
                %326 = vst [vmem:[%s206 + $0x1d8] sm:$0xff] %v325
                %v327 = vld [vmem:[%s205 + $0x3c0] sm:$0xff]
                %328 = vst [vmem:[%s206 + $0x1e0] sm:$0xff] %v327
                %v329 = vld [vmem:[%s205 + $0x3c8] sm:$0xff]
                %330 = vst [vmem:[%s206 + $0x1e8] sm:$0xff] %v329
                %v331 = vld [vmem:[%s205 + $0x3e0] sm:$0xff]
                %332 = vst [vmem:[%s206 + $0x1f0] sm:$0xff] %v331
                %v333 = vld [vmem:[%s205 + $0x3e8] sm:$0xff]
                %334 = vst [vmem:[%s206 + $0x1f8] sm:$0xff] %v333
                %v335 = vld [vmem:[%s205 + $0x400] sm:$0xff]
                %336 = vst [vmem:[%s206 + $0x200] sm:$0xff] %v335
                %v337 = vld [vmem:[%s205 + $0x408] sm:$0xff]
                %338 = vst [vmem:[%s206 + $0x208] sm:$0xff] %v337
                %v339 = vld [vmem:[%s205 + $0x420] sm:$0xff]
                %340 = vst [vmem:[%s206 + $0x210] sm:$0xff] %v339
                %v341 = vld [vmem:[%s205 + $0x428] sm:$0xff]
                %342 = vst [vmem:[%s206 + $0x218] sm:$0xff] %v341
                %v343 = vld [vmem:[%s205 + $0x440] sm:$0xff]
                %344 = vst [vmem:[%s206 + $0x220] sm:$0xff] %v343
                %v345 = vld [vmem:[%s205 + $0x448] sm:$0xff]
                %346 = vst [vmem:[%s206 + $0x228] sm:$0xff] %v345
                %v347 = vld [vmem:[%s205 + $0x460] sm:$0xff]
                %348 = vst [vmem:[%s206 + $0x230] sm:$0xff] %v347
                %v349 = vld [vmem:[%s205 + $0x468] sm:$0xff]
                %350 = vst [vmem:[%s206 + $0x238] sm:$0xff] %v349
                %v351 = vld [vmem:[%s205 + $0x480] sm:$0xff]
                %352 = vst [vmem:[%s206 + $0x240] sm:$0xff] %v351
                %v353 = vld [vmem:[%s205 + $0x488] sm:$0xff]
                %354 = vst [vmem:[%s206 + $0x248] sm:$0xff] %v353
                %v355 = vld [vmem:[%s205 + $0x4a0] sm:$0xff]
                %356 = vst [vmem:[%s206 + $0x250] sm:$0xff] %v355
                %v357 = vld [vmem:[%s205 + $0x4a8] sm:$0xff]
                %358 = vst [vmem:[%s206 + $0x258] sm:$0xff] %v357
                %v359 = vld [vmem:[%s205 + $0x4c0] sm:$0xff]
                %360 = vst [vmem:[%s206 + $0x260] sm:$0xff] %v359
                %v361 = vld [vmem:[%s205 + $0x4c8] sm:$0xff]
                %362 = vst [vmem:[%s206 + $0x268] sm:$0xff] %v361
                %v363 = vld [vmem:[%s205 + $0x4e0] sm:$0xff]
                %364 = vst [vmem:[%s206 + $0x270] sm:$0xff] %v363
                %v365 = vld [vmem:[%s205 + $0x4e8] sm:$0xff]
                %366 = vst [vmem:[%s206 + $0x278] sm:$0xff] %v365
                %v367 = vld [vmem:[%s205 + $0x500] sm:$0xff]
                %368 = vst [vmem:[%s206 + $0x280] sm:$0xff] %v367
                %v369 = vld [vmem:[%s205 + $0x508] sm:$0xff]
                %370 = vst [vmem:[%s206 + $0x288] sm:$0xff] %v369
                %v371 = vld [vmem:[%s205 + $0x520] sm:$0xff]
                %372 = vst [vmem:[%s206 + $0x290] sm:$0xff] %v371
                %v373 = vld [vmem:[%s205 + $0x528] sm:$0xff]
                %374 = vst [vmem:[%s206 + $0x298] sm:$0xff] %v373
                %v375 = vld [vmem:[%s205 + $0x540] sm:$0xff]
                %376 = vst [vmem:[%s206 + $0x2a0] sm:$0xff] %v375
                %v377 = vld [vmem:[%s205 + $0x548] sm:$0xff]
                %378 = vst [vmem:[%s206 + $0x2a8] sm:$0xff] %v377
                %v379 = vld [vmem:[%s205 + $0x560] sm:$0xff]
                %380 = vst [vmem:[%s206 + $0x2b0] sm:$0xff] %v379
                %v381 = vld [vmem:[%s205 + $0x568] sm:$0xff]
                %382 = vst [vmem:[%s206 + $0x2b8] sm:$0xff] %v381
                %v383 = vld [vmem:[%s205 + $0x580] sm:$0xff]
                %384 = vst [vmem:[%s206 + $0x2c0] sm:$0xff] %v383
                %v385 = vld [vmem:[%s205 + $0x588] sm:$0xff]
                %386 = vst [vmem:[%s206 + $0x2c8] sm:$0xff] %v385
                %v387 = vld [vmem:[%s205 + $0x5a0] sm:$0xff]
                %388 = vst [vmem:[%s206 + $0x2d0] sm:$0xff] %v387
                %v389 = vld [vmem:[%s205 + $0x5a8] sm:$0xff]
                %390 = vst [vmem:[%s206 + $0x2d8] sm:$0xff] %v389
                %v391 = vld [vmem:[%s205 + $0x5c0] sm:$0xff]
                %392 = vst [vmem:[%s206 + $0x2e0] sm:$0xff] %v391
                %v393 = vld [vmem:[%s205 + $0x5c8] sm:$0xff]
                %394 = vst [vmem:[%s206 + $0x2e8] sm:$0xff] %v393
                %v395 = vld [vmem:[%s205 + $0x5e0] sm:$0xff]
                %396 = vst [vmem:[%s206 + $0x2f0] sm:$0xff] %v395
                %v397 = vld [vmem:[%s205 + $0x5e8] sm:$0xff]
                %398 = vst [vmem:[%s206 + $0x2f8] sm:$0xff] %v397
                %v399 = vld [vmem:[%s205 + $0x600] sm:$0xff]
                %400 = vst [vmem:[%s206 + $0x300] sm:$0xff] %v399
                %v401 = vld [vmem:[%s205 + $0x608] sm:$0xff]
                %402 = vst [vmem:[%s206 + $0x308] sm:$0xff] %v401
                %v403 = vld [vmem:[%s205 + $0x620] sm:$0xff]
                %404 = vst [vmem:[%s206 + $0x310] sm:$0xff] %v403
                %v405 = vld [vmem:[%s205 + $0x628] sm:$0xff]
                %406 = vst [vmem:[%s206 + $0x318] sm:$0xff] %v405
                %v407 = vld [vmem:[%s205 + $0x640] sm:$0xff]
                %408 = vst [vmem:[%s206 + $0x320] sm:$0xff] %v407
                %v409 = vld [vmem:[%s205 + $0x648] sm:$0xff]
                %410 = vst [vmem:[%s206 + $0x328] sm:$0xff] %v409
                %v411 = vld [vmem:[%s205 + $0x660] sm:$0xff]
                %412 = vst [vmem:[%s206 + $0x330] sm:$0xff] %v411
                %v413 = vld [vmem:[%s205 + $0x668] sm:$0xff]
                %414 = vst [vmem:[%s206 + $0x338] sm:$0xff] %v413
                %v415 = vld [vmem:[%s205 + $0x680] sm:$0xff]
                %416 = vst [vmem:[%s206 + $0x340] sm:$0xff] %v415
                %v417 = vld [vmem:[%s205 + $0x688] sm:$0xff]
                %418 = vst [vmem:[%s206 + $0x348] sm:$0xff] %v417
                %v419 = vld [vmem:[%s205 + $0x6a0] sm:$0xff]
                %420 = vst [vmem:[%s206 + $0x350] sm:$0xff] %v419
                %v421 = vld [vmem:[%s205 + $0x6a8] sm:$0xff]
                %422 = vst [vmem:[%s206 + $0x358] sm:$0xff] %v421
                %v423 = vld [vmem:[%s205 + $0x6c0] sm:$0xff]
                %424 = vst [vmem:[%s206 + $0x360] sm:$0xff] %v423
                %v425 = vld [vmem:[%s205 + $0x6c8] sm:$0xff]
                %426 = vst [vmem:[%s206 + $0x368] sm:$0xff] %v425
                %v427 = vld [vmem:[%s205 + $0x6e0] sm:$0xff]
                %428 = vst [vmem:[%s206 + $0x370] sm:$0xff] %v427
                %v429 = vld [vmem:[%s205 + $0x6e8] sm:$0xff]
                %430 = vst [vmem:[%s206 + $0x378] sm:$0xff] %v429
                %v431 = vld [vmem:[%s205 + $0x700] sm:$0xff]
                %432 = vst [vmem:[%s206 + $0x380] sm:$0xff] %v431
                %v433 = vld [vmem:[%s205 + $0x708] sm:$0xff]
                %434 = vst [vmem:[%s206 + $0x388] sm:$0xff] %v433
                %v435 = vld [vmem:[%s205 + $0x720] sm:$0xff]
                %436 = vst [vmem:[%s206 + $0x390] sm:$0xff] %v435
                %v437 = vld [vmem:[%s205 + $0x728] sm:$0xff]
                %438 = vst [vmem:[%s206 + $0x398] sm:$0xff] %v437
                %v439 = vld [vmem:[%s205 + $0x740] sm:$0xff]
                %440 = vst [vmem:[%s206 + $0x3a0] sm:$0xff] %v439
                %v441 = vld [vmem:[%s205 + $0x748] sm:$0xff]
                %442 = vst [vmem:[%s206 + $0x3a8] sm:$0xff] %v441
                %v443 = vld [vmem:[%s205 + $0x760] sm:$0xff]
                %444 = vst [vmem:[%s206 + $0x3b0] sm:$0xff] %v443
                %v445 = vld [vmem:[%s205 + $0x768] sm:$0xff]
                %446 = vst [vmem:[%s206 + $0x3b8] sm:$0xff] %v445
                %v447 = vld [vmem:[%s205 + $0x780] sm:$0xff]
                %448 = vst [vmem:[%s206 + $0x3c0] sm:$0xff] %v447
                %v449 = vld [vmem:[%s205 + $0x788] sm:$0xff]
                %450 = vst [vmem:[%s206 + $0x3c8] sm:$0xff] %v449
                %v451 = vld [vmem:[%s205 + $0x7a0] sm:$0xff]
                %452 = vst [vmem:[%s206 + $0x3d0] sm:$0xff] %v451
                %v453 = vld [vmem:[%s205 + $0x7a8] sm:$0xff]
                %454 = vst [vmem:[%s206 + $0x3d8] sm:$0xff] %v453
                %v455 = vld [vmem:[%s205 + $0x7c0] sm:$0xff]
                %456 = vst [vmem:[%s206 + $0x3e0] sm:$0xff] %v455
                %v457 = vld [vmem:[%s205 + $0x7c8] sm:$0xff]
                %458 = vst [vmem:[%s206 + $0x3e8] sm:$0xff] %v457
                %v459 = vld [vmem:[%s205 + $0x7e0] sm:$0xff]
                %460 = vst [vmem:[%s206 + $0x3f0] sm:$0xff] %v459
                %v461 = vld [vmem:[%s205 + $0x7e8] sm:$0xff]
                %462 = vst [vmem:[%s206 + $0x3f8] sm:$0xff] %v461
              $region41: #{discriminator_forward.8} parent=35 // loop_footer
                %s204 = sadd.s32 1, %s200
              $region42: #{discriminator_forward.8} parent=35 // loop_footer_branch
                %199 = sbr.rel target = $region38
              $region43: #{discriminator_forward.8} parent=35 // loop_exit
                _
            $region36: #{discriminator_forward.8} parent=31 // pred_fallthru
              _
            // Predicated region
            $region44: #{discriminator_forward.8} parent=31 // pred_check
              _
            $region45: #{discriminator_forward.8} parent=31 // pred_check_branch
              %464 = sbr.rel target = $region47
            $region46: #{discriminator_forward.8} parent=31 // pred_region
              _
            $region47: #{discriminator_forward.8} parent=31 // pred_fallthru
              _
          $region32: #{discriminator_forward.8} parent=27 // pred_fallthru
            _
          %465 = vnop
        $region28: #{discriminator_forward.8} parent=23 // pred_fallthru
          _
        // Predicated region
        $region48: #{discriminator_forward.8} parent=23 // pred_check
          %p466 = pneg %p70
        $region49: #{discriminator_forward.8} parent=23 // pred_check_branch
          %468 = sbr.rel (%p466) target = $region51
        $region50: #{discriminator_forward.8} parent=23 // pred_region
          %s469 = smul.u32 64, %s18
          %p470 = scmp.lt.s32.totalorder %s469, 127
          %s471 = scalar_select %p470, %s469, 127
          %p472 = scmp.lt.s32.totalorder %s17, 0
          %s473 = scalar_select %p472, %s17, 0
          %s474 = sadd.s32 %s473, %s471
          %s475 = smul.addr %s474, 4
          %s476 = scalar_lea.vmem %s1, %s475
          %s477 = smul.u32 64, %s18
        $region51: #{discriminator_forward.8} parent=23 // pred_fallthru
          _
      $region24: #{discriminator_forward.8} parent=5 // pred_fallthru
        _
      %p478 = scmp.le.s32.totalorder 1, %s10
      %p479 = scmp.lt.s32.totalorder %s10, 3
      %p480 = pnand %p478, %p479
      %p481 = pneg %p480
      // Predicated region
      $region52: #{discriminator_forward.8} parent=5 // pred_check
        _
      $region53: #{discriminator_forward.8} parent=5 // pred_check_branch
        %483 = sbr.rel (%p480) target = $region55
      $region54: #{discriminator_forward.8} parent=5 // pred_region
        %s484 = ssub.s32 %s10, 1
        %s485 = sand.u32 %s35, 1
        %s486 = sand.u32 %s35, 1
        %s487 = smul.addr %s486, 1024
        %s488 = scalar_lea.vmem [#allocation3], %s487
        // Predicated region
        $region56: #{discriminator_forward.8} parent=54 // pred_check
          %p489 = pneg %p48
        $region57: #{discriminator_forward.8} parent=54 // pred_check_branch
          %491 = sbr.rel (%p489) target = $region59
        $region58: #{discriminator_forward.8} parent=54 // pred_region
          _
        $region59: #{discriminator_forward.8} parent=54 // pred_fallthru
          _
        %s492 = sand.u32 %s35, 1
        %s493 = sand.u32 %s35, 1
        %s494 = smul.addr %s493, 1024
        %s495 = scalar_lea.vmem [#allocation3], %s494
        %p496 = pneg %p48
        %p497 = pneg %p45
        %s498 = smul.u32 64, %s20
        %p499 = scmp.lt.s32.totalorder %s498, 127
        %s500 = scalar_select %p499, %s498, 127
        %p501 = scmp.lt.s32.totalorder %s19, 0
        %s502 = scalar_select %p501, %s19, 0
        %s503 = sadd.s32 %s502, %s500
        %s504 = smul.addr %s503, 4
        %s505 = scalar_lea.vmem %s1, %s504
        %p506 = pneg %p76
        %p507 = pneg %p73
        %p508 = scmp.lt.s32.totalorder %s19, 0
        %s509 = scalar_select %p508, %s19, 0
        %s510 = scalar_lea.vmem %s2, %s509
        %p511 = pneg %p102
        %p512 = pneg %p99
        %p513 = scmp.lt.s32.totalorder %s19, 0
        %s514 = scalar_select %p513, %s19, 0
        %s515 = scalar_lea.vmem %s3, %s514
        %p516 = pneg %p128
        %p517 = pneg %p125
        %p518 = pneg %p154
        %p519 = pneg %p151
        %p520 = scmp.lt.s32.totalorder %s19, 0
        %s521 = scalar_select %p520, %s19, 0
        %s522 = smul.addr %s521, 4
        %s523 = scalar_lea.vmem %s4, %s522
        %s524 = smul.u32 4, %s20
        %s525 = smul.u32 64, %s20
        %p526 = scmp.lt.s32.totalorder %s525, 127
        %s527 = scalar_select %p526, %s525, 127
        %p528 = scmp.lt.s32.totalorder %s19, 0
        %s529 = scalar_select %p528, %s19, 0
        %s530 = sadd.s32 %s529, %s527
        %s531 = smul.addr %s530, 4
        %s532 = scalar_lea.vmem %s1, %s531
        %s533 = smul.u32 64, %s20
        %p534 = scmp.lt.s32.totalorder %s19, 0
        %s535 = scalar_select %p534, %s19, 0
        %s536 = scalar_lea.vmem %s2, %s535
        %p537 = scmp.lt.s32.totalorder %s19, 0
        %s538 = scalar_select %p537, %s19, 0
        %s539 = scalar_lea.vmem %s3, %s538
        %p540 = scmp.lt.s32.totalorder %s19, 0
        %s541 = scalar_select %p540, %s19, 0
        %s542 = smul.addr %s541, 4
        %s543 = scalar_lea.vmem %s4, %s542
        %p545 = scmp.eq.s32.totalorder %s20, 0
        // Predicated region
        $region60: #{discriminator_forward.8} parent=54 // pred_check
          %p546 = pneg %p545
        $region61: #{discriminator_forward.8} parent=54 // pred_check_branch
          %548 = sbr.rel (%p546) target = $region63
        $region62: #{discriminator_forward.8} parent=54 // pred_region
          %549 = vst [vmem:[#allocation2] sm:$0xff] 0.0
          %550 = vst [vmem:[#allocation2 + $0x8] sm:$0xff] 0.0
          %551 = vst [vmem:[#allocation2 + $0x10] sm:$0xff] 0.0
          %552 = vst [vmem:[#allocation2 + $0x18] sm:$0xff] 0.0
          %553 = vst [vmem:[#allocation2 + $0x20] sm:$0xff] 0.0
          %554 = vst [vmem:[#allocation2 + $0x28] sm:$0xff] 0.0
          %555 = vst [vmem:[#allocation2 + $0x30] sm:$0xff] 0.0
          %556 = vst [vmem:[#allocation2 + $0x38] sm:$0xff] 0.0
          %557 = vst [vmem:[#allocation2 + $0x40] sm:$0xff] 0.0
          %558 = vst [vmem:[#allocation2 + $0x48] sm:$0xff] 0.0
          %559 = vst [vmem:[#allocation2 + $0x50] sm:$0xff] 0.0
          %560 = vst [vmem:[#allocation2 + $0x58] sm:$0xff] 0.0
          %561 = vst [vmem:[#allocation2 + $0x60] sm:$0xff] 0.0
          %562 = vst [vmem:[#allocation2 + $0x68] sm:$0xff] 0.0
          %563 = vst [vmem:[#allocation2 + $0x70] sm:$0xff] 0.0
          %564 = vst [vmem:[#allocation2 + $0x78] sm:$0xff] 0.0
          %565 = vst [vmem:[#allocation2 + $0x80] sm:$0xff] 0.0
          %566 = vst [vmem:[#allocation2 + $0x88] sm:$0xff] 0.0
          %567 = vst [vmem:[#allocation2 + $0x90] sm:$0xff] 0.0
          %568 = vst [vmem:[#allocation2 + $0x98] sm:$0xff] 0.0
          %569 = vst [vmem:[#allocation2 + $0xa0] sm:$0xff] 0.0
          %570 = vst [vmem:[#allocation2 + $0xa8] sm:$0xff] 0.0
          %571 = vst [vmem:[#allocation2 + $0xb0] sm:$0xff] 0.0
          %572 = vst [vmem:[#allocation2 + $0xb8] sm:$0xff] 0.0
          %573 = vst [vmem:[#allocation2 + $0xc0] sm:$0xff] 0.0
          %574 = vst [vmem:[#allocation2 + $0xc8] sm:$0xff] 0.0
          %575 = vst [vmem:[#allocation2 + $0xd0] sm:$0xff] 0.0
          %576 = vst [vmem:[#allocation2 + $0xd8] sm:$0xff] 0.0
          %577 = vst [vmem:[#allocation2 + $0xe0] sm:$0xff] 0.0
          %578 = vst [vmem:[#allocation2 + $0xe8] sm:$0xff] 0.0
          %579 = vst [vmem:[#allocation2 + $0xf0] sm:$0xff] 0.0
          %580 = vst [vmem:[#allocation2 + $0xf8] sm:$0xff] 0.0
          %581 = vst [vmem:[#allocation2 + $0x100] sm:$0xff] 0.0
          %582 = vst [vmem:[#allocation2 + $0x108] sm:$0xff] 0.0
          %583 = vst [vmem:[#allocation2 + $0x110] sm:$0xff] 0.0
          %584 = vst [vmem:[#allocation2 + $0x118] sm:$0xff] 0.0
          %585 = vst [vmem:[#allocation2 + $0x120] sm:$0xff] 0.0
          %586 = vst [vmem:[#allocation2 + $0x128] sm:$0xff] 0.0
          %587 = vst [vmem:[#allocation2 + $0x130] sm:$0xff] 0.0
          %588 = vst [vmem:[#allocation2 + $0x138] sm:$0xff] 0.0
          %589 = vst [vmem:[#allocation2 + $0x140] sm:$0xff] 0.0
          %590 = vst [vmem:[#allocation2 + $0x148] sm:$0xff] 0.0
          %591 = vst [vmem:[#allocation2 + $0x150] sm:$0xff] 0.0
          %592 = vst [vmem:[#allocation2 + $0x158] sm:$0xff] 0.0
          %593 = vst [vmem:[#allocation2 + $0x160] sm:$0xff] 0.0
          %594 = vst [vmem:[#allocation2 + $0x168] sm:$0xff] 0.0
          %595 = vst [vmem:[#allocation2 + $0x170] sm:$0xff] 0.0
          %596 = vst [vmem:[#allocation2 + $0x178] sm:$0xff] 0.0
          %597 = vst [vmem:[#allocation2 + $0x180] sm:$0xff] 0.0
          %598 = vst [vmem:[#allocation2 + $0x188] sm:$0xff] 0.0
          %599 = vst [vmem:[#allocation2 + $0x190] sm:$0xff] 0.0
          %600 = vst [vmem:[#allocation2 + $0x198] sm:$0xff] 0.0
          %601 = vst [vmem:[#allocation2 + $0x1a0] sm:$0xff] 0.0
          %602 = vst [vmem:[#allocation2 + $0x1a8] sm:$0xff] 0.0
          %603 = vst [vmem:[#allocation2 + $0x1b0] sm:$0xff] 0.0
          %604 = vst [vmem:[#allocation2 + $0x1b8] sm:$0xff] 0.0
          %605 = vst [vmem:[#allocation2 + $0x1c0] sm:$0xff] 0.0
          %606 = vst [vmem:[#allocation2 + $0x1c8] sm:$0xff] 0.0
          %607 = vst [vmem:[#allocation2 + $0x1d0] sm:$0xff] 0.0
          %608 = vst [vmem:[#allocation2 + $0x1d8] sm:$0xff] 0.0
          %609 = vst [vmem:[#allocation2 + $0x1e0] sm:$0xff] 0.0
          %610 = vst [vmem:[#allocation2 + $0x1e8] sm:$0xff] 0.0
          %611 = vst [vmem:[#allocation2 + $0x1f0] sm:$0xff] 0.0
          %612 = vst [vmem:[#allocation2 + $0x1f8] sm:$0xff] 0.0
        $region63: #{discriminator_forward.8} parent=54 // pred_fallthru
          _
        %v613 = vld [vmem:[#allocation2] sm:$0xff]
        %v614 = vld [vmem:[#allocation2 + $0x8] sm:$0xff]
        %v615 = vld [vmem:[#allocation2 + $0x10] sm:$0xff]
        %v616 = vld [vmem:[#allocation2 + $0x18] sm:$0xff]
        %v617 = vld [vmem:[#allocation2 + $0x20] sm:$0xff]
        %v618 = vld [vmem:[#allocation2 + $0x28] sm:$0xff]
        %v619 = vld [vmem:[#allocation2 + $0x30] sm:$0xff]
        %v620 = vld [vmem:[#allocation2 + $0x38] sm:$0xff]
        %v621 = vld [vmem:[#allocation2 + $0x40] sm:$0xff]
        %v622 = vld [vmem:[#allocation2 + $0x48] sm:$0xff]
        %v623 = vld [vmem:[#allocation2 + $0x50] sm:$0xff]
        %v624 = vld [vmem:[#allocation2 + $0x58] sm:$0xff]
        %v625 = vld [vmem:[#allocation2 + $0x60] sm:$0xff]
        %v626 = vld [vmem:[#allocation2 + $0x68] sm:$0xff]
        %v627 = vld [vmem:[#allocation2 + $0x70] sm:$0xff]
        %v628 = vld [vmem:[#allocation2 + $0x78] sm:$0xff]
        %v629 = vld [vmem:[#allocation2 + $0x80] sm:$0xff]
        %v630 = vld [vmem:[#allocation2 + $0x88] sm:$0xff]
        %v631 = vld [vmem:[#allocation2 + $0x90] sm:$0xff]
        %v632 = vld [vmem:[#allocation2 + $0x98] sm:$0xff]
        %v633 = vld [vmem:[#allocation2 + $0xa0] sm:$0xff]
        %v634 = vld [vmem:[#allocation2 + $0xa8] sm:$0xff]
        %v635 = vld [vmem:[#allocation2 + $0xb0] sm:$0xff]
        %v636 = vld [vmem:[#allocation2 + $0xb8] sm:$0xff]
        %v637 = vld [vmem:[#allocation2 + $0xc0] sm:$0xff]
        %v638 = vld [vmem:[#allocation2 + $0xc8] sm:$0xff]
        %v639 = vld [vmem:[#allocation2 + $0xd0] sm:$0xff]
        %v640 = vld [vmem:[#allocation2 + $0xd8] sm:$0xff]
        %v641 = vld [vmem:[#allocation2 + $0xe0] sm:$0xff]
        %v642 = vld [vmem:[#allocation2 + $0xe8] sm:$0xff]
        %v643 = vld [vmem:[#allocation2 + $0xf0] sm:$0xff]
        %v644 = vld [vmem:[#allocation2 + $0xf8] sm:$0xff]
        %v645 = vld [vmem:[#allocation2 + $0x100] sm:$0xff]
        %v646 = vld [vmem:[#allocation2 + $0x108] sm:$0xff]
        %v647 = vld [vmem:[#allocation2 + $0x110] sm:$0xff]
        %v648 = vld [vmem:[#allocation2 + $0x118] sm:$0xff]
        %v649 = vld [vmem:[#allocation2 + $0x120] sm:$0xff]
        %v650 = vld [vmem:[#allocation2 + $0x128] sm:$0xff]
        %v651 = vld [vmem:[#allocation2 + $0x130] sm:$0xff]
        %v652 = vld [vmem:[#allocation2 + $0x138] sm:$0xff]
        %v653 = vld [vmem:[#allocation2 + $0x140] sm:$0xff]
        %v654 = vld [vmem:[#allocation2 + $0x148] sm:$0xff]
        %v655 = vld [vmem:[#allocation2 + $0x150] sm:$0xff]
        %v656 = vld [vmem:[#allocation2 + $0x158] sm:$0xff]
        %v657 = vld [vmem:[#allocation2 + $0x160] sm:$0xff]
        %v658 = vld [vmem:[#allocation2 + $0x168] sm:$0xff]
        %v659 = vld [vmem:[#allocation2 + $0x170] sm:$0xff]
        %v660 = vld [vmem:[#allocation2 + $0x178] sm:$0xff]
        %v661 = vld [vmem:[#allocation2 + $0x180] sm:$0xff]
        %v662 = vld [vmem:[#allocation2 + $0x188] sm:$0xff]
        %v663 = vld [vmem:[#allocation2 + $0x190] sm:$0xff]
        %v664 = vld [vmem:[#allocation2 + $0x198] sm:$0xff]
        %v665 = vld [vmem:[#allocation2 + $0x1a0] sm:$0xff]
        %v666 = vld [vmem:[#allocation2 + $0x1a8] sm:$0xff]
        %v667 = vld [vmem:[#allocation2 + $0x1b0] sm:$0xff]
        %v668 = vld [vmem:[#allocation2 + $0x1b8] sm:$0xff]
        %v669 = vld [vmem:[#allocation2 + $0x1c0] sm:$0xff]
        %v670 = vld [vmem:[#allocation2 + $0x1c8] sm:$0xff]
        %v671 = vld [vmem:[#allocation2 + $0x1d0] sm:$0xff]
        %v672 = vld [vmem:[#allocation2 + $0x1d8] sm:$0xff]
        %v673 = vld [vmem:[#allocation2 + $0x1e0] sm:$0xff]
        %v674 = vld [vmem:[#allocation2 + $0x1e8] sm:$0xff]
        %v675 = vld [vmem:[#allocation2 + $0x1f0] sm:$0xff]
        %v676 = vld [vmem:[#allocation2 + $0x1f8] sm:$0xff]
        %v677 = vld [vmem:[%s488] sm:$0xff]
        %v678 = vld [vmem:[%s488 + $0x8] sm:$0xff]
        %v679 = vld [vmem:[%s488 + $0x10] sm:$0xff]
        %v680 = vld [vmem:[%s488 + $0x18] sm:$0xff]
        %v681 = vld [vmem:[%s488 + $0x20] sm:$0xff]
        %v682 = vld [vmem:[%s488 + $0x28] sm:$0xff]
        %v683 = vld [vmem:[%s488 + $0x30] sm:$0xff]
        %v684 = vld [vmem:[%s488 + $0x38] sm:$0xff]
        %v685 = vld [vmem:[%s488 + $0x40] sm:$0xff]
        %v686 = vld [vmem:[%s488 + $0x48] sm:$0xff]
        %v687 = vld [vmem:[%s488 + $0x50] sm:$0xff]
        %v688 = vld [vmem:[%s488 + $0x58] sm:$0xff]
        %v689 = vld [vmem:[%s488 + $0x60] sm:$0xff]
        %v690 = vld [vmem:[%s488 + $0x68] sm:$0xff]
        %v691 = vld [vmem:[%s488 + $0x70] sm:$0xff]
        %v692 = vld [vmem:[%s488 + $0x78] sm:$0xff]
        %v693 = vld [vmem:[%s488 + $0x80] sm:$0xff]
        %v694 = vld [vmem:[%s488 + $0x88] sm:$0xff]
        %v695 = vld [vmem:[%s488 + $0x90] sm:$0xff]
        %v696 = vld [vmem:[%s488 + $0x98] sm:$0xff]
        %v697 = vld [vmem:[%s488 + $0xa0] sm:$0xff]
        %v698 = vld [vmem:[%s488 + $0xa8] sm:$0xff]
        %v699 = vld [vmem:[%s488 + $0xb0] sm:$0xff]
        %v700 = vld [vmem:[%s488 + $0xb8] sm:$0xff]
        %v701 = vld [vmem:[%s488 + $0xc0] sm:$0xff]
        %v702 = vld [vmem:[%s488 + $0xc8] sm:$0xff]
        %v703 = vld [vmem:[%s488 + $0xd0] sm:$0xff]
        %v704 = vld [vmem:[%s488 + $0xd8] sm:$0xff]
        %v705 = vld [vmem:[%s488 + $0xe0] sm:$0xff]
        %v706 = vld [vmem:[%s488 + $0xe8] sm:$0xff]
        %v707 = vld [vmem:[%s488 + $0xf0] sm:$0xff]
        %v708 = vld [vmem:[%s488 + $0xf8] sm:$0xff]
        %v709 = vld [vmem:[%s488 + $0x100] sm:$0xff]
        %v710 = vld [vmem:[%s488 + $0x108] sm:$0xff]
        %v711 = vld [vmem:[%s488 + $0x110] sm:$0xff]
        %v712 = vld [vmem:[%s488 + $0x118] sm:$0xff]
        %v713 = vld [vmem:[%s488 + $0x120] sm:$0xff]
        %v714 = vld [vmem:[%s488 + $0x128] sm:$0xff]
        %v715 = vld [vmem:[%s488 + $0x130] sm:$0xff]
        %v716 = vld [vmem:[%s488 + $0x138] sm:$0xff]
        %v717 = vld [vmem:[%s488 + $0x140] sm:$0xff]
        %v718 = vld [vmem:[%s488 + $0x148] sm:$0xff]
        %v719 = vld [vmem:[%s488 + $0x150] sm:$0xff]
        %v720 = vld [vmem:[%s488 + $0x158] sm:$0xff]
        %v721 = vld [vmem:[%s488 + $0x160] sm:$0xff]
        %v722 = vld [vmem:[%s488 + $0x168] sm:$0xff]
        %v723 = vld [vmem:[%s488 + $0x170] sm:$0xff]
        %v724 = vld [vmem:[%s488 + $0x178] sm:$0xff]
        %v725 = vld [vmem:[%s488 + $0x180] sm:$0xff]
        %v726 = vld [vmem:[%s488 + $0x188] sm:$0xff]
        %v727 = vld [vmem:[%s488 + $0x190] sm:$0xff]
        %v728 = vld [vmem:[%s488 + $0x198] sm:$0xff]
        %v729 = vld [vmem:[%s488 + $0x1a0] sm:$0xff]
        %v730 = vld [vmem:[%s488 + $0x1a8] sm:$0xff]
        %v731 = vld [vmem:[%s488 + $0x1b0] sm:$0xff]
        %v732 = vld [vmem:[%s488 + $0x1b8] sm:$0xff]
        %v733 = vld [vmem:[%s488 + $0x1c0] sm:$0xff]
        %v734 = vld [vmem:[%s488 + $0x1c8] sm:$0xff]
        %v735 = vld [vmem:[%s488 + $0x1d0] sm:$0xff]
        %v736 = vld [vmem:[%s488 + $0x1d8] sm:$0xff]
        %v737 = vld [vmem:[%s488 + $0x1e0] sm:$0xff]
        %v738 = vld [vmem:[%s488 + $0x1e8] sm:$0xff]
        %v739 = vld [vmem:[%s488 + $0x1f0] sm:$0xff]
        %v740 = vld [vmem:[%s488 + $0x1f8] sm:$0xff]
        %v741 = vld [vmem:[%s488 + $0x200] sm:$0xff]
        %v742 = vld [vmem:[%s488 + $0x208] sm:$0xff]
        %v743 = vld [vmem:[%s488 + $0x210] sm:$0xff]
        %v744 = vld [vmem:[%s488 + $0x218] sm:$0xff]
        %v745 = vld [vmem:[%s488 + $0x220] sm:$0xff]
        %v746 = vld [vmem:[%s488 + $0x228] sm:$0xff]
        %v747 = vld [vmem:[%s488 + $0x230] sm:$0xff]
        %v748 = vld [vmem:[%s488 + $0x238] sm:$0xff]
        %v749 = vld [vmem:[%s488 + $0x240] sm:$0xff]
        %v750 = vld [vmem:[%s488 + $0x248] sm:$0xff]
        %v751 = vld [vmem:[%s488 + $0x250] sm:$0xff]
        %v752 = vld [vmem:[%s488 + $0x258] sm:$0xff]
        %v753 = vld [vmem:[%s488 + $0x260] sm:$0xff]
        %v754 = vld [vmem:[%s488 + $0x268] sm:$0xff]
        %v755 = vld [vmem:[%s488 + $0x270] sm:$0xff]
        %v756 = vld [vmem:[%s488 + $0x278] sm:$0xff]
        %v757 = vld [vmem:[%s488 + $0x280] sm:$0xff]
        %v758 = vld [vmem:[%s488 + $0x288] sm:$0xff]
        %v759 = vld [vmem:[%s488 + $0x290] sm:$0xff]
        %v760 = vld [vmem:[%s488 + $0x298] sm:$0xff]
        %v761 = vld [vmem:[%s488 + $0x2a0] sm:$0xff]
        %v762 = vld [vmem:[%s488 + $0x2a8] sm:$0xff]
        %v763 = vld [vmem:[%s488 + $0x2b0] sm:$0xff]
        %v764 = vld [vmem:[%s488 + $0x2b8] sm:$0xff]
        %v765 = vld [vmem:[%s488 + $0x2c0] sm:$0xff]
        %v766 = vld [vmem:[%s488 + $0x2c8] sm:$0xff]
        %v767 = vld [vmem:[%s488 + $0x2d0] sm:$0xff]
        %v768 = vld [vmem:[%s488 + $0x2d8] sm:$0xff]
        %v769 = vld [vmem:[%s488 + $0x2e0] sm:$0xff]
        %v770 = vld [vmem:[%s488 + $0x2e8] sm:$0xff]
        %v771 = vld [vmem:[%s488 + $0x2f0] sm:$0xff]
        %v772 = vld [vmem:[%s488 + $0x2f8] sm:$0xff]
        %v773 = vld [vmem:[%s488 + $0x300] sm:$0xff]
        %v774 = vld [vmem:[%s488 + $0x308] sm:$0xff]
        %v775 = vld [vmem:[%s488 + $0x310] sm:$0xff]
        %v776 = vld [vmem:[%s488 + $0x318] sm:$0xff]
        %v777 = vld [vmem:[%s488 + $0x320] sm:$0xff]
        %v778 = vld [vmem:[%s488 + $0x328] sm:$0xff]
        %v779 = vld [vmem:[%s488 + $0x330] sm:$0xff]
        %v780 = vld [vmem:[%s488 + $0x338] sm:$0xff]
        %v781 = vld [vmem:[%s488 + $0x340] sm:$0xff]
        %v782 = vld [vmem:[%s488 + $0x348] sm:$0xff]
        %v783 = vld [vmem:[%s488 + $0x350] sm:$0xff]
        %v784 = vld [vmem:[%s488 + $0x358] sm:$0xff]
        %v785 = vld [vmem:[%s488 + $0x360] sm:$0xff]
        %v786 = vld [vmem:[%s488 + $0x368] sm:$0xff]
        %v787 = vld [vmem:[%s488 + $0x370] sm:$0xff]
        %v788 = vld [vmem:[%s488 + $0x378] sm:$0xff]
        %v789 = vld [vmem:[%s488 + $0x380] sm:$0xff]
        %v790 = vld [vmem:[%s488 + $0x388] sm:$0xff]
        %v791 = vld [vmem:[%s488 + $0x390] sm:$0xff]
        %v792 = vld [vmem:[%s488 + $0x398] sm:$0xff]
        %v793 = vld [vmem:[%s488 + $0x3a0] sm:$0xff]
        %v794 = vld [vmem:[%s488 + $0x3a8] sm:$0xff]
        %v795 = vld [vmem:[%s488 + $0x3b0] sm:$0xff]
        %v796 = vld [vmem:[%s488 + $0x3b8] sm:$0xff]
        %v797 = vld [vmem:[%s488 + $0x3c0] sm:$0xff]
        %v798 = vld [vmem:[%s488 + $0x3c8] sm:$0xff]
        %v799 = vld [vmem:[%s488 + $0x3d0] sm:$0xff]
        %v800 = vld [vmem:[%s488 + $0x3d8] sm:$0xff]
        %v801 = vld [vmem:[%s488 + $0x3e0] sm:$0xff]
        %v802 = vld [vmem:[%s488 + $0x3e8] sm:$0xff]
        %v803 = vld [vmem:[%s488 + $0x3f0] sm:$0xff]
        %v804 = vld [vmem:[%s488 + $0x3f8] sm:$0xff]
        %v805 = vld [vmem:[%s532] sm:$0xf]
        %v806 = vld [vmem:[%s532 + $0x4] sm:$0xf]
        %v807 = vld [vmem:[%s532 + $0x8] sm:$0xf]
        %v808 = vld [vmem:[%s532 + $0xc] sm:$0xf]
        %v809 = vld [vmem:[%s532 + $0x10] sm:$0xf]
        %v810 = vld [vmem:[%s532 + $0x14] sm:$0xf]
        %v811 = vld [vmem:[%s532 + $0x18] sm:$0xf]
        %v812 = vld [vmem:[%s532 + $0x1c] sm:$0xf]
        %v813 = vld [vmem:[%s532 + $0x20] sm:$0xf]
        %v814 = vld [vmem:[%s532 + $0x24] sm:$0xf]
        %v815 = vld [vmem:[%s532 + $0x28] sm:$0xf]
        %v816 = vld [vmem:[%s532 + $0x2c] sm:$0xf]
        %v817 = vld [vmem:[%s532 + $0x30] sm:$0xf]
        %v818 = vld [vmem:[%s532 + $0x34] sm:$0xf]
        %v819 = vld [vmem:[%s532 + $0x38] sm:$0xf]
        %v820 = vld [vmem:[%s532 + $0x3c] sm:$0xf]
        %v821 = vld [vmem:[%s532 + $0x40] sm:$0xf]
        %v822 = vld [vmem:[%s532 + $0x44] sm:$0xf]
        %v823 = vld [vmem:[%s532 + $0x48] sm:$0xf]
        %v824 = vld [vmem:[%s532 + $0x4c] sm:$0xf]
        %v825 = vld [vmem:[%s532 + $0x50] sm:$0xf]
        %v826 = vld [vmem:[%s532 + $0x54] sm:$0xf]
        %v827 = vld [vmem:[%s532 + $0x58] sm:$0xf]
        %v828 = vld [vmem:[%s532 + $0x5c] sm:$0xf]
        %v829 = vld [vmem:[%s532 + $0x60] sm:$0xf]
        %v830 = vld [vmem:[%s532 + $0x64] sm:$0xf]
        %v831 = vld [vmem:[%s532 + $0x68] sm:$0xf]
        %v832 = vld [vmem:[%s532 + $0x6c] sm:$0xf]
        %v833 = vld [vmem:[%s532 + $0x70] sm:$0xf]
        %v834 = vld [vmem:[%s532 + $0x74] sm:$0xf]
        %v835 = vld [vmem:[%s532 + $0x78] sm:$0xf]
        %v836 = vld [vmem:[%s532 + $0x7c] sm:$0xf]
        %v837 = vld [vmem:[%s532 + $0x80] sm:$0xf]
        %v838 = vld [vmem:[%s532 + $0x84] sm:$0xf]
        %v839 = vld [vmem:[%s532 + $0x88] sm:$0xf]
        %v840 = vld [vmem:[%s532 + $0x8c] sm:$0xf]
        %v841 = vld [vmem:[%s532 + $0x90] sm:$0xf]
        %v842 = vld [vmem:[%s532 + $0x94] sm:$0xf]
        %v843 = vld [vmem:[%s532 + $0x98] sm:$0xf]
        %v844 = vld [vmem:[%s532 + $0x9c] sm:$0xf]
        %v845 = vld [vmem:[%s532 + $0xa0] sm:$0xf]
        %v846 = vld [vmem:[%s532 + $0xa4] sm:$0xf]
        %v847 = vld [vmem:[%s532 + $0xa8] sm:$0xf]
        %v848 = vld [vmem:[%s532 + $0xac] sm:$0xf]
        %v849 = vld [vmem:[%s532 + $0xb0] sm:$0xf]
        %v850 = vld [vmem:[%s532 + $0xb4] sm:$0xf]
        %v851 = vld [vmem:[%s532 + $0xb8] sm:$0xf]
        %v852 = vld [vmem:[%s532 + $0xbc] sm:$0xf]
        %v853 = vld [vmem:[%s532 + $0xc0] sm:$0xf]
        %v854 = vld [vmem:[%s532 + $0xc4] sm:$0xf]
        %v855 = vld [vmem:[%s532 + $0xc8] sm:$0xf]
        %v856 = vld [vmem:[%s532 + $0xcc] sm:$0xf]
        %v857 = vld [vmem:[%s532 + $0xd0] sm:$0xf]
        %v858 = vld [vmem:[%s532 + $0xd4] sm:$0xf]
        %v859 = vld [vmem:[%s532 + $0xd8] sm:$0xf]
        %v860 = vld [vmem:[%s532 + $0xdc] sm:$0xf]
        %v861 = vld [vmem:[%s532 + $0xe0] sm:$0xf]
        %v862 = vld [vmem:[%s532 + $0xe4] sm:$0xf]
        %v863 = vld [vmem:[%s532 + $0xe8] sm:$0xf]
        %v864 = vld [vmem:[%s532 + $0xec] sm:$0xf]
        %v865 = vld [vmem:[%s532 + $0xf0] sm:$0xf]
        %v866 = vld [vmem:[%s532 + $0xf4] sm:$0xf]
        %v867 = vld [vmem:[%s532 + $0xf8] sm:$0xf]
        %v868 = vld [vmem:[%s532 + $0xfc] sm:$0xf]
        %v997 = vunpack.c.l.b16 %v677
        %v998 = vunpack.c.h.b16 %v677
        %v999 = vunpack.c.l.b16 %v678
        %v1000 = vunpack.c.h.b16 %v678
        %v1001 = vunpack.c.l.b16 %v679
        %v1002 = vunpack.c.h.b16 %v679
        %v1003 = vunpack.c.l.b16 %v680
        %v1004 = vunpack.c.h.b16 %v680
        %v1005 = vunpack.c.l.b16 %v681
        %v1006 = vunpack.c.h.b16 %v681
        %v1007 = vunpack.c.l.b16 %v682
        %v1008 = vunpack.c.h.b16 %v682
        %v1009 = vunpack.c.l.b16 %v683
        %v1010 = vunpack.c.h.b16 %v683
        %v1011 = vunpack.c.l.b16 %v684
        %v1012 = vunpack.c.h.b16 %v684
        %v1013 = vunpack.c.l.b16 %v685
        %v1014 = vunpack.c.h.b16 %v685
        %v1015 = vunpack.c.l.b16 %v686
        %v1016 = vunpack.c.h.b16 %v686
        %v1017 = vunpack.c.l.b16 %v687
        %v1018 = vunpack.c.h.b16 %v687
        %v1019 = vunpack.c.l.b16 %v688
        %v1020 = vunpack.c.h.b16 %v688
        %v1021 = vunpack.c.l.b16 %v689
        %v1022 = vunpack.c.h.b16 %v689
        %v1023 = vunpack.c.l.b16 %v690
        %v1024 = vunpack.c.h.b16 %v690
        %v1025 = vunpack.c.l.b16 %v691
        %v1026 = vunpack.c.h.b16 %v691
        %v1027 = vunpack.c.l.b16 %v692
        %v1028 = vunpack.c.h.b16 %v692
        %v1029 = vunpack.c.l.b16 %v693
        %v1030 = vunpack.c.h.b16 %v693
        %v1031 = vunpack.c.l.b16 %v694
        %v1032 = vunpack.c.h.b16 %v694
        %v1033 = vunpack.c.l.b16 %v695
        %v1034 = vunpack.c.h.b16 %v695
        %v1035 = vunpack.c.l.b16 %v696
        %v1036 = vunpack.c.h.b16 %v696
        %v1037 = vunpack.c.l.b16 %v697
        %v1038 = vunpack.c.h.b16 %v697
        %v1039 = vunpack.c.l.b16 %v698
        %v1040 = vunpack.c.h.b16 %v698
        %v1041 = vunpack.c.l.b16 %v699
        %v1042 = vunpack.c.h.b16 %v699
        %v1043 = vunpack.c.l.b16 %v700
        %v1044 = vunpack.c.h.b16 %v700
        %v1045 = vunpack.c.l.b16 %v701
        %v1046 = vunpack.c.h.b16 %v701
        %v1047 = vunpack.c.l.b16 %v702
        %v1048 = vunpack.c.h.b16 %v702
        %v1049 = vunpack.c.l.b16 %v703
        %v1050 = vunpack.c.h.b16 %v703
        %v1051 = vunpack.c.l.b16 %v704
        %v1052 = vunpack.c.h.b16 %v704
        %v1053 = vunpack.c.l.b16 %v705
        %v1054 = vunpack.c.h.b16 %v705
        %v1055 = vunpack.c.l.b16 %v706
        %v1056 = vunpack.c.h.b16 %v706
        %v1057 = vunpack.c.l.b16 %v707
        %v1058 = vunpack.c.h.b16 %v707
        %v1059 = vunpack.c.l.b16 %v708
        %v1060 = vunpack.c.h.b16 %v708
        %v1061 = vunpack.c.l.b16 %v709
        %v1062 = vunpack.c.h.b16 %v709
        %v1063 = vunpack.c.l.b16 %v710
        %v1064 = vunpack.c.h.b16 %v710
        %v1065 = vunpack.c.l.b16 %v711
        %v1066 = vunpack.c.h.b16 %v711
        %v1067 = vunpack.c.l.b16 %v712
        %v1068 = vunpack.c.h.b16 %v712
        %v1069 = vunpack.c.l.b16 %v713
        %v1070 = vunpack.c.h.b16 %v713
        %v1071 = vunpack.c.l.b16 %v714
        %v1072 = vunpack.c.h.b16 %v714
        %v1073 = vunpack.c.l.b16 %v715
        %v1074 = vunpack.c.h.b16 %v715
        %v1075 = vunpack.c.l.b16 %v716
        %v1076 = vunpack.c.h.b16 %v716
        %v1077 = vunpack.c.l.b16 %v717
        %v1078 = vunpack.c.h.b16 %v717
        %v1079 = vunpack.c.l.b16 %v718
        %v1080 = vunpack.c.h.b16 %v718
        %v1081 = vunpack.c.l.b16 %v719
        %v1082 = vunpack.c.h.b16 %v719
        %v1083 = vunpack.c.l.b16 %v720
        %v1084 = vunpack.c.h.b16 %v720
        %v1085 = vunpack.c.l.b16 %v721
        %v1086 = vunpack.c.h.b16 %v721
        %v1087 = vunpack.c.l.b16 %v722
        %v1088 = vunpack.c.h.b16 %v722
        %v1089 = vunpack.c.l.b16 %v723
        %v1090 = vunpack.c.h.b16 %v723
        %v1091 = vunpack.c.l.b16 %v724
        %v1092 = vunpack.c.h.b16 %v724
        %v1093 = vunpack.c.l.b16 %v725
        %v1094 = vunpack.c.h.b16 %v725
        %v1095 = vunpack.c.l.b16 %v726
        %v1096 = vunpack.c.h.b16 %v726
        %v1097 = vunpack.c.l.b16 %v727
        %v1098 = vunpack.c.h.b16 %v727
        %v1099 = vunpack.c.l.b16 %v728
        %v1100 = vunpack.c.h.b16 %v728
        %v1101 = vunpack.c.l.b16 %v729
        %v1102 = vunpack.c.h.b16 %v729
        %v1103 = vunpack.c.l.b16 %v730
        %v1104 = vunpack.c.h.b16 %v730
        %v1105 = vunpack.c.l.b16 %v731
        %v1106 = vunpack.c.h.b16 %v731
        %v1107 = vunpack.c.l.b16 %v732
        %v1108 = vunpack.c.h.b16 %v732
        %v1109 = vunpack.c.l.b16 %v733
        %v1110 = vunpack.c.h.b16 %v733
        %v1111 = vunpack.c.l.b16 %v734
        %v1112 = vunpack.c.h.b16 %v734
        %v1113 = vunpack.c.l.b16 %v735
        %v1114 = vunpack.c.h.b16 %v735
        %v1115 = vunpack.c.l.b16 %v736
        %v1116 = vunpack.c.h.b16 %v736
        %v1117 = vunpack.c.l.b16 %v737
        %v1118 = vunpack.c.h.b16 %v737
        %v1119 = vunpack.c.l.b16 %v738
        %v1120 = vunpack.c.h.b16 %v738
        %v1121 = vunpack.c.l.b16 %v739
        %v1122 = vunpack.c.h.b16 %v739
        %v1123 = vunpack.c.l.b16 %v740
        %v1124 = vunpack.c.h.b16 %v740
        %v1125 = vunpack.c.l.b16 %v741
        %v1126 = vunpack.c.h.b16 %v741
        %v1127 = vunpack.c.l.b16 %v742
        %v1128 = vunpack.c.h.b16 %v742
        %v1129 = vunpack.c.l.b16 %v743
        %v1130 = vunpack.c.h.b16 %v743
        %v1131 = vunpack.c.l.b16 %v744
        %v1132 = vunpack.c.h.b16 %v744
        %v1133 = vunpack.c.l.b16 %v745
        %v1134 = vunpack.c.h.b16 %v745
        %v1135 = vunpack.c.l.b16 %v746
        %v1136 = vunpack.c.h.b16 %v746
        %v1137 = vunpack.c.l.b16 %v747
        %v1138 = vunpack.c.h.b16 %v747
        %v1139 = vunpack.c.l.b16 %v748
        %v1140 = vunpack.c.h.b16 %v748
        %v1141 = vunpack.c.l.b16 %v749
        %v1142 = vunpack.c.h.b16 %v749
        %v1143 = vunpack.c.l.b16 %v750
        %v1144 = vunpack.c.h.b16 %v750
        %v1145 = vunpack.c.l.b16 %v751
        %v1146 = vunpack.c.h.b16 %v751
        %v1147 = vunpack.c.l.b16 %v752
        %v1148 = vunpack.c.h.b16 %v752
        %v1149 = vunpack.c.l.b16 %v753
        %v1150 = vunpack.c.h.b16 %v753
        %v1151 = vunpack.c.l.b16 %v754
        %v1152 = vunpack.c.h.b16 %v754
        %v1153 = vunpack.c.l.b16 %v755
        %v1154 = vunpack.c.h.b16 %v755
        %v1155 = vunpack.c.l.b16 %v756
        %v1156 = vunpack.c.h.b16 %v756
        %v1157 = vunpack.c.l.b16 %v757
        %v1158 = vunpack.c.h.b16 %v757
        %v1159 = vunpack.c.l.b16 %v758
        %v1160 = vunpack.c.h.b16 %v758
        %v1161 = vunpack.c.l.b16 %v759
        %v1162 = vunpack.c.h.b16 %v759
        %v1163 = vunpack.c.l.b16 %v760
        %v1164 = vunpack.c.h.b16 %v760
        %v1165 = vunpack.c.l.b16 %v761
        %v1166 = vunpack.c.h.b16 %v761
        %v1167 = vunpack.c.l.b16 %v762
        %v1168 = vunpack.c.h.b16 %v762
        %v1169 = vunpack.c.l.b16 %v763
        %v1170 = vunpack.c.h.b16 %v763
        %v1171 = vunpack.c.l.b16 %v764
        %v1172 = vunpack.c.h.b16 %v764
        %v1173 = vunpack.c.l.b16 %v765
        %v1174 = vunpack.c.h.b16 %v765
        %v1175 = vunpack.c.l.b16 %v766
        %v1176 = vunpack.c.h.b16 %v766
        %v1177 = vunpack.c.l.b16 %v767
        %v1178 = vunpack.c.h.b16 %v767
        %v1179 = vunpack.c.l.b16 %v768
        %v1180 = vunpack.c.h.b16 %v768
        %v1181 = vunpack.c.l.b16 %v769
        %v1182 = vunpack.c.h.b16 %v769
        %v1183 = vunpack.c.l.b16 %v770
        %v1184 = vunpack.c.h.b16 %v770
        %v1185 = vunpack.c.l.b16 %v771
        %v1186 = vunpack.c.h.b16 %v771
        %v1187 = vunpack.c.l.b16 %v772
        %v1188 = vunpack.c.h.b16 %v772
        %v1189 = vunpack.c.l.b16 %v773
        %v1190 = vunpack.c.h.b16 %v773
        %v1191 = vunpack.c.l.b16 %v774
        %v1192 = vunpack.c.h.b16 %v774
        %v1193 = vunpack.c.l.b16 %v775
        %v1194 = vunpack.c.h.b16 %v775
        %v1195 = vunpack.c.l.b16 %v776
        %v1196 = vunpack.c.h.b16 %v776
        %v1197 = vunpack.c.l.b16 %v777
        %v1198 = vunpack.c.h.b16 %v777
        %v1199 = vunpack.c.l.b16 %v778
        %v1200 = vunpack.c.h.b16 %v778
        %v1201 = vunpack.c.l.b16 %v779
        %v1202 = vunpack.c.h.b16 %v779
        %v1203 = vunpack.c.l.b16 %v780
        %v1204 = vunpack.c.h.b16 %v780
        %v1205 = vunpack.c.l.b16 %v781
        %v1206 = vunpack.c.h.b16 %v781
        %v1207 = vunpack.c.l.b16 %v782
        %v1208 = vunpack.c.h.b16 %v782
        %v1209 = vunpack.c.l.b16 %v783
        %v1210 = vunpack.c.h.b16 %v783
        %v1211 = vunpack.c.l.b16 %v784
        %v1212 = vunpack.c.h.b16 %v784
        %v1213 = vunpack.c.l.b16 %v785
        %v1214 = vunpack.c.h.b16 %v785
        %v1215 = vunpack.c.l.b16 %v786
        %v1216 = vunpack.c.h.b16 %v786
        %v1217 = vunpack.c.l.b16 %v787
        %v1218 = vunpack.c.h.b16 %v787
        %v1219 = vunpack.c.l.b16 %v788
        %v1220 = vunpack.c.h.b16 %v788
        %v1221 = vunpack.c.l.b16 %v789
        %v1222 = vunpack.c.h.b16 %v789
        %v1223 = vunpack.c.l.b16 %v790
        %v1224 = vunpack.c.h.b16 %v790
        %v1225 = vunpack.c.l.b16 %v791
        %v1226 = vunpack.c.h.b16 %v791
        %v1227 = vunpack.c.l.b16 %v792
        %v1228 = vunpack.c.h.b16 %v792
        %v1229 = vunpack.c.l.b16 %v793
        %v1230 = vunpack.c.h.b16 %v793
        %v1231 = vunpack.c.l.b16 %v794
        %v1232 = vunpack.c.h.b16 %v794
        %v1233 = vunpack.c.l.b16 %v795
        %v1234 = vunpack.c.h.b16 %v795
        %v1235 = vunpack.c.l.b16 %v796
        %v1236 = vunpack.c.h.b16 %v796
        %v1237 = vunpack.c.l.b16 %v797
        %v1238 = vunpack.c.h.b16 %v797
        %v1239 = vunpack.c.l.b16 %v798
        %v1240 = vunpack.c.h.b16 %v798
        %v1241 = vunpack.c.l.b16 %v799
        %v1242 = vunpack.c.h.b16 %v799
        %v1243 = vunpack.c.l.b16 %v800
        %v1244 = vunpack.c.h.b16 %v800
        %v1245 = vunpack.c.l.b16 %v801
        %v1246 = vunpack.c.h.b16 %v801
        %v1247 = vunpack.c.l.b16 %v802
        %v1248 = vunpack.c.h.b16 %v802
        %v1249 = vunpack.c.l.b16 %v803
        %v1250 = vunpack.c.h.b16 %v803
        %v1251 = vunpack.c.l.b16 %v804
        %v1252 = vunpack.c.h.b16 %v804
        %v1253 = vpack.c.b16 %v1001, %v997
        %v1254 = vpack.c.b16 %v1002, %v998
        %v1255 = vpack.c.b16 %v1003, %v999
        %v1256 = vpack.c.b16 %v1004, %v1000
        %v1257 = vpack.c.b16 %v1009, %v1005
        %v1258 = vpack.c.b16 %v1010, %v1006
        %v1259 = vpack.c.b16 %v1011, %v1007
        %v1260 = vpack.c.b16 %v1012, %v1008
        %v1261 = vpack.c.b16 %v1017, %v1013
        %v1262 = vpack.c.b16 %v1018, %v1014
        %v1263 = vpack.c.b16 %v1019, %v1015
        %v1264 = vpack.c.b16 %v1020, %v1016
        %v1265 = vpack.c.b16 %v1025, %v1021
        %v1266 = vpack.c.b16 %v1026, %v1022
        %v1267 = vpack.c.b16 %v1027, %v1023
        %v1268 = vpack.c.b16 %v1028, %v1024
        %v1269 = vpack.c.b16 %v1033, %v1029
        %v1270 = vpack.c.b16 %v1034, %v1030
        %v1271 = vpack.c.b16 %v1035, %v1031
        %v1272 = vpack.c.b16 %v1036, %v1032
        %v1273 = vpack.c.b16 %v1041, %v1037
        %v1274 = vpack.c.b16 %v1042, %v1038
        %v1275 = vpack.c.b16 %v1043, %v1039
        %v1276 = vpack.c.b16 %v1044, %v1040
        %v1277 = vpack.c.b16 %v1049, %v1045
        %v1278 = vpack.c.b16 %v1050, %v1046
        %v1279 = vpack.c.b16 %v1051, %v1047
        %v1280 = vpack.c.b16 %v1052, %v1048
        %v1281 = vpack.c.b16 %v1057, %v1053
        %v1282 = vpack.c.b16 %v1058, %v1054
        %v1283 = vpack.c.b16 %v1059, %v1055
        %v1284 = vpack.c.b16 %v1060, %v1056
        %v1285 = vpack.c.b16 %v1065, %v1061
        %v1286 = vpack.c.b16 %v1066, %v1062
        %v1287 = vpack.c.b16 %v1067, %v1063
        %v1288 = vpack.c.b16 %v1068, %v1064
        %v1289 = vpack.c.b16 %v1073, %v1069
        %v1290 = vpack.c.b16 %v1074, %v1070
        %v1291 = vpack.c.b16 %v1075, %v1071
        %v1292 = vpack.c.b16 %v1076, %v1072
        %v1293 = vpack.c.b16 %v1081, %v1077
        %v1294 = vpack.c.b16 %v1082, %v1078
        %v1295 = vpack.c.b16 %v1083, %v1079
        %v1296 = vpack.c.b16 %v1084, %v1080
        %v1297 = vpack.c.b16 %v1089, %v1085
        %v1298 = vpack.c.b16 %v1090, %v1086
        %v1299 = vpack.c.b16 %v1091, %v1087
        %v1300 = vpack.c.b16 %v1092, %v1088
        %v1301 = vpack.c.b16 %v1097, %v1093
        %v1302 = vpack.c.b16 %v1098, %v1094
        %v1303 = vpack.c.b16 %v1099, %v1095
        %v1304 = vpack.c.b16 %v1100, %v1096
        %v1305 = vpack.c.b16 %v1105, %v1101
        %v1306 = vpack.c.b16 %v1106, %v1102
        %v1307 = vpack.c.b16 %v1107, %v1103
        %v1308 = vpack.c.b16 %v1108, %v1104
        %v1309 = vpack.c.b16 %v1113, %v1109
        %v1310 = vpack.c.b16 %v1114, %v1110
        %v1311 = vpack.c.b16 %v1115, %v1111
        %v1312 = vpack.c.b16 %v1116, %v1112
        %v1313 = vpack.c.b16 %v1121, %v1117
        %v1314 = vpack.c.b16 %v1122, %v1118
        %v1315 = vpack.c.b16 %v1123, %v1119
        %v1316 = vpack.c.b16 %v1124, %v1120
        %v1317 = vpack.c.b16 %v1129, %v1125
        %v1318 = vpack.c.b16 %v1130, %v1126
        %v1319 = vpack.c.b16 %v1131, %v1127
        %v1320 = vpack.c.b16 %v1132, %v1128
        %v1321 = vpack.c.b16 %v1137, %v1133
        %v1322 = vpack.c.b16 %v1138, %v1134
        %v1323 = vpack.c.b16 %v1139, %v1135
        %v1324 = vpack.c.b16 %v1140, %v1136
        %v1325 = vpack.c.b16 %v1145, %v1141
        %v1326 = vpack.c.b16 %v1146, %v1142
        %v1327 = vpack.c.b16 %v1147, %v1143
        %v1328 = vpack.c.b16 %v1148, %v1144
        %v1329 = vpack.c.b16 %v1153, %v1149
        %v1330 = vpack.c.b16 %v1154, %v1150
        %v1331 = vpack.c.b16 %v1155, %v1151
        %v1332 = vpack.c.b16 %v1156, %v1152
        %v1333 = vpack.c.b16 %v1161, %v1157
        %v1334 = vpack.c.b16 %v1162, %v1158
        %v1335 = vpack.c.b16 %v1163, %v1159
        %v1336 = vpack.c.b16 %v1164, %v1160
        %v1337 = vpack.c.b16 %v1169, %v1165
        %v1338 = vpack.c.b16 %v1170, %v1166
        %v1339 = vpack.c.b16 %v1171, %v1167
        %v1340 = vpack.c.b16 %v1172, %v1168
        %v1341 = vpack.c.b16 %v1177, %v1173
        %v1342 = vpack.c.b16 %v1178, %v1174
        %v1343 = vpack.c.b16 %v1179, %v1175
        %v1344 = vpack.c.b16 %v1180, %v1176
        %v1345 = vpack.c.b16 %v1185, %v1181
        %v1346 = vpack.c.b16 %v1186, %v1182
        %v1347 = vpack.c.b16 %v1187, %v1183
        %v1348 = vpack.c.b16 %v1188, %v1184
        %v1349 = vpack.c.b16 %v1193, %v1189
        %v1350 = vpack.c.b16 %v1194, %v1190
        %v1351 = vpack.c.b16 %v1195, %v1191
        %v1352 = vpack.c.b16 %v1196, %v1192
        %v1353 = vpack.c.b16 %v1201, %v1197
        %v1354 = vpack.c.b16 %v1202, %v1198
        %v1355 = vpack.c.b16 %v1203, %v1199
        %v1356 = vpack.c.b16 %v1204, %v1200
        %v1357 = vpack.c.b16 %v1209, %v1205
        %v1358 = vpack.c.b16 %v1210, %v1206
        %v1359 = vpack.c.b16 %v1211, %v1207
        %v1360 = vpack.c.b16 %v1212, %v1208
        %v1361 = vpack.c.b16 %v1217, %v1213
        %v1362 = vpack.c.b16 %v1218, %v1214
        %v1363 = vpack.c.b16 %v1219, %v1215
        %v1364 = vpack.c.b16 %v1220, %v1216
        %v1365 = vpack.c.b16 %v1225, %v1221
        %v1366 = vpack.c.b16 %v1226, %v1222
        %v1367 = vpack.c.b16 %v1227, %v1223
        %v1368 = vpack.c.b16 %v1228, %v1224
        %v1369 = vpack.c.b16 %v1233, %v1229
        %v1370 = vpack.c.b16 %v1234, %v1230
        %v1371 = vpack.c.b16 %v1235, %v1231
        %v1372 = vpack.c.b16 %v1236, %v1232
        %v1373 = vpack.c.b16 %v1241, %v1237
        %v1374 = vpack.c.b16 %v1242, %v1238
        %v1375 = vpack.c.b16 %v1243, %v1239
        %v1376 = vpack.c.b16 %v1244, %v1240
        %v1377 = vpack.c.b16 %v1249, %v1245
        %v1378 = vpack.c.b16 %v1250, %v1246
        %v1379 = vpack.c.b16 %v1251, %v1247
        %v1380 = vpack.c.b16 %v1252, %v1248
        %v1573 = vunpack.c.l.b16 %v805
        %v1574 = vunpack.c.l.b16 %v806
        %v1575 = vunpack.c.l.b16 %v807
        %v1576 = vunpack.c.l.b16 %v808
        %v1577 = vunpack.c.l.b16 %v809
        %v1578 = vunpack.c.l.b16 %v810
        %v1579 = vunpack.c.l.b16 %v811
        %v1580 = vunpack.c.l.b16 %v812
        %v1581 = vunpack.c.l.b16 %v813
        %v1582 = vunpack.c.l.b16 %v814
        %v1583 = vunpack.c.l.b16 %v815
        %v1584 = vunpack.c.l.b16 %v816
        %v1585 = vunpack.c.l.b16 %v817
        %v1586 = vunpack.c.l.b16 %v818
        %v1587 = vunpack.c.l.b16 %v819
        %v1588 = vunpack.c.l.b16 %v820
        %v1589 = vunpack.c.l.b16 %v821
        %v1590 = vunpack.c.l.b16 %v822
        %v1591 = vunpack.c.l.b16 %v823
        %v1592 = vunpack.c.l.b16 %v824
        %v1593 = vunpack.c.l.b16 %v825
        %v1594 = vunpack.c.l.b16 %v826
        %v1595 = vunpack.c.l.b16 %v827
        %v1596 = vunpack.c.l.b16 %v828
        %v1597 = vunpack.c.l.b16 %v829
        %v1598 = vunpack.c.l.b16 %v830
        %v1599 = vunpack.c.l.b16 %v831
        %v1600 = vunpack.c.l.b16 %v832
        %v1601 = vunpack.c.l.b16 %v833
        %v1602 = vunpack.c.l.b16 %v834
        %v1603 = vunpack.c.l.b16 %v835
        %v1604 = vunpack.c.l.b16 %v836
        %v1605 = vunpack.c.l.b16 %v837
        %v1606 = vunpack.c.l.b16 %v838
        %v1607 = vunpack.c.l.b16 %v839
        %v1608 = vunpack.c.l.b16 %v840
        %v1609 = vunpack.c.l.b16 %v841
        %v1610 = vunpack.c.l.b16 %v842
        %v1611 = vunpack.c.l.b16 %v843
        %v1612 = vunpack.c.l.b16 %v844
        %v1613 = vunpack.c.l.b16 %v845
        %v1614 = vunpack.c.l.b16 %v846
        %v1615 = vunpack.c.l.b16 %v847
        %v1616 = vunpack.c.l.b16 %v848
        %v1617 = vunpack.c.l.b16 %v849
        %v1618 = vunpack.c.l.b16 %v850
        %v1619 = vunpack.c.l.b16 %v851
        %v1620 = vunpack.c.l.b16 %v852
        %v1621 = vunpack.c.l.b16 %v853
        %v1622 = vunpack.c.l.b16 %v854
        %v1623 = vunpack.c.l.b16 %v855
        %v1624 = vunpack.c.l.b16 %v856
        %v1625 = vunpack.c.l.b16 %v857
        %v1626 = vunpack.c.l.b16 %v858
        %v1627 = vunpack.c.l.b16 %v859
        %v1628 = vunpack.c.l.b16 %v860
        %v1629 = vunpack.c.l.b16 %v861
        %v1630 = vunpack.c.l.b16 %v862
        %v1631 = vunpack.c.l.b16 %v863
        %v1632 = vunpack.c.l.b16 %v864
        %v1633 = vunpack.c.l.b16 %v865
        %v1634 = vunpack.c.l.b16 %v866
        %v1635 = vunpack.c.l.b16 %v867
        %v1636 = vunpack.c.l.b16 %v868
        %v1637 = vpack.c.b16 %v1574, %v1573
        %v1638 = vpack.c.b16 %v1576, %v1575
        %v1639 = vpack.c.b16 %v1578, %v1577
        %v1640 = vpack.c.b16 %v1580, %v1579
        %v1641 = vpack.c.b16 %v1582, %v1581
        %v1642 = vpack.c.b16 %v1584, %v1583
        %v1643 = vpack.c.b16 %v1586, %v1585
        %v1644 = vpack.c.b16 %v1588, %v1587
        %v1645 = vpack.c.b16 %v1590, %v1589
        %v1646 = vpack.c.b16 %v1592, %v1591
        %v1647 = vpack.c.b16 %v1594, %v1593
        %v1648 = vpack.c.b16 %v1596, %v1595
        %v1649 = vpack.c.b16 %v1598, %v1597
        %v1650 = vpack.c.b16 %v1600, %v1599
        %v1651 = vpack.c.b16 %v1602, %v1601
        %v1652 = vpack.c.b16 %v1604, %v1603
        %v1653 = vpack.c.b16 %v1606, %v1605
        %v1654 = vpack.c.b16 %v1608, %v1607
        %v1655 = vpack.c.b16 %v1610, %v1609
        %v1656 = vpack.c.b16 %v1612, %v1611
        %v1657 = vpack.c.b16 %v1614, %v1613
        %v1658 = vpack.c.b16 %v1616, %v1615
        %v1659 = vpack.c.b16 %v1618, %v1617
        %v1660 = vpack.c.b16 %v1620, %v1619
        %v1661 = vpack.c.b16 %v1622, %v1621
        %v1662 = vpack.c.b16 %v1624, %v1623
        %v1663 = vpack.c.b16 %v1626, %v1625
        %v1664 = vpack.c.b16 %v1628, %v1627
        %v1665 = vpack.c.b16 %v1630, %v1629
        %v1666 = vpack.c.b16 %v1632, %v1631
        %v1667 = vpack.c.b16 %v1634, %v1633
        %v1668 = vpack.c.b16 %v1636, %v1635
        %1701 = vmatprep.subr.bf16.mxu0 0
        %1702 = vmatpush1.bf16.msra.mxu0 %v1644
        %1703 = vmatprep.subr.bf16.mxu0 0
        %1704 = vmatpush1.bf16.msra.mxu0 %v1643
        %1705 = vmatprep.subr.bf16.mxu0 0
        %1706 = vmatpush1.bf16.msra.mxu0 %v1642
        %1707 = vmatprep.subr.bf16.mxu0 0
        %1708 = vmatpush1.bf16.msra.mxu0 %v1641
        %1709 = vmatprep.subr.bf16.mxu0 0
        %1710 = vmatpush1.bf16.msra.mxu0 %v1640
        %1711 = vmatprep.subr.bf16.mxu0 0
        %1712 = vmatpush1.bf16.msra.mxu0 %v1639
        %1713 = vmatprep.subr.bf16.mxu0 0
        %1714 = vmatpush1.bf16.msra.mxu0 %v1638
        %1715 = vmatprep.subr.bf16.mxu0 0
        %1716 = vmatpush1.bf16.msra.mxu0 %v1637
        %1717 = vmatprep.subr.bf16.mxu0 0
        %1718 = vmatpush2.bf16.msra.mxu0 %v1652
        %1719 = vmatprep.subr.bf16.mxu0 0
        %1720 = vmatpush2.bf16.msra.mxu0 %v1651
        %1721 = vmatprep.subr.bf16.mxu0 0
        %1722 = vmatpush2.bf16.msra.mxu0 %v1650
        %1723 = vmatprep.subr.bf16.mxu0 0
        %1724 = vmatpush2.bf16.msra.mxu0 %v1649
        %1725 = vmatprep.subr.bf16.mxu0 0
        %1726 = vmatpush2.bf16.msra.mxu0 %v1648
        %1727 = vmatprep.subr.bf16.mxu0 0
        %1728 = vmatpush2.bf16.msra.mxu0 %v1647
        %1729 = vmatprep.subr.bf16.mxu0 0
        %1730 = vmatpush2.bf16.msra.mxu0 %v1646
        %1731 = vmatprep.subr.bf16.mxu0 0
        %1732 = vmatpush2.bf16.msra.mxu0 %v1645
        %1733 = vmatprep.mubr.bf16.mxu0 %v1254
        %1734 = vmatmul.mubr.bf16.gmra.mxu0 %v1253
        %v1735 = vpop.f32.mrf.mxu0
        %v1736 = vadd.f32 0.0, %v1735
        %v1737 = vpop.f32.mrf.mxu0
        %v1738 = vpop.f32.mrf.mxu0
        %v1739 = vadd.f32 0.0, %v1738
        %v1740 = vpop.f32.mrf.mxu0
        %1741 = vmatprep.mubr.bf16.mxu0 %v1258
        %1742 = vmatmul.mubr.bf16.gmra.mxu0 %v1257
        %v1743 = vpop.f32.mrf.mxu0
        %v1744 = vadd.f32 0.0, %v1743
        %v1745 = vpop.f32.mrf.mxu0
        %v1746 = vpop.f32.mrf.mxu0
        %v1747 = vadd.f32 0.0, %v1746
        %v1748 = vpop.f32.mrf.mxu0
        %1749 = vmatprep.mubr.bf16.mxu0 %v1262
        %1750 = vmatmul.mubr.bf16.gmra.mxu0 %v1261
        %v1751 = vpop.f32.mrf.mxu0
        %v1752 = vadd.f32 0.0, %v1751
        %v1753 = vpop.f32.mrf.mxu0
        %v1754 = vpop.f32.mrf.mxu0
        %v1755 = vadd.f32 0.0, %v1754
        %v1756 = vpop.f32.mrf.mxu0
        %1757 = vmatprep.mubr.bf16.mxu0 %v1266
        %1758 = vmatmul.mubr.bf16.gmra.mxu0 %v1265
        %v1759 = vpop.f32.mrf.mxu0
        %v1760 = vadd.f32 0.0, %v1759
        %v1761 = vpop.f32.mrf.mxu0
        %v1762 = vpop.f32.mrf.mxu0
        %v1763 = vadd.f32 0.0, %v1762
        %v1764 = vpop.f32.mrf.mxu0
        %1765 = vmatprep.mubr.bf16.mxu0 %v1270
        %1766 = vmatmul.mubr.bf16.gmra.mxu0 %v1269
        %v1767 = vpop.f32.mrf.mxu0
        %v1768 = vadd.f32 0.0, %v1767
        %v1769 = vpop.f32.mrf.mxu0
        %v1770 = vpop.f32.mrf.mxu0
        %v1771 = vadd.f32 0.0, %v1770
        %v1772 = vpop.f32.mrf.mxu0
        %1773 = vmatprep.mubr.bf16.mxu0 %v1274
        %1774 = vmatmul.mubr.bf16.gmra.mxu0 %v1273
        %v1775 = vpop.f32.mrf.mxu0
        %v1776 = vadd.f32 0.0, %v1775
        %v1777 = vpop.f32.mrf.mxu0
        %v1778 = vpop.f32.mrf.mxu0
        %v1779 = vadd.f32 0.0, %v1778
        %v1780 = vpop.f32.mrf.mxu0
        %1781 = vmatprep.mubr.bf16.mxu0 %v1278
        %1782 = vmatmul.mubr.bf16.gmra.mxu0 %v1277
        %v1783 = vpop.f32.mrf.mxu0
        %v1784 = vadd.f32 0.0, %v1783
        %v1785 = vpop.f32.mrf.mxu0
        %v1786 = vpop.f32.mrf.mxu0
        %v1787 = vadd.f32 0.0, %v1786
        %v1788 = vpop.f32.mrf.mxu0
        %1789 = vmatprep.mubr.bf16.mxu0 %v1282
        %1790 = vmatmul.mubr.bf16.gmra.mxu0 %v1281
        %v1791 = vpop.f32.mrf.mxu0
        %v1792 = vadd.f32 0.0, %v1791
        %v1793 = vpop.f32.mrf.mxu0
        %v1794 = vpop.f32.mrf.mxu0
        %v1795 = vadd.f32 0.0, %v1794
        %v1796 = vpop.f32.mrf.mxu0
        %1797 = vmatprep.mubr.bf16.mxu0 %v1286
        %1798 = vmatmul.mubr.bf16.gmra.mxu0 %v1285
        %v1799 = vpop.f32.mrf.mxu0
        %v1800 = vadd.f32 0.0, %v1799
        %v1801 = vpop.f32.mrf.mxu0
        %v1802 = vpop.f32.mrf.mxu0
        %v1803 = vadd.f32 0.0, %v1802
        %v1804 = vpop.f32.mrf.mxu0
        %1805 = vmatprep.mubr.bf16.mxu0 %v1290
        %1806 = vmatmul.mubr.bf16.gmra.mxu0 %v1289
        %v1807 = vpop.f32.mrf.mxu0
        %v1808 = vadd.f32 0.0, %v1807
        %v1809 = vpop.f32.mrf.mxu0
        %v1810 = vpop.f32.mrf.mxu0
        %v1811 = vadd.f32 0.0, %v1810
        %v1812 = vpop.f32.mrf.mxu0
        %1813 = vmatprep.mubr.bf16.mxu0 %v1294
        %1814 = vmatmul.mubr.bf16.gmra.mxu0 %v1293
        %v1815 = vpop.f32.mrf.mxu0
        %v1816 = vadd.f32 0.0, %v1815
        %v1817 = vpop.f32.mrf.mxu0
        %v1818 = vpop.f32.mrf.mxu0
        %v1819 = vadd.f32 0.0, %v1818
        %v1820 = vpop.f32.mrf.mxu0
        %1821 = vmatprep.mubr.bf16.mxu0 %v1298
        %1822 = vmatmul.mubr.bf16.gmra.mxu0 %v1297
        %v1823 = vpop.f32.mrf.mxu0
        %v1824 = vadd.f32 0.0, %v1823
        %v1825 = vpop.f32.mrf.mxu0
        %v1826 = vpop.f32.mrf.mxu0
        %v1827 = vadd.f32 0.0, %v1826
        %v1828 = vpop.f32.mrf.mxu0
        %1829 = vmatprep.mubr.bf16.mxu0 %v1302
        %1830 = vmatmul.mubr.bf16.gmra.mxu0 %v1301
        %v1831 = vpop.f32.mrf.mxu0
        %v1832 = vadd.f32 0.0, %v1831
        %v1833 = vpop.f32.mrf.mxu0
        %v1834 = vpop.f32.mrf.mxu0
        %v1835 = vadd.f32 0.0, %v1834
        %v1836 = vpop.f32.mrf.mxu0
        %1837 = vmatprep.mubr.bf16.mxu0 %v1306
        %1838 = vmatmul.mubr.bf16.gmra.mxu0 %v1305
        %v1839 = vpop.f32.mrf.mxu0
        %v1840 = vadd.f32 0.0, %v1839
        %v1841 = vpop.f32.mrf.mxu0
        %v1842 = vpop.f32.mrf.mxu0
        %v1843 = vadd.f32 0.0, %v1842
        %v1844 = vpop.f32.mrf.mxu0
        %1845 = vmatprep.mubr.bf16.mxu0 %v1310
        %1846 = vmatmul.mubr.bf16.gmra.mxu0 %v1309
        %v1847 = vpop.f32.mrf.mxu0
        %v1848 = vadd.f32 0.0, %v1847
        %v1849 = vpop.f32.mrf.mxu0
        %v1850 = vpop.f32.mrf.mxu0
        %v1851 = vadd.f32 0.0, %v1850
        %v1852 = vpop.f32.mrf.mxu0
        %1853 = vmatprep.mubr.bf16.mxu0 %v1314
        %1854 = vmatmul.mubr.bf16.gmra.mxu0 %v1313
        %v1855 = vpop.f32.mrf.mxu0
        %v1856 = vadd.f32 0.0, %v1855
        %v1857 = vpop.f32.mrf.mxu0
        %v1858 = vpop.f32.mrf.mxu0
        %v1859 = vadd.f32 0.0, %v1858
        %v1860 = vpop.f32.mrf.mxu0
        %1861 = vmatprep.mubr.bf16.mxu0 %v1318
        %1862 = vmatmul.mubr.bf16.gmra.mxu0 %v1317
        %v1863 = vpop.f32.mrf.mxu0
        %v1864 = vadd.f32 0.0, %v1863
        %v1865 = vpop.f32.mrf.mxu0
        %v1866 = vpop.f32.mrf.mxu0
        %v1867 = vadd.f32 0.0, %v1866
        %v1868 = vpop.f32.mrf.mxu0
        %1869 = vmatprep.mubr.bf16.mxu0 %v1322
        %1870 = vmatmul.mubr.bf16.gmra.mxu0 %v1321
        %v1871 = vpop.f32.mrf.mxu0
        %v1872 = vadd.f32 0.0, %v1871
        %v1873 = vpop.f32.mrf.mxu0
        %v1874 = vpop.f32.mrf.mxu0
        %v1875 = vadd.f32 0.0, %v1874
        %v1876 = vpop.f32.mrf.mxu0
        %1877 = vmatprep.mubr.bf16.mxu0 %v1326
        %1878 = vmatmul.mubr.bf16.gmra.mxu0 %v1325
        %v1879 = vpop.f32.mrf.mxu0
        %v1880 = vadd.f32 0.0, %v1879
        %v1881 = vpop.f32.mrf.mxu0
        %v1882 = vpop.f32.mrf.mxu0
        %v1883 = vadd.f32 0.0, %v1882
        %v1884 = vpop.f32.mrf.mxu0
        %1885 = vmatprep.mubr.bf16.mxu0 %v1330
        %1886 = vmatmul.mubr.bf16.gmra.mxu0 %v1329
        %v1887 = vpop.f32.mrf.mxu0
        %v1888 = vadd.f32 0.0, %v1887
        %v1889 = vpop.f32.mrf.mxu0
        %v1890 = vpop.f32.mrf.mxu0
        %v1891 = vadd.f32 0.0, %v1890
        %v1892 = vpop.f32.mrf.mxu0
        %1893 = vmatprep.mubr.bf16.mxu0 %v1334
        %1894 = vmatmul.mubr.bf16.gmra.mxu0 %v1333
        %v1895 = vpop.f32.mrf.mxu0
        %v1896 = vadd.f32 0.0, %v1895
        %v1897 = vpop.f32.mrf.mxu0
        %v1898 = vpop.f32.mrf.mxu0
        %v1899 = vadd.f32 0.0, %v1898
        %v1900 = vpop.f32.mrf.mxu0
        %1901 = vmatprep.mubr.bf16.mxu0 %v1338
        %1902 = vmatmul.mubr.bf16.gmra.mxu0 %v1337
        %v1903 = vpop.f32.mrf.mxu0
        %v1904 = vadd.f32 0.0, %v1903
        %v1905 = vpop.f32.mrf.mxu0
        %v1906 = vpop.f32.mrf.mxu0
        %v1907 = vadd.f32 0.0, %v1906
        %v1908 = vpop.f32.mrf.mxu0
        %1909 = vmatprep.mubr.bf16.mxu0 %v1342
        %1910 = vmatmul.mubr.bf16.gmra.mxu0 %v1341
        %v1911 = vpop.f32.mrf.mxu0
        %v1912 = vadd.f32 0.0, %v1911
        %v1913 = vpop.f32.mrf.mxu0
        %v1914 = vpop.f32.mrf.mxu0
        %v1915 = vadd.f32 0.0, %v1914
        %v1916 = vpop.f32.mrf.mxu0
        %1917 = vmatprep.mubr.bf16.mxu0 %v1346
        %1918 = vmatmul.mubr.bf16.gmra.mxu0 %v1345
        %v1919 = vpop.f32.mrf.mxu0
        %v1920 = vadd.f32 0.0, %v1919
        %v1921 = vpop.f32.mrf.mxu0
        %v1922 = vpop.f32.mrf.mxu0
        %v1923 = vadd.f32 0.0, %v1922
        %v1924 = vpop.f32.mrf.mxu0
        %1925 = vmatprep.mubr.bf16.mxu0 %v1350
        %1926 = vmatmul.mubr.bf16.gmra.mxu0 %v1349
        %v1927 = vpop.f32.mrf.mxu0
        %v1928 = vadd.f32 0.0, %v1927
        %v1929 = vpop.f32.mrf.mxu0
        %v1930 = vpop.f32.mrf.mxu0
        %v1931 = vadd.f32 0.0, %v1930
        %v1932 = vpop.f32.mrf.mxu0
        %1933 = vmatprep.mubr.bf16.mxu0 %v1354
        %1934 = vmatmul.mubr.bf16.gmra.mxu0 %v1353
        %v1935 = vpop.f32.mrf.mxu0
        %v1936 = vadd.f32 0.0, %v1935
        %v1937 = vpop.f32.mrf.mxu0
        %v1938 = vpop.f32.mrf.mxu0
        %v1939 = vadd.f32 0.0, %v1938
        %v1940 = vpop.f32.mrf.mxu0
        %1941 = vmatprep.mubr.bf16.mxu0 %v1358
        %1942 = vmatmul.mubr.bf16.gmra.mxu0 %v1357
        %v1943 = vpop.f32.mrf.mxu0
        %v1944 = vadd.f32 0.0, %v1943
        %v1945 = vpop.f32.mrf.mxu0
        %v1946 = vpop.f32.mrf.mxu0
        %v1947 = vadd.f32 0.0, %v1946
        %v1948 = vpop.f32.mrf.mxu0
        %1949 = vmatprep.mubr.bf16.mxu0 %v1362
        %1950 = vmatmul.mubr.bf16.gmra.mxu0 %v1361
        %v1951 = vpop.f32.mrf.mxu0
        %v1952 = vadd.f32 0.0, %v1951
        %v1953 = vpop.f32.mrf.mxu0
        %v1954 = vpop.f32.mrf.mxu0
        %v1955 = vadd.f32 0.0, %v1954
        %v1956 = vpop.f32.mrf.mxu0
        %1957 = vmatprep.mubr.bf16.mxu0 %v1366
        %1958 = vmatmul.mubr.bf16.gmra.mxu0 %v1365
        %v1959 = vpop.f32.mrf.mxu0
        %v1960 = vadd.f32 0.0, %v1959
        %v1961 = vpop.f32.mrf.mxu0
        %v1962 = vpop.f32.mrf.mxu0
        %v1963 = vadd.f32 0.0, %v1962
        %v1964 = vpop.f32.mrf.mxu0
        %1965 = vmatprep.mubr.bf16.mxu0 %v1370
        %1966 = vmatmul.mubr.bf16.gmra.mxu0 %v1369
        %v1967 = vpop.f32.mrf.mxu0
        %v1968 = vadd.f32 0.0, %v1967
        %v1969 = vpop.f32.mrf.mxu0
        %v1970 = vpop.f32.mrf.mxu0
        %v1971 = vadd.f32 0.0, %v1970
        %v1972 = vpop.f32.mrf.mxu0
        %1973 = vmatprep.mubr.bf16.mxu0 %v1374
        %1974 = vmatmul.mubr.bf16.gmra.mxu0 %v1373
        %v1975 = vpop.f32.mrf.mxu0
        %v1976 = vadd.f32 0.0, %v1975
        %v1977 = vpop.f32.mrf.mxu0
        %v1978 = vpop.f32.mrf.mxu0
        %v1979 = vadd.f32 0.0, %v1978
        %v1980 = vpop.f32.mrf.mxu0
        %1981 = vmatprep.mubr.bf16.mxu0 %v1378
        %1982 = vmatmul.mubr.bf16.gmra.mxu0 %v1377
        %v1983 = vpop.f32.mrf.mxu0
        %v1984 = vadd.f32 0.0, %v1983
        %v1985 = vpop.f32.mrf.mxu0
        %v1986 = vpop.f32.mrf.mxu0
        %v1987 = vadd.f32 0.0, %v1986
        %v1988 = vpop.f32.mrf.mxu0
        %1989 = vdwg.mxu0
        %1990 = vmatprep.subr.bf16.mxu0 0
        %1991 = vmatpush1.bf16.msra.mxu0 %v1660
        %1992 = vmatprep.subr.bf16.mxu0 0
        %1993 = vmatpush1.bf16.msra.mxu0 %v1659
        %1994 = vmatprep.subr.bf16.mxu0 0
        %1995 = vmatpush1.bf16.msra.mxu0 %v1658
        %1996 = vmatprep.subr.bf16.mxu0 0
        %1997 = vmatpush1.bf16.msra.mxu0 %v1657
        %1998 = vmatprep.subr.bf16.mxu0 0
        %1999 = vmatpush1.bf16.msra.mxu0 %v1656
        %2000 = vmatprep.subr.bf16.mxu0 0
        %2001 = vmatpush1.bf16.msra.mxu0 %v1655
        %2002 = vmatprep.subr.bf16.mxu0 0
        %2003 = vmatpush1.bf16.msra.mxu0 %v1654
        %2004 = vmatprep.subr.bf16.mxu0 0
        %2005 = vmatpush1.bf16.msra.mxu0 %v1653
        %2006 = vmatprep.subr.bf16.mxu0 0
        %2007 = vmatpush2.bf16.msra.mxu0 %v1668
        %2008 = vmatprep.subr.bf16.mxu0 0
        %2009 = vmatpush2.bf16.msra.mxu0 %v1667
        %2010 = vmatprep.subr.bf16.mxu0 0
        %2011 = vmatpush2.bf16.msra.mxu0 %v1666
        %2012 = vmatprep.subr.bf16.mxu0 0
        %2013 = vmatpush2.bf16.msra.mxu0 %v1665
        %2014 = vmatprep.subr.bf16.mxu0 0
        %2015 = vmatpush2.bf16.msra.mxu0 %v1664
        %2016 = vmatprep.subr.bf16.mxu0 0
        %2017 = vmatpush2.bf16.msra.mxu0 %v1663
        %2018 = vmatprep.subr.bf16.mxu0 0
        %2019 = vmatpush2.bf16.msra.mxu0 %v1662
        %2020 = vmatprep.subr.bf16.mxu0 0
        %2021 = vmatpush2.bf16.msra.mxu0 %v1661
        %2022 = vmatprep.mubr.bf16.mxu0 %v1256
        %2023 = vmatmul.mubr.bf16.gmra.mxu0 %v1255
        %v2024 = vpop.f32.mrf.mxu0
        %v2025 = vadd.f32 %v1736, %v2024
        %v2026 = vpop.f32.mrf.mxu0
        %v2027 = vpop.f32.mrf.mxu0
        %v2028 = vadd.f32 %v1739, %v2027
        %v2029 = vpop.f32.mrf.mxu0
        %2030 = vmatprep.mubr.bf16.mxu0 %v1260
        %2031 = vmatmul.mubr.bf16.gmra.mxu0 %v1259
        %v2032 = vpop.f32.mrf.mxu0
        %v2033 = vadd.f32 %v1744, %v2032
        %v2034 = vpop.f32.mrf.mxu0
        %v2035 = vpop.f32.mrf.mxu0
        %v2036 = vadd.f32 %v1747, %v2035
        %v2037 = vpop.f32.mrf.mxu0
        %2038 = vmatprep.mubr.bf16.mxu0 %v1264
        %2039 = vmatmul.mubr.bf16.gmra.mxu0 %v1263
        %v2040 = vpop.f32.mrf.mxu0
        %v2041 = vadd.f32 %v1752, %v2040
        %v2042 = vpop.f32.mrf.mxu0
        %v2043 = vpop.f32.mrf.mxu0
        %v2044 = vadd.f32 %v1755, %v2043
        %v2045 = vpop.f32.mrf.mxu0
        %2046 = vmatprep.mubr.bf16.mxu0 %v1268
        %2047 = vmatmul.mubr.bf16.gmra.mxu0 %v1267
        %v2048 = vpop.f32.mrf.mxu0
        %v2049 = vadd.f32 %v1760, %v2048
        %v2050 = vpop.f32.mrf.mxu0
        %v2051 = vpop.f32.mrf.mxu0
        %v2052 = vadd.f32 %v1763, %v2051
        %v2053 = vpop.f32.mrf.mxu0
        %2054 = vmatprep.mubr.bf16.mxu0 %v1272
        %2055 = vmatmul.mubr.bf16.gmra.mxu0 %v1271
        %v2056 = vpop.f32.mrf.mxu0
        %v2057 = vadd.f32 %v1768, %v2056
        %v2058 = vpop.f32.mrf.mxu0
        %v2059 = vpop.f32.mrf.mxu0
        %v2060 = vadd.f32 %v1771, %v2059
        %v2061 = vpop.f32.mrf.mxu0
        %2062 = vmatprep.mubr.bf16.mxu0 %v1276
        %2063 = vmatmul.mubr.bf16.gmra.mxu0 %v1275
        %v2064 = vpop.f32.mrf.mxu0
        %v2065 = vadd.f32 %v1776, %v2064
        %v2066 = vpop.f32.mrf.mxu0
        %v2067 = vpop.f32.mrf.mxu0
        %v2068 = vadd.f32 %v1779, %v2067
        %v2069 = vpop.f32.mrf.mxu0
        %2070 = vmatprep.mubr.bf16.mxu0 %v1280
        %2071 = vmatmul.mubr.bf16.gmra.mxu0 %v1279
        %v2072 = vpop.f32.mrf.mxu0
        %v2073 = vadd.f32 %v1784, %v2072
        %v2074 = vpop.f32.mrf.mxu0
        %v2075 = vpop.f32.mrf.mxu0
        %v2076 = vadd.f32 %v1787, %v2075
        %v2077 = vpop.f32.mrf.mxu0
        %2078 = vmatprep.mubr.bf16.mxu0 %v1284
        %2079 = vmatmul.mubr.bf16.gmra.mxu0 %v1283
        %v2080 = vpop.f32.mrf.mxu0
        %v2081 = vadd.f32 %v1792, %v2080
        %v2082 = vpop.f32.mrf.mxu0
        %v2083 = vpop.f32.mrf.mxu0
        %v2084 = vadd.f32 %v1795, %v2083
        %v2085 = vpop.f32.mrf.mxu0
        %2086 = vmatprep.mubr.bf16.mxu0 %v1288
        %2087 = vmatmul.mubr.bf16.gmra.mxu0 %v1287
        %v2088 = vpop.f32.mrf.mxu0
        %v2089 = vadd.f32 %v1800, %v2088
        %v2090 = vpop.f32.mrf.mxu0
        %v2091 = vpop.f32.mrf.mxu0
        %v2092 = vadd.f32 %v1803, %v2091
        %v2093 = vpop.f32.mrf.mxu0
        %2094 = vmatprep.mubr.bf16.mxu0 %v1292
        %2095 = vmatmul.mubr.bf16.gmra.mxu0 %v1291
        %v2096 = vpop.f32.mrf.mxu0
        %v2097 = vadd.f32 %v1808, %v2096
        %v2098 = vpop.f32.mrf.mxu0
        %v2099 = vpop.f32.mrf.mxu0
        %v2100 = vadd.f32 %v1811, %v2099
        %v2101 = vpop.f32.mrf.mxu0
        %2102 = vmatprep.mubr.bf16.mxu0 %v1296
        %2103 = vmatmul.mubr.bf16.gmra.mxu0 %v1295
        %v2104 = vpop.f32.mrf.mxu0
        %v2105 = vadd.f32 %v1816, %v2104
        %v2106 = vpop.f32.mrf.mxu0
        %v2107 = vpop.f32.mrf.mxu0
        %v2108 = vadd.f32 %v1819, %v2107
        %v2109 = vpop.f32.mrf.mxu0
        %2110 = vmatprep.mubr.bf16.mxu0 %v1300
        %2111 = vmatmul.mubr.bf16.gmra.mxu0 %v1299
        %v2112 = vpop.f32.mrf.mxu0
        %v2113 = vadd.f32 %v1824, %v2112
        %v2114 = vpop.f32.mrf.mxu0
        %v2115 = vpop.f32.mrf.mxu0
        %v2116 = vadd.f32 %v1827, %v2115
        %v2117 = vpop.f32.mrf.mxu0
        %2118 = vmatprep.mubr.bf16.mxu0 %v1304
        %2119 = vmatmul.mubr.bf16.gmra.mxu0 %v1303
        %v2120 = vpop.f32.mrf.mxu0
        %v2121 = vadd.f32 %v1832, %v2120
        %v2122 = vpop.f32.mrf.mxu0
        %v2123 = vpop.f32.mrf.mxu0
        %v2124 = vadd.f32 %v1835, %v2123
        %v2125 = vpop.f32.mrf.mxu0
        %2126 = vmatprep.mubr.bf16.mxu0 %v1308
        %2127 = vmatmul.mubr.bf16.gmra.mxu0 %v1307
        %v2128 = vpop.f32.mrf.mxu0
        %v2129 = vadd.f32 %v1840, %v2128
        %v2130 = vpop.f32.mrf.mxu0
        %v2131 = vpop.f32.mrf.mxu0
        %v2132 = vadd.f32 %v1843, %v2131
        %v2133 = vpop.f32.mrf.mxu0
        %2134 = vmatprep.mubr.bf16.mxu0 %v1312
        %2135 = vmatmul.mubr.bf16.gmra.mxu0 %v1311
        %v2136 = vpop.f32.mrf.mxu0
        %v2137 = vadd.f32 %v1848, %v2136
        %v2138 = vpop.f32.mrf.mxu0
        %v2139 = vpop.f32.mrf.mxu0
        %v2140 = vadd.f32 %v1851, %v2139
        %v2141 = vpop.f32.mrf.mxu0
        %2142 = vmatprep.mubr.bf16.mxu0 %v1316
        %2143 = vmatmul.mubr.bf16.gmra.mxu0 %v1315
        %v2144 = vpop.f32.mrf.mxu0
        %v2145 = vadd.f32 %v1856, %v2144
        %v2146 = vpop.f32.mrf.mxu0
        %v2147 = vpop.f32.mrf.mxu0
        %v2148 = vadd.f32 %v1859, %v2147
        %v2149 = vpop.f32.mrf.mxu0
        %2150 = vmatprep.mubr.bf16.mxu0 %v1320
        %2151 = vmatmul.mubr.bf16.gmra.mxu0 %v1319
        %v2152 = vpop.f32.mrf.mxu0
        %v2153 = vadd.f32 %v1864, %v2152
        %v2154 = vpop.f32.mrf.mxu0
        %v2155 = vpop.f32.mrf.mxu0
        %v2156 = vadd.f32 %v1867, %v2155
        %v2157 = vpop.f32.mrf.mxu0
        %2158 = vmatprep.mubr.bf16.mxu0 %v1324
        %2159 = vmatmul.mubr.bf16.gmra.mxu0 %v1323
        %v2160 = vpop.f32.mrf.mxu0
        %v2161 = vadd.f32 %v1872, %v2160
        %v2162 = vpop.f32.mrf.mxu0
        %v2163 = vpop.f32.mrf.mxu0
        %v2164 = vadd.f32 %v1875, %v2163
        %v2165 = vpop.f32.mrf.mxu0
        %2166 = vmatprep.mubr.bf16.mxu0 %v1328
        %2167 = vmatmul.mubr.bf16.gmra.mxu0 %v1327
        %v2168 = vpop.f32.mrf.mxu0
        %v2169 = vadd.f32 %v1880, %v2168
        %v2170 = vpop.f32.mrf.mxu0
        %v2171 = vpop.f32.mrf.mxu0
        %v2172 = vadd.f32 %v1883, %v2171
        %v2173 = vpop.f32.mrf.mxu0
        %2174 = vmatprep.mubr.bf16.mxu0 %v1332
        %2175 = vmatmul.mubr.bf16.gmra.mxu0 %v1331
        %v2176 = vpop.f32.mrf.mxu0
        %v2177 = vadd.f32 %v1888, %v2176
        %v2178 = vpop.f32.mrf.mxu0
        %v2179 = vpop.f32.mrf.mxu0
        %v2180 = vadd.f32 %v1891, %v2179
        %v2181 = vpop.f32.mrf.mxu0
        %2182 = vmatprep.mubr.bf16.mxu0 %v1336
        %2183 = vmatmul.mubr.bf16.gmra.mxu0 %v1335
        %v2184 = vpop.f32.mrf.mxu0
        %v2185 = vadd.f32 %v1896, %v2184
        %v2186 = vpop.f32.mrf.mxu0
        %v2187 = vpop.f32.mrf.mxu0
        %v2188 = vadd.f32 %v1899, %v2187
        %v2189 = vpop.f32.mrf.mxu0
        %2190 = vmatprep.mubr.bf16.mxu0 %v1340
        %2191 = vmatmul.mubr.bf16.gmra.mxu0 %v1339
        %v2192 = vpop.f32.mrf.mxu0
        %v2193 = vadd.f32 %v1904, %v2192
        %v2194 = vpop.f32.mrf.mxu0
        %v2195 = vpop.f32.mrf.mxu0
        %v2196 = vadd.f32 %v1907, %v2195
        %v2197 = vpop.f32.mrf.mxu0
        %2198 = vmatprep.mubr.bf16.mxu0 %v1344
        %2199 = vmatmul.mubr.bf16.gmra.mxu0 %v1343
        %v2200 = vpop.f32.mrf.mxu0
        %v2201 = vadd.f32 %v1912, %v2200
        %v2202 = vpop.f32.mrf.mxu0
        %v2203 = vpop.f32.mrf.mxu0
        %v2204 = vadd.f32 %v1915, %v2203
        %v2205 = vpop.f32.mrf.mxu0
        %2206 = vmatprep.mubr.bf16.mxu0 %v1348
        %2207 = vmatmul.mubr.bf16.gmra.mxu0 %v1347
        %v2208 = vpop.f32.mrf.mxu0
        %v2209 = vadd.f32 %v1920, %v2208
        %v2210 = vpop.f32.mrf.mxu0
        %v2211 = vpop.f32.mrf.mxu0
        %v2212 = vadd.f32 %v1923, %v2211
        %v2213 = vpop.f32.mrf.mxu0
        %2214 = vmatprep.mubr.bf16.mxu0 %v1352
        %2215 = vmatmul.mubr.bf16.gmra.mxu0 %v1351
        %v2216 = vpop.f32.mrf.mxu0
        %v2217 = vadd.f32 %v1928, %v2216
        %v2218 = vpop.f32.mrf.mxu0
        %v2219 = vpop.f32.mrf.mxu0
        %v2220 = vadd.f32 %v1931, %v2219
        %v2221 = vpop.f32.mrf.mxu0
        %2222 = vmatprep.mubr.bf16.mxu0 %v1356
        %2223 = vmatmul.mubr.bf16.gmra.mxu0 %v1355
        %v2224 = vpop.f32.mrf.mxu0
        %v2225 = vadd.f32 %v1936, %v2224
        %v2226 = vpop.f32.mrf.mxu0
        %v2227 = vpop.f32.mrf.mxu0
        %v2228 = vadd.f32 %v1939, %v2227
        %v2229 = vpop.f32.mrf.mxu0
        %2230 = vmatprep.mubr.bf16.mxu0 %v1360
        %2231 = vmatmul.mubr.bf16.gmra.mxu0 %v1359
        %v2232 = vpop.f32.mrf.mxu0
        %v2233 = vadd.f32 %v1944, %v2232
        %v2234 = vpop.f32.mrf.mxu0
        %v2235 = vpop.f32.mrf.mxu0
        %v2236 = vadd.f32 %v1947, %v2235
        %v2237 = vpop.f32.mrf.mxu0
        %2238 = vmatprep.mubr.bf16.mxu0 %v1364
        %2239 = vmatmul.mubr.bf16.gmra.mxu0 %v1363
        %v2240 = vpop.f32.mrf.mxu0
        %v2241 = vadd.f32 %v1952, %v2240
        %v2242 = vpop.f32.mrf.mxu0
        %v2243 = vpop.f32.mrf.mxu0
        %v2244 = vadd.f32 %v1955, %v2243
        %v2245 = vpop.f32.mrf.mxu0
        %2246 = vmatprep.mubr.bf16.mxu0 %v1368
        %2247 = vmatmul.mubr.bf16.gmra.mxu0 %v1367
        %v2248 = vpop.f32.mrf.mxu0
        %v2249 = vadd.f32 %v1960, %v2248
        %v2250 = vpop.f32.mrf.mxu0
        %v2251 = vpop.f32.mrf.mxu0
        %v2252 = vadd.f32 %v1963, %v2251
        %v2253 = vpop.f32.mrf.mxu0
        %2254 = vmatprep.mubr.bf16.mxu0 %v1372
        %2255 = vmatmul.mubr.bf16.gmra.mxu0 %v1371
        %v2256 = vpop.f32.mrf.mxu0
        %v2257 = vadd.f32 %v1968, %v2256
        %v2258 = vpop.f32.mrf.mxu0
        %v2259 = vpop.f32.mrf.mxu0
        %v2260 = vadd.f32 %v1971, %v2259
        %v2261 = vpop.f32.mrf.mxu0
        %2262 = vmatprep.mubr.bf16.mxu0 %v1376
        %2263 = vmatmul.mubr.bf16.gmra.mxu0 %v1375
        %v2264 = vpop.f32.mrf.mxu0
        %v2265 = vadd.f32 %v1976, %v2264
        %v2266 = vpop.f32.mrf.mxu0
        %v2267 = vpop.f32.mrf.mxu0
        %v2268 = vadd.f32 %v1979, %v2267
        %v2269 = vpop.f32.mrf.mxu0
        %2270 = vmatprep.mubr.bf16.mxu0 %v1380
        %2271 = vmatmul.mubr.bf16.gmra.mxu0 %v1379
        %v2272 = vpop.f32.mrf.mxu0
        %v2273 = vadd.f32 %v1984, %v2272
        %v2274 = vpop.f32.mrf.mxu0
        %v2275 = vpop.f32.mrf.mxu0
        %v2276 = vadd.f32 %v1987, %v2275
        %v2277 = vpop.f32.mrf.mxu0
        %2278 = vdwg.mxu0
        %v2279 = vadd.f32 %v613, %v2025
        %v2280 = vadd.f32 %v614, %v2028
        %v2281 = vadd.f32 %v615, %v2033
        %v2282 = vadd.f32 %v616, %v2036
        %v2283 = vadd.f32 %v617, %v2041
        %v2284 = vadd.f32 %v618, %v2044
        %v2285 = vadd.f32 %v619, %v2049
        %v2286 = vadd.f32 %v620, %v2052
        %v2287 = vadd.f32 %v621, %v2057
        %v2288 = vadd.f32 %v622, %v2060
        %v2289 = vadd.f32 %v623, %v2065
        %v2290 = vadd.f32 %v624, %v2068
        %v2291 = vadd.f32 %v625, %v2073
        %v2292 = vadd.f32 %v626, %v2076
        %v2293 = vadd.f32 %v627, %v2081
        %v2294 = vadd.f32 %v628, %v2084
        %v2295 = vadd.f32 %v629, %v2089
        %v2296 = vadd.f32 %v630, %v2092
        %v2297 = vadd.f32 %v631, %v2097
        %v2298 = vadd.f32 %v632, %v2100
        %v2299 = vadd.f32 %v633, %v2105
        %v2300 = vadd.f32 %v634, %v2108
        %v2301 = vadd.f32 %v635, %v2113
        %v2302 = vadd.f32 %v636, %v2116
        %v2303 = vadd.f32 %v637, %v2121
        %v2304 = vadd.f32 %v638, %v2124
        %v2305 = vadd.f32 %v639, %v2129
        %v2306 = vadd.f32 %v640, %v2132
        %v2307 = vadd.f32 %v641, %v2137
        %v2308 = vadd.f32 %v642, %v2140
        %v2309 = vadd.f32 %v643, %v2145
        %v2310 = vadd.f32 %v644, %v2148
        %v2311 = vadd.f32 %v645, %v2153
        %v2312 = vadd.f32 %v646, %v2156
        %v2313 = vadd.f32 %v647, %v2161
        %v2314 = vadd.f32 %v648, %v2164
        %v2315 = vadd.f32 %v649, %v2169
        %v2316 = vadd.f32 %v650, %v2172
        %v2317 = vadd.f32 %v651, %v2177
        %v2318 = vadd.f32 %v652, %v2180
        %v2319 = vadd.f32 %v653, %v2185
        %v2320 = vadd.f32 %v654, %v2188
        %v2321 = vadd.f32 %v655, %v2193
        %v2322 = vadd.f32 %v656, %v2196
        %v2323 = vadd.f32 %v657, %v2201
        %v2324 = vadd.f32 %v658, %v2204
        %v2325 = vadd.f32 %v659, %v2209
        %v2326 = vadd.f32 %v660, %v2212
        %v2327 = vadd.f32 %v661, %v2217
        %v2328 = vadd.f32 %v662, %v2220
        %v2329 = vadd.f32 %v663, %v2225
        %v2330 = vadd.f32 %v664, %v2228
        %v2331 = vadd.f32 %v665, %v2233
        %v2332 = vadd.f32 %v666, %v2236
        %v2333 = vadd.f32 %v667, %v2241
        %v2334 = vadd.f32 %v668, %v2244
        %v2335 = vadd.f32 %v669, %v2249
        %v2336 = vadd.f32 %v670, %v2252
        %v2337 = vadd.f32 %v671, %v2257
        %v2338 = vadd.f32 %v672, %v2260
        %v2339 = vadd.f32 %v673, %v2265
        %v2340 = vadd.f32 %v674, %v2268
        %v2341 = vadd.f32 %v675, %v2273
        %v2342 = vadd.f32 %v676, %v2276
        %2343 = vst [vmem:[#allocation2] sm:$0xff] %v2279
        %2344 = vst [vmem:[#allocation2 + $0x8] sm:$0xff] %v2280
        %2345 = vst [vmem:[#allocation2 + $0x10] sm:$0xff] %v2281
        %2346 = vst [vmem:[#allocation2 + $0x18] sm:$0xff] %v2282
        %2347 = vst [vmem:[#allocation2 + $0x20] sm:$0xff] %v2283
        %2348 = vst [vmem:[#allocation2 + $0x28] sm:$0xff] %v2284
        %2349 = vst [vmem:[#allocation2 + $0x30] sm:$0xff] %v2285
        %2350 = vst [vmem:[#allocation2 + $0x38] sm:$0xff] %v2286
        %2351 = vst [vmem:[#allocation2 + $0x40] sm:$0xff] %v2287
        %2352 = vst [vmem:[#allocation2 + $0x48] sm:$0xff] %v2288
        %2353 = vst [vmem:[#allocation2 + $0x50] sm:$0xff] %v2289
        %2354 = vst [vmem:[#allocation2 + $0x58] sm:$0xff] %v2290
        %2355 = vst [vmem:[#allocation2 + $0x60] sm:$0xff] %v2291
        %2356 = vst [vmem:[#allocation2 + $0x68] sm:$0xff] %v2292
        %2357 = vst [vmem:[#allocation2 + $0x70] sm:$0xff] %v2293
        %2358 = vst [vmem:[#allocation2 + $0x78] sm:$0xff] %v2294
        %2359 = vst [vmem:[#allocation2 + $0x80] sm:$0xff] %v2295
        %2360 = vst [vmem:[#allocation2 + $0x88] sm:$0xff] %v2296
        %2361 = vst [vmem:[#allocation2 + $0x90] sm:$0xff] %v2297
        %2362 = vst [vmem:[#allocation2 + $0x98] sm:$0xff] %v2298
        %2363 = vst [vmem:[#allocation2 + $0xa0] sm:$0xff] %v2299
        %2364 = vst [vmem:[#allocation2 + $0xa8] sm:$0xff] %v2300
        %2365 = vst [vmem:[#allocation2 + $0xb0] sm:$0xff] %v2301
        %2366 = vst [vmem:[#allocation2 + $0xb8] sm:$0xff] %v2302
        %2367 = vst [vmem:[#allocation2 + $0xc0] sm:$0xff] %v2303
        %2368 = vst [vmem:[#allocation2 + $0xc8] sm:$0xff] %v2304
        %2369 = vst [vmem:[#allocation2 + $0xd0] sm:$0xff] %v2305
        %2370 = vst [vmem:[#allocation2 + $0xd8] sm:$0xff] %v2306
        %2371 = vst [vmem:[#allocation2 + $0xe0] sm:$0xff] %v2307
        %2372 = vst [vmem:[#allocation2 + $0xe8] sm:$0xff] %v2308
        %2373 = vst [vmem:[#allocation2 + $0xf0] sm:$0xff] %v2309
        %2374 = vst [vmem:[#allocation2 + $0xf8] sm:$0xff] %v2310
        %2375 = vst [vmem:[#allocation2 + $0x100] sm:$0xff] %v2311
        %2376 = vst [vmem:[#allocation2 + $0x108] sm:$0xff] %v2312
        %2377 = vst [vmem:[#allocation2 + $0x110] sm:$0xff] %v2313
        %2378 = vst [vmem:[#allocation2 + $0x118] sm:$0xff] %v2314
        %2379 = vst [vmem:[#allocation2 + $0x120] sm:$0xff] %v2315
        %2380 = vst [vmem:[#allocation2 + $0x128] sm:$0xff] %v2316
        %2381 = vst [vmem:[#allocation2 + $0x130] sm:$0xff] %v2317
        %2382 = vst [vmem:[#allocation2 + $0x138] sm:$0xff] %v2318
        %2383 = vst [vmem:[#allocation2 + $0x140] sm:$0xff] %v2319
        %2384 = vst [vmem:[#allocation2 + $0x148] sm:$0xff] %v2320
        %2385 = vst [vmem:[#allocation2 + $0x150] sm:$0xff] %v2321
        %2386 = vst [vmem:[#allocation2 + $0x158] sm:$0xff] %v2322
        %2387 = vst [vmem:[#allocation2 + $0x160] sm:$0xff] %v2323
        %2388 = vst [vmem:[#allocation2 + $0x168] sm:$0xff] %v2324
        %2389 = vst [vmem:[#allocation2 + $0x170] sm:$0xff] %v2325
        %2390 = vst [vmem:[#allocation2 + $0x178] sm:$0xff] %v2326
        %2391 = vst [vmem:[#allocation2 + $0x180] sm:$0xff] %v2327
        %2392 = vst [vmem:[#allocation2 + $0x188] sm:$0xff] %v2328
        %2393 = vst [vmem:[#allocation2 + $0x190] sm:$0xff] %v2329
        %2394 = vst [vmem:[#allocation2 + $0x198] sm:$0xff] %v2330
        %2395 = vst [vmem:[#allocation2 + $0x1a0] sm:$0xff] %v2331
        %2396 = vst [vmem:[#allocation2 + $0x1a8] sm:$0xff] %v2332
        %2397 = vst [vmem:[#allocation2 + $0x1b0] sm:$0xff] %v2333
        %2398 = vst [vmem:[#allocation2 + $0x1b8] sm:$0xff] %v2334
        %2399 = vst [vmem:[#allocation2 + $0x1c0] sm:$0xff] %v2335
        %2400 = vst [vmem:[#allocation2 + $0x1c8] sm:$0xff] %v2336
        %2401 = vst [vmem:[#allocation2 + $0x1d0] sm:$0xff] %v2337
        %2402 = vst [vmem:[#allocation2 + $0x1d8] sm:$0xff] %v2338
        %2403 = vst [vmem:[#allocation2 + $0x1e0] sm:$0xff] %v2339
        %2404 = vst [vmem:[#allocation2 + $0x1e8] sm:$0xff] %v2340
        %2405 = vst [vmem:[#allocation2 + $0x1f0] sm:$0xff] %v2341
        %2406 = vst [vmem:[#allocation2 + $0x1f8] sm:$0xff] %v2342
        %p2407 = scmp.eq.s32.totalorder %s20, 1
        // Predicated region
        $region64: #{discriminator_forward.8} parent=54 // pred_check
          %p2408 = pneg %p2407
        $region65: #{discriminator_forward.8} parent=54 // pred_check_branch
          %2410 = sbr.rel (%p2408) target = $region67
        $region66: #{discriminator_forward.8} parent=54 // pred_region
          %v2411 = vld [vmem:[#allocation2] sm:$0xff]
          %v2412 = vld [vmem:[#allocation2 + $0x8] sm:$0xff]
          %v2413 = vld [vmem:[#allocation2 + $0x10] sm:$0xff]
          %v2414 = vld [vmem:[#allocation2 + $0x18] sm:$0xff]
          %v2415 = vld [vmem:[#allocation2 + $0x20] sm:$0xff]
          %v2416 = vld [vmem:[#allocation2 + $0x28] sm:$0xff]
          %v2417 = vld [vmem:[#allocation2 + $0x30] sm:$0xff]
          %v2418 = vld [vmem:[#allocation2 + $0x38] sm:$0xff]
          %v2419 = vld [vmem:[#allocation2 + $0x40] sm:$0xff]
          %v2420 = vld [vmem:[#allocation2 + $0x48] sm:$0xff]
          %v2421 = vld [vmem:[#allocation2 + $0x50] sm:$0xff]
          %v2422 = vld [vmem:[#allocation2 + $0x58] sm:$0xff]
          %v2423 = vld [vmem:[#allocation2 + $0x60] sm:$0xff]
          %v2424 = vld [vmem:[#allocation2 + $0x68] sm:$0xff]
          %v2425 = vld [vmem:[#allocation2 + $0x70] sm:$0xff]
          %v2426 = vld [vmem:[#allocation2 + $0x78] sm:$0xff]
          %v2427 = vld [vmem:[#allocation2 + $0x80] sm:$0xff]
          %v2428 = vld [vmem:[#allocation2 + $0x88] sm:$0xff]
          %v2429 = vld [vmem:[#allocation2 + $0x90] sm:$0xff]
          %v2430 = vld [vmem:[#allocation2 + $0x98] sm:$0xff]
          %v2431 = vld [vmem:[#allocation2 + $0xa0] sm:$0xff]
          %v2432 = vld [vmem:[#allocation2 + $0xa8] sm:$0xff]
          %v2433 = vld [vmem:[#allocation2 + $0xb0] sm:$0xff]
          %v2434 = vld [vmem:[#allocation2 + $0xb8] sm:$0xff]
          %v2435 = vld [vmem:[#allocation2 + $0xc0] sm:$0xff]
          %v2436 = vld [vmem:[#allocation2 + $0xc8] sm:$0xff]
          %v2437 = vld [vmem:[#allocation2 + $0xd0] sm:$0xff]
          %v2438 = vld [vmem:[#allocation2 + $0xd8] sm:$0xff]
          %v2439 = vld [vmem:[#allocation2 + $0xe0] sm:$0xff]
          %v2440 = vld [vmem:[#allocation2 + $0xe8] sm:$0xff]
          %v2441 = vld [vmem:[#allocation2 + $0xf0] sm:$0xff]
          %v2442 = vld [vmem:[#allocation2 + $0xf8] sm:$0xff]
          %v2443 = vld [vmem:[#allocation2 + $0x100] sm:$0xff]
          %v2444 = vld [vmem:[#allocation2 + $0x108] sm:$0xff]
          %v2445 = vld [vmem:[#allocation2 + $0x110] sm:$0xff]
          %v2446 = vld [vmem:[#allocation2 + $0x118] sm:$0xff]
          %v2447 = vld [vmem:[#allocation2 + $0x120] sm:$0xff]
          %v2448 = vld [vmem:[#allocation2 + $0x128] sm:$0xff]
          %v2449 = vld [vmem:[#allocation2 + $0x130] sm:$0xff]
          %v2450 = vld [vmem:[#allocation2 + $0x138] sm:$0xff]
          %v2451 = vld [vmem:[#allocation2 + $0x140] sm:$0xff]
          %v2452 = vld [vmem:[#allocation2 + $0x148] sm:$0xff]
          %v2453 = vld [vmem:[#allocation2 + $0x150] sm:$0xff]
          %v2454 = vld [vmem:[#allocation2 + $0x158] sm:$0xff]
          %v2455 = vld [vmem:[#allocation2 + $0x160] sm:$0xff]
          %v2456 = vld [vmem:[#allocation2 + $0x168] sm:$0xff]
          %v2457 = vld [vmem:[#allocation2 + $0x170] sm:$0xff]
          %v2458 = vld [vmem:[#allocation2 + $0x178] sm:$0xff]
          %v2459 = vld [vmem:[#allocation2 + $0x180] sm:$0xff]
          %v2460 = vld [vmem:[#allocation2 + $0x188] sm:$0xff]
          %v2461 = vld [vmem:[#allocation2 + $0x190] sm:$0xff]
          %v2462 = vld [vmem:[#allocation2 + $0x198] sm:$0xff]
          %v2463 = vld [vmem:[#allocation2 + $0x1a0] sm:$0xff]
          %v2464 = vld [vmem:[#allocation2 + $0x1a8] sm:$0xff]
          %v2465 = vld [vmem:[#allocation2 + $0x1b0] sm:$0xff]
          %v2466 = vld [vmem:[#allocation2 + $0x1b8] sm:$0xff]
          %v2467 = vld [vmem:[#allocation2 + $0x1c0] sm:$0xff]
          %v2468 = vld [vmem:[#allocation2 + $0x1c8] sm:$0xff]
          %v2469 = vld [vmem:[#allocation2 + $0x1d0] sm:$0xff]
          %v2470 = vld [vmem:[#allocation2 + $0x1d8] sm:$0xff]
          %v2471 = vld [vmem:[#allocation2 + $0x1e0] sm:$0xff]
          %v2472 = vld [vmem:[#allocation2 + $0x1e8] sm:$0xff]
          %v2473 = vld [vmem:[#allocation2 + $0x1f0] sm:$0xff]
          %v2474 = vld [vmem:[#allocation2 + $0x1f8] sm:$0xff]
          %v2475 = vadd.f32 %v2411, %v2412
          %v2476 = vadd.f32 %v2475, %v2413
          %v2477 = vadd.f32 %v2476, %v2414
          %v2478 = vadd.f32 %v2477, %v2415
          %v2479 = vadd.f32 %v2478, %v2416
          %v2480 = vadd.f32 %v2479, %v2417
          %v2481 = vadd.f32 %v2480, %v2418
          %v2482 = vadd.f32 %v2481, %v2419
          %v2483 = vadd.f32 %v2482, %v2420
          %v2484 = vadd.f32 %v2483, %v2421
          %v2485 = vadd.f32 %v2484, %v2422
          %v2486 = vadd.f32 %v2485, %v2423
          %v2487 = vadd.f32 %v2486, %v2424
          %v2488 = vadd.f32 %v2487, %v2425
          %v2489 = vadd.f32 %v2488, %v2426
          %v2490 = vadd.f32 %v2489, %v2427
          %v2491 = vadd.f32 %v2490, %v2428
          %v2492 = vadd.f32 %v2491, %v2429
          %v2493 = vadd.f32 %v2492, %v2430
          %v2494 = vadd.f32 %v2493, %v2431
          %v2495 = vadd.f32 %v2494, %v2432
          %v2496 = vadd.f32 %v2495, %v2433
          %v2497 = vadd.f32 %v2496, %v2434
          %v2498 = vadd.f32 %v2497, %v2435
          %v2499 = vadd.f32 %v2498, %v2436
          %v2500 = vadd.f32 %v2499, %v2437
          %v2501 = vadd.f32 %v2500, %v2438
          %v2502 = vadd.f32 %v2501, %v2439
          %v2503 = vadd.f32 %v2502, %v2440
          %v2504 = vadd.f32 %v2503, %v2441
          %v2505 = vadd.f32 %v2504, %v2442
          %v2506 = vadd.f32 %v2505, %v2443
          %v2507 = vadd.f32 %v2506, %v2444
          %v2508 = vadd.f32 %v2507, %v2445
          %v2509 = vadd.f32 %v2508, %v2446
          %v2510 = vadd.f32 %v2509, %v2447
          %v2511 = vadd.f32 %v2510, %v2448
          %v2512 = vadd.f32 %v2511, %v2449
          %v2513 = vadd.f32 %v2512, %v2450
          %v2514 = vadd.f32 %v2513, %v2451
          %v2515 = vadd.f32 %v2514, %v2452
          %v2516 = vadd.f32 %v2515, %v2453
          %v2517 = vadd.f32 %v2516, %v2454
          %v2518 = vadd.f32 %v2517, %v2455
          %v2519 = vadd.f32 %v2518, %v2456
          %v2520 = vadd.f32 %v2519, %v2457
          %v2521 = vadd.f32 %v2520, %v2458
          %v2522 = vadd.f32 %v2521, %v2459
          %v2523 = vadd.f32 %v2522, %v2460
          %v2524 = vadd.f32 %v2523, %v2461
          %v2525 = vadd.f32 %v2524, %v2462
          %v2526 = vadd.f32 %v2525, %v2463
          %v2527 = vadd.f32 %v2526, %v2464
          %v2528 = vadd.f32 %v2527, %v2465
          %v2529 = vadd.f32 %v2528, %v2466
          %v2530 = vadd.f32 %v2529, %v2467
          %v2531 = vadd.f32 %v2530, %v2468
          %v2532 = vadd.f32 %v2531, %v2469
          %v2533 = vadd.f32 %v2532, %v2470
          %v2534 = vadd.f32 %v2533, %v2471
          %v2535 = vadd.f32 %v2534, %v2472
          %v2536 = vadd.f32 %v2535, %v2473
          %v2537 = vadd.f32 %v2536, %v2474
          %v2538 = vrot.slane %v2537, 4
          %v2539 = vadd.f32 %v2537, %v2538
          %v2540 = vrot.slane %v2539, 2
          %v2541 = vadd.f32 %v2539, %v2540
          %v2542 = vrot.slane %v2541, 1
          %v2543 = vadd.f32 %v2541, %v2542
          %v2544 = vrcp.pop 512.0
          %v2545 = vmul.f32 %v2543, %v2544
          %v2546 = vmul.f32 %v2411, %v2411
          %v2547 = vmul.f32 %v2412, %v2412
          %v2548 = vmul.f32 %v2413, %v2413
          %v2549 = vmul.f32 %v2414, %v2414
          %v2550 = vmul.f32 %v2415, %v2415
          %v2551 = vmul.f32 %v2416, %v2416
          %v2552 = vmul.f32 %v2417, %v2417
          %v2553 = vmul.f32 %v2418, %v2418
          %v2554 = vmul.f32 %v2419, %v2419
          %v2555 = vmul.f32 %v2420, %v2420
          %v2556 = vmul.f32 %v2421, %v2421
          %v2557 = vmul.f32 %v2422, %v2422
          %v2558 = vmul.f32 %v2423, %v2423
          %v2559 = vmul.f32 %v2424, %v2424
          %v2560 = vmul.f32 %v2425, %v2425
          %v2561 = vmul.f32 %v2426, %v2426
          %v2562 = vmul.f32 %v2427, %v2427
          %v2563 = vmul.f32 %v2428, %v2428
          %v2564 = vmul.f32 %v2429, %v2429
          %v2565 = vmul.f32 %v2430, %v2430
          %v2566 = vmul.f32 %v2431, %v2431
          %v2567 = vmul.f32 %v2432, %v2432
          %v2568 = vmul.f32 %v2433, %v2433
          %v2569 = vmul.f32 %v2434, %v2434
          %v2570 = vmul.f32 %v2435, %v2435
          %v2571 = vmul.f32 %v2436, %v2436
          %v2572 = vmul.f32 %v2437, %v2437
          %v2573 = vmul.f32 %v2438, %v2438
          %v2574 = vmul.f32 %v2439, %v2439
          %v2575 = vmul.f32 %v2440, %v2440
          %v2576 = vmul.f32 %v2441, %v2441
          %v2577 = vmul.f32 %v2442, %v2442
          %v2578 = vmul.f32 %v2443, %v2443
          %v2579 = vmul.f32 %v2444, %v2444
          %v2580 = vmul.f32 %v2445, %v2445
          %v2581 = vmul.f32 %v2446, %v2446
          %v2582 = vmul.f32 %v2447, %v2447
          %v2583 = vmul.f32 %v2448, %v2448
          %v2584 = vmul.f32 %v2449, %v2449
          %v2585 = vmul.f32 %v2450, %v2450
          %v2586 = vmul.f32 %v2451, %v2451
          %v2587 = vmul.f32 %v2452, %v2452
          %v2588 = vmul.f32 %v2453, %v2453
          %v2589 = vmul.f32 %v2454, %v2454
          %v2590 = vmul.f32 %v2455, %v2455
          %v2591 = vmul.f32 %v2456, %v2456
          %v2592 = vmul.f32 %v2457, %v2457
          %v2593 = vmul.f32 %v2458, %v2458
          %v2594 = vmul.f32 %v2459, %v2459
          %v2595 = vmul.f32 %v2460, %v2460
          %v2596 = vmul.f32 %v2461, %v2461
          %v2597 = vmul.f32 %v2462, %v2462
          %v2598 = vmul.f32 %v2463, %v2463
          %v2599 = vmul.f32 %v2464, %v2464
          %v2600 = vmul.f32 %v2465, %v2465
          %v2601 = vmul.f32 %v2466, %v2466
          %v2602 = vmul.f32 %v2467, %v2467
          %v2603 = vmul.f32 %v2468, %v2468
          %v2604 = vmul.f32 %v2469, %v2469
          %v2605 = vmul.f32 %v2470, %v2470
          %v2606 = vmul.f32 %v2471, %v2471
          %v2607 = vmul.f32 %v2472, %v2472
          %v2608 = vmul.f32 %v2473, %v2473
          %v2609 = vmul.f32 %v2474, %v2474
          %v2610 = vadd.f32 %v2546, %v2547
          %v2611 = vadd.f32 %v2610, %v2548
          %v2612 = vadd.f32 %v2611, %v2549
          %v2613 = vadd.f32 %v2612, %v2550
          %v2614 = vadd.f32 %v2613, %v2551
          %v2615 = vadd.f32 %v2614, %v2552
          %v2616 = vadd.f32 %v2615, %v2553
          %v2617 = vadd.f32 %v2616, %v2554
          %v2618 = vadd.f32 %v2617, %v2555
          %v2619 = vadd.f32 %v2618, %v2556
          %v2620 = vadd.f32 %v2619, %v2557
          %v2621 = vadd.f32 %v2620, %v2558
          %v2622 = vadd.f32 %v2621, %v2559
          %v2623 = vadd.f32 %v2622, %v2560
          %v2624 = vadd.f32 %v2623, %v2561
          %v2625 = vadd.f32 %v2624, %v2562
          %v2626 = vadd.f32 %v2625, %v2563
          %v2627 = vadd.f32 %v2626, %v2564
          %v2628 = vadd.f32 %v2627, %v2565
          %v2629 = vadd.f32 %v2628, %v2566
          %v2630 = vadd.f32 %v2629, %v2567
          %v2631 = vadd.f32 %v2630, %v2568
          %v2632 = vadd.f32 %v2631, %v2569
          %v2633 = vadd.f32 %v2632, %v2570
          %v2634 = vadd.f32 %v2633, %v2571
          %v2635 = vadd.f32 %v2634, %v2572
          %v2636 = vadd.f32 %v2635, %v2573
          %v2637 = vadd.f32 %v2636, %v2574
          %v2638 = vadd.f32 %v2637, %v2575
          %v2639 = vadd.f32 %v2638, %v2576
          %v2640 = vadd.f32 %v2639, %v2577
          %v2641 = vadd.f32 %v2640, %v2578
          %v2642 = vadd.f32 %v2641, %v2579
          %v2643 = vadd.f32 %v2642, %v2580
          %v2644 = vadd.f32 %v2643, %v2581
          %v2645 = vadd.f32 %v2644, %v2582
          %v2646 = vadd.f32 %v2645, %v2583
          %v2647 = vadd.f32 %v2646, %v2584
          %v2648 = vadd.f32 %v2647, %v2585
          %v2649 = vadd.f32 %v2648, %v2586
          %v2650 = vadd.f32 %v2649, %v2587
          %v2651 = vadd.f32 %v2650, %v2588
          %v2652 = vadd.f32 %v2651, %v2589
          %v2653 = vadd.f32 %v2652, %v2590
          %v2654 = vadd.f32 %v2653, %v2591
          %v2655 = vadd.f32 %v2654, %v2592
          %v2656 = vadd.f32 %v2655, %v2593
          %v2657 = vadd.f32 %v2656, %v2594
          %v2658 = vadd.f32 %v2657, %v2595
          %v2659 = vadd.f32 %v2658, %v2596
          %v2660 = vadd.f32 %v2659, %v2597
          %v2661 = vadd.f32 %v2660, %v2598
          %v2662 = vadd.f32 %v2661, %v2599
          %v2663 = vadd.f32 %v2662, %v2600
          %v2664 = vadd.f32 %v2663, %v2601
          %v2665 = vadd.f32 %v2664, %v2602
          %v2666 = vadd.f32 %v2665, %v2603
          %v2667 = vadd.f32 %v2666, %v2604
          %v2668 = vadd.f32 %v2667, %v2605
          %v2669 = vadd.f32 %v2668, %v2606
          %v2670 = vadd.f32 %v2669, %v2607
          %v2671 = vadd.f32 %v2670, %v2608
          %v2672 = vadd.f32 %v2671, %v2609
          %v2673 = vrot.slane %v2672, 4
          %v2674 = vadd.f32 %v2672, %v2673
          %v2675 = vrot.slane %v2674, 2
          %v2676 = vadd.f32 %v2674, %v2675
          %v2677 = vrot.slane %v2676, 1
          %v2678 = vadd.f32 %v2676, %v2677
          %v2679 = vmul.f32 %v2678, %v2544
          %v2680 = vmul.f32 %v2545, %v2545
          %v2681 = vsub.f32 %v2679, %v2680
          %v2682 = vmax.f32 %v2681, 0.0
          %v2683 = vsub.f32 %v2411, %v2545
          %v2684 = vsub.f32 %v2412, %v2545
          %v2685 = vsub.f32 %v2413, %v2545
          %v2686 = vsub.f32 %v2414, %v2545
          %v2687 = vsub.f32 %v2415, %v2545
          %v2688 = vsub.f32 %v2416, %v2545
          %v2689 = vsub.f32 %v2417, %v2545
          %v2690 = vsub.f32 %v2418, %v2545
          %v2691 = vsub.f32 %v2419, %v2545
          %v2692 = vsub.f32 %v2420, %v2545
          %v2693 = vsub.f32 %v2421, %v2545
          %v2694 = vsub.f32 %v2422, %v2545
          %v2695 = vsub.f32 %v2423, %v2545
          %v2696 = vsub.f32 %v2424, %v2545
          %v2697 = vsub.f32 %v2425, %v2545
          %v2698 = vsub.f32 %v2426, %v2545
          %v2699 = vsub.f32 %v2427, %v2545
          %v2700 = vsub.f32 %v2428, %v2545
          %v2701 = vsub.f32 %v2429, %v2545
          %v2702 = vsub.f32 %v2430, %v2545
          %v2703 = vsub.f32 %v2431, %v2545
          %v2704 = vsub.f32 %v2432, %v2545
          %v2705 = vsub.f32 %v2433, %v2545
          %v2706 = vsub.f32 %v2434, %v2545
          %v2707 = vsub.f32 %v2435, %v2545
          %v2708 = vsub.f32 %v2436, %v2545
          %v2709 = vsub.f32 %v2437, %v2545
          %v2710 = vsub.f32 %v2438, %v2545
          %v2711 = vsub.f32 %v2439, %v2545
          %v2712 = vsub.f32 %v2440, %v2545
          %v2713 = vsub.f32 %v2441, %v2545
          %v2714 = vsub.f32 %v2442, %v2545
          %v2715 = vsub.f32 %v2443, %v2545
          %v2716 = vsub.f32 %v2444, %v2545
          %v2717 = vsub.f32 %v2445, %v2545
          %v2718 = vsub.f32 %v2446, %v2545
          %v2719 = vsub.f32 %v2447, %v2545
          %v2720 = vsub.f32 %v2448, %v2545
          %v2721 = vsub.f32 %v2449, %v2545
          %v2722 = vsub.f32 %v2450, %v2545
          %v2723 = vsub.f32 %v2451, %v2545
          %v2724 = vsub.f32 %v2452, %v2545
          %v2725 = vsub.f32 %v2453, %v2545
          %v2726 = vsub.f32 %v2454, %v2545
          %v2727 = vsub.f32 %v2455, %v2545
          %v2728 = vsub.f32 %v2456, %v2545
          %v2729 = vsub.f32 %v2457, %v2545
          %v2730 = vsub.f32 %v2458, %v2545
          %v2731 = vsub.f32 %v2459, %v2545
          %v2732 = vsub.f32 %v2460, %v2545
          %v2733 = vsub.f32 %v2461, %v2545
          %v2734 = vsub.f32 %v2462, %v2545
          %v2735 = vsub.f32 %v2463, %v2545
          %v2736 = vsub.f32 %v2464, %v2545
          %v2737 = vsub.f32 %v2465, %v2545
          %v2738 = vsub.f32 %v2466, %v2545
          %v2739 = vsub.f32 %v2467, %v2545
          %v2740 = vsub.f32 %v2468, %v2545
          %v2741 = vsub.f32 %v2469, %v2545
          %v2742 = vsub.f32 %v2470, %v2545
          %v2743 = vsub.f32 %v2471, %v2545
          %v2744 = vsub.f32 %v2472, %v2545
          %v2745 = vsub.f32 %v2473, %v2545
          %v2746 = vsub.f32 %v2474, %v2545
          %v2747 = vadd.f32 %v2682, 1e-05
          %v2748 = vrsqrt.pop %v2747
          %v2749 = vmul.f32 %v2683, %v2748
          %v2750 = vmul.f32 %v2684, %v2748
          %v2751 = vmul.f32 %v2685, %v2748
          %v2752 = vmul.f32 %v2686, %v2748
          %v2753 = vmul.f32 %v2687, %v2748
          %v2754 = vmul.f32 %v2688, %v2748
          %v2755 = vmul.f32 %v2689, %v2748
          %v2756 = vmul.f32 %v2690, %v2748
          %v2757 = vmul.f32 %v2691, %v2748
          %v2758 = vmul.f32 %v2692, %v2748
          %v2759 = vmul.f32 %v2693, %v2748
          %v2760 = vmul.f32 %v2694, %v2748
          %v2761 = vmul.f32 %v2695, %v2748
          %v2762 = vmul.f32 %v2696, %v2748
          %v2763 = vmul.f32 %v2697, %v2748
          %v2764 = vmul.f32 %v2698, %v2748
          %v2765 = vmul.f32 %v2699, %v2748
          %v2766 = vmul.f32 %v2700, %v2748
          %v2767 = vmul.f32 %v2701, %v2748
          %v2768 = vmul.f32 %v2702, %v2748
          %v2769 = vmul.f32 %v2703, %v2748
          %v2770 = vmul.f32 %v2704, %v2748
          %v2771 = vmul.f32 %v2705, %v2748
          %v2772 = vmul.f32 %v2706, %v2748
          %v2773 = vmul.f32 %v2707, %v2748
          %v2774 = vmul.f32 %v2708, %v2748
          %v2775 = vmul.f32 %v2709, %v2748
          %v2776 = vmul.f32 %v2710, %v2748
          %v2777 = vmul.f32 %v2711, %v2748
          %v2778 = vmul.f32 %v2712, %v2748
          %v2779 = vmul.f32 %v2713, %v2748
          %v2780 = vmul.f32 %v2714, %v2748
          %v2781 = vmul.f32 %v2715, %v2748
          %v2782 = vmul.f32 %v2716, %v2748
          %v2783 = vmul.f32 %v2717, %v2748
          %v2784 = vmul.f32 %v2718, %v2748
          %v2785 = vmul.f32 %v2719, %v2748
          %v2786 = vmul.f32 %v2720, %v2748
          %v2787 = vmul.f32 %v2721, %v2748
          %v2788 = vmul.f32 %v2722, %v2748
          %v2789 = vmul.f32 %v2723, %v2748
          %v2790 = vmul.f32 %v2724, %v2748
          %v2791 = vmul.f32 %v2725, %v2748
          %v2792 = vmul.f32 %v2726, %v2748
          %v2793 = vmul.f32 %v2727, %v2748
          %v2794 = vmul.f32 %v2728, %v2748
          %v2795 = vmul.f32 %v2729, %v2748
          %v2796 = vmul.f32 %v2730, %v2748
          %v2797 = vmul.f32 %v2731, %v2748
          %v2798 = vmul.f32 %v2732, %v2748
          %v2799 = vmul.f32 %v2733, %v2748
          %v2800 = vmul.f32 %v2734, %v2748
          %v2801 = vmul.f32 %v2735, %v2748
          %v2802 = vmul.f32 %v2736, %v2748
          %v2803 = vmul.f32 %v2737, %v2748
          %v2804 = vmul.f32 %v2738, %v2748
          %v2805 = vmul.f32 %v2739, %v2748
          %v2806 = vmul.f32 %v2740, %v2748
          %v2807 = vmul.f32 %v2741, %v2748
          %v2808 = vmul.f32 %v2742, %v2748
          %v2809 = vmul.f32 %v2743, %v2748
          %v2810 = vmul.f32 %v2744, %v2748
          %v2811 = vmul.f32 %v2745, %v2748
          %v2812 = vmul.f32 %v2746, %v2748
          %v2813 = vld [vmem:[%s536] sm:$0x1]
          %v2815 = vlaneseq
          %v2816 = vshrl.u32 %v2815, 7
          %v2817 = vsub.s32 0, %v2816
          %v2818 = vrot.slane %v2813, %v2817
          %v2820 = vmul.f32 %v2749, %v2818
          %v2821 = vmul.f32 %v2750, %v2818
          %v2822 = vmul.f32 %v2751, %v2818
          %v2823 = vmul.f32 %v2752, %v2818
          %v2824 = vmul.f32 %v2753, %v2818
          %v2825 = vmul.f32 %v2754, %v2818
          %v2826 = vmul.f32 %v2755, %v2818
          %v2827 = vmul.f32 %v2756, %v2818
          %v2828 = vmul.f32 %v2757, %v2818
          %v2829 = vmul.f32 %v2758, %v2818
          %v2830 = vmul.f32 %v2759, %v2818
          %v2831 = vmul.f32 %v2760, %v2818
          %v2832 = vmul.f32 %v2761, %v2818
          %v2833 = vmul.f32 %v2762, %v2818
          %v2834 = vmul.f32 %v2763, %v2818
          %v2835 = vmul.f32 %v2764, %v2818
          %v2836 = vmul.f32 %v2765, %v2818
          %v2837 = vmul.f32 %v2766, %v2818
          %v2838 = vmul.f32 %v2767, %v2818
          %v2839 = vmul.f32 %v2768, %v2818
          %v2840 = vmul.f32 %v2769, %v2818
          %v2841 = vmul.f32 %v2770, %v2818
          %v2842 = vmul.f32 %v2771, %v2818
          %v2843 = vmul.f32 %v2772, %v2818
          %v2844 = vmul.f32 %v2773, %v2818
          %v2845 = vmul.f32 %v2774, %v2818
          %v2846 = vmul.f32 %v2775, %v2818
          %v2847 = vmul.f32 %v2776, %v2818
          %v2848 = vmul.f32 %v2777, %v2818
          %v2849 = vmul.f32 %v2778, %v2818
          %v2850 = vmul.f32 %v2779, %v2818
          %v2851 = vmul.f32 %v2780, %v2818
          %v2852 = vmul.f32 %v2781, %v2818
          %v2853 = vmul.f32 %v2782, %v2818
          %v2854 = vmul.f32 %v2783, %v2818
          %v2855 = vmul.f32 %v2784, %v2818
          %v2856 = vmul.f32 %v2785, %v2818
          %v2857 = vmul.f32 %v2786, %v2818
          %v2858 = vmul.f32 %v2787, %v2818
          %v2859 = vmul.f32 %v2788, %v2818
          %v2860 = vmul.f32 %v2789, %v2818
          %v2861 = vmul.f32 %v2790, %v2818
          %v2862 = vmul.f32 %v2791, %v2818
          %v2863 = vmul.f32 %v2792, %v2818
          %v2864 = vmul.f32 %v2793, %v2818
          %v2865 = vmul.f32 %v2794, %v2818
          %v2866 = vmul.f32 %v2795, %v2818
          %v2867 = vmul.f32 %v2796, %v2818
          %v2868 = vmul.f32 %v2797, %v2818
          %v2869 = vmul.f32 %v2798, %v2818
          %v2870 = vmul.f32 %v2799, %v2818
          %v2871 = vmul.f32 %v2800, %v2818
          %v2872 = vmul.f32 %v2801, %v2818
          %v2873 = vmul.f32 %v2802, %v2818
          %v2874 = vmul.f32 %v2803, %v2818
          %v2875 = vmul.f32 %v2804, %v2818
          %v2876 = vmul.f32 %v2805, %v2818
          %v2877 = vmul.f32 %v2806, %v2818
          %v2878 = vmul.f32 %v2807, %v2818
          %v2879 = vmul.f32 %v2808, %v2818
          %v2880 = vmul.f32 %v2809, %v2818
          %v2881 = vmul.f32 %v2810, %v2818
          %v2882 = vmul.f32 %v2811, %v2818
          %v2883 = vmul.f32 %v2812, %v2818
          %v2884 = vld [vmem:[%s539] sm:$0x1]
          %v2886 = vlaneseq
          %v2887 = vshrl.u32 %v2886, 7
          %v2888 = vsub.s32 0, %v2887
          %v2889 = vrot.slane %v2884, %v2888
          %v2891 = vadd.f32 %v2820, %v2889
          %v2892 = vadd.f32 %v2821, %v2889
          %v2893 = vadd.f32 %v2822, %v2889
          %v2894 = vadd.f32 %v2823, %v2889
          %v2895 = vadd.f32 %v2824, %v2889
          %v2896 = vadd.f32 %v2825, %v2889
          %v2897 = vadd.f32 %v2826, %v2889
          %v2898 = vadd.f32 %v2827, %v2889
          %v2899 = vadd.f32 %v2828, %v2889
          %v2900 = vadd.f32 %v2829, %v2889
          %v2901 = vadd.f32 %v2830, %v2889
          %v2902 = vadd.f32 %v2831, %v2889
          %v2903 = vadd.f32 %v2832, %v2889
          %v2904 = vadd.f32 %v2833, %v2889
          %v2905 = vadd.f32 %v2834, %v2889
          %v2906 = vadd.f32 %v2835, %v2889
          %v2907 = vadd.f32 %v2836, %v2889
          %v2908 = vadd.f32 %v2837, %v2889
          %v2909 = vadd.f32 %v2838, %v2889
          %v2910 = vadd.f32 %v2839, %v2889
          %v2911 = vadd.f32 %v2840, %v2889
          %v2912 = vadd.f32 %v2841, %v2889
          %v2913 = vadd.f32 %v2842, %v2889
          %v2914 = vadd.f32 %v2843, %v2889
          %v2915 = vadd.f32 %v2844, %v2889
          %v2916 = vadd.f32 %v2845, %v2889
          %v2917 = vadd.f32 %v2846, %v2889
          %v2918 = vadd.f32 %v2847, %v2889
          %v2919 = vadd.f32 %v2848, %v2889
          %v2920 = vadd.f32 %v2849, %v2889
          %v2921 = vadd.f32 %v2850, %v2889
          %v2922 = vadd.f32 %v2851, %v2889
          %v2923 = vadd.f32 %v2852, %v2889
          %v2924 = vadd.f32 %v2853, %v2889
          %v2925 = vadd.f32 %v2854, %v2889
          %v2926 = vadd.f32 %v2855, %v2889
          %v2927 = vadd.f32 %v2856, %v2889
          %v2928 = vadd.f32 %v2857, %v2889
          %v2929 = vadd.f32 %v2858, %v2889
          %v2930 = vadd.f32 %v2859, %v2889
          %v2931 = vadd.f32 %v2860, %v2889
          %v2932 = vadd.f32 %v2861, %v2889
          %v2933 = vadd.f32 %v2862, %v2889
          %v2934 = vadd.f32 %v2863, %v2889
          %v2935 = vadd.f32 %v2864, %v2889
          %v2936 = vadd.f32 %v2865, %v2889
          %v2937 = vadd.f32 %v2866, %v2889
          %v2938 = vadd.f32 %v2867, %v2889
          %v2939 = vadd.f32 %v2868, %v2889
          %v2940 = vadd.f32 %v2869, %v2889
          %v2941 = vadd.f32 %v2870, %v2889
          %v2942 = vadd.f32 %v2871, %v2889
          %v2943 = vadd.f32 %v2872, %v2889
          %v2944 = vadd.f32 %v2873, %v2889
          %v2945 = vadd.f32 %v2874, %v2889
          %v2946 = vadd.f32 %v2875, %v2889
          %v2947 = vadd.f32 %v2876, %v2889
          %v2948 = vadd.f32 %v2877, %v2889
          %v2949 = vadd.f32 %v2878, %v2889
          %v2950 = vadd.f32 %v2879, %v2889
          %v2951 = vadd.f32 %v2880, %v2889
          %v2952 = vadd.f32 %v2881, %v2889
          %v2953 = vadd.f32 %v2882, %v2889
          %v2954 = vadd.f32 %v2883, %v2889
          %vm2955 = vcmp.ge.f32.partialorder %v2891, 0.0
          %vm2956 = vcmp.ge.f32.partialorder %v2892, 0.0
          %vm2957 = vcmp.ge.f32.partialorder %v2893, 0.0
          %vm2958 = vcmp.ge.f32.partialorder %v2894, 0.0
          %vm2959 = vcmp.ge.f32.partialorder %v2895, 0.0
          %vm2960 = vcmp.ge.f32.partialorder %v2896, 0.0
          %vm2961 = vcmp.ge.f32.partialorder %v2897, 0.0
          %vm2962 = vcmp.ge.f32.partialorder %v2898, 0.0
          %vm2963 = vcmp.ge.f32.partialorder %v2899, 0.0
          %vm2964 = vcmp.ge.f32.partialorder %v2900, 0.0
          %vm2965 = vcmp.ge.f32.partialorder %v2901, 0.0
          %vm2966 = vcmp.ge.f32.partialorder %v2902, 0.0
          %vm2967 = vcmp.ge.f32.partialorder %v2903, 0.0
          %vm2968 = vcmp.ge.f32.partialorder %v2904, 0.0
          %vm2969 = vcmp.ge.f32.partialorder %v2905, 0.0
          %vm2970 = vcmp.ge.f32.partialorder %v2906, 0.0
          %vm2971 = vcmp.ge.f32.partialorder %v2907, 0.0
          %vm2972 = vcmp.ge.f32.partialorder %v2908, 0.0
          %vm2973 = vcmp.ge.f32.partialorder %v2909, 0.0
          %vm2974 = vcmp.ge.f32.partialorder %v2910, 0.0
          %vm2975 = vcmp.ge.f32.partialorder %v2911, 0.0
          %vm2976 = vcmp.ge.f32.partialorder %v2912, 0.0
          %vm2977 = vcmp.ge.f32.partialorder %v2913, 0.0
          %vm2978 = vcmp.ge.f32.partialorder %v2914, 0.0
          %vm2979 = vcmp.ge.f32.partialorder %v2915, 0.0
          %vm2980 = vcmp.ge.f32.partialorder %v2916, 0.0
          %vm2981 = vcmp.ge.f32.partialorder %v2917, 0.0
          %vm2982 = vcmp.ge.f32.partialorder %v2918, 0.0
          %vm2983 = vcmp.ge.f32.partialorder %v2919, 0.0
          %vm2984 = vcmp.ge.f32.partialorder %v2920, 0.0
          %vm2985 = vcmp.ge.f32.partialorder %v2921, 0.0
          %vm2986 = vcmp.ge.f32.partialorder %v2922, 0.0
          %vm2987 = vcmp.ge.f32.partialorder %v2923, 0.0
          %vm2988 = vcmp.ge.f32.partialorder %v2924, 0.0
          %vm2989 = vcmp.ge.f32.partialorder %v2925, 0.0
          %vm2990 = vcmp.ge.f32.partialorder %v2926, 0.0
          %vm2991 = vcmp.ge.f32.partialorder %v2927, 0.0
          %vm2992 = vcmp.ge.f32.partialorder %v2928, 0.0
          %vm2993 = vcmp.ge.f32.partialorder %v2929, 0.0
          %vm2994 = vcmp.ge.f32.partialorder %v2930, 0.0
          %vm2995 = vcmp.ge.f32.partialorder %v2931, 0.0
          %vm2996 = vcmp.ge.f32.partialorder %v2932, 0.0
          %vm2997 = vcmp.ge.f32.partialorder %v2933, 0.0
          %vm2998 = vcmp.ge.f32.partialorder %v2934, 0.0
          %vm2999 = vcmp.ge.f32.partialorder %v2935, 0.0
          %vm3000 = vcmp.ge.f32.partialorder %v2936, 0.0
          %vm3001 = vcmp.ge.f32.partialorder %v2937, 0.0
          %vm3002 = vcmp.ge.f32.partialorder %v2938, 0.0
          %vm3003 = vcmp.ge.f32.partialorder %v2939, 0.0
          %vm3004 = vcmp.ge.f32.partialorder %v2940, 0.0
          %vm3005 = vcmp.ge.f32.partialorder %v2941, 0.0
          %vm3006 = vcmp.ge.f32.partialorder %v2942, 0.0
          %vm3007 = vcmp.ge.f32.partialorder %v2943, 0.0
          %vm3008 = vcmp.ge.f32.partialorder %v2944, 0.0
          %vm3009 = vcmp.ge.f32.partialorder %v2945, 0.0
          %vm3010 = vcmp.ge.f32.partialorder %v2946, 0.0
          %vm3011 = vcmp.ge.f32.partialorder %v2947, 0.0
          %vm3012 = vcmp.ge.f32.partialorder %v2948, 0.0
          %vm3013 = vcmp.ge.f32.partialorder %v2949, 0.0
          %vm3014 = vcmp.ge.f32.partialorder %v2950, 0.0
          %vm3015 = vcmp.ge.f32.partialorder %v2951, 0.0
          %vm3016 = vcmp.ge.f32.partialorder %v2952, 0.0
          %vm3017 = vcmp.ge.f32.partialorder %v2953, 0.0
          %vm3018 = vcmp.ge.f32.partialorder %v2954, 0.0
          %v3019 = vmul.f32 %v2891, 0.2
          %v3020 = vmul.f32 %v2892, 0.2
          %v3021 = vmul.f32 %v2893, 0.2
          %v3022 = vmul.f32 %v2894, 0.2
          %v3023 = vmul.f32 %v2895, 0.2
          %v3024 = vmul.f32 %v2896, 0.2
          %v3025 = vmul.f32 %v2897, 0.2
          %v3026 = vmul.f32 %v2898, 0.2
          %v3027 = vmul.f32 %v2899, 0.2
          %v3028 = vmul.f32 %v2900, 0.2
          %v3029 = vmul.f32 %v2901, 0.2
          %v3030 = vmul.f32 %v2902, 0.2
          %v3031 = vmul.f32 %v2903, 0.2
          %v3032 = vmul.f32 %v2904, 0.2
          %v3033 = vmul.f32 %v2905, 0.2
          %v3034 = vmul.f32 %v2906, 0.2
          %v3035 = vmul.f32 %v2907, 0.2
          %v3036 = vmul.f32 %v2908, 0.2
          %v3037 = vmul.f32 %v2909, 0.2
          %v3038 = vmul.f32 %v2910, 0.2
          %v3039 = vmul.f32 %v2911, 0.2
          %v3040 = vmul.f32 %v2912, 0.2
          %v3041 = vmul.f32 %v2913, 0.2
          %v3042 = vmul.f32 %v2914, 0.2
          %v3043 = vmul.f32 %v2915, 0.2
          %v3044 = vmul.f32 %v2916, 0.2
          %v3045 = vmul.f32 %v2917, 0.2
          %v3046 = vmul.f32 %v2918, 0.2
          %v3047 = vmul.f32 %v2919, 0.2
          %v3048 = vmul.f32 %v2920, 0.2
          %v3049 = vmul.f32 %v2921, 0.2
          %v3050 = vmul.f32 %v2922, 0.2
          %v3051 = vmul.f32 %v2923, 0.2
          %v3052 = vmul.f32 %v2924, 0.2
          %v3053 = vmul.f32 %v2925, 0.2
          %v3054 = vmul.f32 %v2926, 0.2
          %v3055 = vmul.f32 %v2927, 0.2
          %v3056 = vmul.f32 %v2928, 0.2
          %v3057 = vmul.f32 %v2929, 0.2
          %v3058 = vmul.f32 %v2930, 0.2
          %v3059 = vmul.f32 %v2931, 0.2
          %v3060 = vmul.f32 %v2932, 0.2
          %v3061 = vmul.f32 %v2933, 0.2
          %v3062 = vmul.f32 %v2934, 0.2
          %v3063 = vmul.f32 %v2935, 0.2
          %v3064 = vmul.f32 %v2936, 0.2
          %v3065 = vmul.f32 %v2937, 0.2
          %v3066 = vmul.f32 %v2938, 0.2
          %v3067 = vmul.f32 %v2939, 0.2
          %v3068 = vmul.f32 %v2940, 0.2
          %v3069 = vmul.f32 %v2941, 0.2
          %v3070 = vmul.f32 %v2942, 0.2
          %v3071 = vmul.f32 %v2943, 0.2
          %v3072 = vmul.f32 %v2944, 0.2
          %v3073 = vmul.f32 %v2945, 0.2
          %v3074 = vmul.f32 %v2946, 0.2
          %v3075 = vmul.f32 %v2947, 0.2
          %v3076 = vmul.f32 %v2948, 0.2
          %v3077 = vmul.f32 %v2949, 0.2
          %v3078 = vmul.f32 %v2950, 0.2
          %v3079 = vmul.f32 %v2951, 0.2
          %v3080 = vmul.f32 %v2952, 0.2
          %v3081 = vmul.f32 %v2953, 0.2
          %v3082 = vmul.f32 %v2954, 0.2
          %v3083 = vsel %vm2955, %v2891, %v3019
          %v3084 = vsel %vm2956, %v2892, %v3020
          %v3085 = vsel %vm2957, %v2893, %v3021
          %v3086 = vsel %vm2958, %v2894, %v3022
          %v3087 = vsel %vm2959, %v2895, %v3023
          %v3088 = vsel %vm2960, %v2896, %v3024
          %v3089 = vsel %vm2961, %v2897, %v3025
          %v3090 = vsel %vm2962, %v2898, %v3026
          %v3091 = vsel %vm2963, %v2899, %v3027
          %v3092 = vsel %vm2964, %v2900, %v3028
          %v3093 = vsel %vm2965, %v2901, %v3029
          %v3094 = vsel %vm2966, %v2902, %v3030
          %v3095 = vsel %vm2967, %v2903, %v3031
          %v3096 = vsel %vm2968, %v2904, %v3032
          %v3097 = vsel %vm2969, %v2905, %v3033
          %v3098 = vsel %vm2970, %v2906, %v3034
          %v3099 = vsel %vm2971, %v2907, %v3035
          %v3100 = vsel %vm2972, %v2908, %v3036
          %v3101 = vsel %vm2973, %v2909, %v3037
          %v3102 = vsel %vm2974, %v2910, %v3038
          %v3103 = vsel %vm2975, %v2911, %v3039
          %v3104 = vsel %vm2976, %v2912, %v3040
          %v3105 = vsel %vm2977, %v2913, %v3041
          %v3106 = vsel %vm2978, %v2914, %v3042
          %v3107 = vsel %vm2979, %v2915, %v3043
          %v3108 = vsel %vm2980, %v2916, %v3044
          %v3109 = vsel %vm2981, %v2917, %v3045
          %v3110 = vsel %vm2982, %v2918, %v3046
          %v3111 = vsel %vm2983, %v2919, %v3047
          %v3112 = vsel %vm2984, %v2920, %v3048
          %v3113 = vsel %vm2985, %v2921, %v3049
          %v3114 = vsel %vm2986, %v2922, %v3050
          %v3115 = vsel %vm2987, %v2923, %v3051
          %v3116 = vsel %vm2988, %v2924, %v3052
          %v3117 = vsel %vm2989, %v2925, %v3053
          %v3118 = vsel %vm2990, %v2926, %v3054
          %v3119 = vsel %vm2991, %v2927, %v3055
          %v3120 = vsel %vm2992, %v2928, %v3056
          %v3121 = vsel %vm2993, %v2929, %v3057
          %v3122 = vsel %vm2994, %v2930, %v3058
          %v3123 = vsel %vm2995, %v2931, %v3059
          %v3124 = vsel %vm2996, %v2932, %v3060
          %v3125 = vsel %vm2997, %v2933, %v3061
          %v3126 = vsel %vm2998, %v2934, %v3062
          %v3127 = vsel %vm2999, %v2935, %v3063
          %v3128 = vsel %vm3000, %v2936, %v3064
          %v3129 = vsel %vm3001, %v2937, %v3065
          %v3130 = vsel %vm3002, %v2938, %v3066
          %v3131 = vsel %vm3003, %v2939, %v3067
          %v3132 = vsel %vm3004, %v2940, %v3068
          %v3133 = vsel %vm3005, %v2941, %v3069
          %v3134 = vsel %vm3006, %v2942, %v3070
          %v3135 = vsel %vm3007, %v2943, %v3071
          %v3136 = vsel %vm3008, %v2944, %v3072
          %v3137 = vsel %vm3009, %v2945, %v3073
          %v3138 = vsel %vm3010, %v2946, %v3074
          %v3139 = vsel %vm3011, %v2947, %v3075
          %v3140 = vsel %vm3012, %v2948, %v3076
          %v3141 = vsel %vm3013, %v2949, %v3077
          %v3142 = vsel %vm3014, %v2950, %v3078
          %v3143 = vsel %vm3015, %v2951, %v3079
          %v3144 = vsel %vm3016, %v2952, %v3080
          %v3145 = vsel %vm3017, %v2953, %v3081
          %v3146 = vsel %vm3018, %v2954, %v3082
          %v3147 = vpack.c.bf16 %v3084, %v3083
          %v3148 = vpack.c.bf16 %v3086, %v3085
          %v3149 = vpack.c.bf16 %v3088, %v3087
          %v3150 = vpack.c.bf16 %v3090, %v3089
          %v3151 = vpack.c.bf16 %v3092, %v3091
          %v3152 = vpack.c.bf16 %v3094, %v3093
          %v3153 = vpack.c.bf16 %v3096, %v3095
          %v3154 = vpack.c.bf16 %v3098, %v3097
          %v3155 = vpack.c.bf16 %v3100, %v3099
          %v3156 = vpack.c.bf16 %v3102, %v3101
          %v3157 = vpack.c.bf16 %v3104, %v3103
          %v3158 = vpack.c.bf16 %v3106, %v3105
          %v3159 = vpack.c.bf16 %v3108, %v3107
          %v3160 = vpack.c.bf16 %v3110, %v3109
          %v3161 = vpack.c.bf16 %v3112, %v3111
          %v3162 = vpack.c.bf16 %v3114, %v3113
          %v3163 = vpack.c.bf16 %v3116, %v3115
          %v3164 = vpack.c.bf16 %v3118, %v3117
          %v3165 = vpack.c.bf16 %v3120, %v3119
          %v3166 = vpack.c.bf16 %v3122, %v3121
          %v3167 = vpack.c.bf16 %v3124, %v3123
          %v3168 = vpack.c.bf16 %v3126, %v3125
          %v3169 = vpack.c.bf16 %v3128, %v3127
          %v3170 = vpack.c.bf16 %v3130, %v3129
          %v3171 = vpack.c.bf16 %v3132, %v3131
          %v3172 = vpack.c.bf16 %v3134, %v3133
          %v3173 = vpack.c.bf16 %v3136, %v3135
          %v3174 = vpack.c.bf16 %v3138, %v3137
          %v3175 = vpack.c.bf16 %v3140, %v3139
          %v3176 = vpack.c.bf16 %v3142, %v3141
          %v3177 = vpack.c.bf16 %v3144, %v3143
          %v3178 = vpack.c.bf16 %v3146, %v3145
          %v3211 = vunpack.c.l.b16 %v3147
          %v3212 = vunpack.c.h.b16 %v3147
          %v3213 = vunpack.c.l.b16 %v3148
          %v3214 = vunpack.c.h.b16 %v3148
          %v3215 = vunpack.c.l.b16 %v3149
          %v3216 = vunpack.c.h.b16 %v3149
          %v3217 = vunpack.c.l.b16 %v3150
          %v3218 = vunpack.c.h.b16 %v3150
          %v3219 = vunpack.c.l.b16 %v3151
          %v3220 = vunpack.c.h.b16 %v3151
          %v3221 = vunpack.c.l.b16 %v3152
          %v3222 = vunpack.c.h.b16 %v3152
          %v3223 = vunpack.c.l.b16 %v3153
          %v3224 = vunpack.c.h.b16 %v3153
          %v3225 = vunpack.c.l.b16 %v3154
          %v3226 = vunpack.c.h.b16 %v3154
          %v3227 = vunpack.c.l.b16 %v3155
          %v3228 = vunpack.c.h.b16 %v3155
          %v3229 = vunpack.c.l.b16 %v3156
          %v3230 = vunpack.c.h.b16 %v3156
          %v3231 = vunpack.c.l.b16 %v3157
          %v3232 = vunpack.c.h.b16 %v3157
          %v3233 = vunpack.c.l.b16 %v3158
          %v3234 = vunpack.c.h.b16 %v3158
          %v3235 = vunpack.c.l.b16 %v3159
          %v3236 = vunpack.c.h.b16 %v3159
          %v3237 = vunpack.c.l.b16 %v3160
          %v3238 = vunpack.c.h.b16 %v3160
          %v3239 = vunpack.c.l.b16 %v3161
          %v3240 = vunpack.c.h.b16 %v3161
          %v3241 = vunpack.c.l.b16 %v3162
          %v3242 = vunpack.c.h.b16 %v3162
          %v3243 = vunpack.c.l.b16 %v3163
          %v3244 = vunpack.c.h.b16 %v3163
          %v3245 = vunpack.c.l.b16 %v3164
          %v3246 = vunpack.c.h.b16 %v3164
          %v3247 = vunpack.c.l.b16 %v3165
          %v3248 = vunpack.c.h.b16 %v3165
          %v3249 = vunpack.c.l.b16 %v3166
          %v3250 = vunpack.c.h.b16 %v3166
          %v3251 = vunpack.c.l.b16 %v3167
          %v3252 = vunpack.c.h.b16 %v3167
          %v3253 = vunpack.c.l.b16 %v3168
          %v3254 = vunpack.c.h.b16 %v3168
          %v3255 = vunpack.c.l.b16 %v3169
          %v3256 = vunpack.c.h.b16 %v3169
          %v3257 = vunpack.c.l.b16 %v3170
          %v3258 = vunpack.c.h.b16 %v3170
          %v3259 = vunpack.c.l.b16 %v3171
          %v3260 = vunpack.c.h.b16 %v3171
          %v3261 = vunpack.c.l.b16 %v3172
          %v3262 = vunpack.c.h.b16 %v3172
          %v3263 = vunpack.c.l.b16 %v3173
          %v3264 = vunpack.c.h.b16 %v3173
          %v3265 = vunpack.c.l.b16 %v3174
          %v3266 = vunpack.c.h.b16 %v3174
          %v3267 = vunpack.c.l.b16 %v3175
          %v3268 = vunpack.c.h.b16 %v3175
          %v3269 = vunpack.c.l.b16 %v3176
          %v3270 = vunpack.c.h.b16 %v3176
          %v3271 = vunpack.c.l.b16 %v3177
          %v3272 = vunpack.c.h.b16 %v3177
          %v3273 = vunpack.c.l.b16 %v3178
          %v3274 = vunpack.c.h.b16 %v3178
          %v3275 = vpack.c.b16 %v3211, %v3211
          %v3276 = vpack.c.b16 %v3212, %v3212
          %v3277 = vpack.c.b16 %v3213, %v3213
          %v3278 = vpack.c.b16 %v3214, %v3214
          %v3279 = vpack.c.b16 %v3215, %v3215
          %v3280 = vpack.c.b16 %v3216, %v3216
          %v3281 = vpack.c.b16 %v3217, %v3217
          %v3282 = vpack.c.b16 %v3218, %v3218
          %v3283 = vpack.c.b16 %v3219, %v3219
          %v3284 = vpack.c.b16 %v3220, %v3220
          %v3285 = vpack.c.b16 %v3221, %v3221
          %v3286 = vpack.c.b16 %v3222, %v3222
          %v3287 = vpack.c.b16 %v3223, %v3223
          %v3288 = vpack.c.b16 %v3224, %v3224
          %v3289 = vpack.c.b16 %v3225, %v3225
          %v3290 = vpack.c.b16 %v3226, %v3226
          %v3291 = vpack.c.b16 %v3227, %v3227
          %v3292 = vpack.c.b16 %v3228, %v3228
          %v3293 = vpack.c.b16 %v3229, %v3229
          %v3294 = vpack.c.b16 %v3230, %v3230
          %v3295 = vpack.c.b16 %v3231, %v3231
          %v3296 = vpack.c.b16 %v3232, %v3232
          %v3297 = vpack.c.b16 %v3233, %v3233
          %v3298 = vpack.c.b16 %v3234, %v3234
          %v3299 = vpack.c.b16 %v3235, %v3235
          %v3300 = vpack.c.b16 %v3236, %v3236
          %v3301 = vpack.c.b16 %v3237, %v3237
          %v3302 = vpack.c.b16 %v3238, %v3238
          %v3303 = vpack.c.b16 %v3239, %v3239
          %v3304 = vpack.c.b16 %v3240, %v3240
          %v3305 = vpack.c.b16 %v3241, %v3241
          %v3306 = vpack.c.b16 %v3242, %v3242
          %v3307 = vpack.c.b16 %v3243, %v3243
          %v3308 = vpack.c.b16 %v3244, %v3244
          %v3309 = vpack.c.b16 %v3245, %v3245
          %v3310 = vpack.c.b16 %v3246, %v3246
          %v3311 = vpack.c.b16 %v3247, %v3247
          %v3312 = vpack.c.b16 %v3248, %v3248
          %v3313 = vpack.c.b16 %v3249, %v3249
          %v3314 = vpack.c.b16 %v3250, %v3250
          %v3315 = vpack.c.b16 %v3251, %v3251
          %v3316 = vpack.c.b16 %v3252, %v3252
          %v3317 = vpack.c.b16 %v3253, %v3253
          %v3318 = vpack.c.b16 %v3254, %v3254
          %v3319 = vpack.c.b16 %v3255, %v3255
          %v3320 = vpack.c.b16 %v3256, %v3256
          %v3321 = vpack.c.b16 %v3257, %v3257
          %v3322 = vpack.c.b16 %v3258, %v3258
          %v3323 = vpack.c.b16 %v3259, %v3259
          %v3324 = vpack.c.b16 %v3260, %v3260
          %v3325 = vpack.c.b16 %v3261, %v3261
          %v3326 = vpack.c.b16 %v3262, %v3262
          %v3327 = vpack.c.b16 %v3263, %v3263
          %v3328 = vpack.c.b16 %v3264, %v3264
          %v3329 = vpack.c.b16 %v3265, %v3265
          %v3330 = vpack.c.b16 %v3266, %v3266
          %v3331 = vpack.c.b16 %v3267, %v3267
          %v3332 = vpack.c.b16 %v3268, %v3268
          %v3333 = vpack.c.b16 %v3269, %v3269
          %v3334 = vpack.c.b16 %v3270, %v3270
          %v3335 = vpack.c.b16 %v3271, %v3271
          %v3336 = vpack.c.b16 %v3272, %v3272
          %v3337 = vpack.c.b16 %v3273, %v3273
          %v3338 = vpack.c.b16 %v3274, %v3274
          %3403 = vst [vmem:[%s543] sm:$0xf] %v3275
          %3404 = vst [vmem:[%s543 + $0x4] sm:$0xf] %v3276
          %3405 = vst [vmem:[%s543 + $0x8] sm:$0xf] %v3277
          %3406 = vst [vmem:[%s543 + $0xc] sm:$0xf] %v3278
          %3407 = vst [vmem:[%s543 + $0x10] sm:$0xf] %v3279
          %3408 = vst [vmem:[%s543 + $0x14] sm:$0xf] %v3280
          %3409 = vst [vmem:[%s543 + $0x18] sm:$0xf] %v3281
          %3410 = vst [vmem:[%s543 + $0x1c] sm:$0xf] %v3282
          %3411 = vst [vmem:[%s543 + $0x20] sm:$0xf] %v3283
          %3412 = vst [vmem:[%s543 + $0x24] sm:$0xf] %v3284
          %3413 = vst [vmem:[%s543 + $0x28] sm:$0xf] %v3285
          %3414 = vst [vmem:[%s543 + $0x2c] sm:$0xf] %v3286
          %3415 = vst [vmem:[%s543 + $0x30] sm:$0xf] %v3287
          %3416 = vst [vmem:[%s543 + $0x34] sm:$0xf] %v3288
          %3417 = vst [vmem:[%s543 + $0x38] sm:$0xf] %v3289
          %3418 = vst [vmem:[%s543 + $0x3c] sm:$0xf] %v3290
          %3419 = vst [vmem:[%s543 + $0x40] sm:$0xf] %v3291
          %3420 = vst [vmem:[%s543 + $0x44] sm:$0xf] %v3292
          %3421 = vst [vmem:[%s543 + $0x48] sm:$0xf] %v3293
          %3422 = vst [vmem:[%s543 + $0x4c] sm:$0xf] %v3294
          %3423 = vst [vmem:[%s543 + $0x50] sm:$0xf] %v3295
          %3424 = vst [vmem:[%s543 + $0x54] sm:$0xf] %v3296
          %3425 = vst [vmem:[%s543 + $0x58] sm:$0xf] %v3297
          %3426 = vst [vmem:[%s543 + $0x5c] sm:$0xf] %v3298
          %3427 = vst [vmem:[%s543 + $0x60] sm:$0xf] %v3299
          %3428 = vst [vmem:[%s543 + $0x64] sm:$0xf] %v3300
          %3429 = vst [vmem:[%s543 + $0x68] sm:$0xf] %v3301
          %3430 = vst [vmem:[%s543 + $0x6c] sm:$0xf] %v3302
          %3431 = vst [vmem:[%s543 + $0x70] sm:$0xf] %v3303
          %3432 = vst [vmem:[%s543 + $0x74] sm:$0xf] %v3304
          %3433 = vst [vmem:[%s543 + $0x78] sm:$0xf] %v3305
          %3434 = vst [vmem:[%s543 + $0x7c] sm:$0xf] %v3306
          %3435 = vst [vmem:[%s543 + $0x80] sm:$0xf] %v3307
          %3436 = vst [vmem:[%s543 + $0x84] sm:$0xf] %v3308
          %3437 = vst [vmem:[%s543 + $0x88] sm:$0xf] %v3309
          %3438 = vst [vmem:[%s543 + $0x8c] sm:$0xf] %v3310
          %3439 = vst [vmem:[%s543 + $0x90] sm:$0xf] %v3311
          %3440 = vst [vmem:[%s543 + $0x94] sm:$0xf] %v3312
          %3441 = vst [vmem:[%s543 + $0x98] sm:$0xf] %v3313
          %3442 = vst [vmem:[%s543 + $0x9c] sm:$0xf] %v3314
          %3443 = vst [vmem:[%s543 + $0xa0] sm:$0xf] %v3315
          %3444 = vst [vmem:[%s543 + $0xa4] sm:$0xf] %v3316
          %3445 = vst [vmem:[%s543 + $0xa8] sm:$0xf] %v3317
          %3446 = vst [vmem:[%s543 + $0xac] sm:$0xf] %v3318
          %3447 = vst [vmem:[%s543 + $0xb0] sm:$0xf] %v3319
          %3448 = vst [vmem:[%s543 + $0xb4] sm:$0xf] %v3320
          %3449 = vst [vmem:[%s543 + $0xb8] sm:$0xf] %v3321
          %3450 = vst [vmem:[%s543 + $0xbc] sm:$0xf] %v3322
          %3451 = vst [vmem:[%s543 + $0xc0] sm:$0xf] %v3323
          %3452 = vst [vmem:[%s543 + $0xc4] sm:$0xf] %v3324
          %3453 = vst [vmem:[%s543 + $0xc8] sm:$0xf] %v3325
          %3454 = vst [vmem:[%s543 + $0xcc] sm:$0xf] %v3326
          %3455 = vst [vmem:[%s543 + $0xd0] sm:$0xf] %v3327
          %3456 = vst [vmem:[%s543 + $0xd4] sm:$0xf] %v3328
          %3457 = vst [vmem:[%s543 + $0xd8] sm:$0xf] %v3329
          %3458 = vst [vmem:[%s543 + $0xdc] sm:$0xf] %v3330
          %3459 = vst [vmem:[%s543 + $0xe0] sm:$0xf] %v3331
          %3460 = vst [vmem:[%s543 + $0xe4] sm:$0xf] %v3332
          %3461 = vst [vmem:[%s543 + $0xe8] sm:$0xf] %v3333
          %3462 = vst [vmem:[%s543 + $0xec] sm:$0xf] %v3334
          %3463 = vst [vmem:[%s543 + $0xf0] sm:$0xf] %v3335
          %3464 = vst [vmem:[%s543 + $0xf4] sm:$0xf] %v3336
          %3465 = vst [vmem:[%s543 + $0xf8] sm:$0xf] %v3337
          %3466 = vst [vmem:[%s543 + $0xfc] sm:$0xf] %v3338
        $region67: #{discriminator_forward.8} parent=54 // pred_fallthru
          _
        %p3467 = scmp.lt.s32.totalorder %s19, 0
        %s3468 = scalar_select %p3467, %s19, 0
        %s3469 = smul.addr %s3468, 4
        %s3470 = scalar_lea.vmem %s4, %s3469
        // Predicated region
        $region68: #{discriminator_forward.8} parent=54 // pred_check
          %p3471 = pneg %p151
        $region69: #{discriminator_forward.8} parent=54 // pred_check_branch
          %3473 = sbr.rel (%p3471) target = $region71
        $region70: #{discriminator_forward.8} parent=54 // pred_region
          _
        $region71: #{discriminator_forward.8} parent=54 // pred_fallthru
          _
        // Predicated region
        $region72: #{discriminator_forward.8} parent=54 // pred_check
          %p3474 = pneg %p151
        $region73: #{discriminator_forward.8} parent=54 // pred_check_branch
          %3476 = sbr.rel (%p3474) target = $region75
        $region74: #{discriminator_forward.8} parent=54 // pred_region
          %p3477 = scmp.lt.s32.totalorder %s19, 0
          %s3478 = scalar_select %p3477, %s19, 0
          %s3479 = smul.addr %s3478, 4
          %s3480 = scalar_lea.vmem %s4, %s3479
        $region75: #{discriminator_forward.8} parent=54 // pred_fallthru
          _
      $region55: #{discriminator_forward.8} parent=5 // pred_fallthru
        _
      %p3481 = scmp.le.s32.totalorder 2, %s10
      // Predicated region
      $region76: #{discriminator_forward.8} parent=5 // pred_check
        %p3482 = pneg %p3481
      $region77: #{discriminator_forward.8} parent=5 // pred_check_branch
        %3484 = sbr.rel (%p3482) target = $region79
      $region78: #{discriminator_forward.8} parent=5 // pred_region
        %s3485 = ssub.s32 %s10, 2
      $region79: #{discriminator_forward.8} parent=5 // pred_fallthru
        _
    $region6: #{discriminator_forward.8} parent=1 // loop_footer
      %s14 = sadd.s32 1, %s10
    $region7: #{discriminator_forward.8} parent=1 // loop_footer_branch
      %9 = sbr.rel target = $region3
    $region8: #{discriminator_forward.8} parent=1 // loop_exit
      _

// kernel: discriminator_forward.9
$region0: #{discriminator_forward.9}
  #allocation0 [shape = 'u32[]', space=smem, size = 0x4, offset = 0x4, fixed_abs, tag = 'smem constant byte address 0x4 - core index']
  #allocation1 [shape = 'u32[144,128]{1,0:T(1,128)}', space=vmem, size = 0x12000, scoped, tag = 'internal scratch']
  #allocation2 [shape = 'f32[128,128]{1,0:T(8,128)}', space=vmem, size = 0x10000, scoped, tag = 'scratch operand']
  %s0 = inlined_call_operand.vmem [shape: bf16[128,2048], index: 0, kind: input, shape index: {}]
  %s1 = inlined_call_operand.vmem [shape: bf16[2048,256], index: 1, kind: input, shape index: {}]
  %s2 = inlined_call_operand.vmem [shape: f32[1,256], index: 2, kind: input, shape index: {}]
  %s3 = inlined_call_operand.vmem [shape: f32[1,256], index: 3, kind: input, shape index: {}]
  %s4 = inlined_call_operand.vmem [shape: bf16[128,256], index: 4, kind: output, shape index: {}]
  %s5 = sld [smem:[#allocation0]]
  $region158: #{discriminator_forward.9} parent=0
    _
  %s7 = ssub.s32 1, %s5
  %s8 = scalar_select 0, %s7, %s5
  $region1: #{discriminator_forward.9} parent=0
    #allocation3 [shape = 'u8[262144]{0}', space=vmem, size = 0x40000, scoped, tag = 'input window, operand 0']
    #allocation4 [shape = 'u8[262144]{0}', space=vmem, size = 0x40000, scoped, tag = 'input window, operand 1']
    #allocation5 [shape = 'u8[65536]{0}', space=vmem, size = 0x10000, scoped, tag = 'output window, operand 0']
    loop: start=0, step=1, limit=10
    $region2: #{discriminator_forward.9} parent=1 // loop_pre_header
      _
    $region3: #{discriminator_forward.9} parent=1 // loop_header
      %s10 = sphi 0, %s14
      %p11 = scmp.ge.s32.totalorder %s10, 10
      %s17 = sphi 0, %s29
      %s18 = sphi 0, %s25
      %s19 = sphi 0, %s17
      %s20 = sphi 0, %s18
      %s21 = sphi 0, %s19
      %s22 = sphi 0, %s20
      %s32 = sphi 0, %s34
      %s35 = sphi 0, %s32
      %s36 = sphi 0, %s35
      %s52 = sphi 0, %s36
      %s60 = sphi 0, %s62
      %s63 = sphi 0, %s60
      %s64 = sphi 0, %s63
      %s80 = sphi 0, %s64
      %s86 = sphi 0, %s88
      %s89 = sphi 0, %s86
      %s90 = sphi 0, %s89
      %s106 = sphi 0, %s90
      %s112 = sphi 0, %s114
      %s115 = sphi 0, %s112
      %s116 = sphi 0, %s115
      %s132 = sphi 0, %s116
      %s138 = sphi 0, %s140
      %s141 = sphi 0, %s138
      %s142 = sphi 0, %s141
      %s158 = sphi 0, %s142
    $region4: #{discriminator_forward.9} parent=1 // loop_header_branch
      %13 = sbr.rel (%p11) target = $region8
    $region5: #{discriminator_forward.9} parent=1 // loop_body
      %s15 = ssub.s32 %s10, 1
      %s16 = ssub.s32 %s10, 2
      %s23 = sadd.s32 1, %s18
      %p24 = scmp.ge.s32.totalorder %s23, 4
      %s25 = scalar_select %p24, 0, %s23
      %s26 = sadd.s32 1, %s17
      %s27 = scalar_select %p24, %s26, %s17
      %p28 = scmp.ge.s32.totalorder %s27, 2
      %s29 = scalar_select %p28, 0, %s27
      %s30 = ssub.s32 %s18, %s25
      %p31 = scmp.eq.s32.totalorder %s30, 0
      %s33 = sadd.s32 %s32, 1
      %s34 = scalar_select %p31, %s32, %s33
      %p37 = pneg %p31
      %p38 = scmp.eq.s32.totalorder %s10, 7
      %p39 = por %p37, %p38
      %p40 = scmp.ne.s32.totalorder %s32, %s35
      %p41 = scmp.eq.s32.totalorder %s10, 0
      %p42 = por %p40, %p41
      %p43 = scmp.ne.s32.totalorder %s32, %s35
      %p44 = scmp.eq.s32.totalorder %s15, 7
      %p45 = por %p43, %p44
      %p46 = scmp.ne.s32.totalorder %s35, %s36
      %p47 = scmp.eq.s32.totalorder %s15, 0
      %p48 = por %p46, %p47
      %p49 = scmp.ne.s32.totalorder %s35, %s36
      %p50 = scmp.eq.s32.totalorder %s16, 7
      %p51 = por %p49, %p50
      %p53 = scmp.ne.s32.totalorder %s36, %s52
      %p54 = scmp.eq.s32.totalorder %s16, 0
      %p55 = por %p53, %p54
      %s56 = ssub.s32 %s18, %s25
      %s57 = ssub.s32 %s17, %s29
      %s58 = sor.u32 %s56, %s57
      %p59 = scmp.eq.s32.totalorder %s58, 0
      %s61 = sadd.s32 %s60, 1
      %s62 = scalar_select %p59, %s60, %s61
      %p65 = pneg %p59
      %p66 = scmp.eq.s32.totalorder %s10, 7
      %p67 = por %p65, %p66
      %p68 = scmp.ne.s32.totalorder %s60, %s63
      %p69 = scmp.eq.s32.totalorder %s10, 0
      %p70 = por %p68, %p69
      %p71 = scmp.ne.s32.totalorder %s60, %s63
      %p72 = scmp.eq.s32.totalorder %s15, 7
      %p73 = por %p71, %p72
      %p74 = scmp.ne.s32.totalorder %s63, %s64
      %p75 = scmp.eq.s32.totalorder %s15, 0
      %p76 = por %p74, %p75
      %p77 = scmp.ne.s32.totalorder %s63, %s64
      %p78 = scmp.eq.s32.totalorder %s16, 7
      %p79 = por %p77, %p78
      %p81 = scmp.ne.s32.totalorder %s64, %s80
      %p82 = scmp.eq.s32.totalorder %s16, 0
      %p83 = por %p81, %p82
      %s84 = ssub.s32 %s17, %s29
      %p85 = scmp.eq.s32.totalorder %s84, 0
      %s87 = sadd.s32 %s86, 1
      %s88 = scalar_select %p85, %s86, %s87
      %p91 = pneg %p85
      %p92 = scmp.eq.s32.totalorder %s10, 7
      %p93 = por %p91, %p92
      %p94 = scmp.ne.s32.totalorder %s86, %s89
      %p95 = scmp.eq.s32.totalorder %s10, 0
      %p96 = por %p94, %p95
      %p97 = scmp.ne.s32.totalorder %s86, %s89
      %p98 = scmp.eq.s32.totalorder %s15, 7
      %p99 = por %p97, %p98
      %p100 = scmp.ne.s32.totalorder %s89, %s90
      %p101 = scmp.eq.s32.totalorder %s15, 0
      %p102 = por %p100, %p101
      %p103 = scmp.ne.s32.totalorder %s89, %s90
      %p104 = scmp.eq.s32.totalorder %s16, 7
      %p105 = por %p103, %p104
      %p107 = scmp.ne.s32.totalorder %s90, %s106
      %p108 = scmp.eq.s32.totalorder %s16, 0
      %p109 = por %p107, %p108
      %s110 = ssub.s32 %s17, %s29
      %p111 = scmp.eq.s32.totalorder %s110, 0
      %s113 = sadd.s32 %s112, 1
      %s114 = scalar_select %p111, %s112, %s113
      %p117 = pneg %p111
      %p118 = scmp.eq.s32.totalorder %s10, 7
      %p119 = por %p117, %p118
      %p120 = scmp.ne.s32.totalorder %s112, %s115
      %p121 = scmp.eq.s32.totalorder %s10, 0
      %p122 = por %p120, %p121
      %p123 = scmp.ne.s32.totalorder %s112, %s115
      %p124 = scmp.eq.s32.totalorder %s15, 7
      %p125 = por %p123, %p124
      %p126 = scmp.ne.s32.totalorder %s115, %s116
      %p127 = scmp.eq.s32.totalorder %s15, 0
      %p128 = por %p126, %p127
      %p129 = scmp.ne.s32.totalorder %s115, %s116
      %p130 = scmp.eq.s32.totalorder %s16, 7
      %p131 = por %p129, %p130
      %p133 = scmp.ne.s32.totalorder %s116, %s132
      %p134 = scmp.eq.s32.totalorder %s16, 0
      %p135 = por %p133, %p134
      %s136 = ssub.s32 %s17, %s29
      %p137 = scmp.eq.s32.totalorder %s136, 0
      %s139 = sadd.s32 %s138, 1
      %s140 = scalar_select %p137, %s138, %s139
      %p143 = pneg %p137
      %p144 = scmp.eq.s32.totalorder %s10, 7
      %p145 = por %p143, %p144
      %p146 = scmp.ne.s32.totalorder %s138, %s141
      %p147 = scmp.eq.s32.totalorder %s10, 0
      %p148 = por %p146, %p147
      %p149 = scmp.ne.s32.totalorder %s138, %s141
      %p150 = scmp.eq.s32.totalorder %s15, 7
      %p151 = por %p149, %p150
      %p152 = scmp.ne.s32.totalorder %s141, %s142
      %p153 = scmp.eq.s32.totalorder %s15, 0
      %p154 = por %p152, %p153
      %p155 = scmp.ne.s32.totalorder %s141, %s142
      %p156 = scmp.eq.s32.totalorder %s16, 7
      %p157 = por %p155, %p156
      %p159 = scmp.ne.s32.totalorder %s142, %s158
      %p160 = scmp.eq.s32.totalorder %s16, 0
      %p161 = por %p159, %p160
      %p162 = scmp.le.s32.totalorder 1, %s10
      %p163 = scmp.lt.s32.totalorder %s10, 9
      %p164 = pnand %p162, %p163
      %p165 = pneg %p164
      // Predicated region
      $region9: #{discriminator_forward.9} parent=5 // pred_check
        _
      $region10: #{discriminator_forward.9} parent=5 // pred_check_branch
        %167 = sbr.rel (%p164) target = $region12
      $region11: #{discriminator_forward.9} parent=5 // pred_region
        %s168 = ssub.s32 %s10, 1
      $region12: #{discriminator_forward.9} parent=5 // pred_fallthru
        _
      %p169 = scmp.lt.s32.totalorder %s10, 8
      // Predicated region
      $region13: #{discriminator_forward.9} parent=5 // pred_check
        %p170 = pneg %p169
      $region14: #{discriminator_forward.9} parent=5 // pred_check_branch
        %172 = sbr.rel (%p170) target = $region16
      $region15: #{discriminator_forward.9} parent=5 // pred_region
        // Predicated region
        $region17: #{discriminator_forward.9} parent=15 // pred_check
          %p173 = pneg %p42
        $region18: #{discriminator_forward.9} parent=15 // pred_check_branch
          %175 = sbr.rel (%p173) target = $region20
        $region19: #{discriminator_forward.9} parent=15 // pred_region
          %s176 = sand.u32 %s32, 1
          %s177 = sand.u32 %s32, 1
          %s178 = smul.addr %s177, 256
          %s179 = scalar_lea.vmem [#allocation3], %s178
          %s180 = smul.u32 4, %s18
          %s181 = smul.addr %s180, 4
          %s182 = scalar_lea.vmem %s0, %s181
          // Predicated region
          $region21: #{discriminator_forward.9} parent=19 // pred_check
            _
          $region22: #{discriminator_forward.9} parent=19 // pred_check_branch
            %184 = sbr.rel (0) target = $region24
          $region23: #{discriminator_forward.9} parent=19 // pred_region
            // Predicated region
            $region25: #{discriminator_forward.9} parent=23 // pred_check
              _
            $region26: #{discriminator_forward.9} parent=23 // pred_check_branch
              %186 = sbr.rel (0) target = $region28
            $region27: #{discriminator_forward.9} parent=23 // pred_region
              loop: start=0, step=1, limit=1
              $region29: #{discriminator_forward.9} parent=27 // loop_pre_header
                _
              $region30: #{discriminator_forward.9} parent=27 // loop_header
                %s188 = sphi 0, %s192
                %p189 = scmp.ge.s32.totalorder %s188, 1
                %s193 = sphi %s182, %s182
                %s194 = sphi %s179, %s179
              $region31: #{discriminator_forward.9} parent=27 // loop_header_branch
                %191 = sbr.rel (%p189) target = $region35
              $region32: #{discriminator_forward.9} parent=27 // loop_body
                %v195 = vld [vmem:[%s193] sm:$0xff]
                %196 = vst [vmem:[%s194] sm:$0xff] %v195
                %v197 = vld [vmem:[%s193 + $0x8] sm:$0xff]
                %198 = vst [vmem:[%s194 + $0x8] sm:$0xff] %v197
                %v199 = vld [vmem:[%s193 + $0x40] sm:$0xff]
                %200 = vst [vmem:[%s194 + $0x10] sm:$0xff] %v199
                %v201 = vld [vmem:[%s193 + $0x48] sm:$0xff]
                %202 = vst [vmem:[%s194 + $0x18] sm:$0xff] %v201
                %v203 = vld [vmem:[%s193 + $0x80] sm:$0xff]
                %204 = vst [vmem:[%s194 + $0x20] sm:$0xff] %v203
                %v205 = vld [vmem:[%s193 + $0x88] sm:$0xff]
                %206 = vst [vmem:[%s194 + $0x28] sm:$0xff] %v205
                %v207 = vld [vmem:[%s193 + $0xc0] sm:$0xff]
                %208 = vst [vmem:[%s194 + $0x30] sm:$0xff] %v207
                %v209 = vld [vmem:[%s193 + $0xc8] sm:$0xff]
                %210 = vst [vmem:[%s194 + $0x38] sm:$0xff] %v209
                %v211 = vld [vmem:[%s193 + $0x100] sm:$0xff]
                %212 = vst [vmem:[%s194 + $0x40] sm:$0xff] %v211
                %v213 = vld [vmem:[%s193 + $0x108] sm:$0xff]
                %214 = vst [vmem:[%s194 + $0x48] sm:$0xff] %v213
                %v215 = vld [vmem:[%s193 + $0x140] sm:$0xff]
                %216 = vst [vmem:[%s194 + $0x50] sm:$0xff] %v215
                %v217 = vld [vmem:[%s193 + $0x148] sm:$0xff]
                %218 = vst [vmem:[%s194 + $0x58] sm:$0xff] %v217
                %v219 = vld [vmem:[%s193 + $0x180] sm:$0xff]
                %220 = vst [vmem:[%s194 + $0x60] sm:$0xff] %v219
                %v221 = vld [vmem:[%s193 + $0x188] sm:$0xff]
                %222 = vst [vmem:[%s194 + $0x68] sm:$0xff] %v221
                %v223 = vld [vmem:[%s193 + $0x1c0] sm:$0xff]
                %224 = vst [vmem:[%s194 + $0x70] sm:$0xff] %v223
                %v225 = vld [vmem:[%s193 + $0x1c8] sm:$0xff]
                %226 = vst [vmem:[%s194 + $0x78] sm:$0xff] %v225
                %v227 = vld [vmem:[%s193 + $0x200] sm:$0xff]
                %228 = vst [vmem:[%s194 + $0x80] sm:$0xff] %v227
                %v229 = vld [vmem:[%s193 + $0x208] sm:$0xff]
                %230 = vst [vmem:[%s194 + $0x88] sm:$0xff] %v229
                %v231 = vld [vmem:[%s193 + $0x240] sm:$0xff]
                %232 = vst [vmem:[%s194 + $0x90] sm:$0xff] %v231
                %v233 = vld [vmem:[%s193 + $0x248] sm:$0xff]
                %234 = vst [vmem:[%s194 + $0x98] sm:$0xff] %v233
                %v235 = vld [vmem:[%s193 + $0x280] sm:$0xff]
                %236 = vst [vmem:[%s194 + $0xa0] sm:$0xff] %v235
                %v237 = vld [vmem:[%s193 + $0x288] sm:$0xff]
                %238 = vst [vmem:[%s194 + $0xa8] sm:$0xff] %v237
                %v239 = vld [vmem:[%s193 + $0x2c0] sm:$0xff]
                %240 = vst [vmem:[%s194 + $0xb0] sm:$0xff] %v239
                %v241 = vld [vmem:[%s193 + $0x2c8] sm:$0xff]
                %242 = vst [vmem:[%s194 + $0xb8] sm:$0xff] %v241
                %v243 = vld [vmem:[%s193 + $0x300] sm:$0xff]
                %244 = vst [vmem:[%s194 + $0xc0] sm:$0xff] %v243
                %v245 = vld [vmem:[%s193 + $0x308] sm:$0xff]
                %246 = vst [vmem:[%s194 + $0xc8] sm:$0xff] %v245
                %v247 = vld [vmem:[%s193 + $0x340] sm:$0xff]
                %248 = vst [vmem:[%s194 + $0xd0] sm:$0xff] %v247
                %v249 = vld [vmem:[%s193 + $0x348] sm:$0xff]
                %250 = vst [vmem:[%s194 + $0xd8] sm:$0xff] %v249
                %v251 = vld [vmem:[%s193 + $0x380] sm:$0xff]
                %252 = vst [vmem:[%s194 + $0xe0] sm:$0xff] %v251
                %v253 = vld [vmem:[%s193 + $0x388] sm:$0xff]
                %254 = vst [vmem:[%s194 + $0xe8] sm:$0xff] %v253
                %v255 = vld [vmem:[%s193 + $0x3c0] sm:$0xff]
                %256 = vst [vmem:[%s194 + $0xf0] sm:$0xff] %v255
                %v257 = vld [vmem:[%s193 + $0x3c8] sm:$0xff]
                %258 = vst [vmem:[%s194 + $0xf8] sm:$0xff] %v257
              $region33: #{discriminator_forward.9} parent=27 // loop_footer
                %s192 = sadd.s32 1, %s188
              $region34: #{discriminator_forward.9} parent=27 // loop_footer_branch
                %187 = sbr.rel target = $region30
              $region35: #{discriminator_forward.9} parent=27 // loop_exit
                _
            $region28: #{discriminator_forward.9} parent=23 // pred_fallthru
              _
            // Predicated region
            $region36: #{discriminator_forward.9} parent=23 // pred_check
              _
            $region37: #{discriminator_forward.9} parent=23 // pred_check_branch
              %260 = sbr.rel target = $region39
            $region38: #{discriminator_forward.9} parent=23 // pred_region
              _
            $region39: #{discriminator_forward.9} parent=23 // pred_fallthru
              _
          $region24: #{discriminator_forward.9} parent=19 // pred_fallthru
            _
          %261 = vnop
        $region20: #{discriminator_forward.9} parent=15 // pred_fallthru
          _
        // Predicated region
        $region40: #{discriminator_forward.9} parent=15 // pred_check
          %p262 = pneg %p70
        $region41: #{discriminator_forward.9} parent=15 // pred_check_branch
          %264 = sbr.rel (%p262) target = $region43
        $region42: #{discriminator_forward.9} parent=15 // pred_region
          %s265 = sand.u32 %s60, 1
          %s266 = sand.u32 %s60, 1
          %s267 = smul.addr %s266, 256
          %s268 = scalar_lea.vmem [#allocation4], %s267
          %s269 = smul.u32 64, %s18
          %s270 = smul.addr %s269, 2
          %s271 = sadd.s32 %s17, %s270
          %s272 = smul.addr %s271, 4
          %s273 = scalar_lea.vmem %s1, %s272
          // Predicated region
          $region44: #{discriminator_forward.9} parent=42 // pred_check
            _
          $region45: #{discriminator_forward.9} parent=42 // pred_check_branch
            %275 = sbr.rel (0) target = $region47
          $region46: #{discriminator_forward.9} parent=42 // pred_region
            // Predicated region
            $region48: #{discriminator_forward.9} parent=46 // pred_check
              _
            $region49: #{discriminator_forward.9} parent=46 // pred_check_branch
              %277 = sbr.rel target = $region51
            $region50: #{discriminator_forward.9} parent=46 // pred_region
              // Predicated region
              $region63: #{discriminator_forward.9} parent=50 // pred_check
                _
              $region64: #{discriminator_forward.9} parent=50 // pred_check_branch
                %419 = sbr.rel (0) target = $region66
              $region65: #{discriminator_forward.9} parent=50 // pred_region
                loop: start=0, step=1, limit=1
                $region67: #{discriminator_forward.9} parent=65 // loop_pre_header
                  _
                $region68: #{discriminator_forward.9} parent=65 // loop_header
                  %s421 = sphi 0, %s425
                  %p422 = scmp.ge.s32.totalorder %s421, 1
                  %s426 = sphi %s273, %s273
                  %s427 = sphi %s268, %s268
                $region69: #{discriminator_forward.9} parent=65 // loop_header_branch
                  %424 = sbr.rel (%p422) target = $region73
                $region70: #{discriminator_forward.9} parent=65 // loop_body
                  _
                $region71: #{discriminator_forward.9} parent=65 // loop_footer
                  %s425 = sadd.s32 1, %s421
                $region72: #{discriminator_forward.9} parent=65 // loop_footer_branch
                  %420 = sbr.rel target = $region68
                $region73: #{discriminator_forward.9} parent=65 // loop_exit
                  _
                %s429 = ssub.s32 16, 1
                loop: start=0, step=1, limit=1
                $region74: #{discriminator_forward.9} parent=65 // loop_pre_header
                  _
                $region75: #{discriminator_forward.9} parent=65 // loop_header
                  %s431 = sphi 0, %s435
                  %p432 = scmp.ge.s32.totalorder %s431, 1
                  %s436 = sphi %s273, %s273
                  %s437 = sphi %s268, %s268
                $region76: #{discriminator_forward.9} parent=65 // loop_header_branch
                  %434 = sbr.rel (%p432) target = $region80
                $region77: #{discriminator_forward.9} parent=65 // loop_body
                  %v438 = vld [vmem:[%s436] sm:%s429]
                  %439 = vst [vmem:[%s437] sm:%s429] %v438
                  %v440 = vld [vmem:[%s436 + $0x8] sm:%s429]
                  %441 = vst [vmem:[%s437 + $0x4] sm:%s429] %v440
                  %v442 = vld [vmem:[%s436 + $0x10] sm:%s429]
                  %443 = vst [vmem:[%s437 + $0x8] sm:%s429] %v442
                  %v444 = vld [vmem:[%s436 + $0x18] sm:%s429]
                  %445 = vst [vmem:[%s437 + $0xc] sm:%s429] %v444
                  %v446 = vld [vmem:[%s436 + $0x20] sm:%s429]
                  %447 = vst [vmem:[%s437 + $0x10] sm:%s429] %v446
                  %v448 = vld [vmem:[%s436 + $0x28] sm:%s429]
                  %449 = vst [vmem:[%s437 + $0x14] sm:%s429] %v448
                  %v450 = vld [vmem:[%s436 + $0x30] sm:%s429]
                  %451 = vst [vmem:[%s437 + $0x18] sm:%s429] %v450
                  %v452 = vld [vmem:[%s436 + $0x38] sm:%s429]
                  %453 = vst [vmem:[%s437 + $0x1c] sm:%s429] %v452
                  %v454 = vld [vmem:[%s436 + $0x40] sm:%s429]
                  %455 = vst [vmem:[%s437 + $0x20] sm:%s429] %v454
                  %v456 = vld [vmem:[%s436 + $0x48] sm:%s429]
                  %457 = vst [vmem:[%s437 + $0x24] sm:%s429] %v456
                  %v458 = vld [vmem:[%s436 + $0x50] sm:%s429]
                  %459 = vst [vmem:[%s437 + $0x28] sm:%s429] %v458
                  %v460 = vld [vmem:[%s436 + $0x58] sm:%s429]
                  %461 = vst [vmem:[%s437 + $0x2c] sm:%s429] %v460
                  %v462 = vld [vmem:[%s436 + $0x60] sm:%s429]
                  %463 = vst [vmem:[%s437 + $0x30] sm:%s429] %v462
                  %v464 = vld [vmem:[%s436 + $0x68] sm:%s429]
                  %465 = vst [vmem:[%s437 + $0x34] sm:%s429] %v464
                  %v466 = vld [vmem:[%s436 + $0x70] sm:%s429]
                  %467 = vst [vmem:[%s437 + $0x38] sm:%s429] %v466
                  %v468 = vld [vmem:[%s436 + $0x78] sm:%s429]
                  %469 = vst [vmem:[%s437 + $0x3c] sm:%s429] %v468
                  %v470 = vld [vmem:[%s436 + $0x80] sm:%s429]
                  %471 = vst [vmem:[%s437 + $0x40] sm:%s429] %v470
                  %v472 = vld [vmem:[%s436 + $0x88] sm:%s429]
                  %473 = vst [vmem:[%s437 + $0x44] sm:%s429] %v472
                  %v474 = vld [vmem:[%s436 + $0x90] sm:%s429]
                  %475 = vst [vmem:[%s437 + $0x48] sm:%s429] %v474
                  %v476 = vld [vmem:[%s436 + $0x98] sm:%s429]
                  %477 = vst [vmem:[%s437 + $0x4c] sm:%s429] %v476
                  %v478 = vld [vmem:[%s436 + $0xa0] sm:%s429]
                  %479 = vst [vmem:[%s437 + $0x50] sm:%s429] %v478
                  %v480 = vld [vmem:[%s436 + $0xa8] sm:%s429]
                  %481 = vst [vmem:[%s437 + $0x54] sm:%s429] %v480
                  %v482 = vld [vmem:[%s436 + $0xb0] sm:%s429]
                  %483 = vst [vmem:[%s437 + $0x58] sm:%s429] %v482
                  %v484 = vld [vmem:[%s436 + $0xb8] sm:%s429]
                  %485 = vst [vmem:[%s437 + $0x5c] sm:%s429] %v484
                  %v486 = vld [vmem:[%s436 + $0xc0] sm:%s429]
                  %487 = vst [vmem:[%s437 + $0x60] sm:%s429] %v486
                  %v488 = vld [vmem:[%s436 + $0xc8] sm:%s429]
                  %489 = vst [vmem:[%s437 + $0x64] sm:%s429] %v488
                  %v490 = vld [vmem:[%s436 + $0xd0] sm:%s429]
                  %491 = vst [vmem:[%s437 + $0x68] sm:%s429] %v490
                  %v492 = vld [vmem:[%s436 + $0xd8] sm:%s429]
                  %493 = vst [vmem:[%s437 + $0x6c] sm:%s429] %v492
                  %v494 = vld [vmem:[%s436 + $0xe0] sm:%s429]
                  %495 = vst [vmem:[%s437 + $0x70] sm:%s429] %v494
                  %v496 = vld [vmem:[%s436 + $0xe8] sm:%s429]
                  %497 = vst [vmem:[%s437 + $0x74] sm:%s429] %v496
                  %v498 = vld [vmem:[%s436 + $0xf0] sm:%s429]
                  %499 = vst [vmem:[%s437 + $0x78] sm:%s429] %v498
                  %v500 = vld [vmem:[%s436 + $0xf8] sm:%s429]
                  %501 = vst [vmem:[%s437 + $0x7c] sm:%s429] %v500
                  %v502 = vld [vmem:[%s436 + $0x100] sm:%s429]
                  %503 = vst [vmem:[%s437 + $0x80] sm:%s429] %v502
                  %v504 = vld [vmem:[%s436 + $0x108] sm:%s429]
                  %505 = vst [vmem:[%s437 + $0x84] sm:%s429] %v504
                  %v506 = vld [vmem:[%s436 + $0x110] sm:%s429]
                  %507 = vst [vmem:[%s437 + $0x88] sm:%s429] %v506
                  %v508 = vld [vmem:[%s436 + $0x118] sm:%s429]
                  %509 = vst [vmem:[%s437 + $0x8c] sm:%s429] %v508
                  %v510 = vld [vmem:[%s436 + $0x120] sm:%s429]
                  %511 = vst [vmem:[%s437 + $0x90] sm:%s429] %v510
                  %v512 = vld [vmem:[%s436 + $0x128] sm:%s429]
                  %513 = vst [vmem:[%s437 + $0x94] sm:%s429] %v512
                  %v514 = vld [vmem:[%s436 + $0x130] sm:%s429]
                  %515 = vst [vmem:[%s437 + $0x98] sm:%s429] %v514
                  %v516 = vld [vmem:[%s436 + $0x138] sm:%s429]
                  %517 = vst [vmem:[%s437 + $0x9c] sm:%s429] %v516
                  %v518 = vld [vmem:[%s436 + $0x140] sm:%s429]
                  %519 = vst [vmem:[%s437 + $0xa0] sm:%s429] %v518
                  %v520 = vld [vmem:[%s436 + $0x148] sm:%s429]
                  %521 = vst [vmem:[%s437 + $0xa4] sm:%s429] %v520
                  %v522 = vld [vmem:[%s436 + $0x150] sm:%s429]
                  %523 = vst [vmem:[%s437 + $0xa8] sm:%s429] %v522
                  %v524 = vld [vmem:[%s436 + $0x158] sm:%s429]
                  %525 = vst [vmem:[%s437 + $0xac] sm:%s429] %v524
                  %v526 = vld [vmem:[%s436 + $0x160] sm:%s429]
                  %527 = vst [vmem:[%s437 + $0xb0] sm:%s429] %v526
                  %v528 = vld [vmem:[%s436 + $0x168] sm:%s429]
                  %529 = vst [vmem:[%s437 + $0xb4] sm:%s429] %v528
                  %v530 = vld [vmem:[%s436 + $0x170] sm:%s429]
                  %531 = vst [vmem:[%s437 + $0xb8] sm:%s429] %v530
                  %v532 = vld [vmem:[%s436 + $0x178] sm:%s429]
                  %533 = vst [vmem:[%s437 + $0xbc] sm:%s429] %v532
                  %v534 = vld [vmem:[%s436 + $0x180] sm:%s429]
                  %535 = vst [vmem:[%s437 + $0xc0] sm:%s429] %v534
                  %v536 = vld [vmem:[%s436 + $0x188] sm:%s429]
                  %537 = vst [vmem:[%s437 + $0xc4] sm:%s429] %v536
                  %v538 = vld [vmem:[%s436 + $0x190] sm:%s429]
                  %539 = vst [vmem:[%s437 + $0xc8] sm:%s429] %v538
                  %v540 = vld [vmem:[%s436 + $0x198] sm:%s429]
                  %541 = vst [vmem:[%s437 + $0xcc] sm:%s429] %v540
                  %v542 = vld [vmem:[%s436 + $0x1a0] sm:%s429]
                  %543 = vst [vmem:[%s437 + $0xd0] sm:%s429] %v542
                  %v544 = vld [vmem:[%s436 + $0x1a8] sm:%s429]
                  %545 = vst [vmem:[%s437 + $0xd4] sm:%s429] %v544
                  %v546 = vld [vmem:[%s436 + $0x1b0] sm:%s429]
                  %547 = vst [vmem:[%s437 + $0xd8] sm:%s429] %v546
                  %v548 = vld [vmem:[%s436 + $0x1b8] sm:%s429]
                  %549 = vst [vmem:[%s437 + $0xdc] sm:%s429] %v548
                  %v550 = vld [vmem:[%s436 + $0x1c0] sm:%s429]
                  %551 = vst [vmem:[%s437 + $0xe0] sm:%s429] %v550
                  %v552 = vld [vmem:[%s436 + $0x1c8] sm:%s429]
                  %553 = vst [vmem:[%s437 + $0xe4] sm:%s429] %v552
                  %v554 = vld [vmem:[%s436 + $0x1d0] sm:%s429]
                  %555 = vst [vmem:[%s437 + $0xe8] sm:%s429] %v554
                  %v556 = vld [vmem:[%s436 + $0x1d8] sm:%s429]
                  %557 = vst [vmem:[%s437 + $0xec] sm:%s429] %v556
                  %v558 = vld [vmem:[%s436 + $0x1e0] sm:%s429]
                  %559 = vst [vmem:[%s437 + $0xf0] sm:%s429] %v558
                  %v560 = vld [vmem:[%s436 + $0x1e8] sm:%s429]
                  %561 = vst [vmem:[%s437 + $0xf4] sm:%s429] %v560
                  %v562 = vld [vmem:[%s436 + $0x1f0] sm:%s429]
                  %563 = vst [vmem:[%s437 + $0xf8] sm:%s429] %v562
                  %v564 = vld [vmem:[%s436 + $0x1f8] sm:%s429]
                  %565 = vst [vmem:[%s437 + $0xfc] sm:%s429] %v564
                $region78: #{discriminator_forward.9} parent=65 // loop_footer
                  %s435 = sadd.s32 1, %s431
                $region79: #{discriminator_forward.9} parent=65 // loop_footer_branch
                  %430 = sbr.rel target = $region75
                $region80: #{discriminator_forward.9} parent=65 // loop_exit
                  _
              $region66: #{discriminator_forward.9} parent=50 // pred_fallthru
                _
            $region51: #{discriminator_forward.9} parent=46 // pred_fallthru
              _
            // Predicated region
            $region52: #{discriminator_forward.9} parent=46 // pred_check
              _
            $region53: #{discriminator_forward.9} parent=46 // pred_check_branch
              %279 = sbr.rel (0) target = $region55
            $region54: #{discriminator_forward.9} parent=46 // pred_region
              %s281 = ssub.s32 16, 1
              loop: start=0, step=1, limit=1
              $region56: #{discriminator_forward.9} parent=54 // loop_pre_header
                _
              $region57: #{discriminator_forward.9} parent=54 // loop_header
                %s283 = sphi 0, %s287
                %p284 = scmp.ge.s32.totalorder %s283, 1
                %s288 = sphi %s273, %s273
                %s289 = sphi %s268, %s268
              $region58: #{discriminator_forward.9} parent=54 // loop_header_branch
                %286 = sbr.rel (%p284) target = $region62
              $region59: #{discriminator_forward.9} parent=54 // loop_body
                %v290 = vld [vmem:[%s288] sm:%s281]
                %291 = vst [vmem:[%s289] sm:%s281] %v290
                %v292 = vld [vmem:[%s288 + $0x8] sm:%s281]
                %293 = vst [vmem:[%s289 + $0x4] sm:%s281] %v292
                %v294 = vld [vmem:[%s288 + $0x10] sm:%s281]
                %295 = vst [vmem:[%s289 + $0x8] sm:%s281] %v294
                %v296 = vld [vmem:[%s288 + $0x18] sm:%s281]
                %297 = vst [vmem:[%s289 + $0xc] sm:%s281] %v296
                %v298 = vld [vmem:[%s288 + $0x20] sm:%s281]
                %299 = vst [vmem:[%s289 + $0x10] sm:%s281] %v298
                %v300 = vld [vmem:[%s288 + $0x28] sm:%s281]
                %301 = vst [vmem:[%s289 + $0x14] sm:%s281] %v300
                %v302 = vld [vmem:[%s288 + $0x30] sm:%s281]
                %303 = vst [vmem:[%s289 + $0x18] sm:%s281] %v302
                %v304 = vld [vmem:[%s288 + $0x38] sm:%s281]
                %305 = vst [vmem:[%s289 + $0x1c] sm:%s281] %v304
                %v306 = vld [vmem:[%s288 + $0x40] sm:%s281]
                %307 = vst [vmem:[%s289 + $0x20] sm:%s281] %v306
                %v308 = vld [vmem:[%s288 + $0x48] sm:%s281]
                %309 = vst [vmem:[%s289 + $0x24] sm:%s281] %v308
                %v310 = vld [vmem:[%s288 + $0x50] sm:%s281]
                %311 = vst [vmem:[%s289 + $0x28] sm:%s281] %v310
                %v312 = vld [vmem:[%s288 + $0x58] sm:%s281]
                %313 = vst [vmem:[%s289 + $0x2c] sm:%s281] %v312
                %v314 = vld [vmem:[%s288 + $0x60] sm:%s281]
                %315 = vst [vmem:[%s289 + $0x30] sm:%s281] %v314
                %v316 = vld [vmem:[%s288 + $0x68] sm:%s281]
                %317 = vst [vmem:[%s289 + $0x34] sm:%s281] %v316
                %v318 = vld [vmem:[%s288 + $0x70] sm:%s281]
                %319 = vst [vmem:[%s289 + $0x38] sm:%s281] %v318
                %v320 = vld [vmem:[%s288 + $0x78] sm:%s281]
                %321 = vst [vmem:[%s289 + $0x3c] sm:%s281] %v320
                %v322 = vld [vmem:[%s288 + $0x80] sm:%s281]
                %323 = vst [vmem:[%s289 + $0x40] sm:%s281] %v322
                %v324 = vld [vmem:[%s288 + $0x88] sm:%s281]
                %325 = vst [vmem:[%s289 + $0x44] sm:%s281] %v324
                %v326 = vld [vmem:[%s288 + $0x90] sm:%s281]
                %327 = vst [vmem:[%s289 + $0x48] sm:%s281] %v326
                %v328 = vld [vmem:[%s288 + $0x98] sm:%s281]
                %329 = vst [vmem:[%s289 + $0x4c] sm:%s281] %v328
                %v330 = vld [vmem:[%s288 + $0xa0] sm:%s281]
                %331 = vst [vmem:[%s289 + $0x50] sm:%s281] %v330
                %v332 = vld [vmem:[%s288 + $0xa8] sm:%s281]
                %333 = vst [vmem:[%s289 + $0x54] sm:%s281] %v332
                %v334 = vld [vmem:[%s288 + $0xb0] sm:%s281]
                %335 = vst [vmem:[%s289 + $0x58] sm:%s281] %v334
                %v336 = vld [vmem:[%s288 + $0xb8] sm:%s281]
                %337 = vst [vmem:[%s289 + $0x5c] sm:%s281] %v336
                %v338 = vld [vmem:[%s288 + $0xc0] sm:%s281]
                %339 = vst [vmem:[%s289 + $0x60] sm:%s281] %v338
                %v340 = vld [vmem:[%s288 + $0xc8] sm:%s281]
                %341 = vst [vmem:[%s289 + $0x64] sm:%s281] %v340
                %v342 = vld [vmem:[%s288 + $0xd0] sm:%s281]
                %343 = vst [vmem:[%s289 + $0x68] sm:%s281] %v342
                %v344 = vld [vmem:[%s288 + $0xd8] sm:%s281]
                %345 = vst [vmem:[%s289 + $0x6c] sm:%s281] %v344
                %v346 = vld [vmem:[%s288 + $0xe0] sm:%s281]
                %347 = vst [vmem:[%s289 + $0x70] sm:%s281] %v346
                %v348 = vld [vmem:[%s288 + $0xe8] sm:%s281]
                %349 = vst [vmem:[%s289 + $0x74] sm:%s281] %v348
                %v350 = vld [vmem:[%s288 + $0xf0] sm:%s281]
                %351 = vst [vmem:[%s289 + $0x78] sm:%s281] %v350
                %v352 = vld [vmem:[%s288 + $0xf8] sm:%s281]
                %353 = vst [vmem:[%s289 + $0x7c] sm:%s281] %v352
                %v354 = vld [vmem:[%s288 + $0x100] sm:%s281]
                %355 = vst [vmem:[%s289 + $0x80] sm:%s281] %v354
                %v356 = vld [vmem:[%s288 + $0x108] sm:%s281]
                %357 = vst [vmem:[%s289 + $0x84] sm:%s281] %v356
                %v358 = vld [vmem:[%s288 + $0x110] sm:%s281]
                %359 = vst [vmem:[%s289 + $0x88] sm:%s281] %v358
                %v360 = vld [vmem:[%s288 + $0x118] sm:%s281]
                %361 = vst [vmem:[%s289 + $0x8c] sm:%s281] %v360
                %v362 = vld [vmem:[%s288 + $0x120] sm:%s281]
                %363 = vst [vmem:[%s289 + $0x90] sm:%s281] %v362
                %v364 = vld [vmem:[%s288 + $0x128] sm:%s281]
                %365 = vst [vmem:[%s289 + $0x94] sm:%s281] %v364
                %v366 = vld [vmem:[%s288 + $0x130] sm:%s281]
                %367 = vst [vmem:[%s289 + $0x98] sm:%s281] %v366
                %v368 = vld [vmem:[%s288 + $0x138] sm:%s281]
                %369 = vst [vmem:[%s289 + $0x9c] sm:%s281] %v368
                %v370 = vld [vmem:[%s288 + $0x140] sm:%s281]
                %371 = vst [vmem:[%s289 + $0xa0] sm:%s281] %v370
                %v372 = vld [vmem:[%s288 + $0x148] sm:%s281]
                %373 = vst [vmem:[%s289 + $0xa4] sm:%s281] %v372
                %v374 = vld [vmem:[%s288 + $0x150] sm:%s281]
                %375 = vst [vmem:[%s289 + $0xa8] sm:%s281] %v374
                %v376 = vld [vmem:[%s288 + $0x158] sm:%s281]
                %377 = vst [vmem:[%s289 + $0xac] sm:%s281] %v376
                %v378 = vld [vmem:[%s288 + $0x160] sm:%s281]
                %379 = vst [vmem:[%s289 + $0xb0] sm:%s281] %v378
                %v380 = vld [vmem:[%s288 + $0x168] sm:%s281]
                %381 = vst [vmem:[%s289 + $0xb4] sm:%s281] %v380
                %v382 = vld [vmem:[%s288 + $0x170] sm:%s281]
                %383 = vst [vmem:[%s289 + $0xb8] sm:%s281] %v382
                %v384 = vld [vmem:[%s288 + $0x178] sm:%s281]
                %385 = vst [vmem:[%s289 + $0xbc] sm:%s281] %v384
                %v386 = vld [vmem:[%s288 + $0x180] sm:%s281]
                %387 = vst [vmem:[%s289 + $0xc0] sm:%s281] %v386
                %v388 = vld [vmem:[%s288 + $0x188] sm:%s281]
                %389 = vst [vmem:[%s289 + $0xc4] sm:%s281] %v388
                %v390 = vld [vmem:[%s288 + $0x190] sm:%s281]
                %391 = vst [vmem:[%s289 + $0xc8] sm:%s281] %v390
                %v392 = vld [vmem:[%s288 + $0x198] sm:%s281]
                %393 = vst [vmem:[%s289 + $0xcc] sm:%s281] %v392
                %v394 = vld [vmem:[%s288 + $0x1a0] sm:%s281]
                %395 = vst [vmem:[%s289 + $0xd0] sm:%s281] %v394
                %v396 = vld [vmem:[%s288 + $0x1a8] sm:%s281]
                %397 = vst [vmem:[%s289 + $0xd4] sm:%s281] %v396
                %v398 = vld [vmem:[%s288 + $0x1b0] sm:%s281]
                %399 = vst [vmem:[%s289 + $0xd8] sm:%s281] %v398
                %v400 = vld [vmem:[%s288 + $0x1b8] sm:%s281]
                %401 = vst [vmem:[%s289 + $0xdc] sm:%s281] %v400
                %v402 = vld [vmem:[%s288 + $0x1c0] sm:%s281]
                %403 = vst [vmem:[%s289 + $0xe0] sm:%s281] %v402
                %v404 = vld [vmem:[%s288 + $0x1c8] sm:%s281]
                %405 = vst [vmem:[%s289 + $0xe4] sm:%s281] %v404
                %v406 = vld [vmem:[%s288 + $0x1d0] sm:%s281]
                %407 = vst [vmem:[%s289 + $0xe8] sm:%s281] %v406
                %v408 = vld [vmem:[%s288 + $0x1d8] sm:%s281]
                %409 = vst [vmem:[%s289 + $0xec] sm:%s281] %v408
                %v410 = vld [vmem:[%s288 + $0x1e0] sm:%s281]
                %411 = vst [vmem:[%s289 + $0xf0] sm:%s281] %v410
                %v412 = vld [vmem:[%s288 + $0x1e8] sm:%s281]
                %413 = vst [vmem:[%s289 + $0xf4] sm:%s281] %v412
                %v414 = vld [vmem:[%s288 + $0x1f0] sm:%s281]
                %415 = vst [vmem:[%s289 + $0xf8] sm:%s281] %v414
                %v416 = vld [vmem:[%s288 + $0x1f8] sm:%s281]
                %417 = vst [vmem:[%s289 + $0xfc] sm:%s281] %v416
              $region60: #{discriminator_forward.9} parent=54 // loop_footer
                %s287 = sadd.s32 1, %s283
              $region61: #{discriminator_forward.9} parent=54 // loop_footer_branch
                %282 = sbr.rel target = $region57
              $region62: #{discriminator_forward.9} parent=54 // loop_exit
                _
            $region55: #{discriminator_forward.9} parent=46 // pred_fallthru
              _
          $region47: #{discriminator_forward.9} parent=42 // pred_fallthru
            _
          %566 = vnop
        $region43: #{discriminator_forward.9} parent=15 // pred_fallthru
          _
        // Predicated region
        $region81: #{discriminator_forward.9} parent=15 // pred_check
          %p567 = pneg %p96
        $region82: #{discriminator_forward.9} parent=15 // pred_check_branch
          %569 = sbr.rel (%p567) target = $region84
        $region83: #{discriminator_forward.9} parent=15 // pred_region
          %p570 = scmp.lt.s32.totalorder %s17, 1
          %s571 = scalar_select %p570, %s17, 1
          %s572 = scalar_lea.vmem %s2, %s571
        $region84: #{discriminator_forward.9} parent=15 // pred_fallthru
          _
        // Predicated region
        $region85: #{discriminator_forward.9} parent=15 // pred_check
          %p573 = pneg %p122
        $region86: #{discriminator_forward.9} parent=15 // pred_check_branch
          %575 = sbr.rel (%p573) target = $region88
        $region87: #{discriminator_forward.9} parent=15 // pred_region
          %p576 = scmp.lt.s32.totalorder %s17, 1
          %s577 = scalar_select %p576, %s17, 1
          %s578 = scalar_lea.vmem %s3, %s577
        $region88: #{discriminator_forward.9} parent=15 // pred_fallthru
          _
      $region16: #{discriminator_forward.9} parent=5 // pred_fallthru
        _
      %p579 = scmp.le.s32.totalorder 1, %s10
      %p580 = scmp.lt.s32.totalorder %s10, 9
      %p581 = pnand %p579, %p580
      %p582 = pneg %p581
      // Predicated region
      $region89: #{discriminator_forward.9} parent=5 // pred_check
        _
      $region90: #{discriminator_forward.9} parent=5 // pred_check_branch
        %584 = sbr.rel (%p581) target = $region92
      $region91: #{discriminator_forward.9} parent=5 // pred_region
        %s585 = ssub.s32 %s10, 1
        %s586 = sand.u32 %s35, 1
        %s587 = sand.u32 %s35, 1
        %s588 = smul.addr %s587, 256
        %s589 = scalar_lea.vmem [#allocation3], %s588
        // Predicated region
        $region93: #{discriminator_forward.9} parent=91 // pred_check
          %p590 = pneg %p48
        $region94: #{discriminator_forward.9} parent=91 // pred_check_branch
          %592 = sbr.rel (%p590) target = $region96
        $region95: #{discriminator_forward.9} parent=91 // pred_region
          _
        $region96: #{discriminator_forward.9} parent=91 // pred_fallthru
          _
        %s593 = sand.u32 %s63, 1
        %s594 = sand.u32 %s63, 1
        %s595 = smul.addr %s594, 256
        %s596 = scalar_lea.vmem [#allocation4], %s595
        // Predicated region
        $region97: #{discriminator_forward.9} parent=91 // pred_check
          %p597 = pneg %p76
        $region98: #{discriminator_forward.9} parent=91 // pred_check_branch
          %599 = sbr.rel (%p597) target = $region100
        $region99: #{discriminator_forward.9} parent=91 // pred_region
          _
        $region100: #{discriminator_forward.9} parent=91 // pred_fallthru
          _
        %s600 = sand.u32 %s35, 1
        %s601 = sand.u32 %s35, 1
        %s602 = smul.addr %s601, 256
        %s603 = scalar_lea.vmem [#allocation3], %s602
        %p604 = pneg %p48
        %p605 = pneg %p45
        %s606 = sand.u32 %s63, 1
        %s607 = sand.u32 %s63, 1
        %s608 = smul.addr %s607, 256
        %s609 = scalar_lea.vmem [#allocation4], %s608
        %p610 = pneg %p76
        %p611 = pneg %p73
        %p612 = scmp.lt.s32.totalorder %s19, 1
        %s613 = scalar_select %p612, %s19, 1
        %s614 = scalar_lea.vmem %s2, %s613
        %p615 = pneg %p102
        %p616 = pneg %p99
        %p617 = scmp.lt.s32.totalorder %s19, 1
        %s618 = scalar_select %p617, %s19, 1
        %s619 = scalar_lea.vmem %s3, %s618
        %p620 = pneg %p128
        %p621 = pneg %p125
        %p622 = pneg %p154
        %p623 = pneg %p151
        %s624 = sand.u32 %s141, 1
        %s625 = sand.u32 %s141, 1
        %s626 = smul.addr %s625, 64
        %s627 = scalar_lea.vmem [#allocation5], %s626
        %s628 = smul.u32 4, %s20
        %s629 = smul.u32 64, %s20
        %p630 = scmp.lt.s32.totalorder %s19, 1
        %s631 = scalar_select %p630, %s19, 1
        %s632 = scalar_lea.vmem %s2, %s631
        %p633 = scmp.lt.s32.totalorder %s19, 1
        %s634 = scalar_select %p633, %s19, 1
        %s635 = scalar_lea.vmem %s3, %s634
        %p637 = scmp.eq.s32.totalorder %s20, 0
        // Predicated region
        $region101: #{discriminator_forward.9} parent=91 // pred_check
          %p638 = pneg %p637
        $region102: #{discriminator_forward.9} parent=91 // pred_check_branch
          %640 = sbr.rel (%p638) target = $region104
        $region103: #{discriminator_forward.9} parent=91 // pred_region
          %641 = vst [vmem:[#allocation2] sm:$0xff] 0.0
          %642 = vst [vmem:[#allocation2 + $0x8] sm:$0xff] 0.0
          %643 = vst [vmem:[#allocation2 + $0x10] sm:$0xff] 0.0
          %644 = vst [vmem:[#allocation2 + $0x18] sm:$0xff] 0.0
          %645 = vst [vmem:[#allocation2 + $0x20] sm:$0xff] 0.0
          %646 = vst [vmem:[#allocation2 + $0x28] sm:$0xff] 0.0
          %647 = vst [vmem:[#allocation2 + $0x30] sm:$0xff] 0.0
          %648 = vst [vmem:[#allocation2 + $0x38] sm:$0xff] 0.0
          %649 = vst [vmem:[#allocation2 + $0x40] sm:$0xff] 0.0
          %650 = vst [vmem:[#allocation2 + $0x48] sm:$0xff] 0.0
          %651 = vst [vmem:[#allocation2 + $0x50] sm:$0xff] 0.0
          %652 = vst [vmem:[#allocation2 + $0x58] sm:$0xff] 0.0
          %653 = vst [vmem:[#allocation2 + $0x60] sm:$0xff] 0.0
          %654 = vst [vmem:[#allocation2 + $0x68] sm:$0xff] 0.0
          %655 = vst [vmem:[#allocation2 + $0x70] sm:$0xff] 0.0
          %656 = vst [vmem:[#allocation2 + $0x78] sm:$0xff] 0.0
        $region104: #{discriminator_forward.9} parent=91 // pred_fallthru
          _
        %v657 = vld [vmem:[#allocation2] sm:$0xff]
        %v658 = vld [vmem:[#allocation2 + $0x8] sm:$0xff]
        %v659 = vld [vmem:[#allocation2 + $0x10] sm:$0xff]
        %v660 = vld [vmem:[#allocation2 + $0x18] sm:$0xff]
        %v661 = vld [vmem:[#allocation2 + $0x20] sm:$0xff]
        %v662 = vld [vmem:[#allocation2 + $0x28] sm:$0xff]
        %v663 = vld [vmem:[#allocation2 + $0x30] sm:$0xff]
        %v664 = vld [vmem:[#allocation2 + $0x38] sm:$0xff]
        %v665 = vld [vmem:[#allocation2 + $0x40] sm:$0xff]
        %v666 = vld [vmem:[#allocation2 + $0x48] sm:$0xff]
        %v667 = vld [vmem:[#allocation2 + $0x50] sm:$0xff]
        %v668 = vld [vmem:[#allocation2 + $0x58] sm:$0xff]
        %v669 = vld [vmem:[#allocation2 + $0x60] sm:$0xff]
        %v670 = vld [vmem:[#allocation2 + $0x68] sm:$0xff]
        %v671 = vld [vmem:[#allocation2 + $0x70] sm:$0xff]
        %v672 = vld [vmem:[#allocation2 + $0x78] sm:$0xff]
        %v673 = vld [vmem:[%s589] sm:$0xff]
        %v674 = vld [vmem:[%s589 + $0x8] sm:$0xff]
        %v675 = vld [vmem:[%s589 + $0x10] sm:$0xff]
        %v676 = vld [vmem:[%s589 + $0x18] sm:$0xff]
        %v677 = vld [vmem:[%s589 + $0x20] sm:$0xff]
        %v678 = vld [vmem:[%s589 + $0x28] sm:$0xff]
        %v679 = vld [vmem:[%s589 + $0x30] sm:$0xff]
        %v680 = vld [vmem:[%s589 + $0x38] sm:$0xff]
        %v681 = vld [vmem:[%s589 + $0x40] sm:$0xff]
        %v682 = vld [vmem:[%s589 + $0x48] sm:$0xff]
        %v683 = vld [vmem:[%s589 + $0x50] sm:$0xff]
        %v684 = vld [vmem:[%s589 + $0x58] sm:$0xff]
        %v685 = vld [vmem:[%s589 + $0x60] sm:$0xff]
        %v686 = vld [vmem:[%s589 + $0x68] sm:$0xff]
        %v687 = vld [vmem:[%s589 + $0x70] sm:$0xff]
        %v688 = vld [vmem:[%s589 + $0x78] sm:$0xff]
        %v689 = vld [vmem:[%s589 + $0x80] sm:$0xff]
        %v690 = vld [vmem:[%s589 + $0x88] sm:$0xff]
        %v691 = vld [vmem:[%s589 + $0x90] sm:$0xff]
        %v692 = vld [vmem:[%s589 + $0x98] sm:$0xff]
        %v693 = vld [vmem:[%s589 + $0xa0] sm:$0xff]
        %v694 = vld [vmem:[%s589 + $0xa8] sm:$0xff]
        %v695 = vld [vmem:[%s589 + $0xb0] sm:$0xff]
        %v696 = vld [vmem:[%s589 + $0xb8] sm:$0xff]
        %v697 = vld [vmem:[%s589 + $0xc0] sm:$0xff]
        %v698 = vld [vmem:[%s589 + $0xc8] sm:$0xff]
        %v699 = vld [vmem:[%s589 + $0xd0] sm:$0xff]
        %v700 = vld [vmem:[%s589 + $0xd8] sm:$0xff]
        %v701 = vld [vmem:[%s589 + $0xe0] sm:$0xff]
        %v702 = vld [vmem:[%s589 + $0xe8] sm:$0xff]
        %v703 = vld [vmem:[%s589 + $0xf0] sm:$0xff]
        %v704 = vld [vmem:[%s589 + $0xf8] sm:$0xff]
        %v705 = vld [vmem:[%s596] sm:$0xf]
        %v706 = vld [vmem:[%s596 + $0x4] sm:$0xf]
        %v707 = vld [vmem:[%s596 + $0x8] sm:$0xf]
        %v708 = vld [vmem:[%s596 + $0xc] sm:$0xf]
        %v709 = vld [vmem:[%s596 + $0x10] sm:$0xf]
        %v710 = vld [vmem:[%s596 + $0x14] sm:$0xf]
        %v711 = vld [vmem:[%s596 + $0x18] sm:$0xf]
        %v712 = vld [vmem:[%s596 + $0x1c] sm:$0xf]
        %v713 = vld [vmem:[%s596 + $0x20] sm:$0xf]
        %v714 = vld [vmem:[%s596 + $0x24] sm:$0xf]
        %v715 = vld [vmem:[%s596 + $0x28] sm:$0xf]
        %v716 = vld [vmem:[%s596 + $0x2c] sm:$0xf]
        %v717 = vld [vmem:[%s596 + $0x30] sm:$0xf]
        %v718 = vld [vmem:[%s596 + $0x34] sm:$0xf]
        %v719 = vld [vmem:[%s596 + $0x38] sm:$0xf]
        %v720 = vld [vmem:[%s596 + $0x3c] sm:$0xf]
        %v721 = vld [vmem:[%s596 + $0x40] sm:$0xf]
        %v722 = vld [vmem:[%s596 + $0x44] sm:$0xf]
        %v723 = vld [vmem:[%s596 + $0x48] sm:$0xf]
        %v724 = vld [vmem:[%s596 + $0x4c] sm:$0xf]
        %v725 = vld [vmem:[%s596 + $0x50] sm:$0xf]
        %v726 = vld [vmem:[%s596 + $0x54] sm:$0xf]
        %v727 = vld [vmem:[%s596 + $0x58] sm:$0xf]
        %v728 = vld [vmem:[%s596 + $0x5c] sm:$0xf]
        %v729 = vld [vmem:[%s596 + $0x60] sm:$0xf]
        %v730 = vld [vmem:[%s596 + $0x64] sm:$0xf]
        %v731 = vld [vmem:[%s596 + $0x68] sm:$0xf]
        %v732 = vld [vmem:[%s596 + $0x6c] sm:$0xf]
        %v733 = vld [vmem:[%s596 + $0x70] sm:$0xf]
        %v734 = vld [vmem:[%s596 + $0x74] sm:$0xf]
        %v735 = vld [vmem:[%s596 + $0x78] sm:$0xf]
        %v736 = vld [vmem:[%s596 + $0x7c] sm:$0xf]
        %v737 = vld [vmem:[%s596 + $0x80] sm:$0xf]
        %v738 = vld [vmem:[%s596 + $0x84] sm:$0xf]
        %v739 = vld [vmem:[%s596 + $0x88] sm:$0xf]
        %v740 = vld [vmem:[%s596 + $0x8c] sm:$0xf]
        %v741 = vld [vmem:[%s596 + $0x90] sm:$0xf]
        %v742 = vld [vmem:[%s596 + $0x94] sm:$0xf]
        %v743 = vld [vmem:[%s596 + $0x98] sm:$0xf]
        %v744 = vld [vmem:[%s596 + $0x9c] sm:$0xf]
        %v745 = vld [vmem:[%s596 + $0xa0] sm:$0xf]
        %v746 = vld [vmem:[%s596 + $0xa4] sm:$0xf]
        %v747 = vld [vmem:[%s596 + $0xa8] sm:$0xf]
        %v748 = vld [vmem:[%s596 + $0xac] sm:$0xf]
        %v749 = vld [vmem:[%s596 + $0xb0] sm:$0xf]
        %v750 = vld [vmem:[%s596 + $0xb4] sm:$0xf]
        %v751 = vld [vmem:[%s596 + $0xb8] sm:$0xf]
        %v752 = vld [vmem:[%s596 + $0xbc] sm:$0xf]
        %v753 = vld [vmem:[%s596 + $0xc0] sm:$0xf]
        %v754 = vld [vmem:[%s596 + $0xc4] sm:$0xf]
        %v755 = vld [vmem:[%s596 + $0xc8] sm:$0xf]
        %v756 = vld [vmem:[%s596 + $0xcc] sm:$0xf]
        %v757 = vld [vmem:[%s596 + $0xd0] sm:$0xf]
        %v758 = vld [vmem:[%s596 + $0xd4] sm:$0xf]
        %v759 = vld [vmem:[%s596 + $0xd8] sm:$0xf]
        %v760 = vld [vmem:[%s596 + $0xdc] sm:$0xf]
        %v761 = vld [vmem:[%s596 + $0xe0] sm:$0xf]
        %v762 = vld [vmem:[%s596 + $0xe4] sm:$0xf]
        %v763 = vld [vmem:[%s596 + $0xe8] sm:$0xf]
        %v764 = vld [vmem:[%s596 + $0xec] sm:$0xf]
        %v765 = vld [vmem:[%s596 + $0xf0] sm:$0xf]
        %v766 = vld [vmem:[%s596 + $0xf4] sm:$0xf]
        %v767 = vld [vmem:[%s596 + $0xf8] sm:$0xf]
        %v768 = vld [vmem:[%s596 + $0xfc] sm:$0xf]
        %v801 = vunpack.c.l.b16 %v673
        %v802 = vunpack.c.h.b16 %v673
        %v803 = vunpack.c.l.b16 %v674
        %v804 = vunpack.c.h.b16 %v674
        %v805 = vunpack.c.l.b16 %v675
        %v806 = vunpack.c.h.b16 %v675
        %v807 = vunpack.c.l.b16 %v676
        %v808 = vunpack.c.h.b16 %v676
        %v809 = vunpack.c.l.b16 %v677
        %v810 = vunpack.c.h.b16 %v677
        %v811 = vunpack.c.l.b16 %v678
        %v812 = vunpack.c.h.b16 %v678
        %v813 = vunpack.c.l.b16 %v679
        %v814 = vunpack.c.h.b16 %v679
        %v815 = vunpack.c.l.b16 %v680
        %v816 = vunpack.c.h.b16 %v680
        %v817 = vunpack.c.l.b16 %v681
        %v818 = vunpack.c.h.b16 %v681
        %v819 = vunpack.c.l.b16 %v682
        %v820 = vunpack.c.h.b16 %v682
        %v821 = vunpack.c.l.b16 %v683
        %v822 = vunpack.c.h.b16 %v683
        %v823 = vunpack.c.l.b16 %v684
        %v824 = vunpack.c.h.b16 %v684
        %v825 = vunpack.c.l.b16 %v685
        %v826 = vunpack.c.h.b16 %v685
        %v827 = vunpack.c.l.b16 %v686
        %v828 = vunpack.c.h.b16 %v686
        %v829 = vunpack.c.l.b16 %v687
        %v830 = vunpack.c.h.b16 %v687
        %v831 = vunpack.c.l.b16 %v688
        %v832 = vunpack.c.h.b16 %v688
        %v833 = vunpack.c.l.b16 %v689
        %v834 = vunpack.c.h.b16 %v689
        %v835 = vunpack.c.l.b16 %v690
        %v836 = vunpack.c.h.b16 %v690
        %v837 = vunpack.c.l.b16 %v691
        %v838 = vunpack.c.h.b16 %v691
        %v839 = vunpack.c.l.b16 %v692
        %v840 = vunpack.c.h.b16 %v692
        %v841 = vunpack.c.l.b16 %v693
        %v842 = vunpack.c.h.b16 %v693
        %v843 = vunpack.c.l.b16 %v694
        %v844 = vunpack.c.h.b16 %v694
        %v845 = vunpack.c.l.b16 %v695
        %v846 = vunpack.c.h.b16 %v695
        %v847 = vunpack.c.l.b16 %v696
        %v848 = vunpack.c.h.b16 %v696
        %v849 = vunpack.c.l.b16 %v697
        %v850 = vunpack.c.h.b16 %v697
        %v851 = vunpack.c.l.b16 %v698
        %v852 = vunpack.c.h.b16 %v698
        %v853 = vunpack.c.l.b16 %v699
        %v854 = vunpack.c.h.b16 %v699
        %v855 = vunpack.c.l.b16 %v700
        %v856 = vunpack.c.h.b16 %v700
        %v857 = vunpack.c.l.b16 %v701
        %v858 = vunpack.c.h.b16 %v701
        %v859 = vunpack.c.l.b16 %v702
        %v860 = vunpack.c.h.b16 %v702
        %v861 = vunpack.c.l.b16 %v703
        %v862 = vunpack.c.h.b16 %v703
        %v863 = vunpack.c.l.b16 %v704
        %v864 = vunpack.c.h.b16 %v704
        %v865 = vpack.c.b16 %v805, %v801
        %v866 = vpack.c.b16 %v806, %v802
        %v867 = vpack.c.b16 %v807, %v803
        %v868 = vpack.c.b16 %v808, %v804
        %v869 = vpack.c.b16 %v813, %v809
        %v870 = vpack.c.b16 %v814, %v810
        %v871 = vpack.c.b16 %v815, %v811
        %v872 = vpack.c.b16 %v816, %v812
        %v873 = vpack.c.b16 %v821, %v817
        %v874 = vpack.c.b16 %v822, %v818
        %v875 = vpack.c.b16 %v823, %v819
        %v876 = vpack.c.b16 %v824, %v820
        %v877 = vpack.c.b16 %v829, %v825
        %v878 = vpack.c.b16 %v830, %v826
        %v879 = vpack.c.b16 %v831, %v827
        %v880 = vpack.c.b16 %v832, %v828
        %v881 = vpack.c.b16 %v837, %v833
        %v882 = vpack.c.b16 %v838, %v834
        %v883 = vpack.c.b16 %v839, %v835
        %v884 = vpack.c.b16 %v840, %v836
        %v885 = vpack.c.b16 %v845, %v841
        %v886 = vpack.c.b16 %v846, %v842
        %v887 = vpack.c.b16 %v847, %v843
        %v888 = vpack.c.b16 %v848, %v844
        %v889 = vpack.c.b16 %v853, %v849
        %v890 = vpack.c.b16 %v854, %v850
        %v891 = vpack.c.b16 %v855, %v851
        %v892 = vpack.c.b16 %v856, %v852
        %v893 = vpack.c.b16 %v861, %v857
        %v894 = vpack.c.b16 %v862, %v858
        %v895 = vpack.c.b16 %v863, %v859
        %v896 = vpack.c.b16 %v864, %v860
        %v993 = vunpack.c.l.b16 %v705
        %v994 = vunpack.c.l.b16 %v706
        %v995 = vunpack.c.l.b16 %v707
        %v996 = vunpack.c.l.b16 %v708
        %v997 = vunpack.c.l.b16 %v709
        %v998 = vunpack.c.l.b16 %v710
        %v999 = vunpack.c.l.b16 %v711
        %v1000 = vunpack.c.l.b16 %v712
        %v1001 = vunpack.c.l.b16 %v713
        %v1002 = vunpack.c.l.b16 %v714
        %v1003 = vunpack.c.l.b16 %v715
        %v1004 = vunpack.c.l.b16 %v716
        %v1005 = vunpack.c.l.b16 %v717
        %v1006 = vunpack.c.l.b16 %v718
        %v1007 = vunpack.c.l.b16 %v719
        %v1008 = vunpack.c.l.b16 %v720
        %v1009 = vunpack.c.l.b16 %v721
        %v1010 = vunpack.c.l.b16 %v722
        %v1011 = vunpack.c.l.b16 %v723
        %v1012 = vunpack.c.l.b16 %v724
        %v1013 = vunpack.c.l.b16 %v725
        %v1014 = vunpack.c.l.b16 %v726
        %v1015 = vunpack.c.l.b16 %v727
        %v1016 = vunpack.c.l.b16 %v728
        %v1017 = vunpack.c.l.b16 %v729
        %v1018 = vunpack.c.l.b16 %v730
        %v1019 = vunpack.c.l.b16 %v731
        %v1020 = vunpack.c.l.b16 %v732
        %v1021 = vunpack.c.l.b16 %v733
        %v1022 = vunpack.c.l.b16 %v734
        %v1023 = vunpack.c.l.b16 %v735
        %v1024 = vunpack.c.l.b16 %v736
        %v1025 = vunpack.c.l.b16 %v737
        %v1026 = vunpack.c.l.b16 %v738
        %v1027 = vunpack.c.l.b16 %v739
        %v1028 = vunpack.c.l.b16 %v740
        %v1029 = vunpack.c.l.b16 %v741
        %v1030 = vunpack.c.l.b16 %v742
        %v1031 = vunpack.c.l.b16 %v743
        %v1032 = vunpack.c.l.b16 %v744
        %v1033 = vunpack.c.l.b16 %v745
        %v1034 = vunpack.c.l.b16 %v746
        %v1035 = vunpack.c.l.b16 %v747
        %v1036 = vunpack.c.l.b16 %v748
        %v1037 = vunpack.c.l.b16 %v749
        %v1038 = vunpack.c.l.b16 %v750
        %v1039 = vunpack.c.l.b16 %v751
        %v1040 = vunpack.c.l.b16 %v752
        %v1041 = vunpack.c.l.b16 %v753
        %v1042 = vunpack.c.l.b16 %v754
        %v1043 = vunpack.c.l.b16 %v755
        %v1044 = vunpack.c.l.b16 %v756
        %v1045 = vunpack.c.l.b16 %v757
        %v1046 = vunpack.c.l.b16 %v758
        %v1047 = vunpack.c.l.b16 %v759
        %v1048 = vunpack.c.l.b16 %v760
        %v1049 = vunpack.c.l.b16 %v761
        %v1050 = vunpack.c.l.b16 %v762
        %v1051 = vunpack.c.l.b16 %v763
        %v1052 = vunpack.c.l.b16 %v764
        %v1053 = vunpack.c.l.b16 %v765
        %v1054 = vunpack.c.l.b16 %v766
        %v1055 = vunpack.c.l.b16 %v767
        %v1056 = vunpack.c.l.b16 %v768
        %v1057 = vpack.c.b16 %v994, %v993
        %v1058 = vpack.c.b16 %v996, %v995
        %v1059 = vpack.c.b16 %v998, %v997
        %v1060 = vpack.c.b16 %v1000, %v999
        %v1061 = vpack.c.b16 %v1002, %v1001
        %v1062 = vpack.c.b16 %v1004, %v1003
        %v1063 = vpack.c.b16 %v1006, %v1005
        %v1064 = vpack.c.b16 %v1008, %v1007
        %v1065 = vpack.c.b16 %v1010, %v1009
        %v1066 = vpack.c.b16 %v1012, %v1011
        %v1067 = vpack.c.b16 %v1014, %v1013
        %v1068 = vpack.c.b16 %v1016, %v1015
        %v1069 = vpack.c.b16 %v1018, %v1017
        %v1070 = vpack.c.b16 %v1020, %v1019
        %v1071 = vpack.c.b16 %v1022, %v1021
        %v1072 = vpack.c.b16 %v1024, %v1023
        %v1073 = vpack.c.b16 %v1026, %v1025
        %v1074 = vpack.c.b16 %v1028, %v1027
        %v1075 = vpack.c.b16 %v1030, %v1029
        %v1076 = vpack.c.b16 %v1032, %v1031
        %v1077 = vpack.c.b16 %v1034, %v1033
        %v1078 = vpack.c.b16 %v1036, %v1035
        %v1079 = vpack.c.b16 %v1038, %v1037
        %v1080 = vpack.c.b16 %v1040, %v1039
        %v1081 = vpack.c.b16 %v1042, %v1041
        %v1082 = vpack.c.b16 %v1044, %v1043
        %v1083 = vpack.c.b16 %v1046, %v1045
        %v1084 = vpack.c.b16 %v1048, %v1047
        %v1085 = vpack.c.b16 %v1050, %v1049
        %v1086 = vpack.c.b16 %v1052, %v1051
        %v1087 = vpack.c.b16 %v1054, %v1053
        %v1088 = vpack.c.b16 %v1056, %v1055
        %1121 = vmatprep.subr.bf16.mxu0 0
        %1122 = vmatpush1.bf16.msra.mxu0 %v1064
        %1123 = vmatprep.subr.bf16.mxu0 0
        %1124 = vmatpush1.bf16.msra.mxu0 %v1063
        %1125 = vmatprep.subr.bf16.mxu0 0
        %1126 = vmatpush1.bf16.msra.mxu0 %v1062
        %1127 = vmatprep.subr.bf16.mxu0 0
        %1128 = vmatpush1.bf16.msra.mxu0 %v1061
        %1129 = vmatprep.subr.bf16.mxu0 0
        %1130 = vmatpush1.bf16.msra.mxu0 %v1060
        %1131 = vmatprep.subr.bf16.mxu0 0
        %1132 = vmatpush1.bf16.msra.mxu0 %v1059
        %1133 = vmatprep.subr.bf16.mxu0 0
        %1134 = vmatpush1.bf16.msra.mxu0 %v1058
        %1135 = vmatprep.subr.bf16.mxu0 0
        %1136 = vmatpush1.bf16.msra.mxu0 %v1057
        %1137 = vmatprep.subr.bf16.mxu0 0
        %1138 = vmatpush2.bf16.msra.mxu0 %v1072
        %1139 = vmatprep.subr.bf16.mxu0 0
        %1140 = vmatpush2.bf16.msra.mxu0 %v1071
        %1141 = vmatprep.subr.bf16.mxu0 0
        %1142 = vmatpush2.bf16.msra.mxu0 %v1070
        %1143 = vmatprep.subr.bf16.mxu0 0
        %1144 = vmatpush2.bf16.msra.mxu0 %v1069
        %1145 = vmatprep.subr.bf16.mxu0 0
        %1146 = vmatpush2.bf16.msra.mxu0 %v1068
        %1147 = vmatprep.subr.bf16.mxu0 0
        %1148 = vmatpush2.bf16.msra.mxu0 %v1067
        %1149 = vmatprep.subr.bf16.mxu0 0
        %1150 = vmatpush2.bf16.msra.mxu0 %v1066
        %1151 = vmatprep.subr.bf16.mxu0 0
        %1152 = vmatpush2.bf16.msra.mxu0 %v1065
        %1153 = vmatprep.mubr.bf16.mxu0 %v866
        %1154 = vmatmul.mubr.bf16.gmra.mxu0 %v865
        %v1155 = vpop.f32.mrf.mxu0
        %v1156 = vadd.f32 0.0, %v1155
        %v1157 = vpop.f32.mrf.mxu0
        %v1158 = vpop.f32.mrf.mxu0
        %v1159 = vadd.f32 0.0, %v1158
        %v1160 = vpop.f32.mrf.mxu0
        %1161 = vmatprep.mubr.bf16.mxu0 %v870
        %1162 = vmatmul.mubr.bf16.gmra.mxu0 %v869
        %v1163 = vpop.f32.mrf.mxu0
        %v1164 = vadd.f32 0.0, %v1163
        %v1165 = vpop.f32.mrf.mxu0
        %v1166 = vpop.f32.mrf.mxu0
        %v1167 = vadd.f32 0.0, %v1166
        %v1168 = vpop.f32.mrf.mxu0
        %1169 = vmatprep.mubr.bf16.mxu0 %v874
        %1170 = vmatmul.mubr.bf16.gmra.mxu0 %v873
        %v1171 = vpop.f32.mrf.mxu0
        %v1172 = vadd.f32 0.0, %v1171
        %v1173 = vpop.f32.mrf.mxu0
        %v1174 = vpop.f32.mrf.mxu0
        %v1175 = vadd.f32 0.0, %v1174
        %v1176 = vpop.f32.mrf.mxu0
        %1177 = vmatprep.mubr.bf16.mxu0 %v878
        %1178 = vmatmul.mubr.bf16.gmra.mxu0 %v877
        %v1179 = vpop.f32.mrf.mxu0
        %v1180 = vadd.f32 0.0, %v1179
        %v1181 = vpop.f32.mrf.mxu0
        %v1182 = vpop.f32.mrf.mxu0
        %v1183 = vadd.f32 0.0, %v1182
        %v1184 = vpop.f32.mrf.mxu0
        %1185 = vmatprep.mubr.bf16.mxu0 %v882
        %1186 = vmatmul.mubr.bf16.gmra.mxu0 %v881
        %v1187 = vpop.f32.mrf.mxu0
        %v1188 = vadd.f32 0.0, %v1187
        %v1189 = vpop.f32.mrf.mxu0
        %v1190 = vpop.f32.mrf.mxu0
        %v1191 = vadd.f32 0.0, %v1190
        %v1192 = vpop.f32.mrf.mxu0
        %1193 = vmatprep.mubr.bf16.mxu0 %v886
        %1194 = vmatmul.mubr.bf16.gmra.mxu0 %v885
        %v1195 = vpop.f32.mrf.mxu0
        %v1196 = vadd.f32 0.0, %v1195
        %v1197 = vpop.f32.mrf.mxu0
        %v1198 = vpop.f32.mrf.mxu0
        %v1199 = vadd.f32 0.0, %v1198
        %v1200 = vpop.f32.mrf.mxu0
        %1201 = vmatprep.mubr.bf16.mxu0 %v890
        %1202 = vmatmul.mubr.bf16.gmra.mxu0 %v889
        %v1203 = vpop.f32.mrf.mxu0
        %v1204 = vadd.f32 0.0, %v1203
        %v1205 = vpop.f32.mrf.mxu0
        %v1206 = vpop.f32.mrf.mxu0
        %v1207 = vadd.f32 0.0, %v1206
        %v1208 = vpop.f32.mrf.mxu0
        %1209 = vmatprep.mubr.bf16.mxu0 %v894
        %1210 = vmatmul.mubr.bf16.gmra.mxu0 %v893
        %v1211 = vpop.f32.mrf.mxu0
        %v1212 = vadd.f32 0.0, %v1211
        %v1213 = vpop.f32.mrf.mxu0
        %v1214 = vpop.f32.mrf.mxu0
        %v1215 = vadd.f32 0.0, %v1214
        %v1216 = vpop.f32.mrf.mxu0
        %1217 = vdwg.mxu0
        %1218 = vmatprep.subr.bf16.mxu0 0
        %1219 = vmatpush1.bf16.msra.mxu0 %v1080
        %1220 = vmatprep.subr.bf16.mxu0 0
        %1221 = vmatpush1.bf16.msra.mxu0 %v1079
        %1222 = vmatprep.subr.bf16.mxu0 0
        %1223 = vmatpush1.bf16.msra.mxu0 %v1078
        %1224 = vmatprep.subr.bf16.mxu0 0
        %1225 = vmatpush1.bf16.msra.mxu0 %v1077
        %1226 = vmatprep.subr.bf16.mxu0 0
        %1227 = vmatpush1.bf16.msra.mxu0 %v1076
        %1228 = vmatprep.subr.bf16.mxu0 0
        %1229 = vmatpush1.bf16.msra.mxu0 %v1075
        %1230 = vmatprep.subr.bf16.mxu0 0
        %1231 = vmatpush1.bf16.msra.mxu0 %v1074
        %1232 = vmatprep.subr.bf16.mxu0 0
        %1233 = vmatpush1.bf16.msra.mxu0 %v1073
        %1234 = vmatprep.subr.bf16.mxu0 0
        %1235 = vmatpush2.bf16.msra.mxu0 %v1088
        %1236 = vmatprep.subr.bf16.mxu0 0
        %1237 = vmatpush2.bf16.msra.mxu0 %v1087
        %1238 = vmatprep.subr.bf16.mxu0 0
        %1239 = vmatpush2.bf16.msra.mxu0 %v1086
        %1240 = vmatprep.subr.bf16.mxu0 0
        %1241 = vmatpush2.bf16.msra.mxu0 %v1085
        %1242 = vmatprep.subr.bf16.mxu0 0
        %1243 = vmatpush2.bf16.msra.mxu0 %v1084
        %1244 = vmatprep.subr.bf16.mxu0 0
        %1245 = vmatpush2.bf16.msra.mxu0 %v1083
        %1246 = vmatprep.subr.bf16.mxu0 0
        %1247 = vmatpush2.bf16.msra.mxu0 %v1082
        %1248 = vmatprep.subr.bf16.mxu0 0
        %1249 = vmatpush2.bf16.msra.mxu0 %v1081
        %1250 = vmatprep.mubr.bf16.mxu0 %v868
        %1251 = vmatmul.mubr.bf16.gmra.mxu0 %v867
        %v1252 = vpop.f32.mrf.mxu0
        %v1253 = vadd.f32 %v1156, %v1252
        %v1254 = vpop.f32.mrf.mxu0
        %v1255 = vpop.f32.mrf.mxu0
        %v1256 = vadd.f32 %v1159, %v1255
        %v1257 = vpop.f32.mrf.mxu0
        %1258 = vmatprep.mubr.bf16.mxu0 %v872
        %1259 = vmatmul.mubr.bf16.gmra.mxu0 %v871
        %v1260 = vpop.f32.mrf.mxu0
        %v1261 = vadd.f32 %v1164, %v1260
        %v1262 = vpop.f32.mrf.mxu0
        %v1263 = vpop.f32.mrf.mxu0
        %v1264 = vadd.f32 %v1167, %v1263
        %v1265 = vpop.f32.mrf.mxu0
        %1266 = vmatprep.mubr.bf16.mxu0 %v876
        %1267 = vmatmul.mubr.bf16.gmra.mxu0 %v875
        %v1268 = vpop.f32.mrf.mxu0
        %v1269 = vadd.f32 %v1172, %v1268
        %v1270 = vpop.f32.mrf.mxu0
        %v1271 = vpop.f32.mrf.mxu0
        %v1272 = vadd.f32 %v1175, %v1271
        %v1273 = vpop.f32.mrf.mxu0
        %1274 = vmatprep.mubr.bf16.mxu0 %v880
        %1275 = vmatmul.mubr.bf16.gmra.mxu0 %v879
        %v1276 = vpop.f32.mrf.mxu0
        %v1277 = vadd.f32 %v1180, %v1276
        %v1278 = vpop.f32.mrf.mxu0
        %v1279 = vpop.f32.mrf.mxu0
        %v1280 = vadd.f32 %v1183, %v1279
        %v1281 = vpop.f32.mrf.mxu0
        %1282 = vmatprep.mubr.bf16.mxu0 %v884
        %1283 = vmatmul.mubr.bf16.gmra.mxu0 %v883
        %v1284 = vpop.f32.mrf.mxu0
        %v1285 = vadd.f32 %v1188, %v1284
        %v1286 = vpop.f32.mrf.mxu0
        %v1287 = vpop.f32.mrf.mxu0
        %v1288 = vadd.f32 %v1191, %v1287
        %v1289 = vpop.f32.mrf.mxu0
        %1290 = vmatprep.mubr.bf16.mxu0 %v888
        %1291 = vmatmul.mubr.bf16.gmra.mxu0 %v887
        %v1292 = vpop.f32.mrf.mxu0
        %v1293 = vadd.f32 %v1196, %v1292
        %v1294 = vpop.f32.mrf.mxu0
        %v1295 = vpop.f32.mrf.mxu0
        %v1296 = vadd.f32 %v1199, %v1295
        %v1297 = vpop.f32.mrf.mxu0
        %1298 = vmatprep.mubr.bf16.mxu0 %v892
        %1299 = vmatmul.mubr.bf16.gmra.mxu0 %v891
        %v1300 = vpop.f32.mrf.mxu0
        %v1301 = vadd.f32 %v1204, %v1300
        %v1302 = vpop.f32.mrf.mxu0
        %v1303 = vpop.f32.mrf.mxu0
        %v1304 = vadd.f32 %v1207, %v1303
        %v1305 = vpop.f32.mrf.mxu0
        %1306 = vmatprep.mubr.bf16.mxu0 %v896
        %1307 = vmatmul.mubr.bf16.gmra.mxu0 %v895
        %v1308 = vpop.f32.mrf.mxu0
        %v1309 = vadd.f32 %v1212, %v1308
        %v1310 = vpop.f32.mrf.mxu0
        %v1311 = vpop.f32.mrf.mxu0
        %v1312 = vadd.f32 %v1215, %v1311
        %v1313 = vpop.f32.mrf.mxu0
        %1314 = vdwg.mxu0
        %v1315 = vadd.f32 %v657, %v1253
        %v1316 = vadd.f32 %v658, %v1256
        %v1317 = vadd.f32 %v659, %v1261
        %v1318 = vadd.f32 %v660, %v1264
        %v1319 = vadd.f32 %v661, %v1269
        %v1320 = vadd.f32 %v662, %v1272
        %v1321 = vadd.f32 %v663, %v1277
        %v1322 = vadd.f32 %v664, %v1280
        %v1323 = vadd.f32 %v665, %v1285
        %v1324 = vadd.f32 %v666, %v1288
        %v1325 = vadd.f32 %v667, %v1293
        %v1326 = vadd.f32 %v668, %v1296
        %v1327 = vadd.f32 %v669, %v1301
        %v1328 = vadd.f32 %v670, %v1304
        %v1329 = vadd.f32 %v671, %v1309
        %v1330 = vadd.f32 %v672, %v1312
        %1331 = vst [vmem:[#allocation2] sm:$0xff] %v1315
        %1332 = vst [vmem:[#allocation2 + $0x8] sm:$0xff] %v1316
        %1333 = vst [vmem:[#allocation2 + $0x10] sm:$0xff] %v1317
        %1334 = vst [vmem:[#allocation2 + $0x18] sm:$0xff] %v1318
        %1335 = vst [vmem:[#allocation2 + $0x20] sm:$0xff] %v1319
        %1336 = vst [vmem:[#allocation2 + $0x28] sm:$0xff] %v1320
        %1337 = vst [vmem:[#allocation2 + $0x30] sm:$0xff] %v1321
        %1338 = vst [vmem:[#allocation2 + $0x38] sm:$0xff] %v1322
        %1339 = vst [vmem:[#allocation2 + $0x40] sm:$0xff] %v1323
        %1340 = vst [vmem:[#allocation2 + $0x48] sm:$0xff] %v1324
        %1341 = vst [vmem:[#allocation2 + $0x50] sm:$0xff] %v1325
        %1342 = vst [vmem:[#allocation2 + $0x58] sm:$0xff] %v1326
        %1343 = vst [vmem:[#allocation2 + $0x60] sm:$0xff] %v1327
        %1344 = vst [vmem:[#allocation2 + $0x68] sm:$0xff] %v1328
        %1345 = vst [vmem:[#allocation2 + $0x70] sm:$0xff] %v1329
        %1346 = vst [vmem:[#allocation2 + $0x78] sm:$0xff] %v1330
        %p1347 = scmp.eq.s32.totalorder %s20, 3
        // Predicated region
        $region105: #{discriminator_forward.9} parent=91 // pred_check
          %p1348 = pneg %p1347
        $region106: #{discriminator_forward.9} parent=91 // pred_check_branch
          %1350 = sbr.rel (%p1348) target = $region108
        $region107: #{discriminator_forward.9} parent=91 // pred_region
          %v1351 = vld [vmem:[#allocation2] sm:$0xff]
          %v1352 = vld [vmem:[#allocation2 + $0x8] sm:$0xff]
          %v1353 = vld [vmem:[#allocation2 + $0x10] sm:$0xff]
          %v1354 = vld [vmem:[#allocation2 + $0x18] sm:$0xff]
          %v1355 = vld [vmem:[#allocation2 + $0x20] sm:$0xff]
          %v1356 = vld [vmem:[#allocation2 + $0x28] sm:$0xff]
          %v1357 = vld [vmem:[#allocation2 + $0x30] sm:$0xff]
          %v1358 = vld [vmem:[#allocation2 + $0x38] sm:$0xff]
          %v1359 = vld [vmem:[#allocation2 + $0x40] sm:$0xff]
          %v1360 = vld [vmem:[#allocation2 + $0x48] sm:$0xff]
          %v1361 = vld [vmem:[#allocation2 + $0x50] sm:$0xff]
          %v1362 = vld [vmem:[#allocation2 + $0x58] sm:$0xff]
          %v1363 = vld [vmem:[#allocation2 + $0x60] sm:$0xff]
          %v1364 = vld [vmem:[#allocation2 + $0x68] sm:$0xff]
          %v1365 = vld [vmem:[#allocation2 + $0x70] sm:$0xff]
          %v1366 = vld [vmem:[#allocation2 + $0x78] sm:$0xff]
          %v1367 = vadd.f32 %v1351, %v1352
          %v1368 = vadd.f32 %v1367, %v1353
          %v1369 = vadd.f32 %v1368, %v1354
          %v1370 = vadd.f32 %v1369, %v1355
          %v1371 = vadd.f32 %v1370, %v1356
          %v1372 = vadd.f32 %v1371, %v1357
          %v1373 = vadd.f32 %v1372, %v1358
          %v1374 = vadd.f32 %v1373, %v1359
          %v1375 = vadd.f32 %v1374, %v1360
          %v1376 = vadd.f32 %v1375, %v1361
          %v1377 = vadd.f32 %v1376, %v1362
          %v1378 = vadd.f32 %v1377, %v1363
          %v1379 = vadd.f32 %v1378, %v1364
          %v1380 = vadd.f32 %v1379, %v1365
          %v1381 = vadd.f32 %v1380, %v1366
          %v1382 = vrot.slane %v1381, 4
          %v1383 = vadd.f32 %v1381, %v1382
          %v1384 = vrot.slane %v1383, 2
          %v1385 = vadd.f32 %v1383, %v1384
          %v1386 = vrot.slane %v1385, 1
          %v1387 = vadd.f32 %v1385, %v1386
          %v1388 = vrcp.pop 128.0
          %v1389 = vmul.f32 %v1387, %v1388
          %v1390 = vmul.f32 %v1351, %v1351
          %v1391 = vmul.f32 %v1352, %v1352
          %v1392 = vmul.f32 %v1353, %v1353
          %v1393 = vmul.f32 %v1354, %v1354
          %v1394 = vmul.f32 %v1355, %v1355
          %v1395 = vmul.f32 %v1356, %v1356
          %v1396 = vmul.f32 %v1357, %v1357
          %v1397 = vmul.f32 %v1358, %v1358
          %v1398 = vmul.f32 %v1359, %v1359
          %v1399 = vmul.f32 %v1360, %v1360
          %v1400 = vmul.f32 %v1361, %v1361
          %v1401 = vmul.f32 %v1362, %v1362
          %v1402 = vmul.f32 %v1363, %v1363
          %v1403 = vmul.f32 %v1364, %v1364
          %v1404 = vmul.f32 %v1365, %v1365
          %v1405 = vmul.f32 %v1366, %v1366
          %v1406 = vadd.f32 %v1390, %v1391
          %v1407 = vadd.f32 %v1406, %v1392
          %v1408 = vadd.f32 %v1407, %v1393
          %v1409 = vadd.f32 %v1408, %v1394
          %v1410 = vadd.f32 %v1409, %v1395
          %v1411 = vadd.f32 %v1410, %v1396
          %v1412 = vadd.f32 %v1411, %v1397
          %v1413 = vadd.f32 %v1412, %v1398
          %v1414 = vadd.f32 %v1413, %v1399
          %v1415 = vadd.f32 %v1414, %v1400
          %v1416 = vadd.f32 %v1415, %v1401
          %v1417 = vadd.f32 %v1416, %v1402
          %v1418 = vadd.f32 %v1417, %v1403
          %v1419 = vadd.f32 %v1418, %v1404
          %v1420 = vadd.f32 %v1419, %v1405
          %v1421 = vrot.slane %v1420, 4
          %v1422 = vadd.f32 %v1420, %v1421
          %v1423 = vrot.slane %v1422, 2
          %v1424 = vadd.f32 %v1422, %v1423
          %v1425 = vrot.slane %v1424, 1
          %v1426 = vadd.f32 %v1424, %v1425
          %v1427 = vmul.f32 %v1426, %v1388
          %v1428 = vmul.f32 %v1389, %v1389
          %v1429 = vsub.f32 %v1427, %v1428
          %v1430 = vmax.f32 %v1429, 0.0
          %v1431 = vsub.f32 %v1351, %v1389
          %v1432 = vsub.f32 %v1352, %v1389
          %v1433 = vsub.f32 %v1353, %v1389
          %v1434 = vsub.f32 %v1354, %v1389
          %v1435 = vsub.f32 %v1355, %v1389
          %v1436 = vsub.f32 %v1356, %v1389
          %v1437 = vsub.f32 %v1357, %v1389
          %v1438 = vsub.f32 %v1358, %v1389
          %v1439 = vsub.f32 %v1359, %v1389
          %v1440 = vsub.f32 %v1360, %v1389
          %v1441 = vsub.f32 %v1361, %v1389
          %v1442 = vsub.f32 %v1362, %v1389
          %v1443 = vsub.f32 %v1363, %v1389
          %v1444 = vsub.f32 %v1364, %v1389
          %v1445 = vsub.f32 %v1365, %v1389
          %v1446 = vsub.f32 %v1366, %v1389
          %v1447 = vadd.f32 %v1430, 1e-05
          %v1448 = vrsqrt.pop %v1447
          %v1449 = vmul.f32 %v1431, %v1448
          %v1450 = vmul.f32 %v1432, %v1448
          %v1451 = vmul.f32 %v1433, %v1448
          %v1452 = vmul.f32 %v1434, %v1448
          %v1453 = vmul.f32 %v1435, %v1448
          %v1454 = vmul.f32 %v1436, %v1448
          %v1455 = vmul.f32 %v1437, %v1448
          %v1456 = vmul.f32 %v1438, %v1448
          %v1457 = vmul.f32 %v1439, %v1448
          %v1458 = vmul.f32 %v1440, %v1448
          %v1459 = vmul.f32 %v1441, %v1448
          %v1460 = vmul.f32 %v1442, %v1448
          %v1461 = vmul.f32 %v1443, %v1448
          %v1462 = vmul.f32 %v1444, %v1448
          %v1463 = vmul.f32 %v1445, %v1448
          %v1464 = vmul.f32 %v1446, %v1448
          %v1465 = vld [vmem:[%s632] sm:$0x1]
          %v1467 = vlaneseq
          %v1468 = vshrl.u32 %v1467, 7
          %v1469 = vsub.s32 0, %v1468
          %v1470 = vrot.slane %v1465, %v1469
          %v1472 = vmul.f32 %v1449, %v1470
          %v1473 = vmul.f32 %v1450, %v1470
          %v1474 = vmul.f32 %v1451, %v1470
          %v1475 = vmul.f32 %v1452, %v1470
          %v1476 = vmul.f32 %v1453, %v1470
          %v1477 = vmul.f32 %v1454, %v1470
          %v1478 = vmul.f32 %v1455, %v1470
          %v1479 = vmul.f32 %v1456, %v1470
          %v1480 = vmul.f32 %v1457, %v1470
          %v1481 = vmul.f32 %v1458, %v1470
          %v1482 = vmul.f32 %v1459, %v1470
          %v1483 = vmul.f32 %v1460, %v1470
          %v1484 = vmul.f32 %v1461, %v1470
          %v1485 = vmul.f32 %v1462, %v1470
          %v1486 = vmul.f32 %v1463, %v1470
          %v1487 = vmul.f32 %v1464, %v1470
          %v1488 = vld [vmem:[%s635] sm:$0x1]
          %v1490 = vlaneseq
          %v1491 = vshrl.u32 %v1490, 7
          %v1492 = vsub.s32 0, %v1491
          %v1493 = vrot.slane %v1488, %v1492
          %v1495 = vadd.f32 %v1472, %v1493
          %v1496 = vadd.f32 %v1473, %v1493
          %v1497 = vadd.f32 %v1474, %v1493
          %v1498 = vadd.f32 %v1475, %v1493
          %v1499 = vadd.f32 %v1476, %v1493
          %v1500 = vadd.f32 %v1477, %v1493
          %v1501 = vadd.f32 %v1478, %v1493
          %v1502 = vadd.f32 %v1479, %v1493
          %v1503 = vadd.f32 %v1480, %v1493
          %v1504 = vadd.f32 %v1481, %v1493
          %v1505 = vadd.f32 %v1482, %v1493
          %v1506 = vadd.f32 %v1483, %v1493
          %v1507 = vadd.f32 %v1484, %v1493
          %v1508 = vadd.f32 %v1485, %v1493
          %v1509 = vadd.f32 %v1486, %v1493
          %v1510 = vadd.f32 %v1487, %v1493
          %vm1511 = vcmp.ge.f32.partialorder %v1495, 0.0
          %vm1512 = vcmp.ge.f32.partialorder %v1496, 0.0
          %vm1513 = vcmp.ge.f32.partialorder %v1497, 0.0
          %vm1514 = vcmp.ge.f32.partialorder %v1498, 0.0
          %vm1515 = vcmp.ge.f32.partialorder %v1499, 0.0
          %vm1516 = vcmp.ge.f32.partialorder %v1500, 0.0
          %vm1517 = vcmp.ge.f32.partialorder %v1501, 0.0
          %vm1518 = vcmp.ge.f32.partialorder %v1502, 0.0
          %vm1519 = vcmp.ge.f32.partialorder %v1503, 0.0
          %vm1520 = vcmp.ge.f32.partialorder %v1504, 0.0
          %vm1521 = vcmp.ge.f32.partialorder %v1505, 0.0
          %vm1522 = vcmp.ge.f32.partialorder %v1506, 0.0
          %vm1523 = vcmp.ge.f32.partialorder %v1507, 0.0
          %vm1524 = vcmp.ge.f32.partialorder %v1508, 0.0
          %vm1525 = vcmp.ge.f32.partialorder %v1509, 0.0
          %vm1526 = vcmp.ge.f32.partialorder %v1510, 0.0
          %v1527 = vmul.f32 %v1495, 0.2
          %v1528 = vmul.f32 %v1496, 0.2
          %v1529 = vmul.f32 %v1497, 0.2
          %v1530 = vmul.f32 %v1498, 0.2
          %v1531 = vmul.f32 %v1499, 0.2
          %v1532 = vmul.f32 %v1500, 0.2
          %v1533 = vmul.f32 %v1501, 0.2
          %v1534 = vmul.f32 %v1502, 0.2
          %v1535 = vmul.f32 %v1503, 0.2
          %v1536 = vmul.f32 %v1504, 0.2
          %v1537 = vmul.f32 %v1505, 0.2
          %v1538 = vmul.f32 %v1506, 0.2
          %v1539 = vmul.f32 %v1507, 0.2
          %v1540 = vmul.f32 %v1508, 0.2
          %v1541 = vmul.f32 %v1509, 0.2
          %v1542 = vmul.f32 %v1510, 0.2
          %v1543 = vsel %vm1511, %v1495, %v1527
          %v1544 = vsel %vm1512, %v1496, %v1528
          %v1545 = vsel %vm1513, %v1497, %v1529
          %v1546 = vsel %vm1514, %v1498, %v1530
          %v1547 = vsel %vm1515, %v1499, %v1531
          %v1548 = vsel %vm1516, %v1500, %v1532
          %v1549 = vsel %vm1517, %v1501, %v1533
          %v1550 = vsel %vm1518, %v1502, %v1534
          %v1551 = vsel %vm1519, %v1503, %v1535
          %v1552 = vsel %vm1520, %v1504, %v1536
          %v1553 = vsel %vm1521, %v1505, %v1537
          %v1554 = vsel %vm1522, %v1506, %v1538
          %v1555 = vsel %vm1523, %v1507, %v1539
          %v1556 = vsel %vm1524, %v1508, %v1540
          %v1557 = vsel %vm1525, %v1509, %v1541
          %v1558 = vsel %vm1526, %v1510, %v1542
          %v1559 = vpack.c.bf16 %v1544, %v1543
          %v1560 = vpack.c.bf16 %v1546, %v1545
          %v1561 = vpack.c.bf16 %v1548, %v1547
          %v1562 = vpack.c.bf16 %v1550, %v1549
          %v1563 = vpack.c.bf16 %v1552, %v1551
          %v1564 = vpack.c.bf16 %v1554, %v1553
          %v1565 = vpack.c.bf16 %v1556, %v1555
          %v1566 = vpack.c.bf16 %v1558, %v1557
          %v1575 = vunpack.c.l.b16 %v1559
          %v1576 = vunpack.c.h.b16 %v1559
          %v1577 = vunpack.c.l.b16 %v1560
          %v1578 = vunpack.c.h.b16 %v1560
          %v1579 = vunpack.c.l.b16 %v1561
          %v1580 = vunpack.c.h.b16 %v1561
          %v1581 = vunpack.c.l.b16 %v1562
          %v1582 = vunpack.c.h.b16 %v1562
          %v1583 = vunpack.c.l.b16 %v1563
          %v1584 = vunpack.c.h.b16 %v1563
          %v1585 = vunpack.c.l.b16 %v1564
          %v1586 = vunpack.c.h.b16 %v1564
          %v1587 = vunpack.c.l.b16 %v1565
          %v1588 = vunpack.c.h.b16 %v1565
          %v1589 = vunpack.c.l.b16 %v1566
          %v1590 = vunpack.c.h.b16 %v1566
          %v1591 = vpack.c.b16 %v1575, %v1575
          %v1592 = vpack.c.b16 %v1576, %v1576
          %v1593 = vpack.c.b16 %v1577, %v1577
          %v1594 = vpack.c.b16 %v1578, %v1578
          %v1595 = vpack.c.b16 %v1579, %v1579
          %v1596 = vpack.c.b16 %v1580, %v1580
          %v1597 = vpack.c.b16 %v1581, %v1581
          %v1598 = vpack.c.b16 %v1582, %v1582
          %v1599 = vpack.c.b16 %v1583, %v1583
          %v1600 = vpack.c.b16 %v1584, %v1584
          %v1601 = vpack.c.b16 %v1585, %v1585
          %v1602 = vpack.c.b16 %v1586, %v1586
          %v1603 = vpack.c.b16 %v1587, %v1587
          %v1604 = vpack.c.b16 %v1588, %v1588
          %v1605 = vpack.c.b16 %v1589, %v1589
          %v1606 = vpack.c.b16 %v1590, %v1590
          %1623 = vst [vmem:[%s627] sm:$0xf] %v1591
          %1624 = vst [vmem:[%s627 + $0x4] sm:$0xf] %v1592
          %1625 = vst [vmem:[%s627 + $0x8] sm:$0xf] %v1593
          %1626 = vst [vmem:[%s627 + $0xc] sm:$0xf] %v1594
          %1627 = vst [vmem:[%s627 + $0x10] sm:$0xf] %v1595
          %1628 = vst [vmem:[%s627 + $0x14] sm:$0xf] %v1596
          %1629 = vst [vmem:[%s627 + $0x18] sm:$0xf] %v1597
          %1630 = vst [vmem:[%s627 + $0x1c] sm:$0xf] %v1598
          %1631 = vst [vmem:[%s627 + $0x20] sm:$0xf] %v1599
          %1632 = vst [vmem:[%s627 + $0x24] sm:$0xf] %v1600
          %1633 = vst [vmem:[%s627 + $0x28] sm:$0xf] %v1601
          %1634 = vst [vmem:[%s627 + $0x2c] sm:$0xf] %v1602
          %1635 = vst [vmem:[%s627 + $0x30] sm:$0xf] %v1603
          %1636 = vst [vmem:[%s627 + $0x34] sm:$0xf] %v1604
          %1637 = vst [vmem:[%s627 + $0x38] sm:$0xf] %v1605
          %1638 = vst [vmem:[%s627 + $0x3c] sm:$0xf] %v1606
        $region108: #{discriminator_forward.9} parent=91 // pred_fallthru
          _
        %s1639 = sand.u32 %s141, 1
        %s1640 = sand.u32 %s141, 1
        %s1641 = smul.addr %s1640, 64
        %s1642 = scalar_lea.vmem [#allocation5], %s1641
        // Predicated region
        $region109: #{discriminator_forward.9} parent=91 // pred_check
          %p1643 = pneg %p151
        $region110: #{discriminator_forward.9} parent=91 // pred_check_branch
          %1645 = sbr.rel (%p1643) target = $region112
        $region111: #{discriminator_forward.9} parent=91 // pred_region
          %s1646 = smul.addr %s19, 4
          %s1647 = scalar_lea.vmem %s4, %s1646
          // Predicated region
          $region113: #{discriminator_forward.9} parent=111 // pred_check
            _
          $region114: #{discriminator_forward.9} parent=111 // pred_check_branch
            %1649 = sbr.rel (0) target = $region116
          $region115: #{discriminator_forward.9} parent=111 // pred_region
            // Predicated region
            $region117: #{discriminator_forward.9} parent=115 // pred_check
              _
            $region118: #{discriminator_forward.9} parent=115 // pred_check_branch
              %1651 = sbr.rel target = $region120
            $region119: #{discriminator_forward.9} parent=115 // pred_region
              // Predicated region
              $region132: #{discriminator_forward.9} parent=119 // pred_check
                _
              $region133: #{discriminator_forward.9} parent=119 // pred_check_branch
                %1697 = sbr.rel (0) target = $region135
              $region134: #{discriminator_forward.9} parent=119 // pred_region
                loop: start=0, step=1, limit=1
                $region136: #{discriminator_forward.9} parent=134 // loop_pre_header
                  _
                $region137: #{discriminator_forward.9} parent=134 // loop_header
                  %s1699 = sphi 0, %s1703
                  %p1700 = scmp.ge.s32.totalorder %s1699, 1
                  %s1704 = sphi %s1642, %s1642
                  %s1705 = sphi %s1647, %s1647
                $region138: #{discriminator_forward.9} parent=134 // loop_header_branch
                  %1702 = sbr.rel (%p1700) target = $region142
                $region139: #{discriminator_forward.9} parent=134 // loop_body
                  _
                $region140: #{discriminator_forward.9} parent=134 // loop_footer
                  %s1703 = sadd.s32 1, %s1699
                $region141: #{discriminator_forward.9} parent=134 // loop_footer_branch
                  %1698 = sbr.rel target = $region137
                $region142: #{discriminator_forward.9} parent=134 // loop_exit
                  _
                %s1707 = ssub.s32 16, 1
                loop: start=0, step=1, limit=1
                $region143: #{discriminator_forward.9} parent=134 // loop_pre_header
                  _
                $region144: #{discriminator_forward.9} parent=134 // loop_header
                  %s1709 = sphi 0, %s1713
                  %p1710 = scmp.ge.s32.totalorder %s1709, 1
                  %s1714 = sphi %s1642, %s1642
                  %s1715 = sphi %s1647, %s1647
                $region145: #{discriminator_forward.9} parent=134 // loop_header_branch
                  %1712 = sbr.rel (%p1710) target = $region149
                $region146: #{discriminator_forward.9} parent=134 // loop_body
                  %v1716 = vld [vmem:[%s1714] sm:%s1707]
                  %1717 = vst [vmem:[%s1715] sm:%s1707] %v1716
                  %v1718 = vld [vmem:[%s1714 + $0x4] sm:%s1707]
                  %1719 = vst [vmem:[%s1715 + $0x8] sm:%s1707] %v1718
                  %v1720 = vld [vmem:[%s1714 + $0x8] sm:%s1707]
                  %1721 = vst [vmem:[%s1715 + $0x10] sm:%s1707] %v1720
                  %v1722 = vld [vmem:[%s1714 + $0xc] sm:%s1707]
                  %1723 = vst [vmem:[%s1715 + $0x18] sm:%s1707] %v1722
                  %v1724 = vld [vmem:[%s1714 + $0x10] sm:%s1707]
                  %1725 = vst [vmem:[%s1715 + $0x20] sm:%s1707] %v1724
                  %v1726 = vld [vmem:[%s1714 + $0x14] sm:%s1707]
                  %1727 = vst [vmem:[%s1715 + $0x28] sm:%s1707] %v1726
                  %v1728 = vld [vmem:[%s1714 + $0x18] sm:%s1707]
                  %1729 = vst [vmem:[%s1715 + $0x30] sm:%s1707] %v1728
                  %v1730 = vld [vmem:[%s1714 + $0x1c] sm:%s1707]
                  %1731 = vst [vmem:[%s1715 + $0x38] sm:%s1707] %v1730
                  %v1732 = vld [vmem:[%s1714 + $0x20] sm:%s1707]
                  %1733 = vst [vmem:[%s1715 + $0x40] sm:%s1707] %v1732
                  %v1734 = vld [vmem:[%s1714 + $0x24] sm:%s1707]
                  %1735 = vst [vmem:[%s1715 + $0x48] sm:%s1707] %v1734
                  %v1736 = vld [vmem:[%s1714 + $0x28] sm:%s1707]
                  %1737 = vst [vmem:[%s1715 + $0x50] sm:%s1707] %v1736
                  %v1738 = vld [vmem:[%s1714 + $0x2c] sm:%s1707]
                  %1739 = vst [vmem:[%s1715 + $0x58] sm:%s1707] %v1738
                  %v1740 = vld [vmem:[%s1714 + $0x30] sm:%s1707]
                  %1741 = vst [vmem:[%s1715 + $0x60] sm:%s1707] %v1740
                  %v1742 = vld [vmem:[%s1714 + $0x34] sm:%s1707]
                  %1743 = vst [vmem:[%s1715 + $0x68] sm:%s1707] %v1742
                  %v1744 = vld [vmem:[%s1714 + $0x38] sm:%s1707]
                  %1745 = vst [vmem:[%s1715 + $0x70] sm:%s1707] %v1744
                  %v1746 = vld [vmem:[%s1714 + $0x3c] sm:%s1707]
                  %1747 = vst [vmem:[%s1715 + $0x78] sm:%s1707] %v1746
                $region147: #{discriminator_forward.9} parent=134 // loop_footer
                  %s1713 = sadd.s32 1, %s1709
                $region148: #{discriminator_forward.9} parent=134 // loop_footer_branch
                  %1708 = sbr.rel target = $region144
                $region149: #{discriminator_forward.9} parent=134 // loop_exit
                  _
              $region135: #{discriminator_forward.9} parent=119 // pred_fallthru
                _
            $region120: #{discriminator_forward.9} parent=115 // pred_fallthru
              _
            // Predicated region
            $region121: #{discriminator_forward.9} parent=115 // pred_check
              _
            $region122: #{discriminator_forward.9} parent=115 // pred_check_branch
              %1653 = sbr.rel (0) target = $region124
            $region123: #{discriminator_forward.9} parent=115 // pred_region
              %s1655 = ssub.s32 16, 1
              loop: start=0, step=1, limit=1
              $region125: #{discriminator_forward.9} parent=123 // loop_pre_header
                _
              $region126: #{discriminator_forward.9} parent=123 // loop_header
                %s1657 = sphi 0, %s1661
                %p1658 = scmp.ge.s32.totalorder %s1657, 1
                %s1662 = sphi %s1642, %s1642
                %s1663 = sphi %s1647, %s1647
              $region127: #{discriminator_forward.9} parent=123 // loop_header_branch
                %1660 = sbr.rel (%p1658) target = $region131
              $region128: #{discriminator_forward.9} parent=123 // loop_body
                %v1664 = vld [vmem:[%s1662] sm:%s1655]
                %1665 = vst [vmem:[%s1663] sm:%s1655] %v1664
                %v1666 = vld [vmem:[%s1662 + $0x4] sm:%s1655]
                %1667 = vst [vmem:[%s1663 + $0x8] sm:%s1655] %v1666
                %v1668 = vld [vmem:[%s1662 + $0x8] sm:%s1655]
                %1669 = vst [vmem:[%s1663 + $0x10] sm:%s1655] %v1668
                %v1670 = vld [vmem:[%s1662 + $0xc] sm:%s1655]
                %1671 = vst [vmem:[%s1663 + $0x18] sm:%s1655] %v1670
                %v1672 = vld [vmem:[%s1662 + $0x10] sm:%s1655]
                %1673 = vst [vmem:[%s1663 + $0x20] sm:%s1655] %v1672
                %v1674 = vld [vmem:[%s1662 + $0x14] sm:%s1655]
                %1675 = vst [vmem:[%s1663 + $0x28] sm:%s1655] %v1674
                %v1676 = vld [vmem:[%s1662 + $0x18] sm:%s1655]
                %1677 = vst [vmem:[%s1663 + $0x30] sm:%s1655] %v1676
                %v1678 = vld [vmem:[%s1662 + $0x1c] sm:%s1655]
                %1679 = vst [vmem:[%s1663 + $0x38] sm:%s1655] %v1678
                %v1680 = vld [vmem:[%s1662 + $0x20] sm:%s1655]
                %1681 = vst [vmem:[%s1663 + $0x40] sm:%s1655] %v1680
                %v1682 = vld [vmem:[%s1662 + $0x24] sm:%s1655]
                %1683 = vst [vmem:[%s1663 + $0x48] sm:%s1655] %v1682
                %v1684 = vld [vmem:[%s1662 + $0x28] sm:%s1655]
                %1685 = vst [vmem:[%s1663 + $0x50] sm:%s1655] %v1684
                %v1686 = vld [vmem:[%s1662 + $0x2c] sm:%s1655]
                %1687 = vst [vmem:[%s1663 + $0x58] sm:%s1655] %v1686
                %v1688 = vld [vmem:[%s1662 + $0x30] sm:%s1655]
                %1689 = vst [vmem:[%s1663 + $0x60] sm:%s1655] %v1688
                %v1690 = vld [vmem:[%s1662 + $0x34] sm:%s1655]
                %1691 = vst [vmem:[%s1663 + $0x68] sm:%s1655] %v1690
                %v1692 = vld [vmem:[%s1662 + $0x38] sm:%s1655]
                %1693 = vst [vmem:[%s1663 + $0x70] sm:%s1655] %v1692
                %v1694 = vld [vmem:[%s1662 + $0x3c] sm:%s1655]
                %1695 = vst [vmem:[%s1663 + $0x78] sm:%s1655] %v1694
              $region129: #{discriminator_forward.9} parent=123 // loop_footer
                %s1661 = sadd.s32 1, %s1657
              $region130: #{discriminator_forward.9} parent=123 // loop_footer_branch
                %1656 = sbr.rel target = $region126
              $region131: #{discriminator_forward.9} parent=123 // loop_exit
                _
            $region124: #{discriminator_forward.9} parent=115 // pred_fallthru
              _
          $region116: #{discriminator_forward.9} parent=111 // pred_fallthru
            _
          %1748 = vnop
        $region112: #{discriminator_forward.9} parent=91 // pred_fallthru
          _
      $region92: #{discriminator_forward.9} parent=5 // pred_fallthru
        _
      %p1749 = scmp.le.s32.totalorder 2, %s10
      // Predicated region
      $region150: #{discriminator_forward.9} parent=5 // pred_check
        %p1750 = pneg %p1749
      $region151: #{discriminator_forward.9} parent=5 // pred_check_branch
        %1752 = sbr.rel (%p1750) target = $region153
      $region152: #{discriminator_forward.9} parent=5 // pred_region
        %s1753 = ssub.s32 %s10, 2
        // Predicated region
        $region154: #{discriminator_forward.9} parent=152 // pred_check
          %p1754 = pneg %p157
        $region155: #{discriminator_forward.9} parent=152 // pred_check_branch
          %1756 = sbr.rel (%p1754) target = $region157
        $region156: #{discriminator_forward.9} parent=152 // pred_region
          %s1757 = sand.u32 %s142, 1
          %s1758 = sand.u32 %s142, 1
          %s1759 = smul.addr %s1758, 64
          %s1760 = scalar_lea.vmem [#allocation5], %s1759
        $region157: #{discriminator_forward.9} parent=152 // pred_fallthru
          _
      $region153: #{discriminator_forward.9} parent=5 // pred_fallthru
        _
    $region6: #{discriminator_forward.9} parent=1 // loop_footer
      %s14 = sadd.s32 1, %s10
    $region7: #{discriminator_forward.9} parent=1 // loop_footer_branch
      %9 = sbr.rel target = $region3
    $region8: #{discriminator_forward.9} parent=1 // loop_exit
      _

// kernel: discriminator_forward.10
$region0: #{discriminator_forward.10}
  #allocation0 [shape = 'u32[]', space=smem, size = 0x4, offset = 0x4, fixed_abs, tag = 'smem constant byte address 0x4 - core index']
  #allocation1 [shape = 'u32[144,128]{1,0:T(1,128)}', space=vmem, size = 0x12000, scoped, tag = 'internal scratch']
  #allocation2 [shape = 'f32[32,128]{1,0:T(8,128)}', space=vmem, size = 0x4000, scoped, tag = 'scratch operand']
  %s0 = inlined_call_operand.vmem [shape: bf16[32,4096], index: 0, kind: input, shape index: {}]
  %s1 = inlined_call_operand.vmem [shape: bf16[4096,512], index: 1, kind: input, shape index: {}]
  %s2 = inlined_call_operand.vmem [shape: f32[1,512], index: 2, kind: input, shape index: {}]
  %s3 = inlined_call_operand.vmem [shape: f32[1,512], index: 3, kind: input, shape index: {}]
  %s4 = inlined_call_operand.vmem [shape: bf16[32,512], index: 4, kind: output, shape index: {}]
  %s5 = sld [smem:[#allocation0]]
  $region158: #{discriminator_forward.10} parent=0
    _
  %s7 = ssub.s32 1, %s5
  %s8 = scalar_select 0, %s7, %s5
  $region1: #{discriminator_forward.10} parent=0
    #allocation3 [shape = 'u8[65536]{0}', space=vmem, size = 0x10000, scoped, tag = 'input window, operand 0']
    #allocation4 [shape = 'u8[262144]{0}', space=vmem, size = 0x40000, scoped, tag = 'input window, operand 1']
    #allocation5 [shape = 'u8[16384]{0}', space=vmem, size = 0x4000, scoped, tag = 'output window, operand 0']
    loop: start=0, step=1, limit=34
    $region2: #{discriminator_forward.10} parent=1 // loop_pre_header
      _
    $region3: #{discriminator_forward.10} parent=1 // loop_header
      %s10 = sphi 0, %s14
      %p11 = scmp.ge.s32.totalorder %s10, 34
      %s17 = sphi 0, %s29
      %s18 = sphi 0, %s25
      %s19 = sphi 0, %s17
      %s20 = sphi 0, %s18
      %s21 = sphi 0, %s19
      %s22 = sphi 0, %s20
      %s32 = sphi 0, %s34
      %s35 = sphi 0, %s32
      %s36 = sphi 0, %s35
      %s52 = sphi 0, %s36
      %s60 = sphi 0, %s62
      %s63 = sphi 0, %s60
      %s64 = sphi 0, %s63
      %s80 = sphi 0, %s64
      %s86 = sphi 0, %s88
      %s89 = sphi 0, %s86
      %s90 = sphi 0, %s89
      %s106 = sphi 0, %s90
      %s112 = sphi 0, %s114
      %s115 = sphi 0, %s112
      %s116 = sphi 0, %s115
      %s132 = sphi 0, %s116
      %s138 = sphi 0, %s140
      %s141 = sphi 0, %s138
      %s142 = sphi 0, %s141
      %s158 = sphi 0, %s142
    $region4: #{discriminator_forward.10} parent=1 // loop_header_branch
      %13 = sbr.rel (%p11) target = $region8
    $region5: #{discriminator_forward.10} parent=1 // loop_body
      %s15 = ssub.s32 %s10, 1
      %s16 = ssub.s32 %s10, 2
      %s23 = sadd.s32 1, %s18
      %p24 = scmp.ge.s32.totalorder %s23, 8
      %s25 = scalar_select %p24, 0, %s23
      %s26 = sadd.s32 1, %s17
      %s27 = scalar_select %p24, %s26, %s17
      %p28 = scmp.ge.s32.totalorder %s27, 4
      %s29 = scalar_select %p28, 0, %s27
      %s30 = ssub.s32 %s18, %s25
      %p31 = scmp.eq.s32.totalorder %s30, 0
      %s33 = sadd.s32 %s32, 1
      %s34 = scalar_select %p31, %s32, %s33
      %p37 = pneg %p31
      %p38 = scmp.eq.s32.totalorder %s10, 31
      %p39 = por %p37, %p38
      %p40 = scmp.ne.s32.totalorder %s32, %s35
      %p41 = scmp.eq.s32.totalorder %s10, 0
      %p42 = por %p40, %p41
      %p43 = scmp.ne.s32.totalorder %s32, %s35
      %p44 = scmp.eq.s32.totalorder %s15, 31
      %p45 = por %p43, %p44
      %p46 = scmp.ne.s32.totalorder %s35, %s36
      %p47 = scmp.eq.s32.totalorder %s15, 0
      %p48 = por %p46, %p47
      %p49 = scmp.ne.s32.totalorder %s35, %s36
      %p50 = scmp.eq.s32.totalorder %s16, 31
      %p51 = por %p49, %p50
      %p53 = scmp.ne.s32.totalorder %s36, %s52
      %p54 = scmp.eq.s32.totalorder %s16, 0
      %p55 = por %p53, %p54
      %s56 = ssub.s32 %s18, %s25
      %s57 = ssub.s32 %s17, %s29
      %s58 = sor.u32 %s56, %s57
      %p59 = scmp.eq.s32.totalorder %s58, 0
      %s61 = sadd.s32 %s60, 1
      %s62 = scalar_select %p59, %s60, %s61
      %p65 = pneg %p59
      %p66 = scmp.eq.s32.totalorder %s10, 31
      %p67 = por %p65, %p66
      %p68 = scmp.ne.s32.totalorder %s60, %s63
      %p69 = scmp.eq.s32.totalorder %s10, 0
      %p70 = por %p68, %p69
      %p71 = scmp.ne.s32.totalorder %s60, %s63
      %p72 = scmp.eq.s32.totalorder %s15, 31
      %p73 = por %p71, %p72
      %p74 = scmp.ne.s32.totalorder %s63, %s64
      %p75 = scmp.eq.s32.totalorder %s15, 0
      %p76 = por %p74, %p75
      %p77 = scmp.ne.s32.totalorder %s63, %s64
      %p78 = scmp.eq.s32.totalorder %s16, 31
      %p79 = por %p77, %p78
      %p81 = scmp.ne.s32.totalorder %s64, %s80
      %p82 = scmp.eq.s32.totalorder %s16, 0
      %p83 = por %p81, %p82
      %s84 = ssub.s32 %s17, %s29
      %p85 = scmp.eq.s32.totalorder %s84, 0
      %s87 = sadd.s32 %s86, 1
      %s88 = scalar_select %p85, %s86, %s87
      %p91 = pneg %p85
      %p92 = scmp.eq.s32.totalorder %s10, 31
      %p93 = por %p91, %p92
      %p94 = scmp.ne.s32.totalorder %s86, %s89
      %p95 = scmp.eq.s32.totalorder %s10, 0
      %p96 = por %p94, %p95
      %p97 = scmp.ne.s32.totalorder %s86, %s89
      %p98 = scmp.eq.s32.totalorder %s15, 31
      %p99 = por %p97, %p98
      %p100 = scmp.ne.s32.totalorder %s89, %s90
      %p101 = scmp.eq.s32.totalorder %s15, 0
      %p102 = por %p100, %p101
      %p103 = scmp.ne.s32.totalorder %s89, %s90
      %p104 = scmp.eq.s32.totalorder %s16, 31
      %p105 = por %p103, %p104
      %p107 = scmp.ne.s32.totalorder %s90, %s106
      %p108 = scmp.eq.s32.totalorder %s16, 0
      %p109 = por %p107, %p108
      %s110 = ssub.s32 %s17, %s29
      %p111 = scmp.eq.s32.totalorder %s110, 0
      %s113 = sadd.s32 %s112, 1
      %s114 = scalar_select %p111, %s112, %s113
      %p117 = pneg %p111
      %p118 = scmp.eq.s32.totalorder %s10, 31
      %p119 = por %p117, %p118
      %p120 = scmp.ne.s32.totalorder %s112, %s115
      %p121 = scmp.eq.s32.totalorder %s10, 0
      %p122 = por %p120, %p121
      %p123 = scmp.ne.s32.totalorder %s112, %s115
      %p124 = scmp.eq.s32.totalorder %s15, 31
      %p125 = por %p123, %p124
      %p126 = scmp.ne.s32.totalorder %s115, %s116
      %p127 = scmp.eq.s32.totalorder %s15, 0
      %p128 = por %p126, %p127
      %p129 = scmp.ne.s32.totalorder %s115, %s116
      %p130 = scmp.eq.s32.totalorder %s16, 31
      %p131 = por %p129, %p130
      %p133 = scmp.ne.s32.totalorder %s116, %s132
      %p134 = scmp.eq.s32.totalorder %s16, 0
      %p135 = por %p133, %p134
      %s136 = ssub.s32 %s17, %s29
      %p137 = scmp.eq.s32.totalorder %s136, 0
      %s139 = sadd.s32 %s138, 1
      %s140 = scalar_select %p137, %s138, %s139
      %p143 = pneg %p137
      %p144 = scmp.eq.s32.totalorder %s10, 31
      %p145 = por %p143, %p144
      %p146 = scmp.ne.s32.totalorder %s138, %s141
      %p147 = scmp.eq.s32.totalorder %s10, 0
      %p148 = por %p146, %p147
      %p149 = scmp.ne.s32.totalorder %s138, %s141
      %p150 = scmp.eq.s32.totalorder %s15, 31
      %p151 = por %p149, %p150
      %p152 = scmp.ne.s32.totalorder %s141, %s142
      %p153 = scmp.eq.s32.totalorder %s15, 0
      %p154 = por %p152, %p153
      %p155 = scmp.ne.s32.totalorder %s141, %s142
      %p156 = scmp.eq.s32.totalorder %s16, 31
      %p157 = por %p155, %p156
      %p159 = scmp.ne.s32.totalorder %s142, %s158
      %p160 = scmp.eq.s32.totalorder %s16, 0
      %p161 = por %p159, %p160
      %p162 = scmp.le.s32.totalorder 1, %s10
      %p163 = scmp.lt.s32.totalorder %s10, 33
      %p164 = pnand %p162, %p163
      %p165 = pneg %p164
      // Predicated region
      $region9: #{discriminator_forward.10} parent=5 // pred_check
        _
      $region10: #{discriminator_forward.10} parent=5 // pred_check_branch
        %167 = sbr.rel (%p164) target = $region12
      $region11: #{discriminator_forward.10} parent=5 // pred_region
        %s168 = ssub.s32 %s10, 1
      $region12: #{discriminator_forward.10} parent=5 // pred_fallthru
        _
      %p169 = scmp.lt.s32.totalorder %s10, 32
      // Predicated region
      $region13: #{discriminator_forward.10} parent=5 // pred_check
        %p170 = pneg %p169
      $region14: #{discriminator_forward.10} parent=5 // pred_check_branch
        %172 = sbr.rel (%p170) target = $region16
      $region15: #{discriminator_forward.10} parent=5 // pred_region
        // Predicated region
        $region17: #{discriminator_forward.10} parent=15 // pred_check
          %p173 = pneg %p42
        $region18: #{discriminator_forward.10} parent=15 // pred_check_branch
          %175 = sbr.rel (%p173) target = $region20
        $region19: #{discriminator_forward.10} parent=15 // pred_region
          %s176 = sand.u32 %s32, 1
          %s177 = sand.u32 %s32, 1
          %s178 = smul.addr %s177, 64
          %s179 = scalar_lea.vmem [#allocation3], %s178
          %s180 = smul.u32 4, %s18
          %s181 = smul.addr %s180, 4
          %s182 = scalar_lea.vmem %s0, %s181
          // Predicated region
          $region21: #{discriminator_forward.10} parent=19 // pred_check
            _
          $region22: #{discriminator_forward.10} parent=19 // pred_check_branch
            %184 = sbr.rel (0) target = $region24
          $region23: #{discriminator_forward.10} parent=19 // pred_region
            // Predicated region
            $region25: #{discriminator_forward.10} parent=23 // pred_check
              _
            $region26: #{discriminator_forward.10} parent=23 // pred_check_branch
              %186 = sbr.rel (0) target = $region28
            $region27: #{discriminator_forward.10} parent=23 // pred_region
              loop: start=0, step=1, limit=1
              $region29: #{discriminator_forward.10} parent=27 // loop_pre_header
                _
              $region30: #{discriminator_forward.10} parent=27 // loop_header
                %s188 = sphi 0, %s192
                %p189 = scmp.ge.s32.totalorder %s188, 1
                %s193 = sphi %s182, %s182
                %s194 = sphi %s179, %s179
              $region31: #{discriminator_forward.10} parent=27 // loop_header_branch
                %191 = sbr.rel (%p189) target = $region35
              $region32: #{discriminator_forward.10} parent=27 // loop_body
                %v195 = vld [vmem:[%s193] sm:$0xff]
                %196 = vst [vmem:[%s194] sm:$0xff] %v195
                %v197 = vld [vmem:[%s193 + $0x8] sm:$0xff]
                %198 = vst [vmem:[%s194 + $0x8] sm:$0xff] %v197
                %v199 = vld [vmem:[%s193 + $0x80] sm:$0xff]
                %200 = vst [vmem:[%s194 + $0x10] sm:$0xff] %v199
                %v201 = vld [vmem:[%s193 + $0x88] sm:$0xff]
                %202 = vst [vmem:[%s194 + $0x18] sm:$0xff] %v201
                %v203 = vld [vmem:[%s193 + $0x100] sm:$0xff]
                %204 = vst [vmem:[%s194 + $0x20] sm:$0xff] %v203
                %v205 = vld [vmem:[%s193 + $0x108] sm:$0xff]
                %206 = vst [vmem:[%s194 + $0x28] sm:$0xff] %v205
                %v207 = vld [vmem:[%s193 + $0x180] sm:$0xff]
                %208 = vst [vmem:[%s194 + $0x30] sm:$0xff] %v207
                %v209 = vld [vmem:[%s193 + $0x188] sm:$0xff]
                %210 = vst [vmem:[%s194 + $0x38] sm:$0xff] %v209
              $region33: #{discriminator_forward.10} parent=27 // loop_footer
                %s192 = sadd.s32 1, %s188
              $region34: #{discriminator_forward.10} parent=27 // loop_footer_branch
                %187 = sbr.rel target = $region30
              $region35: #{discriminator_forward.10} parent=27 // loop_exit
                _
            $region28: #{discriminator_forward.10} parent=23 // pred_fallthru
              _
            // Predicated region
            $region36: #{discriminator_forward.10} parent=23 // pred_check
              _
            $region37: #{discriminator_forward.10} parent=23 // pred_check_branch
              %212 = sbr.rel target = $region39
            $region38: #{discriminator_forward.10} parent=23 // pred_region
              _
            $region39: #{discriminator_forward.10} parent=23 // pred_fallthru
              _
          $region24: #{discriminator_forward.10} parent=19 // pred_fallthru
            _
          %213 = vnop
        $region20: #{discriminator_forward.10} parent=15 // pred_fallthru
          _
        // Predicated region
        $region40: #{discriminator_forward.10} parent=15 // pred_check
          %p214 = pneg %p70
        $region41: #{discriminator_forward.10} parent=15 // pred_check_branch
          %216 = sbr.rel (%p214) target = $region43
        $region42: #{discriminator_forward.10} parent=15 // pred_region
          %s217 = sand.u32 %s60, 1
          %s218 = sand.u32 %s60, 1
          %s219 = smul.addr %s218, 256
          %s220 = scalar_lea.vmem [#allocation4], %s219
          %s221 = smul.u32 64, %s18
          %s222 = smul.addr %s221, 4
          %s223 = sadd.s32 %s17, %s222
          %s224 = smul.addr %s223, 4
          %s225 = scalar_lea.vmem %s1, %s224
          // Predicated region
          $region44: #{discriminator_forward.10} parent=42 // pred_check
            _
          $region45: #{discriminator_forward.10} parent=42 // pred_check_branch
            %227 = sbr.rel (0) target = $region47
          $region46: #{discriminator_forward.10} parent=42 // pred_region
            // Predicated region
            $region48: #{discriminator_forward.10} parent=46 // pred_check
              _
            $region49: #{discriminator_forward.10} parent=46 // pred_check_branch
              %229 = sbr.rel target = $region51
            $region50: #{discriminator_forward.10} parent=46 // pred_region
              // Predicated region
              $region63: #{discriminator_forward.10} parent=50 // pred_check
                _
              $region64: #{discriminator_forward.10} parent=50 // pred_check_branch
                %371 = sbr.rel (0) target = $region66
              $region65: #{discriminator_forward.10} parent=50 // pred_region
                loop: start=0, step=1, limit=1
                $region67: #{discriminator_forward.10} parent=65 // loop_pre_header
                  _
                $region68: #{discriminator_forward.10} parent=65 // loop_header
                  %s373 = sphi 0, %s377
                  %p374 = scmp.ge.s32.totalorder %s373, 1
                  %s378 = sphi %s225, %s225
                  %s379 = sphi %s220, %s220
                $region69: #{discriminator_forward.10} parent=65 // loop_header_branch
                  %376 = sbr.rel (%p374) target = $region73
                $region70: #{discriminator_forward.10} parent=65 // loop_body
                  _
                $region71: #{discriminator_forward.10} parent=65 // loop_footer
                  %s377 = sadd.s32 1, %s373
                $region72: #{discriminator_forward.10} parent=65 // loop_footer_branch
                  %372 = sbr.rel target = $region68
                $region73: #{discriminator_forward.10} parent=65 // loop_exit
                  _
                %s381 = ssub.s32 16, 1
                loop: start=0, step=1, limit=1
                $region74: #{discriminator_forward.10} parent=65 // loop_pre_header
                  _
                $region75: #{discriminator_forward.10} parent=65 // loop_header
                  %s383 = sphi 0, %s387
                  %p384 = scmp.ge.s32.totalorder %s383, 1
                  %s388 = sphi %s225, %s225
                  %s389 = sphi %s220, %s220
                $region76: #{discriminator_forward.10} parent=65 // loop_header_branch
                  %386 = sbr.rel (%p384) target = $region80
                $region77: #{discriminator_forward.10} parent=65 // loop_body
                  %v390 = vld [vmem:[%s388] sm:%s381]
                  %391 = vst [vmem:[%s389] sm:%s381] %v390
                  %v392 = vld [vmem:[%s388 + $0x10] sm:%s381]
                  %393 = vst [vmem:[%s389 + $0x4] sm:%s381] %v392
                  %v394 = vld [vmem:[%s388 + $0x20] sm:%s381]
                  %395 = vst [vmem:[%s389 + $0x8] sm:%s381] %v394
                  %v396 = vld [vmem:[%s388 + $0x30] sm:%s381]
                  %397 = vst [vmem:[%s389 + $0xc] sm:%s381] %v396
                  %v398 = vld [vmem:[%s388 + $0x40] sm:%s381]
                  %399 = vst [vmem:[%s389 + $0x10] sm:%s381] %v398
                  %v400 = vld [vmem:[%s388 + $0x50] sm:%s381]
                  %401 = vst [vmem:[%s389 + $0x14] sm:%s381] %v400
                  %v402 = vld [vmem:[%s388 + $0x60] sm:%s381]
                  %403 = vst [vmem:[%s389 + $0x18] sm:%s381] %v402
                  %v404 = vld [vmem:[%s388 + $0x70] sm:%s381]
                  %405 = vst [vmem:[%s389 + $0x1c] sm:%s381] %v404
                  %v406 = vld [vmem:[%s388 + $0x80] sm:%s381]
                  %407 = vst [vmem:[%s389 + $0x20] sm:%s381] %v406
                  %v408 = vld [vmem:[%s388 + $0x90] sm:%s381]
                  %409 = vst [vmem:[%s389 + $0x24] sm:%s381] %v408
                  %v410 = vld [vmem:[%s388 + $0xa0] sm:%s381]
                  %411 = vst [vmem:[%s389 + $0x28] sm:%s381] %v410
                  %v412 = vld [vmem:[%s388 + $0xb0] sm:%s381]
                  %413 = vst [vmem:[%s389 + $0x2c] sm:%s381] %v412
                  %v414 = vld [vmem:[%s388 + $0xc0] sm:%s381]
                  %415 = vst [vmem:[%s389 + $0x30] sm:%s381] %v414
                  %v416 = vld [vmem:[%s388 + $0xd0] sm:%s381]
                  %417 = vst [vmem:[%s389 + $0x34] sm:%s381] %v416
                  %v418 = vld [vmem:[%s388 + $0xe0] sm:%s381]
                  %419 = vst [vmem:[%s389 + $0x38] sm:%s381] %v418
                  %v420 = vld [vmem:[%s388 + $0xf0] sm:%s381]
                  %421 = vst [vmem:[%s389 + $0x3c] sm:%s381] %v420
                  %v422 = vld [vmem:[%s388 + $0x100] sm:%s381]
                  %423 = vst [vmem:[%s389 + $0x40] sm:%s381] %v422
                  %v424 = vld [vmem:[%s388 + $0x110] sm:%s381]
                  %425 = vst [vmem:[%s389 + $0x44] sm:%s381] %v424
                  %v426 = vld [vmem:[%s388 + $0x120] sm:%s381]
                  %427 = vst [vmem:[%s389 + $0x48] sm:%s381] %v426
                  %v428 = vld [vmem:[%s388 + $0x130] sm:%s381]
                  %429 = vst [vmem:[%s389 + $0x4c] sm:%s381] %v428
                  %v430 = vld [vmem:[%s388 + $0x140] sm:%s381]
                  %431 = vst [vmem:[%s389 + $0x50] sm:%s381] %v430
                  %v432 = vld [vmem:[%s388 + $0x150] sm:%s381]
                  %433 = vst [vmem:[%s389 + $0x54] sm:%s381] %v432
                  %v434 = vld [vmem:[%s388 + $0x160] sm:%s381]
                  %435 = vst [vmem:[%s389 + $0x58] sm:%s381] %v434
                  %v436 = vld [vmem:[%s388 + $0x170] sm:%s381]
                  %437 = vst [vmem:[%s389 + $0x5c] sm:%s381] %v436
                  %v438 = vld [vmem:[%s388 + $0x180] sm:%s381]
                  %439 = vst [vmem:[%s389 + $0x60] sm:%s381] %v438
                  %v440 = vld [vmem:[%s388 + $0x190] sm:%s381]
                  %441 = vst [vmem:[%s389 + $0x64] sm:%s381] %v440
                  %v442 = vld [vmem:[%s388 + $0x1a0] sm:%s381]
                  %443 = vst [vmem:[%s389 + $0x68] sm:%s381] %v442
                  %v444 = vld [vmem:[%s388 + $0x1b0] sm:%s381]
                  %445 = vst [vmem:[%s389 + $0x6c] sm:%s381] %v444
                  %v446 = vld [vmem:[%s388 + $0x1c0] sm:%s381]
                  %447 = vst [vmem:[%s389 + $0x70] sm:%s381] %v446
                  %v448 = vld [vmem:[%s388 + $0x1d0] sm:%s381]
                  %449 = vst [vmem:[%s389 + $0x74] sm:%s381] %v448
                  %v450 = vld [vmem:[%s388 + $0x1e0] sm:%s381]
                  %451 = vst [vmem:[%s389 + $0x78] sm:%s381] %v450
                  %v452 = vld [vmem:[%s388 + $0x1f0] sm:%s381]
                  %453 = vst [vmem:[%s389 + $0x7c] sm:%s381] %v452
                  %v454 = vld [vmem:[%s388 + $0x200] sm:%s381]
                  %455 = vst [vmem:[%s389 + $0x80] sm:%s381] %v454
                  %v456 = vld [vmem:[%s388 + $0x210] sm:%s381]
                  %457 = vst [vmem:[%s389 + $0x84] sm:%s381] %v456
                  %v458 = vld [vmem:[%s388 + $0x220] sm:%s381]
                  %459 = vst [vmem:[%s389 + $0x88] sm:%s381] %v458
                  %v460 = vld [vmem:[%s388 + $0x230] sm:%s381]
                  %461 = vst [vmem:[%s389 + $0x8c] sm:%s381] %v460
                  %v462 = vld [vmem:[%s388 + $0x240] sm:%s381]
                  %463 = vst [vmem:[%s389 + $0x90] sm:%s381] %v462
                  %v464 = vld [vmem:[%s388 + $0x250] sm:%s381]
                  %465 = vst [vmem:[%s389 + $0x94] sm:%s381] %v464
                  %v466 = vld [vmem:[%s388 + $0x260] sm:%s381]
                  %467 = vst [vmem:[%s389 + $0x98] sm:%s381] %v466
                  %v468 = vld [vmem:[%s388 + $0x270] sm:%s381]
                  %469 = vst [vmem:[%s389 + $0x9c] sm:%s381] %v468
                  %v470 = vld [vmem:[%s388 + $0x280] sm:%s381]
                  %471 = vst [vmem:[%s389 + $0xa0] sm:%s381] %v470
                  %v472 = vld [vmem:[%s388 + $0x290] sm:%s381]
                  %473 = vst [vmem:[%s389 + $0xa4] sm:%s381] %v472
                  %v474 = vld [vmem:[%s388 + $0x2a0] sm:%s381]
                  %475 = vst [vmem:[%s389 + $0xa8] sm:%s381] %v474
                  %v476 = vld [vmem:[%s388 + $0x2b0] sm:%s381]
                  %477 = vst [vmem:[%s389 + $0xac] sm:%s381] %v476
                  %v478 = vld [vmem:[%s388 + $0x2c0] sm:%s381]
                  %479 = vst [vmem:[%s389 + $0xb0] sm:%s381] %v478
                  %v480 = vld [vmem:[%s388 + $0x2d0] sm:%s381]
                  %481 = vst [vmem:[%s389 + $0xb4] sm:%s381] %v480
                  %v482 = vld [vmem:[%s388 + $0x2e0] sm:%s381]
                  %483 = vst [vmem:[%s389 + $0xb8] sm:%s381] %v482
                  %v484 = vld [vmem:[%s388 + $0x2f0] sm:%s381]
                  %485 = vst [vmem:[%s389 + $0xbc] sm:%s381] %v484
                  %v486 = vld [vmem:[%s388 + $0x300] sm:%s381]
                  %487 = vst [vmem:[%s389 + $0xc0] sm:%s381] %v486
                  %v488 = vld [vmem:[%s388 + $0x310] sm:%s381]
                  %489 = vst [vmem:[%s389 + $0xc4] sm:%s381] %v488
                  %v490 = vld [vmem:[%s388 + $0x320] sm:%s381]
                  %491 = vst [vmem:[%s389 + $0xc8] sm:%s381] %v490
                  %v492 = vld [vmem:[%s388 + $0x330] sm:%s381]
                  %493 = vst [vmem:[%s389 + $0xcc] sm:%s381] %v492
                  %v494 = vld [vmem:[%s388 + $0x340] sm:%s381]
                  %495 = vst [vmem:[%s389 + $0xd0] sm:%s381] %v494
                  %v496 = vld [vmem:[%s388 + $0x350] sm:%s381]
                  %497 = vst [vmem:[%s389 + $0xd4] sm:%s381] %v496
                  %v498 = vld [vmem:[%s388 + $0x360] sm:%s381]
                  %499 = vst [vmem:[%s389 + $0xd8] sm:%s381] %v498
                  %v500 = vld [vmem:[%s388 + $0x370] sm:%s381]
                  %501 = vst [vmem:[%s389 + $0xdc] sm:%s381] %v500
                  %v502 = vld [vmem:[%s388 + $0x380] sm:%s381]
                  %503 = vst [vmem:[%s389 + $0xe0] sm:%s381] %v502
                  %v504 = vld [vmem:[%s388 + $0x390] sm:%s381]
                  %505 = vst [vmem:[%s389 + $0xe4] sm:%s381] %v504
                  %v506 = vld [vmem:[%s388 + $0x3a0] sm:%s381]
                  %507 = vst [vmem:[%s389 + $0xe8] sm:%s381] %v506
                  %v508 = vld [vmem:[%s388 + $0x3b0] sm:%s381]
                  %509 = vst [vmem:[%s389 + $0xec] sm:%s381] %v508
                  %v510 = vld [vmem:[%s388 + $0x3c0] sm:%s381]
                  %511 = vst [vmem:[%s389 + $0xf0] sm:%s381] %v510
                  %v512 = vld [vmem:[%s388 + $0x3d0] sm:%s381]
                  %513 = vst [vmem:[%s389 + $0xf4] sm:%s381] %v512
                  %v514 = vld [vmem:[%s388 + $0x3e0] sm:%s381]
                  %515 = vst [vmem:[%s389 + $0xf8] sm:%s381] %v514
                  %v516 = vld [vmem:[%s388 + $0x3f0] sm:%s381]
                  %517 = vst [vmem:[%s389 + $0xfc] sm:%s381] %v516
                $region78: #{discriminator_forward.10} parent=65 // loop_footer
                  %s387 = sadd.s32 1, %s383
                $region79: #{discriminator_forward.10} parent=65 // loop_footer_branch
                  %382 = sbr.rel target = $region75
                $region80: #{discriminator_forward.10} parent=65 // loop_exit
                  _
              $region66: #{discriminator_forward.10} parent=50 // pred_fallthru
                _
            $region51: #{discriminator_forward.10} parent=46 // pred_fallthru
              _
            // Predicated region
            $region52: #{discriminator_forward.10} parent=46 // pred_check
              _
            $region53: #{discriminator_forward.10} parent=46 // pred_check_branch
              %231 = sbr.rel (0) target = $region55
            $region54: #{discriminator_forward.10} parent=46 // pred_region
              %s233 = ssub.s32 16, 1
              loop: start=0, step=1, limit=1
              $region56: #{discriminator_forward.10} parent=54 // loop_pre_header
                _
              $region57: #{discriminator_forward.10} parent=54 // loop_header
                %s235 = sphi 0, %s239
                %p236 = scmp.ge.s32.totalorder %s235, 1
                %s240 = sphi %s225, %s225
                %s241 = sphi %s220, %s220
              $region58: #{discriminator_forward.10} parent=54 // loop_header_branch
                %238 = sbr.rel (%p236) target = $region62
              $region59: #{discriminator_forward.10} parent=54 // loop_body
                %v242 = vld [vmem:[%s240] sm:%s233]
                %243 = vst [vmem:[%s241] sm:%s233] %v242
                %v244 = vld [vmem:[%s240 + $0x10] sm:%s233]
                %245 = vst [vmem:[%s241 + $0x4] sm:%s233] %v244
                %v246 = vld [vmem:[%s240 + $0x20] sm:%s233]
                %247 = vst [vmem:[%s241 + $0x8] sm:%s233] %v246
                %v248 = vld [vmem:[%s240 + $0x30] sm:%s233]
                %249 = vst [vmem:[%s241 + $0xc] sm:%s233] %v248
                %v250 = vld [vmem:[%s240 + $0x40] sm:%s233]
                %251 = vst [vmem:[%s241 + $0x10] sm:%s233] %v250
                %v252 = vld [vmem:[%s240 + $0x50] sm:%s233]
                %253 = vst [vmem:[%s241 + $0x14] sm:%s233] %v252
                %v254 = vld [vmem:[%s240 + $0x60] sm:%s233]
                %255 = vst [vmem:[%s241 + $0x18] sm:%s233] %v254
                %v256 = vld [vmem:[%s240 + $0x70] sm:%s233]
                %257 = vst [vmem:[%s241 + $0x1c] sm:%s233] %v256
                %v258 = vld [vmem:[%s240 + $0x80] sm:%s233]
                %259 = vst [vmem:[%s241 + $0x20] sm:%s233] %v258
                %v260 = vld [vmem:[%s240 + $0x90] sm:%s233]
                %261 = vst [vmem:[%s241 + $0x24] sm:%s233] %v260
                %v262 = vld [vmem:[%s240 + $0xa0] sm:%s233]
                %263 = vst [vmem:[%s241 + $0x28] sm:%s233] %v262
                %v264 = vld [vmem:[%s240 + $0xb0] sm:%s233]
                %265 = vst [vmem:[%s241 + $0x2c] sm:%s233] %v264
                %v266 = vld [vmem:[%s240 + $0xc0] sm:%s233]
                %267 = vst [vmem:[%s241 + $0x30] sm:%s233] %v266
                %v268 = vld [vmem:[%s240 + $0xd0] sm:%s233]
                %269 = vst [vmem:[%s241 + $0x34] sm:%s233] %v268
                %v270 = vld [vmem:[%s240 + $0xe0] sm:%s233]
                %271 = vst [vmem:[%s241 + $0x38] sm:%s233] %v270
                %v272 = vld [vmem:[%s240 + $0xf0] sm:%s233]
                %273 = vst [vmem:[%s241 + $0x3c] sm:%s233] %v272
                %v274 = vld [vmem:[%s240 + $0x100] sm:%s233]
                %275 = vst [vmem:[%s241 + $0x40] sm:%s233] %v274
                %v276 = vld [vmem:[%s240 + $0x110] sm:%s233]
                %277 = vst [vmem:[%s241 + $0x44] sm:%s233] %v276
                %v278 = vld [vmem:[%s240 + $0x120] sm:%s233]
                %279 = vst [vmem:[%s241 + $0x48] sm:%s233] %v278
                %v280 = vld [vmem:[%s240 + $0x130] sm:%s233]
                %281 = vst [vmem:[%s241 + $0x4c] sm:%s233] %v280
                %v282 = vld [vmem:[%s240 + $0x140] sm:%s233]
                %283 = vst [vmem:[%s241 + $0x50] sm:%s233] %v282
                %v284 = vld [vmem:[%s240 + $0x150] sm:%s233]
                %285 = vst [vmem:[%s241 + $0x54] sm:%s233] %v284
                %v286 = vld [vmem:[%s240 + $0x160] sm:%s233]
                %287 = vst [vmem:[%s241 + $0x58] sm:%s233] %v286
                %v288 = vld [vmem:[%s240 + $0x170] sm:%s233]
                %289 = vst [vmem:[%s241 + $0x5c] sm:%s233] %v288
                %v290 = vld [vmem:[%s240 + $0x180] sm:%s233]
                %291 = vst [vmem:[%s241 + $0x60] sm:%s233] %v290
                %v292 = vld [vmem:[%s240 + $0x190] sm:%s233]
                %293 = vst [vmem:[%s241 + $0x64] sm:%s233] %v292
                %v294 = vld [vmem:[%s240 + $0x1a0] sm:%s233]
                %295 = vst [vmem:[%s241 + $0x68] sm:%s233] %v294
                %v296 = vld [vmem:[%s240 + $0x1b0] sm:%s233]
                %297 = vst [vmem:[%s241 + $0x6c] sm:%s233] %v296
                %v298 = vld [vmem:[%s240 + $0x1c0] sm:%s233]
                %299 = vst [vmem:[%s241 + $0x70] sm:%s233] %v298
                %v300 = vld [vmem:[%s240 + $0x1d0] sm:%s233]
                %301 = vst [vmem:[%s241 + $0x74] sm:%s233] %v300
                %v302 = vld [vmem:[%s240 + $0x1e0] sm:%s233]
                %303 = vst [vmem:[%s241 + $0x78] sm:%s233] %v302
                %v304 = vld [vmem:[%s240 + $0x1f0] sm:%s233]
                %305 = vst [vmem:[%s241 + $0x7c] sm:%s233] %v304
                %v306 = vld [vmem:[%s240 + $0x200] sm:%s233]
                %307 = vst [vmem:[%s241 + $0x80] sm:%s233] %v306
                %v308 = vld [vmem:[%s240 + $0x210] sm:%s233]
                %309 = vst [vmem:[%s241 + $0x84] sm:%s233] %v308
                %v310 = vld [vmem:[%s240 + $0x220] sm:%s233]
                %311 = vst [vmem:[%s241 + $0x88] sm:%s233] %v310
                %v312 = vld [vmem:[%s240 + $0x230] sm:%s233]
                %313 = vst [vmem:[%s241 + $0x8c] sm:%s233] %v312
                %v314 = vld [vmem:[%s240 + $0x240] sm:%s233]
                %315 = vst [vmem:[%s241 + $0x90] sm:%s233] %v314
                %v316 = vld [vmem:[%s240 + $0x250] sm:%s233]
                %317 = vst [vmem:[%s241 + $0x94] sm:%s233] %v316
                %v318 = vld [vmem:[%s240 + $0x260] sm:%s233]
                %319 = vst [vmem:[%s241 + $0x98] sm:%s233] %v318
                %v320 = vld [vmem:[%s240 + $0x270] sm:%s233]
                %321 = vst [vmem:[%s241 + $0x9c] sm:%s233] %v320
                %v322 = vld [vmem:[%s240 + $0x280] sm:%s233]
                %323 = vst [vmem:[%s241 + $0xa0] sm:%s233] %v322
                %v324 = vld [vmem:[%s240 + $0x290] sm:%s233]
                %325 = vst [vmem:[%s241 + $0xa4] sm:%s233] %v324
                %v326 = vld [vmem:[%s240 + $0x2a0] sm:%s233]
                %327 = vst [vmem:[%s241 + $0xa8] sm:%s233] %v326
                %v328 = vld [vmem:[%s240 + $0x2b0] sm:%s233]
                %329 = vst [vmem:[%s241 + $0xac] sm:%s233] %v328
                %v330 = vld [vmem:[%s240 + $0x2c0] sm:%s233]
                %331 = vst [vmem:[%s241 + $0xb0] sm:%s233] %v330
                %v332 = vld [vmem:[%s240 + $0x2d0] sm:%s233]
                %333 = vst [vmem:[%s241 + $0xb4] sm:%s233] %v332
                %v334 = vld [vmem:[%s240 + $0x2e0] sm:%s233]
                %335 = vst [vmem:[%s241 + $0xb8] sm:%s233] %v334
                %v336 = vld [vmem:[%s240 + $0x2f0] sm:%s233]
                %337 = vst [vmem:[%s241 + $0xbc] sm:%s233] %v336
                %v338 = vld [vmem:[%s240 + $0x300] sm:%s233]
                %339 = vst [vmem:[%s241 + $0xc0] sm:%s233] %v338
                %v340 = vld [vmem:[%s240 + $0x310] sm:%s233]
                %341 = vst [vmem:[%s241 + $0xc4] sm:%s233] %v340
                %v342 = vld [vmem:[%s240 + $0x320] sm:%s233]
                %343 = vst [vmem:[%s241 + $0xc8] sm:%s233] %v342
                %v344 = vld [vmem:[%s240 + $0x330] sm:%s233]
                %345 = vst [vmem:[%s241 + $0xcc] sm:%s233] %v344
                %v346 = vld [vmem:[%s240 + $0x340] sm:%s233]
                %347 = vst [vmem:[%s241 + $0xd0] sm:%s233] %v346
                %v348 = vld [vmem:[%s240 + $0x350] sm:%s233]
                %349 = vst [vmem:[%s241 + $0xd4] sm:%s233] %v348
                %v350 = vld [vmem:[%s240 + $0x360] sm:%s233]
                %351 = vst [vmem:[%s241 + $0xd8] sm:%s233] %v350
                %v352 = vld [vmem:[%s240 + $0x370] sm:%s233]
                %353 = vst [vmem:[%s241 + $0xdc] sm:%s233] %v352
                %v354 = vld [vmem:[%s240 + $0x380] sm:%s233]
                %355 = vst [vmem:[%s241 + $0xe0] sm:%s233] %v354
                %v356 = vld [vmem:[%s240 + $0x390] sm:%s233]
                %357 = vst [vmem:[%s241 + $0xe4] sm:%s233] %v356
                %v358 = vld [vmem:[%s240 + $0x3a0] sm:%s233]
                %359 = vst [vmem:[%s241 + $0xe8] sm:%s233] %v358
                %v360 = vld [vmem:[%s240 + $0x3b0] sm:%s233]
                %361 = vst [vmem:[%s241 + $0xec] sm:%s233] %v360
                %v362 = vld [vmem:[%s240 + $0x3c0] sm:%s233]
                %363 = vst [vmem:[%s241 + $0xf0] sm:%s233] %v362
                %v364 = vld [vmem:[%s240 + $0x3d0] sm:%s233]
                %365 = vst [vmem:[%s241 + $0xf4] sm:%s233] %v364
                %v366 = vld [vmem:[%s240 + $0x3e0] sm:%s233]
                %367 = vst [vmem:[%s241 + $0xf8] sm:%s233] %v366
                %v368 = vld [vmem:[%s240 + $0x3f0] sm:%s233]
                %369 = vst [vmem:[%s241 + $0xfc] sm:%s233] %v368
              $region60: #{discriminator_forward.10} parent=54 // loop_footer
                %s239 = sadd.s32 1, %s235
              $region61: #{discriminator_forward.10} parent=54 // loop_footer_branch
                %234 = sbr.rel target = $region57
              $region62: #{discriminator_forward.10} parent=54 // loop_exit
                _
            $region55: #{discriminator_forward.10} parent=46 // pred_fallthru
              _
          $region47: #{discriminator_forward.10} parent=42 // pred_fallthru
            _
          %518 = vnop
        $region43: #{discriminator_forward.10} parent=15 // pred_fallthru
          _
        // Predicated region
        $region81: #{discriminator_forward.10} parent=15 // pred_check
          %p519 = pneg %p96
        $region82: #{discriminator_forward.10} parent=15 // pred_check_branch
          %521 = sbr.rel (%p519) target = $region84
        $region83: #{discriminator_forward.10} parent=15 // pred_region
          %p522 = scmp.lt.s32.totalorder %s17, 3
          %s523 = scalar_select %p522, %s17, 3
          %s524 = scalar_lea.vmem %s2, %s523
        $region84: #{discriminator_forward.10} parent=15 // pred_fallthru
          _
        // Predicated region
        $region85: #{discriminator_forward.10} parent=15 // pred_check
          %p525 = pneg %p122
        $region86: #{discriminator_forward.10} parent=15 // pred_check_branch
          %527 = sbr.rel (%p525) target = $region88
        $region87: #{discriminator_forward.10} parent=15 // pred_region
          %p528 = scmp.lt.s32.totalorder %s17, 3
          %s529 = scalar_select %p528, %s17, 3
          %s530 = scalar_lea.vmem %s3, %s529
        $region88: #{discriminator_forward.10} parent=15 // pred_fallthru
          _
      $region16: #{discriminator_forward.10} parent=5 // pred_fallthru
        _
      %p531 = scmp.le.s32.totalorder 1, %s10
      %p532 = scmp.lt.s32.totalorder %s10, 33
      %p533 = pnand %p531, %p532
      %p534 = pneg %p533
      // Predicated region
      $region89: #{discriminator_forward.10} parent=5 // pred_check
        _
      $region90: #{discriminator_forward.10} parent=5 // pred_check_branch
        %536 = sbr.rel (%p533) target = $region92
      $region91: #{discriminator_forward.10} parent=5 // pred_region
        %s537 = ssub.s32 %s10, 1
        %s538 = sand.u32 %s35, 1
        %s539 = sand.u32 %s35, 1
        %s540 = smul.addr %s539, 64
        %s541 = scalar_lea.vmem [#allocation3], %s540
        // Predicated region
        $region93: #{discriminator_forward.10} parent=91 // pred_check
          %p542 = pneg %p48
        $region94: #{discriminator_forward.10} parent=91 // pred_check_branch
          %544 = sbr.rel (%p542) target = $region96
        $region95: #{discriminator_forward.10} parent=91 // pred_region
          _
        $region96: #{discriminator_forward.10} parent=91 // pred_fallthru
          _
        %s545 = sand.u32 %s63, 1
        %s546 = sand.u32 %s63, 1
        %s547 = smul.addr %s546, 256
        %s548 = scalar_lea.vmem [#allocation4], %s547
        // Predicated region
        $region97: #{discriminator_forward.10} parent=91 // pred_check
          %p549 = pneg %p76
        $region98: #{discriminator_forward.10} parent=91 // pred_check_branch
          %551 = sbr.rel (%p549) target = $region100
        $region99: #{discriminator_forward.10} parent=91 // pred_region
          _
        $region100: #{discriminator_forward.10} parent=91 // pred_fallthru
          _
        %s552 = sand.u32 %s35, 1
        %s553 = sand.u32 %s35, 1
        %s554 = smul.addr %s553, 64
        %s555 = scalar_lea.vmem [#allocation3], %s554
        %p556 = pneg %p48
        %p557 = pneg %p45
        %s558 = sand.u32 %s63, 1
        %s559 = sand.u32 %s63, 1
        %s560 = smul.addr %s559, 256
        %s561 = scalar_lea.vmem [#allocation4], %s560
        %p562 = pneg %p76
        %p563 = pneg %p73
        %p564 = scmp.lt.s32.totalorder %s19, 3
        %s565 = scalar_select %p564, %s19, 3
        %s566 = scalar_lea.vmem %s2, %s565
        %p567 = pneg %p102
        %p568 = pneg %p99
        %p569 = scmp.lt.s32.totalorder %s19, 3
        %s570 = scalar_select %p569, %s19, 3
        %s571 = scalar_lea.vmem %s3, %s570
        %p572 = pneg %p128
        %p573 = pneg %p125
        %p574 = pneg %p154
        %p575 = pneg %p151
        %s576 = sand.u32 %s141, 1
        %s577 = sand.u32 %s141, 1
        %s578 = smul.addr %s577, 16
        %s579 = scalar_lea.vmem [#allocation5], %s578
        %s580 = smul.u32 4, %s20
        %s581 = smul.u32 64, %s20
        %p582 = scmp.lt.s32.totalorder %s19, 3
        %s583 = scalar_select %p582, %s19, 3
        %s584 = scalar_lea.vmem %s2, %s583
        %p585 = scmp.lt.s32.totalorder %s19, 3
        %s586 = scalar_select %p585, %s19, 3
        %s587 = scalar_lea.vmem %s3, %s586
        %p589 = scmp.eq.s32.totalorder %s20, 0
        // Predicated region
        $region101: #{discriminator_forward.10} parent=91 // pred_check
          %p590 = pneg %p589
        $region102: #{discriminator_forward.10} parent=91 // pred_check_branch
          %592 = sbr.rel (%p590) target = $region104
        $region103: #{discriminator_forward.10} parent=91 // pred_region
          %593 = vst [vmem:[#allocation2] sm:$0xff] 0.0
          %594 = vst [vmem:[#allocation2 + $0x8] sm:$0xff] 0.0
          %595 = vst [vmem:[#allocation2 + $0x10] sm:$0xff] 0.0
          %596 = vst [vmem:[#allocation2 + $0x18] sm:$0xff] 0.0
        $region104: #{discriminator_forward.10} parent=91 // pred_fallthru
          _
        %v597 = vld [vmem:[#allocation2] sm:$0xff]
        %v598 = vld [vmem:[#allocation2 + $0x8] sm:$0xff]
        %v599 = vld [vmem:[#allocation2 + $0x10] sm:$0xff]
        %v600 = vld [vmem:[#allocation2 + $0x18] sm:$0xff]
        %v601 = vld [vmem:[%s541] sm:$0xff]
        %v602 = vld [vmem:[%s541 + $0x8] sm:$0xff]
        %v603 = vld [vmem:[%s541 + $0x10] sm:$0xff]
        %v604 = vld [vmem:[%s541 + $0x18] sm:$0xff]
        %v605 = vld [vmem:[%s541 + $0x20] sm:$0xff]
        %v606 = vld [vmem:[%s541 + $0x28] sm:$0xff]
        %v607 = vld [vmem:[%s541 + $0x30] sm:$0xff]
        %v608 = vld [vmem:[%s541 + $0x38] sm:$0xff]
        %v609 = vld [vmem:[%s548] sm:$0xf]
        %v610 = vld [vmem:[%s548 + $0x4] sm:$0xf]
        %v611 = vld [vmem:[%s548 + $0x8] sm:$0xf]
        %v612 = vld [vmem:[%s548 + $0xc] sm:$0xf]
        %v613 = vld [vmem:[%s548 + $0x10] sm:$0xf]
        %v614 = vld [vmem:[%s548 + $0x14] sm:$0xf]
        %v615 = vld [vmem:[%s548 + $0x18] sm:$0xf]
        %v616 = vld [vmem:[%s548 + $0x1c] sm:$0xf]
        %v617 = vld [vmem:[%s548 + $0x20] sm:$0xf]
        %v618 = vld [vmem:[%s548 + $0x24] sm:$0xf]
        %v619 = vld [vmem:[%s548 + $0x28] sm:$0xf]
        %v620 = vld [vmem:[%s548 + $0x2c] sm:$0xf]
        %v621 = vld [vmem:[%s548 + $0x30] sm:$0xf]
        %v622 = vld [vmem:[%s548 + $0x34] sm:$0xf]
        %v623 = vld [vmem:[%s548 + $0x38] sm:$0xf]
        %v624 = vld [vmem:[%s548 + $0x3c] sm:$0xf]
        %v625 = vld [vmem:[%s548 + $0x40] sm:$0xf]
        %v626 = vld [vmem:[%s548 + $0x44] sm:$0xf]
        %v627 = vld [vmem:[%s548 + $0x48] sm:$0xf]
        %v628 = vld [vmem:[%s548 + $0x4c] sm:$0xf]
        %v629 = vld [vmem:[%s548 + $0x50] sm:$0xf]
        %v630 = vld [vmem:[%s548 + $0x54] sm:$0xf]
        %v631 = vld [vmem:[%s548 + $0x58] sm:$0xf]
        %v632 = vld [vmem:[%s548 + $0x5c] sm:$0xf]
        %v633 = vld [vmem:[%s548 + $0x60] sm:$0xf]
        %v634 = vld [vmem:[%s548 + $0x64] sm:$0xf]
        %v635 = vld [vmem:[%s548 + $0x68] sm:$0xf]
        %v636 = vld [vmem:[%s548 + $0x6c] sm:$0xf]
        %v637 = vld [vmem:[%s548 + $0x70] sm:$0xf]
        %v638 = vld [vmem:[%s548 + $0x74] sm:$0xf]
        %v639 = vld [vmem:[%s548 + $0x78] sm:$0xf]
        %v640 = vld [vmem:[%s548 + $0x7c] sm:$0xf]
        %v641 = vld [vmem:[%s548 + $0x80] sm:$0xf]
        %v642 = vld [vmem:[%s548 + $0x84] sm:$0xf]
        %v643 = vld [vmem:[%s548 + $0x88] sm:$0xf]
        %v644 = vld [vmem:[%s548 + $0x8c] sm:$0xf]
        %v645 = vld [vmem:[%s548 + $0x90] sm:$0xf]
        %v646 = vld [vmem:[%s548 + $0x94] sm:$0xf]
        %v647 = vld [vmem:[%s548 + $0x98] sm:$0xf]
        %v648 = vld [vmem:[%s548 + $0x9c] sm:$0xf]
        %v649 = vld [vmem:[%s548 + $0xa0] sm:$0xf]
        %v650 = vld [vmem:[%s548 + $0xa4] sm:$0xf]
        %v651 = vld [vmem:[%s548 + $0xa8] sm:$0xf]
        %v652 = vld [vmem:[%s548 + $0xac] sm:$0xf]
        %v653 = vld [vmem:[%s548 + $0xb0] sm:$0xf]
        %v654 = vld [vmem:[%s548 + $0xb4] sm:$0xf]
        %v655 = vld [vmem:[%s548 + $0xb8] sm:$0xf]
        %v656 = vld [vmem:[%s548 + $0xbc] sm:$0xf]
        %v657 = vld [vmem:[%s548 + $0xc0] sm:$0xf]
        %v658 = vld [vmem:[%s548 + $0xc4] sm:$0xf]
        %v659 = vld [vmem:[%s548 + $0xc8] sm:$0xf]
        %v660 = vld [vmem:[%s548 + $0xcc] sm:$0xf]
        %v661 = vld [vmem:[%s548 + $0xd0] sm:$0xf]
        %v662 = vld [vmem:[%s548 + $0xd4] sm:$0xf]
        %v663 = vld [vmem:[%s548 + $0xd8] sm:$0xf]
        %v664 = vld [vmem:[%s548 + $0xdc] sm:$0xf]
        %v665 = vld [vmem:[%s548 + $0xe0] sm:$0xf]
        %v666 = vld [vmem:[%s548 + $0xe4] sm:$0xf]
        %v667 = vld [vmem:[%s548 + $0xe8] sm:$0xf]
        %v668 = vld [vmem:[%s548 + $0xec] sm:$0xf]
        %v669 = vld [vmem:[%s548 + $0xf0] sm:$0xf]
        %v670 = vld [vmem:[%s548 + $0xf4] sm:$0xf]
        %v671 = vld [vmem:[%s548 + $0xf8] sm:$0xf]
        %v672 = vld [vmem:[%s548 + $0xfc] sm:$0xf]
        %v681 = vunpack.c.l.b16 %v601
        %v682 = vunpack.c.h.b16 %v601
        %v683 = vunpack.c.l.b16 %v602
        %v684 = vunpack.c.h.b16 %v602
        %v685 = vunpack.c.l.b16 %v603
        %v686 = vunpack.c.h.b16 %v603
        %v687 = vunpack.c.l.b16 %v604
        %v688 = vunpack.c.h.b16 %v604
        %v689 = vunpack.c.l.b16 %v605
        %v690 = vunpack.c.h.b16 %v605
        %v691 = vunpack.c.l.b16 %v606
        %v692 = vunpack.c.h.b16 %v606
        %v693 = vunpack.c.l.b16 %v607
        %v694 = vunpack.c.h.b16 %v607
        %v695 = vunpack.c.l.b16 %v608
        %v696 = vunpack.c.h.b16 %v608
        %v697 = vpack.c.b16 %v685, %v681
        %v698 = vpack.c.b16 %v686, %v682
        %v699 = vpack.c.b16 %v687, %v683
        %v700 = vpack.c.b16 %v688, %v684
        %v701 = vpack.c.b16 %v693, %v689
        %v702 = vpack.c.b16 %v694, %v690
        %v703 = vpack.c.b16 %v695, %v691
        %v704 = vpack.c.b16 %v696, %v692
        %v777 = vunpack.c.l.b16 %v609
        %v778 = vunpack.c.l.b16 %v610
        %v779 = vunpack.c.l.b16 %v611
        %v780 = vunpack.c.l.b16 %v612
        %v781 = vunpack.c.l.b16 %v613
        %v782 = vunpack.c.l.b16 %v614
        %v783 = vunpack.c.l.b16 %v615
        %v784 = vunpack.c.l.b16 %v616
        %v785 = vunpack.c.l.b16 %v617
        %v786 = vunpack.c.l.b16 %v618
        %v787 = vunpack.c.l.b16 %v619
        %v788 = vunpack.c.l.b16 %v620
        %v789 = vunpack.c.l.b16 %v621
        %v790 = vunpack.c.l.b16 %v622
        %v791 = vunpack.c.l.b16 %v623
        %v792 = vunpack.c.l.b16 %v624
        %v793 = vunpack.c.l.b16 %v625
        %v794 = vunpack.c.l.b16 %v626
        %v795 = vunpack.c.l.b16 %v627
        %v796 = vunpack.c.l.b16 %v628
        %v797 = vunpack.c.l.b16 %v629
        %v798 = vunpack.c.l.b16 %v630
        %v799 = vunpack.c.l.b16 %v631
        %v800 = vunpack.c.l.b16 %v632
        %v801 = vunpack.c.l.b16 %v633
        %v802 = vunpack.c.l.b16 %v634
        %v803 = vunpack.c.l.b16 %v635
        %v804 = vunpack.c.l.b16 %v636
        %v805 = vunpack.c.l.b16 %v637
        %v806 = vunpack.c.l.b16 %v638
        %v807 = vunpack.c.l.b16 %v639
        %v808 = vunpack.c.l.b16 %v640
        %v809 = vunpack.c.l.b16 %v641
        %v810 = vunpack.c.l.b16 %v642
        %v811 = vunpack.c.l.b16 %v643
        %v812 = vunpack.c.l.b16 %v644
        %v813 = vunpack.c.l.b16 %v645
        %v814 = vunpack.c.l.b16 %v646
        %v815 = vunpack.c.l.b16 %v647
        %v816 = vunpack.c.l.b16 %v648
        %v817 = vunpack.c.l.b16 %v649
        %v818 = vunpack.c.l.b16 %v650
        %v819 = vunpack.c.l.b16 %v651
        %v820 = vunpack.c.l.b16 %v652
        %v821 = vunpack.c.l.b16 %v653
        %v822 = vunpack.c.l.b16 %v654
        %v823 = vunpack.c.l.b16 %v655
        %v824 = vunpack.c.l.b16 %v656
        %v825 = vunpack.c.l.b16 %v657
        %v826 = vunpack.c.l.b16 %v658
        %v827 = vunpack.c.l.b16 %v659
        %v828 = vunpack.c.l.b16 %v660
        %v829 = vunpack.c.l.b16 %v661
        %v830 = vunpack.c.l.b16 %v662
        %v831 = vunpack.c.l.b16 %v663
        %v832 = vunpack.c.l.b16 %v664
        %v833 = vunpack.c.l.b16 %v665
        %v834 = vunpack.c.l.b16 %v666
        %v835 = vunpack.c.l.b16 %v667
        %v836 = vunpack.c.l.b16 %v668
        %v837 = vunpack.c.l.b16 %v669
        %v838 = vunpack.c.l.b16 %v670
        %v839 = vunpack.c.l.b16 %v671
        %v840 = vunpack.c.l.b16 %v672
        %v841 = vpack.c.b16 %v778, %v777
        %v842 = vpack.c.b16 %v780, %v779
        %v843 = vpack.c.b16 %v782, %v781
        %v844 = vpack.c.b16 %v784, %v783
        %v845 = vpack.c.b16 %v786, %v785
        %v846 = vpack.c.b16 %v788, %v787
        %v847 = vpack.c.b16 %v790, %v789
        %v848 = vpack.c.b16 %v792, %v791
        %v849 = vpack.c.b16 %v794, %v793
        %v850 = vpack.c.b16 %v796, %v795
        %v851 = vpack.c.b16 %v798, %v797
        %v852 = vpack.c.b16 %v800, %v799
        %v853 = vpack.c.b16 %v802, %v801
        %v854 = vpack.c.b16 %v804, %v803
        %v855 = vpack.c.b16 %v806, %v805
        %v856 = vpack.c.b16 %v808, %v807
        %v857 = vpack.c.b16 %v810, %v809
        %v858 = vpack.c.b16 %v812, %v811
        %v859 = vpack.c.b16 %v814, %v813
        %v860 = vpack.c.b16 %v816, %v815
        %v861 = vpack.c.b16 %v818, %v817
        %v862 = vpack.c.b16 %v820, %v819
        %v863 = vpack.c.b16 %v822, %v821
        %v864 = vpack.c.b16 %v824, %v823
        %v865 = vpack.c.b16 %v826, %v825
        %v866 = vpack.c.b16 %v828, %v827
        %v867 = vpack.c.b16 %v830, %v829
        %v868 = vpack.c.b16 %v832, %v831
        %v869 = vpack.c.b16 %v834, %v833
        %v870 = vpack.c.b16 %v836, %v835
        %v871 = vpack.c.b16 %v838, %v837
        %v872 = vpack.c.b16 %v840, %v839
        %905 = vmatprep.subr.bf16.mxu0 0
        %906 = vmatpush1.bf16.msra.mxu0 %v848
        %907 = vmatprep.subr.bf16.mxu0 0
        %908 = vmatpush1.bf16.msra.mxu0 %v847
        %909 = vmatprep.subr.bf16.mxu0 0
        %910 = vmatpush1.bf16.msra.mxu0 %v846
        %911 = vmatprep.subr.bf16.mxu0 0
        %912 = vmatpush1.bf16.msra.mxu0 %v845
        %913 = vmatprep.subr.bf16.mxu0 0
        %914 = vmatpush1.bf16.msra.mxu0 %v844
        %915 = vmatprep.subr.bf16.mxu0 0
        %916 = vmatpush1.bf16.msra.mxu0 %v843
        %917 = vmatprep.subr.bf16.mxu0 0
        %918 = vmatpush1.bf16.msra.mxu0 %v842
        %919 = vmatprep.subr.bf16.mxu0 0
        %920 = vmatpush1.bf16.msra.mxu0 %v841
        %921 = vmatprep.subr.bf16.mxu0 0
        %922 = vmatpush2.bf16.msra.mxu0 %v856
        %923 = vmatprep.subr.bf16.mxu0 0
        %924 = vmatpush2.bf16.msra.mxu0 %v855
        %925 = vmatprep.subr.bf16.mxu0 0
        %926 = vmatpush2.bf16.msra.mxu0 %v854
        %927 = vmatprep.subr.bf16.mxu0 0
        %928 = vmatpush2.bf16.msra.mxu0 %v853
        %929 = vmatprep.subr.bf16.mxu0 0
        %930 = vmatpush2.bf16.msra.mxu0 %v852
        %931 = vmatprep.subr.bf16.mxu0 0
        %932 = vmatpush2.bf16.msra.mxu0 %v851
        %933 = vmatprep.subr.bf16.mxu0 0
        %934 = vmatpush2.bf16.msra.mxu0 %v850
        %935 = vmatprep.subr.bf16.mxu0 0
        %936 = vmatpush2.bf16.msra.mxu0 %v849
        %937 = vmatprep.mubr.bf16.mxu0 %v698
        %938 = vmatmul.mubr.bf16.gmra.mxu0 %v697
        %v939 = vpop.f32.mrf.mxu0
        %v940 = vadd.f32 0.0, %v939
        %v941 = vpop.f32.mrf.mxu0
        %v942 = vpop.f32.mrf.mxu0
        %v943 = vadd.f32 0.0, %v942
        %v944 = vpop.f32.mrf.mxu0
        %945 = vmatprep.mubr.bf16.mxu0 %v702
        %946 = vmatmul.mubr.bf16.gmra.mxu0 %v701
        %v947 = vpop.f32.mrf.mxu0
        %v948 = vadd.f32 0.0, %v947
        %v949 = vpop.f32.mrf.mxu0
        %v950 = vpop.f32.mrf.mxu0
        %v951 = vadd.f32 0.0, %v950
        %v952 = vpop.f32.mrf.mxu0
        %953 = vdwg.mxu0
        %954 = vmatprep.subr.bf16.mxu0 0
        %955 = vmatpush1.bf16.msra.mxu0 %v864
        %956 = vmatprep.subr.bf16.mxu0 0
        %957 = vmatpush1.bf16.msra.mxu0 %v863
        %958 = vmatprep.subr.bf16.mxu0 0
        %959 = vmatpush1.bf16.msra.mxu0 %v862
        %960 = vmatprep.subr.bf16.mxu0 0
        %961 = vmatpush1.bf16.msra.mxu0 %v861
        %962 = vmatprep.subr.bf16.mxu0 0
        %963 = vmatpush1.bf16.msra.mxu0 %v860
        %964 = vmatprep.subr.bf16.mxu0 0
        %965 = vmatpush1.bf16.msra.mxu0 %v859
        %966 = vmatprep.subr.bf16.mxu0 0
        %967 = vmatpush1.bf16.msra.mxu0 %v858
        %968 = vmatprep.subr.bf16.mxu0 0
        %969 = vmatpush1.bf16.msra.mxu0 %v857
        %970 = vmatprep.subr.bf16.mxu0 0
        %971 = vmatpush2.bf16.msra.mxu0 %v872
        %972 = vmatprep.subr.bf16.mxu0 0
        %973 = vmatpush2.bf16.msra.mxu0 %v871
        %974 = vmatprep.subr.bf16.mxu0 0
        %975 = vmatpush2.bf16.msra.mxu0 %v870
        %976 = vmatprep.subr.bf16.mxu0 0
        %977 = vmatpush2.bf16.msra.mxu0 %v869
        %978 = vmatprep.subr.bf16.mxu0 0
        %979 = vmatpush2.bf16.msra.mxu0 %v868
        %980 = vmatprep.subr.bf16.mxu0 0
        %981 = vmatpush2.bf16.msra.mxu0 %v867
        %982 = vmatprep.subr.bf16.mxu0 0
        %983 = vmatpush2.bf16.msra.mxu0 %v866
        %984 = vmatprep.subr.bf16.mxu0 0
        %985 = vmatpush2.bf16.msra.mxu0 %v865
        %986 = vmatprep.mubr.bf16.mxu0 %v700
        %987 = vmatmul.mubr.bf16.gmra.mxu0 %v699
        %v988 = vpop.f32.mrf.mxu0
        %v989 = vadd.f32 %v940, %v988
        %v990 = vpop.f32.mrf.mxu0
        %v991 = vpop.f32.mrf.mxu0
        %v992 = vadd.f32 %v943, %v991
        %v993 = vpop.f32.mrf.mxu0
        %994 = vmatprep.mubr.bf16.mxu0 %v704
        %995 = vmatmul.mubr.bf16.gmra.mxu0 %v703
        %v996 = vpop.f32.mrf.mxu0
        %v997 = vadd.f32 %v948, %v996
        %v998 = vpop.f32.mrf.mxu0
        %v999 = vpop.f32.mrf.mxu0
        %v1000 = vadd.f32 %v951, %v999
        %v1001 = vpop.f32.mrf.mxu0
        %1002 = vdwg.mxu0
        %v1003 = vadd.f32 %v597, %v989
        %v1004 = vadd.f32 %v598, %v992
        %v1005 = vadd.f32 %v599, %v997
        %v1006 = vadd.f32 %v600, %v1000
        %1007 = vst [vmem:[#allocation2] sm:$0xff] %v1003
        %1008 = vst [vmem:[#allocation2 + $0x8] sm:$0xff] %v1004
        %1009 = vst [vmem:[#allocation2 + $0x10] sm:$0xff] %v1005
        %1010 = vst [vmem:[#allocation2 + $0x18] sm:$0xff] %v1006
        %p1011 = scmp.eq.s32.totalorder %s20, 7
        // Predicated region
        $region105: #{discriminator_forward.10} parent=91 // pred_check
          %p1012 = pneg %p1011
        $region106: #{discriminator_forward.10} parent=91 // pred_check_branch
          %1014 = sbr.rel (%p1012) target = $region108
        $region107: #{discriminator_forward.10} parent=91 // pred_region
          %v1015 = vld [vmem:[#allocation2] sm:$0xff]
          %v1016 = vld [vmem:[#allocation2 + $0x8] sm:$0xff]
          %v1017 = vld [vmem:[#allocation2 + $0x10] sm:$0xff]
          %v1018 = vld [vmem:[#allocation2 + $0x18] sm:$0xff]
          %v1019 = vadd.f32 %v1015, %v1016
          %v1020 = vadd.f32 %v1019, %v1017
          %v1021 = vadd.f32 %v1020, %v1018
          %v1022 = vrot.slane %v1021, 4
          %v1023 = vadd.f32 %v1021, %v1022
          %v1024 = vrot.slane %v1023, 2
          %v1025 = vadd.f32 %v1023, %v1024
          %v1026 = vrot.slane %v1025, 1
          %v1027 = vadd.f32 %v1025, %v1026
          %v1028 = vrcp.pop 32.0
          %v1029 = vmul.f32 %v1027, %v1028
          %v1030 = vmul.f32 %v1015, %v1015
          %v1031 = vmul.f32 %v1016, %v1016
          %v1032 = vmul.f32 %v1017, %v1017
          %v1033 = vmul.f32 %v1018, %v1018
          %v1034 = vadd.f32 %v1030, %v1031
          %v1035 = vadd.f32 %v1034, %v1032
          %v1036 = vadd.f32 %v1035, %v1033
          %v1037 = vrot.slane %v1036, 4
          %v1038 = vadd.f32 %v1036, %v1037
          %v1039 = vrot.slane %v1038, 2
          %v1040 = vadd.f32 %v1038, %v1039
          %v1041 = vrot.slane %v1040, 1
          %v1042 = vadd.f32 %v1040, %v1041
          %v1043 = vmul.f32 %v1042, %v1028
          %v1044 = vmul.f32 %v1029, %v1029
          %v1045 = vsub.f32 %v1043, %v1044
          %v1046 = vmax.f32 %v1045, 0.0
          %v1047 = vsub.f32 %v1015, %v1029
          %v1048 = vsub.f32 %v1016, %v1029
          %v1049 = vsub.f32 %v1017, %v1029
          %v1050 = vsub.f32 %v1018, %v1029
          %v1051 = vadd.f32 %v1046, 1e-05
          %v1052 = vrsqrt.pop %v1051
          %v1053 = vmul.f32 %v1047, %v1052
          %v1054 = vmul.f32 %v1048, %v1052
          %v1055 = vmul.f32 %v1049, %v1052
          %v1056 = vmul.f32 %v1050, %v1052
          %v1057 = vld [vmem:[%s584] sm:$0x1]
          %v1059 = vlaneseq
          %v1060 = vshrl.u32 %v1059, 7
          %v1061 = vsub.s32 0, %v1060
          %v1062 = vrot.slane %v1057, %v1061
          %v1064 = vmul.f32 %v1053, %v1062
          %v1065 = vmul.f32 %v1054, %v1062
          %v1066 = vmul.f32 %v1055, %v1062
          %v1067 = vmul.f32 %v1056, %v1062
          %v1068 = vld [vmem:[%s587] sm:$0x1]
          %v1070 = vlaneseq
          %v1071 = vshrl.u32 %v1070, 7
          %v1072 = vsub.s32 0, %v1071
          %v1073 = vrot.slane %v1068, %v1072
          %v1075 = vadd.f32 %v1064, %v1073
          %v1076 = vadd.f32 %v1065, %v1073
          %v1077 = vadd.f32 %v1066, %v1073
          %v1078 = vadd.f32 %v1067, %v1073
          %vm1079 = vcmp.ge.f32.partialorder %v1075, 0.0
          %vm1080 = vcmp.ge.f32.partialorder %v1076, 0.0
          %vm1081 = vcmp.ge.f32.partialorder %v1077, 0.0
          %vm1082 = vcmp.ge.f32.partialorder %v1078, 0.0
          %v1083 = vmul.f32 %v1075, 0.2
          %v1084 = vmul.f32 %v1076, 0.2
          %v1085 = vmul.f32 %v1077, 0.2
          %v1086 = vmul.f32 %v1078, 0.2
          %v1087 = vsel %vm1079, %v1075, %v1083
          %v1088 = vsel %vm1080, %v1076, %v1084
          %v1089 = vsel %vm1081, %v1077, %v1085
          %v1090 = vsel %vm1082, %v1078, %v1086
          %v1091 = vpack.c.bf16 %v1088, %v1087
          %v1092 = vpack.c.bf16 %v1090, %v1089
          %v1095 = vunpack.c.l.b16 %v1091
          %v1096 = vunpack.c.h.b16 %v1091
          %v1097 = vunpack.c.l.b16 %v1092
          %v1098 = vunpack.c.h.b16 %v1092
          %v1099 = vpack.c.b16 %v1095, %v1095
          %v1100 = vpack.c.b16 %v1096, %v1096
          %v1101 = vpack.c.b16 %v1097, %v1097
          %v1102 = vpack.c.b16 %v1098, %v1098
          %1107 = vst [vmem:[%s579] sm:$0xf] %v1099
          %1108 = vst [vmem:[%s579 + $0x4] sm:$0xf] %v1100
          %1109 = vst [vmem:[%s579 + $0x8] sm:$0xf] %v1101
          %1110 = vst [vmem:[%s579 + $0xc] sm:$0xf] %v1102
        $region108: #{discriminator_forward.10} parent=91 // pred_fallthru
          _
        %s1111 = sand.u32 %s141, 1
        %s1112 = sand.u32 %s141, 1
        %s1113 = smul.addr %s1112, 16
        %s1114 = scalar_lea.vmem [#allocation5], %s1113
        // Predicated region
        $region109: #{discriminator_forward.10} parent=91 // pred_check
          %p1115 = pneg %p151
        $region110: #{discriminator_forward.10} parent=91 // pred_check_branch
          %1117 = sbr.rel (%p1115) target = $region112
        $region111: #{discriminator_forward.10} parent=91 // pred_region
          %s1118 = smul.addr %s19, 4
          %s1119 = scalar_lea.vmem %s4, %s1118
          // Predicated region
          $region113: #{discriminator_forward.10} parent=111 // pred_check
            _
          $region114: #{discriminator_forward.10} parent=111 // pred_check_branch
            %1121 = sbr.rel (0) target = $region116
          $region115: #{discriminator_forward.10} parent=111 // pred_region
            // Predicated region
            $region117: #{discriminator_forward.10} parent=115 // pred_check
              _
            $region118: #{discriminator_forward.10} parent=115 // pred_check_branch
              %1123 = sbr.rel target = $region120
            $region119: #{discriminator_forward.10} parent=115 // pred_region
              // Predicated region
              $region132: #{discriminator_forward.10} parent=119 // pred_check
                _
              $region133: #{discriminator_forward.10} parent=119 // pred_check_branch
                %1145 = sbr.rel (0) target = $region135
              $region134: #{discriminator_forward.10} parent=119 // pred_region
                loop: start=0, step=1, limit=1
                $region136: #{discriminator_forward.10} parent=134 // loop_pre_header
                  _
                $region137: #{discriminator_forward.10} parent=134 // loop_header
                  %s1147 = sphi 0, %s1151
                  %p1148 = scmp.ge.s32.totalorder %s1147, 1
                  %s1152 = sphi %s1114, %s1114
                  %s1153 = sphi %s1119, %s1119
                $region138: #{discriminator_forward.10} parent=134 // loop_header_branch
                  %1150 = sbr.rel (%p1148) target = $region142
                $region139: #{discriminator_forward.10} parent=134 // loop_body
                  _
                $region140: #{discriminator_forward.10} parent=134 // loop_footer
                  %s1151 = sadd.s32 1, %s1147
                $region141: #{discriminator_forward.10} parent=134 // loop_footer_branch
                  %1146 = sbr.rel target = $region137
                $region142: #{discriminator_forward.10} parent=134 // loop_exit
                  _
                %s1155 = ssub.s32 16, 1
                loop: start=0, step=1, limit=1
                $region143: #{discriminator_forward.10} parent=134 // loop_pre_header
                  _
                $region144: #{discriminator_forward.10} parent=134 // loop_header
                  %s1157 = sphi 0, %s1161
                  %p1158 = scmp.ge.s32.totalorder %s1157, 1
                  %s1162 = sphi %s1114, %s1114
                  %s1163 = sphi %s1119, %s1119
                $region145: #{discriminator_forward.10} parent=134 // loop_header_branch
                  %1160 = sbr.rel (%p1158) target = $region149
                $region146: #{discriminator_forward.10} parent=134 // loop_body
                  %v1164 = vld [vmem:[%s1162] sm:%s1155]
                  %1165 = vst [vmem:[%s1163] sm:%s1155] %v1164
                  %v1166 = vld [vmem:[%s1162 + $0x4] sm:%s1155]
                  %1167 = vst [vmem:[%s1163 + $0x10] sm:%s1155] %v1166
                  %v1168 = vld [vmem:[%s1162 + $0x8] sm:%s1155]
                  %1169 = vst [vmem:[%s1163 + $0x20] sm:%s1155] %v1168
                  %v1170 = vld [vmem:[%s1162 + $0xc] sm:%s1155]
                  %1171 = vst [vmem:[%s1163 + $0x30] sm:%s1155] %v1170
                $region147: #{discriminator_forward.10} parent=134 // loop_footer
                  %s1161 = sadd.s32 1, %s1157
                $region148: #{discriminator_forward.10} parent=134 // loop_footer_branch
                  %1156 = sbr.rel target = $region144
                $region149: #{discriminator_forward.10} parent=134 // loop_exit
                  _
              $region135: #{discriminator_forward.10} parent=119 // pred_fallthru
                _
            $region120: #{discriminator_forward.10} parent=115 // pred_fallthru
              _
            // Predicated region
            $region121: #{discriminator_forward.10} parent=115 // pred_check
              _
            $region122: #{discriminator_forward.10} parent=115 // pred_check_branch
              %1125 = sbr.rel (0) target = $region124
            $region123: #{discriminator_forward.10} parent=115 // pred_region
              %s1127 = ssub.s32 16, 1
              loop: start=0, step=1, limit=1
              $region125: #{discriminator_forward.10} parent=123 // loop_pre_header
                _
              $region126: #{discriminator_forward.10} parent=123 // loop_header
                %s1129 = sphi 0, %s1133
                %p1130 = scmp.ge.s32.totalorder %s1129, 1
                %s1134 = sphi %s1114, %s1114
                %s1135 = sphi %s1119, %s1119
              $region127: #{discriminator_forward.10} parent=123 // loop_header_branch
                %1132 = sbr.rel (%p1130) target = $region131
              $region128: #{discriminator_forward.10} parent=123 // loop_body
                %v1136 = vld [vmem:[%s1134] sm:%s1127]
                %1137 = vst [vmem:[%s1135] sm:%s1127] %v1136
                %v1138 = vld [vmem:[%s1134 + $0x4] sm:%s1127]
                %1139 = vst [vmem:[%s1135 + $0x10] sm:%s1127] %v1138
                %v1140 = vld [vmem:[%s1134 + $0x8] sm:%s1127]
                %1141 = vst [vmem:[%s1135 + $0x20] sm:%s1127] %v1140
                %v1142 = vld [vmem:[%s1134 + $0xc] sm:%s1127]
                %1143 = vst [vmem:[%s1135 + $0x30] sm:%s1127] %v1142
              $region129: #{discriminator_forward.10} parent=123 // loop_footer
                %s1133 = sadd.s32 1, %s1129
              $region130: #{discriminator_forward.10} parent=123 // loop_footer_branch
                %1128 = sbr.rel target = $region126
              $region131: #{discriminator_forward.10} parent=123 // loop_exit
                _
            $region124: #{discriminator_forward.10} parent=115 // pred_fallthru
              _
          $region116: #{discriminator_forward.10} parent=111 // pred_fallthru
            _
          %1172 = vnop
        $region112: #{discriminator_forward.10} parent=91 // pred_fallthru
          _
      $region92: #{discriminator_forward.10} parent=5 // pred_fallthru
        _
      %p1173 = scmp.le.s32.totalorder 2, %s10
      // Predicated region
      $region150: #{discriminator_forward.10} parent=5 // pred_check
        %p1174 = pneg %p1173
      $region151: #{discriminator_forward.10} parent=5 // pred_check_branch
        %1176 = sbr.rel (%p1174) target = $region153
      $region152: #{discriminator_forward.10} parent=5 // pred_region
        %s1177 = ssub.s32 %s10, 2
        // Predicated region
        $region154: #{discriminator_forward.10} parent=152 // pred_check
          %p1178 = pneg %p157
        $region155: #{discriminator_forward.10} parent=152 // pred_check_branch
          %1180 = sbr.rel (%p1178) target = $region157
        $region156: #{discriminator_forward.10} parent=152 // pred_region
          %s1181 = sand.u32 %s142, 1
          %s1182 = sand.u32 %s142, 1
          %s1183 = smul.addr %s1182, 16
          %s1184 = scalar_lea.vmem [#allocation5], %s1183
        $region157: #{discriminator_forward.10} parent=152 // pred_fallthru
          _
      $region153: #{discriminator_forward.10} parent=5 // pred_fallthru
        _
    $region6: #{discriminator_forward.10} parent=1 // loop_footer
      %s14 = sadd.s32 1, %s10
    $region7: #{discriminator_forward.10} parent=1 // loop_footer_branch
      %9 = sbr.rel target = $region3
    $region8: #{discriminator_forward.10} parent=1 // loop_exit
      _

// kernel: discriminator_forward.11
$region0: #{discriminator_forward.11}
  #allocation0 [shape = 'u32[]', space=smem, size = 0x4, offset = 0x4, fixed_abs, tag = 'smem constant byte address 0x4 - core index']
  #allocation1 [shape = 'u32[144,128]{1,0:T(1,128)}', space=vmem, size = 0x12000, scoped, tag = 'internal scratch']
  %s0 = inlined_call_operand.vmem [shape: bf16[2,8192], index: 0, kind: input, shape index: {}]
  %s1 = inlined_call_operand.vmem [shape: bf16[1,8192], index: 1, kind: input, shape index: {}]
  %s2 = inlined_call_operand.vmem [shape: f32[2,1], index: 2, kind: output, shape index: {}]
  %s3 = sld [smem:[#allocation0]]
  $region18: #{discriminator_forward.11} parent=0
    _
  %s5 = ssub.s32 1, %s3
  %s6 = scalar_select 0, %s5, %s3
  // Predicated region
  $region2: #{discriminator_forward.11} parent=0 // pred_check
    _
  $region3: #{discriminator_forward.11} parent=0 // pred_check_branch
    %8 = sbr.rel (0) target = $region5
  $region4: #{discriminator_forward.11} parent=0 // pred_region
    _
  $region5: #{discriminator_forward.11} parent=0 // pred_fallthru
    _
  // Predicated region
  $region6: #{discriminator_forward.11} parent=0 // pred_check
    _
  $region7: #{discriminator_forward.11} parent=0 // pred_check_branch
    %10 = sbr.rel (0) target = $region9
  $region8: #{discriminator_forward.11} parent=0 // pred_region
    _
  $region9: #{discriminator_forward.11} parent=0 // pred_fallthru
    _
  %v11 = vld [vmem:[%s0] sm:$0xff]
  %v12 = vld [vmem:[%s0 + $0x8] sm:$0xff]
  %v13 = vld [vmem:[%s0 + $0x10] sm:$0xff]
  %v14 = vld [vmem:[%s0 + $0x18] sm:$0xff]
  %v15 = vld [vmem:[%s0 + $0x20] sm:$0xff]
  %v16 = vld [vmem:[%s0 + $0x28] sm:$0xff]
  %v17 = vld [vmem:[%s0 + $0x30] sm:$0xff]
  %v18 = vld [vmem:[%s0 + $0x38] sm:$0xff]
  %v19 = vunpack.c.l.bf16 %v11
  %v20 = vunpack.c.h.bf16 %v11
  %v21 = vunpack.c.l.bf16 %v12
  %v22 = vunpack.c.h.bf16 %v12
  %v23 = vunpack.c.l.bf16 %v13
  %v24 = vunpack.c.h.bf16 %v13
  %v25 = vunpack.c.l.bf16 %v14
  %v26 = vunpack.c.h.bf16 %v14
  %v27 = vunpack.c.l.bf16 %v15
  %v28 = vunpack.c.h.bf16 %v15
  %v29 = vunpack.c.l.bf16 %v16
  %v30 = vunpack.c.h.bf16 %v16
  %v31 = vunpack.c.l.bf16 %v17
  %v32 = vunpack.c.h.bf16 %v17
  %v33 = vunpack.c.l.bf16 %v18
  %v34 = vunpack.c.h.bf16 %v18
  %v35 = vld [vmem:[%s1] sm:$0xff]
  %v36 = vld [vmem:[%s1 + $0x8] sm:$0xff]
  %v37 = vld [vmem:[%s1 + $0x10] sm:$0xff]
  %v38 = vld [vmem:[%s1 + $0x18] sm:$0xff]
  %v39 = vld [vmem:[%s1 + $0x20] sm:$0xff]
  %v40 = vld [vmem:[%s1 + $0x28] sm:$0xff]
  %v41 = vld [vmem:[%s1 + $0x30] sm:$0xff]
  %v42 = vld [vmem:[%s1 + $0x38] sm:$0xff]
  %v43 = vunpack.c.l.bf16 %v35
  %v44 = vunpack.c.h.bf16 %v35
  %v45 = vunpack.c.l.bf16 %v36
  %v46 = vunpack.c.h.bf16 %v36
  %v47 = vunpack.c.l.bf16 %v37
  %v48 = vunpack.c.h.bf16 %v37
  %v49 = vunpack.c.l.bf16 %v38
  %v50 = vunpack.c.h.bf16 %v38
  %v51 = vunpack.c.l.bf16 %v39
  %v52 = vunpack.c.h.bf16 %v39
  %v53 = vunpack.c.l.bf16 %v40
  %v54 = vunpack.c.h.bf16 %v40
  %v55 = vunpack.c.l.bf16 %v41
  %v56 = vunpack.c.h.bf16 %v41
  %v57 = vunpack.c.l.bf16 %v42
  %v58 = vunpack.c.h.bf16 %v42
  %v75 = vlaneseq
  %v76 = vshrl.u32 %v75, 7
  %v77 = vsub.s32 0, %v76
  %v78 = vrot.slane %v43, %v77
  %v79 = vlaneseq
  %v80 = vshrl.u32 %v79, 7
  %v81 = vsub.s32 2, %v80
  %v82 = vrot.slane %v43, %v81
  %v83 = vlaneseq
  %v84 = vshrl.u32 %v83, 7
  %v85 = vsub.s32 4, %v84
  %v86 = vrot.slane %v43, %v85
  %v87 = vlaneseq
  %v88 = vshrl.u32 %v87, 7
  %v89 = vsub.s32 6, %v88
  %v90 = vrot.slane %v43, %v89
  %v91 = vlaneseq
  %v92 = vshrl.u32 %v91, 7
  %v93 = vsub.s32 0, %v92
  %v94 = vrot.slane %v44, %v93
  %v95 = vlaneseq
  %v96 = vshrl.u32 %v95, 7
  %v97 = vsub.s32 2, %v96
  %v98 = vrot.slane %v44, %v97
  %v99 = vlaneseq
  %v100 = vshrl.u32 %v99, 7
  %v101 = vsub.s32 4, %v100
  %v102 = vrot.slane %v44, %v101
  %v103 = vlaneseq
  %v104 = vshrl.u32 %v103, 7
  %v105 = vsub.s32 6, %v104
  %v106 = vrot.slane %v44, %v105
  %v107 = vlaneseq
  %v108 = vshrl.u32 %v107, 7
  %v109 = vsub.s32 0, %v108
  %v110 = vrot.slane %v45, %v109
  %v111 = vlaneseq
  %v112 = vshrl.u32 %v111, 7
  %v113 = vsub.s32 2, %v112
  %v114 = vrot.slane %v45, %v113
  %v115 = vlaneseq
  %v116 = vshrl.u32 %v115, 7
  %v117 = vsub.s32 4, %v116
  %v118 = vrot.slane %v45, %v117
  %v119 = vlaneseq
  %v120 = vshrl.u32 %v119, 7
  %v121 = vsub.s32 6, %v120
  %v122 = vrot.slane %v45, %v121
  %v123 = vlaneseq
  %v124 = vshrl.u32 %v123, 7
  %v125 = vsub.s32 0, %v124
  %v126 = vrot.slane %v46, %v125
  %v127 = vlaneseq
  %v128 = vshrl.u32 %v127, 7
  %v129 = vsub.s32 2, %v128
  %v130 = vrot.slane %v46, %v129
  %v131 = vlaneseq
  %v132 = vshrl.u32 %v131, 7
  %v133 = vsub.s32 4, %v132
  %v134 = vrot.slane %v46, %v133
  %v135 = vlaneseq
  %v136 = vshrl.u32 %v135, 7
  %v137 = vsub.s32 6, %v136
  %v138 = vrot.slane %v46, %v137
  %v139 = vlaneseq
  %v140 = vshrl.u32 %v139, 7
  %v141 = vsub.s32 0, %v140
  %v142 = vrot.slane %v47, %v141
  %v143 = vlaneseq
  %v144 = vshrl.u32 %v143, 7
  %v145 = vsub.s32 2, %v144
  %v146 = vrot.slane %v47, %v145
  %v147 = vlaneseq
  %v148 = vshrl.u32 %v147, 7
  %v149 = vsub.s32 4, %v148
  %v150 = vrot.slane %v47, %v149
  %v151 = vlaneseq
  %v152 = vshrl.u32 %v151, 7
  %v153 = vsub.s32 6, %v152
  %v154 = vrot.slane %v47, %v153
  %v155 = vlaneseq
  %v156 = vshrl.u32 %v155, 7
  %v157 = vsub.s32 0, %v156
  %v158 = vrot.slane %v48, %v157
  %v159 = vlaneseq
  %v160 = vshrl.u32 %v159, 7
  %v161 = vsub.s32 2, %v160
  %v162 = vrot.slane %v48, %v161
  %v163 = vlaneseq
  %v164 = vshrl.u32 %v163, 7
  %v165 = vsub.s32 4, %v164
  %v166 = vrot.slane %v48, %v165
  %v167 = vlaneseq
  %v168 = vshrl.u32 %v167, 7
  %v169 = vsub.s32 6, %v168
  %v170 = vrot.slane %v48, %v169
  %v171 = vlaneseq
  %v172 = vshrl.u32 %v171, 7
  %v173 = vsub.s32 0, %v172
  %v174 = vrot.slane %v49, %v173
  %v175 = vlaneseq
  %v176 = vshrl.u32 %v175, 7
  %v177 = vsub.s32 2, %v176
  %v178 = vrot.slane %v49, %v177
  %v179 = vlaneseq
  %v180 = vshrl.u32 %v179, 7
  %v181 = vsub.s32 4, %v180
  %v182 = vrot.slane %v49, %v181
  %v183 = vlaneseq
  %v184 = vshrl.u32 %v183, 7
  %v185 = vsub.s32 6, %v184
  %v186 = vrot.slane %v49, %v185
  %v187 = vlaneseq
  %v188 = vshrl.u32 %v187, 7
  %v189 = vsub.s32 0, %v188
  %v190 = vrot.slane %v50, %v189
  %v191 = vlaneseq
  %v192 = vshrl.u32 %v191, 7
  %v193 = vsub.s32 2, %v192
  %v194 = vrot.slane %v50, %v193
  %v195 = vlaneseq
  %v196 = vshrl.u32 %v195, 7
  %v197 = vsub.s32 4, %v196
  %v198 = vrot.slane %v50, %v197
  %v199 = vlaneseq
  %v200 = vshrl.u32 %v199, 7
  %v201 = vsub.s32 6, %v200
  %v202 = vrot.slane %v50, %v201
  %v203 = vlaneseq
  %v204 = vshrl.u32 %v203, 7
  %v205 = vsub.s32 0, %v204
  %v206 = vrot.slane %v51, %v205
  %v207 = vlaneseq
  %v208 = vshrl.u32 %v207, 7
  %v209 = vsub.s32 2, %v208
  %v210 = vrot.slane %v51, %v209
  %v211 = vlaneseq
  %v212 = vshrl.u32 %v211, 7
  %v213 = vsub.s32 4, %v212
  %v214 = vrot.slane %v51, %v213
  %v215 = vlaneseq
  %v216 = vshrl.u32 %v215, 7
  %v217 = vsub.s32 6, %v216
  %v218 = vrot.slane %v51, %v217
  %v219 = vlaneseq
  %v220 = vshrl.u32 %v219, 7
  %v221 = vsub.s32 0, %v220
  %v222 = vrot.slane %v52, %v221
  %v223 = vlaneseq
  %v224 = vshrl.u32 %v223, 7
  %v225 = vsub.s32 2, %v224
  %v226 = vrot.slane %v52, %v225
  %v227 = vlaneseq
  %v228 = vshrl.u32 %v227, 7
  %v229 = vsub.s32 4, %v228
  %v230 = vrot.slane %v52, %v229
  %v231 = vlaneseq
  %v232 = vshrl.u32 %v231, 7
  %v233 = vsub.s32 6, %v232
  %v234 = vrot.slane %v52, %v233
  %v235 = vlaneseq
  %v236 = vshrl.u32 %v235, 7
  %v237 = vsub.s32 0, %v236
  %v238 = vrot.slane %v53, %v237
  %v239 = vlaneseq
  %v240 = vshrl.u32 %v239, 7
  %v241 = vsub.s32 2, %v240
  %v242 = vrot.slane %v53, %v241
  %v243 = vlaneseq
  %v244 = vshrl.u32 %v243, 7
  %v245 = vsub.s32 4, %v244
  %v246 = vrot.slane %v53, %v245
  %v247 = vlaneseq
  %v248 = vshrl.u32 %v247, 7
  %v249 = vsub.s32 6, %v248
  %v250 = vrot.slane %v53, %v249
  %v251 = vlaneseq
  %v252 = vshrl.u32 %v251, 7
  %v253 = vsub.s32 0, %v252
  %v254 = vrot.slane %v54, %v253
  %v255 = vlaneseq
  %v256 = vshrl.u32 %v255, 7
  %v257 = vsub.s32 2, %v256
  %v258 = vrot.slane %v54, %v257
  %v259 = vlaneseq
  %v260 = vshrl.u32 %v259, 7
  %v261 = vsub.s32 4, %v260
  %v262 = vrot.slane %v54, %v261
  %v263 = vlaneseq
  %v264 = vshrl.u32 %v263, 7
  %v265 = vsub.s32 6, %v264
  %v266 = vrot.slane %v54, %v265
  %v267 = vlaneseq
  %v268 = vshrl.u32 %v267, 7
  %v269 = vsub.s32 0, %v268
  %v270 = vrot.slane %v55, %v269
  %v271 = vlaneseq
  %v272 = vshrl.u32 %v271, 7
  %v273 = vsub.s32 2, %v272
  %v274 = vrot.slane %v55, %v273
  %v275 = vlaneseq
  %v276 = vshrl.u32 %v275, 7
  %v277 = vsub.s32 4, %v276
  %v278 = vrot.slane %v55, %v277
  %v279 = vlaneseq
  %v280 = vshrl.u32 %v279, 7
  %v281 = vsub.s32 6, %v280
  %v282 = vrot.slane %v55, %v281
  %v283 = vlaneseq
  %v284 = vshrl.u32 %v283, 7
  %v285 = vsub.s32 0, %v284
  %v286 = vrot.slane %v56, %v285
  %v287 = vlaneseq
  %v288 = vshrl.u32 %v287, 7
  %v289 = vsub.s32 2, %v288
  %v290 = vrot.slane %v56, %v289
  %v291 = vlaneseq
  %v292 = vshrl.u32 %v291, 7
  %v293 = vsub.s32 4, %v292
  %v294 = vrot.slane %v56, %v293
  %v295 = vlaneseq
  %v296 = vshrl.u32 %v295, 7
  %v297 = vsub.s32 6, %v296
  %v298 = vrot.slane %v56, %v297
  %v299 = vlaneseq
  %v300 = vshrl.u32 %v299, 7
  %v301 = vsub.s32 0, %v300
  %v302 = vrot.slane %v57, %v301
  %v303 = vlaneseq
  %v304 = vshrl.u32 %v303, 7
  %v305 = vsub.s32 2, %v304
  %v306 = vrot.slane %v57, %v305
  %v307 = vlaneseq
  %v308 = vshrl.u32 %v307, 7
  %v309 = vsub.s32 4, %v308
  %v310 = vrot.slane %v57, %v309
  %v311 = vlaneseq
  %v312 = vshrl.u32 %v311, 7
  %v313 = vsub.s32 6, %v312
  %v314 = vrot.slane %v57, %v313
  %v315 = vlaneseq
  %v316 = vshrl.u32 %v315, 7
  %v317 = vsub.s32 0, %v316
  %v318 = vrot.slane %v58, %v317
  %v319 = vlaneseq
  %v320 = vshrl.u32 %v319, 7
  %v321 = vsub.s32 2, %v320
  %v322 = vrot.slane %v58, %v321
  %v323 = vlaneseq
  %v324 = vshrl.u32 %v323, 7
  %v325 = vsub.s32 4, %v324
  %v326 = vrot.slane %v58, %v325
  %v327 = vlaneseq
  %v328 = vshrl.u32 %v327, 7
  %v329 = vsub.s32 6, %v328
  %v330 = vrot.slane %v58, %v329
  %v395 = vlaneseq
  %v396 = vshrl.u32 %v395, 7
  %v397 = vsub.s32 0, %v396
  %v398 = vrot.slane %v78, %v397
  %v399 = vlaneseq
  %v400 = vshrl.u32 %v399, 7
  %v401 = vsub.s32 0, %v400
  %v402 = vrot.slane %v82, %v401
  %v403 = vlaneseq
  %v404 = vshrl.u32 %v403, 7
  %v405 = vsub.s32 0, %v404
  %v406 = vrot.slane %v86, %v405
  %v407 = vlaneseq
  %v408 = vshrl.u32 %v407, 7
  %v409 = vsub.s32 0, %v408
  %v410 = vrot.slane %v90, %v409
  %v411 = vlaneseq
  %v412 = vshrl.u32 %v411, 7
  %v413 = vsub.s32 0, %v412
  %v414 = vrot.slane %v94, %v413
  %v415 = vlaneseq
  %v416 = vshrl.u32 %v415, 7
  %v417 = vsub.s32 0, %v416
  %v418 = vrot.slane %v98, %v417
  %v419 = vlaneseq
  %v420 = vshrl.u32 %v419, 7
  %v421 = vsub.s32 0, %v420
  %v422 = vrot.slane %v102, %v421
  %v423 = vlaneseq
  %v424 = vshrl.u32 %v423, 7
  %v425 = vsub.s32 0, %v424
  %v426 = vrot.slane %v106, %v425
  %v427 = vlaneseq
  %v428 = vshrl.u32 %v427, 7
  %v429 = vsub.s32 0, %v428
  %v430 = vrot.slane %v110, %v429
  %v431 = vlaneseq
  %v432 = vshrl.u32 %v431, 7
  %v433 = vsub.s32 0, %v432
  %v434 = vrot.slane %v114, %v433
  %v435 = vlaneseq
  %v436 = vshrl.u32 %v435, 7
  %v437 = vsub.s32 0, %v436
  %v438 = vrot.slane %v118, %v437
  %v439 = vlaneseq
  %v440 = vshrl.u32 %v439, 7
  %v441 = vsub.s32 0, %v440
  %v442 = vrot.slane %v122, %v441
  %v443 = vlaneseq
  %v444 = vshrl.u32 %v443, 7
  %v445 = vsub.s32 0, %v444
  %v446 = vrot.slane %v126, %v445
  %v447 = vlaneseq
  %v448 = vshrl.u32 %v447, 7
  %v449 = vsub.s32 0, %v448
  %v450 = vrot.slane %v130, %v449
  %v451 = vlaneseq
  %v452 = vshrl.u32 %v451, 7
  %v453 = vsub.s32 0, %v452
  %v454 = vrot.slane %v134, %v453
  %v455 = vlaneseq
  %v456 = vshrl.u32 %v455, 7
  %v457 = vsub.s32 0, %v456
  %v458 = vrot.slane %v138, %v457
  %v459 = vlaneseq
  %v460 = vshrl.u32 %v459, 7
  %v461 = vsub.s32 0, %v460
  %v462 = vrot.slane %v142, %v461
  %v463 = vlaneseq
  %v464 = vshrl.u32 %v463, 7
  %v465 = vsub.s32 0, %v464
  %v466 = vrot.slane %v146, %v465
  %v467 = vlaneseq
  %v468 = vshrl.u32 %v467, 7
  %v469 = vsub.s32 0, %v468
  %v470 = vrot.slane %v150, %v469
  %v471 = vlaneseq
  %v472 = vshrl.u32 %v471, 7
  %v473 = vsub.s32 0, %v472
  %v474 = vrot.slane %v154, %v473
  %v475 = vlaneseq
  %v476 = vshrl.u32 %v475, 7
  %v477 = vsub.s32 0, %v476
  %v478 = vrot.slane %v158, %v477
  %v479 = vlaneseq
  %v480 = vshrl.u32 %v479, 7
  %v481 = vsub.s32 0, %v480
  %v482 = vrot.slane %v162, %v481
  %v483 = vlaneseq
  %v484 = vshrl.u32 %v483, 7
  %v485 = vsub.s32 0, %v484
  %v486 = vrot.slane %v166, %v485
  %v487 = vlaneseq
  %v488 = vshrl.u32 %v487, 7
  %v489 = vsub.s32 0, %v488
  %v490 = vrot.slane %v170, %v489
  %v491 = vlaneseq
  %v492 = vshrl.u32 %v491, 7
  %v493 = vsub.s32 0, %v492
  %v494 = vrot.slane %v174, %v493
  %v495 = vlaneseq
  %v496 = vshrl.u32 %v495, 7
  %v497 = vsub.s32 0, %v496
  %v498 = vrot.slane %v178, %v497
  %v499 = vlaneseq
  %v500 = vshrl.u32 %v499, 7
  %v501 = vsub.s32 0, %v500
  %v502 = vrot.slane %v182, %v501
  %v503 = vlaneseq
  %v504 = vshrl.u32 %v503, 7
  %v505 = vsub.s32 0, %v504
  %v506 = vrot.slane %v186, %v505
  %v507 = vlaneseq
  %v508 = vshrl.u32 %v507, 7
  %v509 = vsub.s32 0, %v508
  %v510 = vrot.slane %v190, %v509
  %v511 = vlaneseq
  %v512 = vshrl.u32 %v511, 7
  %v513 = vsub.s32 0, %v512
  %v514 = vrot.slane %v194, %v513
  %v515 = vlaneseq
  %v516 = vshrl.u32 %v515, 7
  %v517 = vsub.s32 0, %v516
  %v518 = vrot.slane %v198, %v517
  %v519 = vlaneseq
  %v520 = vshrl.u32 %v519, 7
  %v521 = vsub.s32 0, %v520
  %v522 = vrot.slane %v202, %v521
  %v523 = vlaneseq
  %v524 = vshrl.u32 %v523, 7
  %v525 = vsub.s32 0, %v524
  %v526 = vrot.slane %v206, %v525
  %v527 = vlaneseq
  %v528 = vshrl.u32 %v527, 7
  %v529 = vsub.s32 0, %v528
  %v530 = vrot.slane %v210, %v529
  %v531 = vlaneseq
  %v532 = vshrl.u32 %v531, 7
  %v533 = vsub.s32 0, %v532
  %v534 = vrot.slane %v214, %v533
  %v535 = vlaneseq
  %v536 = vshrl.u32 %v535, 7
  %v537 = vsub.s32 0, %v536
  %v538 = vrot.slane %v218, %v537
  %v539 = vlaneseq
  %v540 = vshrl.u32 %v539, 7
  %v541 = vsub.s32 0, %v540
  %v542 = vrot.slane %v222, %v541
  %v543 = vlaneseq
  %v544 = vshrl.u32 %v543, 7
  %v545 = vsub.s32 0, %v544
  %v546 = vrot.slane %v226, %v545
  %v547 = vlaneseq
  %v548 = vshrl.u32 %v547, 7
  %v549 = vsub.s32 0, %v548
  %v550 = vrot.slane %v230, %v549
  %v551 = vlaneseq
  %v552 = vshrl.u32 %v551, 7
  %v553 = vsub.s32 0, %v552
  %v554 = vrot.slane %v234, %v553
  %v555 = vlaneseq
  %v556 = vshrl.u32 %v555, 7
  %v557 = vsub.s32 0, %v556
  %v558 = vrot.slane %v238, %v557
  %v559 = vlaneseq
  %v560 = vshrl.u32 %v559, 7
  %v561 = vsub.s32 0, %v560
  %v562 = vrot.slane %v242, %v561
  %v563 = vlaneseq
  %v564 = vshrl.u32 %v563, 7
  %v565 = vsub.s32 0, %v564
  %v566 = vrot.slane %v246, %v565
  %v567 = vlaneseq
  %v568 = vshrl.u32 %v567, 7
  %v569 = vsub.s32 0, %v568
  %v570 = vrot.slane %v250, %v569
  %v571 = vlaneseq
  %v572 = vshrl.u32 %v571, 7
  %v573 = vsub.s32 0, %v572
  %v574 = vrot.slane %v254, %v573
  %v575 = vlaneseq
  %v576 = vshrl.u32 %v575, 7
  %v577 = vsub.s32 0, %v576
  %v578 = vrot.slane %v258, %v577
  %v579 = vlaneseq
  %v580 = vshrl.u32 %v579, 7
  %v581 = vsub.s32 0, %v580
  %v582 = vrot.slane %v262, %v581
  %v583 = vlaneseq
  %v584 = vshrl.u32 %v583, 7
  %v585 = vsub.s32 0, %v584
  %v586 = vrot.slane %v266, %v585
  %v587 = vlaneseq
  %v588 = vshrl.u32 %v587, 7
  %v589 = vsub.s32 0, %v588
  %v590 = vrot.slane %v270, %v589
  %v591 = vlaneseq
  %v592 = vshrl.u32 %v591, 7
  %v593 = vsub.s32 0, %v592
  %v594 = vrot.slane %v274, %v593
  %v595 = vlaneseq
  %v596 = vshrl.u32 %v595, 7
  %v597 = vsub.s32 0, %v596
  %v598 = vrot.slane %v278, %v597
  %v599 = vlaneseq
  %v600 = vshrl.u32 %v599, 7
  %v601 = vsub.s32 0, %v600
  %v602 = vrot.slane %v282, %v601
  %v603 = vlaneseq
  %v604 = vshrl.u32 %v603, 7
  %v605 = vsub.s32 0, %v604
  %v606 = vrot.slane %v286, %v605
  %v607 = vlaneseq
  %v608 = vshrl.u32 %v607, 7
  %v609 = vsub.s32 0, %v608
  %v610 = vrot.slane %v290, %v609
  %v611 = vlaneseq
  %v612 = vshrl.u32 %v611, 7
  %v613 = vsub.s32 0, %v612
  %v614 = vrot.slane %v294, %v613
  %v615 = vlaneseq
  %v616 = vshrl.u32 %v615, 7
  %v617 = vsub.s32 0, %v616
  %v618 = vrot.slane %v298, %v617
  %v619 = vlaneseq
  %v620 = vshrl.u32 %v619, 7
  %v621 = vsub.s32 0, %v620
  %v622 = vrot.slane %v302, %v621
  %v623 = vlaneseq
  %v624 = vshrl.u32 %v623, 7
  %v625 = vsub.s32 0, %v624
  %v626 = vrot.slane %v306, %v625
  %v627 = vlaneseq
  %v628 = vshrl.u32 %v627, 7
  %v629 = vsub.s32 0, %v628
  %v630 = vrot.slane %v310, %v629
  %v631 = vlaneseq
  %v632 = vshrl.u32 %v631, 7
  %v633 = vsub.s32 0, %v632
  %v634 = vrot.slane %v314, %v633
  %v635 = vlaneseq
  %v636 = vshrl.u32 %v635, 7
  %v637 = vsub.s32 0, %v636
  %v638 = vrot.slane %v318, %v637
  %v639 = vlaneseq
  %v640 = vshrl.u32 %v639, 7
  %v641 = vsub.s32 0, %v640
  %v642 = vrot.slane %v322, %v641
  %v643 = vlaneseq
  %v644 = vshrl.u32 %v643, 7
  %v645 = vsub.s32 0, %v644
  %v646 = vrot.slane %v326, %v645
  %v647 = vlaneseq
  %v648 = vshrl.u32 %v647, 7
  %v649 = vsub.s32 0, %v648
  %v650 = vrot.slane %v330, %v649
  %v715 = vcombine.low %v398, %v402
  %v716 = vcombine.low %v406, %v410
  %v718 = vunpack.c.l.s4 1983009808
  %v719 = vunpack.c.0.s8 %v718
  %v720 = vlaneseq
  %v721 = vshrl.u32 %v720, 7
  %v722 = vsub.s32 %v719, %v721
  %v723 = vrot.slane %v715, %v722
  %v725 = vunpack.c.l.s4 1983009808
  %v726 = vunpack.c.0.s8 %v725
  %v727 = vlaneseq
  %v728 = vshrl.u32 %v727, 7
  %v729 = vsub.s32 %v726, %v728
  %v730 = vrot.slane %v716, %v729
  %v731 = vcombine.low %v723, %v730
  %v732 = vcombine.low %v414, %v418
  %v733 = vcombine.low %v422, %v426
  %v735 = vunpack.c.l.s4 1983009808
  %v736 = vunpack.c.0.s8 %v735
  %v737 = vlaneseq
  %v738 = vshrl.u32 %v737, 7
  %v739 = vsub.s32 %v736, %v738
  %v740 = vrot.slane %v732, %v739
  %v742 = vunpack.c.l.s4 1983009808
  %v743 = vunpack.c.0.s8 %v742
  %v744 = vlaneseq
  %v745 = vshrl.u32 %v744, 7
  %v746 = vsub.s32 %v743, %v745
  %v747 = vrot.slane %v733, %v746
  %v748 = vcombine.low %v740, %v747
  %v749 = vcombine.low %v430, %v434
  %v750 = vcombine.low %v438, %v442
  %v752 = vunpack.c.l.s4 1983009808
  %v753 = vunpack.c.0.s8 %v752
  %v754 = vlaneseq
  %v755 = vshrl.u32 %v754, 7
  %v756 = vsub.s32 %v753, %v755
  %v757 = vrot.slane %v749, %v756
  %v759 = vunpack.c.l.s4 1983009808
  %v760 = vunpack.c.0.s8 %v759
  %v761 = vlaneseq
  %v762 = vshrl.u32 %v761, 7
  %v763 = vsub.s32 %v760, %v762
  %v764 = vrot.slane %v750, %v763
  %v765 = vcombine.low %v757, %v764
  %v766 = vcombine.low %v446, %v450
  %v767 = vcombine.low %v454, %v458
  %v769 = vunpack.c.l.s4 1983009808
  %v770 = vunpack.c.0.s8 %v769
  %v771 = vlaneseq
  %v772 = vshrl.u32 %v771, 7
  %v773 = vsub.s32 %v770, %v772
  %v774 = vrot.slane %v766, %v773
  %v776 = vunpack.c.l.s4 1983009808
  %v777 = vunpack.c.0.s8 %v776
  %v778 = vlaneseq
  %v779 = vshrl.u32 %v778, 7
  %v780 = vsub.s32 %v777, %v779
  %v781 = vrot.slane %v767, %v780
  %v782 = vcombine.low %v774, %v781
  %v783 = vcombine.low %v462, %v466
  %v784 = vcombine.low %v470, %v474
  %v786 = vunpack.c.l.s4 1983009808
  %v787 = vunpack.c.0.s8 %v786
  %v788 = vlaneseq
  %v789 = vshrl.u32 %v788, 7
  %v790 = vsub.s32 %v787, %v789
  %v791 = vrot.slane %v783, %v790
  %v793 = vunpack.c.l.s4 1983009808
  %v794 = vunpack.c.0.s8 %v793
  %v795 = vlaneseq
  %v796 = vshrl.u32 %v795, 7
  %v797 = vsub.s32 %v794, %v796
  %v798 = vrot.slane %v784, %v797
  %v799 = vcombine.low %v791, %v798
  %v800 = vcombine.low %v478, %v482
  %v801 = vcombine.low %v486, %v490
  %v803 = vunpack.c.l.s4 1983009808
  %v804 = vunpack.c.0.s8 %v803
  %v805 = vlaneseq
  %v806 = vshrl.u32 %v805, 7
  %v807 = vsub.s32 %v804, %v806
  %v808 = vrot.slane %v800, %v807
  %v810 = vunpack.c.l.s4 1983009808
  %v811 = vunpack.c.0.s8 %v810
  %v812 = vlaneseq
  %v813 = vshrl.u32 %v812, 7
  %v814 = vsub.s32 %v811, %v813
  %v815 = vrot.slane %v801, %v814
  %v816 = vcombine.low %v808, %v815
  %v817 = vcombine.low %v494, %v498
  %v818 = vcombine.low %v502, %v506
  %v820 = vunpack.c.l.s4 1983009808
  %v821 = vunpack.c.0.s8 %v820
  %v822 = vlaneseq
  %v823 = vshrl.u32 %v822, 7
  %v824 = vsub.s32 %v821, %v823
  %v825 = vrot.slane %v817, %v824
  %v827 = vunpack.c.l.s4 1983009808
  %v828 = vunpack.c.0.s8 %v827
  %v829 = vlaneseq
  %v830 = vshrl.u32 %v829, 7
  %v831 = vsub.s32 %v828, %v830
  %v832 = vrot.slane %v818, %v831
  %v833 = vcombine.low %v825, %v832
  %v834 = vcombine.low %v510, %v514
  %v835 = vcombine.low %v518, %v522
  %v837 = vunpack.c.l.s4 1983009808
  %v838 = vunpack.c.0.s8 %v837
  %v839 = vlaneseq
  %v840 = vshrl.u32 %v839, 7
  %v841 = vsub.s32 %v838, %v840
  %v842 = vrot.slane %v834, %v841
  %v844 = vunpack.c.l.s4 1983009808
  %v845 = vunpack.c.0.s8 %v844
  %v846 = vlaneseq
  %v847 = vshrl.u32 %v846, 7
  %v848 = vsub.s32 %v845, %v847
  %v849 = vrot.slane %v835, %v848
  %v850 = vcombine.low %v842, %v849
  %v851 = vcombine.low %v526, %v530
  %v852 = vcombine.low %v534, %v538
  %v854 = vunpack.c.l.s4 1983009808
  %v855 = vunpack.c.0.s8 %v854
  %v856 = vlaneseq
  %v857 = vshrl.u32 %v856, 7
  %v858 = vsub.s32 %v855, %v857
  %v859 = vrot.slane %v851, %v858
  %v861 = vunpack.c.l.s4 1983009808
  %v862 = vunpack.c.0.s8 %v861
  %v863 = vlaneseq
  %v864 = vshrl.u32 %v863, 7
  %v865 = vsub.s32 %v862, %v864
  %v866 = vrot.slane %v852, %v865
  %v867 = vcombine.low %v859, %v866
  %v868 = vcombine.low %v542, %v546
  %v869 = vcombine.low %v550, %v554
  %v871 = vunpack.c.l.s4 1983009808
  %v872 = vunpack.c.0.s8 %v871
  %v873 = vlaneseq
  %v874 = vshrl.u32 %v873, 7
  %v875 = vsub.s32 %v872, %v874
  %v876 = vrot.slane %v868, %v875
  %v878 = vunpack.c.l.s4 1983009808
  %v879 = vunpack.c.0.s8 %v878
  %v880 = vlaneseq
  %v881 = vshrl.u32 %v880, 7
  %v882 = vsub.s32 %v879, %v881
  %v883 = vrot.slane %v869, %v882
  %v884 = vcombine.low %v876, %v883
  %v885 = vcombine.low %v558, %v562
  %v886 = vcombine.low %v566, %v570
  %v888 = vunpack.c.l.s4 1983009808
  %v889 = vunpack.c.0.s8 %v888
  %v890 = vlaneseq
  %v891 = vshrl.u32 %v890, 7
  %v892 = vsub.s32 %v889, %v891
  %v893 = vrot.slane %v885, %v892
  %v895 = vunpack.c.l.s4 1983009808
  %v896 = vunpack.c.0.s8 %v895
  %v897 = vlaneseq
  %v898 = vshrl.u32 %v897, 7
  %v899 = vsub.s32 %v896, %v898
  %v900 = vrot.slane %v886, %v899
  %v901 = vcombine.low %v893, %v900
  %v902 = vcombine.low %v574, %v578
  %v903 = vcombine.low %v582, %v586
  %v905 = vunpack.c.l.s4 1983009808
  %v906 = vunpack.c.0.s8 %v905
  %v907 = vlaneseq
  %v908 = vshrl.u32 %v907, 7
  %v909 = vsub.s32 %v906, %v908
  %v910 = vrot.slane %v902, %v909
  %v912 = vunpack.c.l.s4 1983009808
  %v913 = vunpack.c.0.s8 %v912
  %v914 = vlaneseq
  %v915 = vshrl.u32 %v914, 7
  %v916 = vsub.s32 %v913, %v915
  %v917 = vrot.slane %v903, %v916
  %v918 = vcombine.low %v910, %v917
  %v919 = vcombine.low %v590, %v594
  %v920 = vcombine.low %v598, %v602
  %v922 = vunpack.c.l.s4 1983009808
  %v923 = vunpack.c.0.s8 %v922
  %v924 = vlaneseq
  %v925 = vshrl.u32 %v924, 7
  %v926 = vsub.s32 %v923, %v925
  %v927 = vrot.slane %v919, %v926
  %v929 = vunpack.c.l.s4 1983009808
  %v930 = vunpack.c.0.s8 %v929
  %v931 = vlaneseq
  %v932 = vshrl.u32 %v931, 7
  %v933 = vsub.s32 %v930, %v932
  %v934 = vrot.slane %v920, %v933
  %v935 = vcombine.low %v927, %v934
  %v936 = vcombine.low %v606, %v610
  %v937 = vcombine.low %v614, %v618
  %v939 = vunpack.c.l.s4 1983009808
  %v940 = vunpack.c.0.s8 %v939
  %v941 = vlaneseq
  %v942 = vshrl.u32 %v941, 7
  %v943 = vsub.s32 %v940, %v942
  %v944 = vrot.slane %v936, %v943
  %v946 = vunpack.c.l.s4 1983009808
  %v947 = vunpack.c.0.s8 %v946
  %v948 = vlaneseq
  %v949 = vshrl.u32 %v948, 7
  %v950 = vsub.s32 %v947, %v949
  %v951 = vrot.slane %v937, %v950
  %v952 = vcombine.low %v944, %v951
  %v953 = vcombine.low %v622, %v626
  %v954 = vcombine.low %v630, %v634
  %v956 = vunpack.c.l.s4 1983009808
  %v957 = vunpack.c.0.s8 %v956
  %v958 = vlaneseq
  %v959 = vshrl.u32 %v958, 7
  %v960 = vsub.s32 %v957, %v959
  %v961 = vrot.slane %v953, %v960
  %v963 = vunpack.c.l.s4 1983009808
  %v964 = vunpack.c.0.s8 %v963
  %v965 = vlaneseq
  %v966 = vshrl.u32 %v965, 7
  %v967 = vsub.s32 %v964, %v966
  %v968 = vrot.slane %v954, %v967
  %v969 = vcombine.low %v961, %v968
  %v970 = vcombine.low %v638, %v642
  %v971 = vcombine.low %v646, %v650
  %v973 = vunpack.c.l.s4 1983009808
  %v974 = vunpack.c.0.s8 %v973
  %v975 = vlaneseq
  %v976 = vshrl.u32 %v975, 7
  %v977 = vsub.s32 %v974, %v976
  %v978 = vrot.slane %v970, %v977
  %v980 = vunpack.c.l.s4 1983009808
  %v981 = vunpack.c.0.s8 %v980
  %v982 = vlaneseq
  %v983 = vshrl.u32 %v982, 7
  %v984 = vsub.s32 %v981, %v983
  %v985 = vrot.slane %v971, %v984
  %v986 = vcombine.low %v978, %v985
  %v1003 = vmul.f32 %v19, %v731
  %v1004 = vmul.f32 %v20, %v748
  %v1005 = vmul.f32 %v21, %v765
  %v1006 = vmul.f32 %v22, %v782
  %v1007 = vmul.f32 %v23, %v799
  %v1008 = vmul.f32 %v24, %v816
  %v1009 = vmul.f32 %v25, %v833
  %v1010 = vmul.f32 %v26, %v850
  %v1011 = vmul.f32 %v27, %v867
  %v1012 = vmul.f32 %v28, %v884
  %v1013 = vmul.f32 %v29, %v901
  %v1014 = vmul.f32 %v30, %v918
  %v1015 = vmul.f32 %v31, %v935
  %v1016 = vmul.f32 %v32, %v952
  %v1017 = vmul.f32 %v33, %v969
  %v1018 = vmul.f32 %v34, %v986
  %v1035 = vcombine.high %v1003, %v1003
  %v1037 = vunpack.c.l.s4 1983009808
  %v1038 = vunpack.c.0.s8 %v1037
  %v1039 = vlaneseq
  %v1040 = vshrl.u32 %v1039, 7
  %v1041 = vsub.s32 %v1038, %v1040
  %v1042 = vrot.slane %v1003, %v1041
  %v1044 = vunpack.c.l.s4 1983009808
  %v1045 = vunpack.c.0.s8 %v1044
  %v1046 = vlaneseq
  %v1047 = vshrl.u32 %v1046, 7
  %v1048 = vsub.s32 %v1045, %v1047
  %v1049 = vrot.slane %v1035, %v1048
  %v1050 = vcombine.high %v1042, %v1042
  %v1051 = vcombine.high %v1049, %v1049
  %v1052 = vcombine.high %v1004, %v1004
  %v1054 = vunpack.c.l.s4 1983009808
  %v1055 = vunpack.c.0.s8 %v1054
  %v1056 = vlaneseq
  %v1057 = vshrl.u32 %v1056, 7
  %v1058 = vsub.s32 %v1055, %v1057
  %v1059 = vrot.slane %v1004, %v1058
  %v1061 = vunpack.c.l.s4 1983009808
  %v1062 = vunpack.c.0.s8 %v1061
  %v1063 = vlaneseq
  %v1064 = vshrl.u32 %v1063, 7
  %v1065 = vsub.s32 %v1062, %v1064
  %v1066 = vrot.slane %v1052, %v1065
  %v1067 = vcombine.high %v1059, %v1059
  %v1068 = vcombine.high %v1066, %v1066
  %v1069 = vcombine.high %v1005, %v1005
  %v1071 = vunpack.c.l.s4 1983009808
  %v1072 = vunpack.c.0.s8 %v1071
  %v1073 = vlaneseq
  %v1074 = vshrl.u32 %v1073, 7
  %v1075 = vsub.s32 %v1072, %v1074
  %v1076 = vrot.slane %v1005, %v1075
  %v1078 = vunpack.c.l.s4 1983009808
  %v1079 = vunpack.c.0.s8 %v1078
  %v1080 = vlaneseq
  %v1081 = vshrl.u32 %v1080, 7
  %v1082 = vsub.s32 %v1079, %v1081
  %v1083 = vrot.slane %v1069, %v1082
  %v1084 = vcombine.high %v1076, %v1076
  %v1085 = vcombine.high %v1083, %v1083
  %v1086 = vcombine.high %v1006, %v1006
  %v1088 = vunpack.c.l.s4 1983009808
  %v1089 = vunpack.c.0.s8 %v1088
  %v1090 = vlaneseq
  %v1091 = vshrl.u32 %v1090, 7
  %v1092 = vsub.s32 %v1089, %v1091
  %v1093 = vrot.slane %v1006, %v1092
  %v1095 = vunpack.c.l.s4 1983009808
  %v1096 = vunpack.c.0.s8 %v1095
  %v1097 = vlaneseq
  %v1098 = vshrl.u32 %v1097, 7
  %v1099 = vsub.s32 %v1096, %v1098
  %v1100 = vrot.slane %v1086, %v1099
  %v1101 = vcombine.high %v1093, %v1093
  %v1102 = vcombine.high %v1100, %v1100
  %v1103 = vcombine.high %v1007, %v1007
  %v1105 = vunpack.c.l.s4 1983009808
  %v1106 = vunpack.c.0.s8 %v1105
  %v1107 = vlaneseq
  %v1108 = vshrl.u32 %v1107, 7
  %v1109 = vsub.s32 %v1106, %v1108
  %v1110 = vrot.slane %v1007, %v1109
  %v1112 = vunpack.c.l.s4 1983009808
  %v1113 = vunpack.c.0.s8 %v1112
  %v1114 = vlaneseq
  %v1115 = vshrl.u32 %v1114, 7
  %v1116 = vsub.s32 %v1113, %v1115
  %v1117 = vrot.slane %v1103, %v1116
  %v1118 = vcombine.high %v1110, %v1110
  %v1119 = vcombine.high %v1117, %v1117
  %v1120 = vcombine.high %v1008, %v1008
  %v1122 = vunpack.c.l.s4 1983009808
  %v1123 = vunpack.c.0.s8 %v1122
  %v1124 = vlaneseq
  %v1125 = vshrl.u32 %v1124, 7
  %v1126 = vsub.s32 %v1123, %v1125
  %v1127 = vrot.slane %v1008, %v1126
  %v1129 = vunpack.c.l.s4 1983009808
  %v1130 = vunpack.c.0.s8 %v1129
  %v1131 = vlaneseq
  %v1132 = vshrl.u32 %v1131, 7
  %v1133 = vsub.s32 %v1130, %v1132
  %v1134 = vrot.slane %v1120, %v1133
  %v1135 = vcombine.high %v1127, %v1127
  %v1136 = vcombine.high %v1134, %v1134
  %v1137 = vcombine.high %v1009, %v1009
  %v1139 = vunpack.c.l.s4 1983009808
  %v1140 = vunpack.c.0.s8 %v1139
  %v1141 = vlaneseq
  %v1142 = vshrl.u32 %v1141, 7
  %v1143 = vsub.s32 %v1140, %v1142
  %v1144 = vrot.slane %v1009, %v1143
  %v1146 = vunpack.c.l.s4 1983009808
  %v1147 = vunpack.c.0.s8 %v1146
  %v1148 = vlaneseq
  %v1149 = vshrl.u32 %v1148, 7
  %v1150 = vsub.s32 %v1147, %v1149
  %v1151 = vrot.slane %v1137, %v1150
  %v1152 = vcombine.high %v1144, %v1144
  %v1153 = vcombine.high %v1151, %v1151
  %v1154 = vcombine.high %v1010, %v1010
  %v1156 = vunpack.c.l.s4 1983009808
  %v1157 = vunpack.c.0.s8 %v1156
  %v1158 = vlaneseq
  %v1159 = vshrl.u32 %v1158, 7
  %v1160 = vsub.s32 %v1157, %v1159
  %v1161 = vrot.slane %v1010, %v1160
  %v1163 = vunpack.c.l.s4 1983009808
  %v1164 = vunpack.c.0.s8 %v1163
  %v1165 = vlaneseq
  %v1166 = vshrl.u32 %v1165, 7
  %v1167 = vsub.s32 %v1164, %v1166
  %v1168 = vrot.slane %v1154, %v1167
  %v1169 = vcombine.high %v1161, %v1161
  %v1170 = vcombine.high %v1168, %v1168
  %v1171 = vcombine.high %v1011, %v1011
  %v1173 = vunpack.c.l.s4 1983009808
  %v1174 = vunpack.c.0.s8 %v1173
  %v1175 = vlaneseq
  %v1176 = vshrl.u32 %v1175, 7
  %v1177 = vsub.s32 %v1174, %v1176
  %v1178 = vrot.slane %v1011, %v1177
  %v1180 = vunpack.c.l.s4 1983009808
  %v1181 = vunpack.c.0.s8 %v1180
  %v1182 = vlaneseq
  %v1183 = vshrl.u32 %v1182, 7
  %v1184 = vsub.s32 %v1181, %v1183
  %v1185 = vrot.slane %v1171, %v1184
  %v1186 = vcombine.high %v1178, %v1178
  %v1187 = vcombine.high %v1185, %v1185
  %v1188 = vcombine.high %v1012, %v1012
  %v1190 = vunpack.c.l.s4 1983009808
  %v1191 = vunpack.c.0.s8 %v1190
  %v1192 = vlaneseq
  %v1193 = vshrl.u32 %v1192, 7
  %v1194 = vsub.s32 %v1191, %v1193
  %v1195 = vrot.slane %v1012, %v1194
  %v1197 = vunpack.c.l.s4 1983009808
  %v1198 = vunpack.c.0.s8 %v1197
  %v1199 = vlaneseq
  %v1200 = vshrl.u32 %v1199, 7
  %v1201 = vsub.s32 %v1198, %v1200
  %v1202 = vrot.slane %v1188, %v1201
  %v1203 = vcombine.high %v1195, %v1195
  %v1204 = vcombine.high %v1202, %v1202
  %v1205 = vcombine.high %v1013, %v1013
  %v1207 = vunpack.c.l.s4 1983009808
  %v1208 = vunpack.c.0.s8 %v1207
  %v1209 = vlaneseq
  %v1210 = vshrl.u32 %v1209, 7
  %v1211 = vsub.s32 %v1208, %v1210
  %v1212 = vrot.slane %v1013, %v1211
  %v1214 = vunpack.c.l.s4 1983009808
  %v1215 = vunpack.c.0.s8 %v1214
  %v1216 = vlaneseq
  %v1217 = vshrl.u32 %v1216, 7
  %v1218 = vsub.s32 %v1215, %v1217
  %v1219 = vrot.slane %v1205, %v1218
  %v1220 = vcombine.high %v1212, %v1212
  %v1221 = vcombine.high %v1219, %v1219
  %v1222 = vcombine.high %v1014, %v1014
  %v1224 = vunpack.c.l.s4 1983009808
  %v1225 = vunpack.c.0.s8 %v1224
  %v1226 = vlaneseq
  %v1227 = vshrl.u32 %v1226, 7
  %v1228 = vsub.s32 %v1225, %v1227
  %v1229 = vrot.slane %v1014, %v1228
  %v1231 = vunpack.c.l.s4 1983009808
  %v1232 = vunpack.c.0.s8 %v1231
  %v1233 = vlaneseq
  %v1234 = vshrl.u32 %v1233, 7
  %v1235 = vsub.s32 %v1232, %v1234
  %v1236 = vrot.slane %v1222, %v1235
  %v1237 = vcombine.high %v1229, %v1229
  %v1238 = vcombine.high %v1236, %v1236
  %v1239 = vcombine.high %v1015, %v1015
  %v1241 = vunpack.c.l.s4 1983009808
  %v1242 = vunpack.c.0.s8 %v1241
  %v1243 = vlaneseq
  %v1244 = vshrl.u32 %v1243, 7
  %v1245 = vsub.s32 %v1242, %v1244
  %v1246 = vrot.slane %v1015, %v1245
  %v1248 = vunpack.c.l.s4 1983009808
  %v1249 = vunpack.c.0.s8 %v1248
  %v1250 = vlaneseq
  %v1251 = vshrl.u32 %v1250, 7
  %v1252 = vsub.s32 %v1249, %v1251
  %v1253 = vrot.slane %v1239, %v1252
  %v1254 = vcombine.high %v1246, %v1246
  %v1255 = vcombine.high %v1253, %v1253
  %v1256 = vcombine.high %v1016, %v1016
  %v1258 = vunpack.c.l.s4 1983009808
  %v1259 = vunpack.c.0.s8 %v1258
  %v1260 = vlaneseq
  %v1261 = vshrl.u32 %v1260, 7
  %v1262 = vsub.s32 %v1259, %v1261
  %v1263 = vrot.slane %v1016, %v1262
  %v1265 = vunpack.c.l.s4 1983009808
  %v1266 = vunpack.c.0.s8 %v1265
  %v1267 = vlaneseq
  %v1268 = vshrl.u32 %v1267, 7
  %v1269 = vsub.s32 %v1266, %v1268
  %v1270 = vrot.slane %v1256, %v1269
  %v1271 = vcombine.high %v1263, %v1263
  %v1272 = vcombine.high %v1270, %v1270
  %v1273 = vcombine.high %v1017, %v1017
  %v1275 = vunpack.c.l.s4 1983009808
  %v1276 = vunpack.c.0.s8 %v1275
  %v1277 = vlaneseq
  %v1278 = vshrl.u32 %v1277, 7
  %v1279 = vsub.s32 %v1276, %v1278
  %v1280 = vrot.slane %v1017, %v1279
  %v1282 = vunpack.c.l.s4 1983009808
  %v1283 = vunpack.c.0.s8 %v1282
  %v1284 = vlaneseq
  %v1285 = vshrl.u32 %v1284, 7
  %v1286 = vsub.s32 %v1283, %v1285
  %v1287 = vrot.slane %v1273, %v1286
  %v1288 = vcombine.high %v1280, %v1280
  %v1289 = vcombine.high %v1287, %v1287
  %v1290 = vcombine.high %v1018, %v1018
  %v1292 = vunpack.c.l.s4 1983009808
  %v1293 = vunpack.c.0.s8 %v1292
  %v1294 = vlaneseq
  %v1295 = vshrl.u32 %v1294, 7
  %v1296 = vsub.s32 %v1293, %v1295
  %v1297 = vrot.slane %v1018, %v1296
  %v1299 = vunpack.c.l.s4 1983009808
  %v1300 = vunpack.c.0.s8 %v1299
  %v1301 = vlaneseq
  %v1302 = vshrl.u32 %v1301, 7
  %v1303 = vsub.s32 %v1300, %v1302
  %v1304 = vrot.slane %v1290, %v1303
  %v1305 = vcombine.high %v1297, %v1297
  %v1306 = vcombine.high %v1304, %v1304
  %vm1371 = vcmask 1041408
  %v1372 = vsel %vm1371, %v1042, 0.0
  %v1373 = vsel %vm1371, %v1050, 0.0
  %v1374 = vadd.f32 %v1372, %v1373
  %v1375 = vsel %vm1371, %v1049, 0.0
  %v1376 = vadd.f32 %v1374, %v1375
  %v1377 = vsel %vm1371, %v1051, 0.0
  %v1378 = vadd.f32 %v1376, %v1377
  %v1379 = vsel %vm1371, %v1059, 0.0
  %v1380 = vadd.f32 %v1378, %v1379
  %v1381 = vsel %vm1371, %v1067, 0.0
  %v1382 = vadd.f32 %v1380, %v1381
  %v1383 = vsel %vm1371, %v1066, 0.0
  %v1384 = vadd.f32 %v1382, %v1383
  %v1385 = vsel %vm1371, %v1068, 0.0
  %v1386 = vadd.f32 %v1384, %v1385
  %v1387 = vsel %vm1371, %v1076, 0.0
  %v1388 = vadd.f32 %v1386, %v1387
  %v1389 = vsel %vm1371, %v1084, 0.0
  %v1390 = vadd.f32 %v1388, %v1389
  %v1391 = vsel %vm1371, %v1083, 0.0
  %v1392 = vadd.f32 %v1390, %v1391
  %v1393 = vsel %vm1371, %v1085, 0.0
  %v1394 = vadd.f32 %v1392, %v1393
  %v1395 = vsel %vm1371, %v1093, 0.0
  %v1396 = vadd.f32 %v1394, %v1395
  %v1397 = vsel %vm1371, %v1101, 0.0
  %v1398 = vadd.f32 %v1396, %v1397
  %v1399 = vsel %vm1371, %v1100, 0.0
  %v1400 = vadd.f32 %v1398, %v1399
  %v1401 = vsel %vm1371, %v1102, 0.0
  %v1402 = vadd.f32 %v1400, %v1401
  %v1403 = vsel %vm1371, %v1110, 0.0
  %v1404 = vadd.f32 %v1402, %v1403
  %v1405 = vsel %vm1371, %v1118, 0.0
  %v1406 = vadd.f32 %v1404, %v1405
  %v1407 = vsel %vm1371, %v1117, 0.0
  %v1408 = vadd.f32 %v1406, %v1407
  %v1409 = vsel %vm1371, %v1119, 0.0
  %v1410 = vadd.f32 %v1408, %v1409
  %v1411 = vsel %vm1371, %v1127, 0.0
  %v1412 = vadd.f32 %v1410, %v1411
  %v1413 = vsel %vm1371, %v1135, 0.0
  %v1414 = vadd.f32 %v1412, %v1413
  %v1415 = vsel %vm1371, %v1134, 0.0
  %v1416 = vadd.f32 %v1414, %v1415
  %v1417 = vsel %vm1371, %v1136, 0.0
  %v1418 = vadd.f32 %v1416, %v1417
  %v1419 = vsel %vm1371, %v1144, 0.0
  %v1420 = vadd.f32 %v1418, %v1419
  %v1421 = vsel %vm1371, %v1152, 0.0
  %v1422 = vadd.f32 %v1420, %v1421
  %v1423 = vsel %vm1371, %v1151, 0.0
  %v1424 = vadd.f32 %v1422, %v1423
  %v1425 = vsel %vm1371, %v1153, 0.0
  %v1426 = vadd.f32 %v1424, %v1425
  %v1427 = vsel %vm1371, %v1161, 0.0
  %v1428 = vadd.f32 %v1426, %v1427
  %v1429 = vsel %vm1371, %v1169, 0.0
  %v1430 = vadd.f32 %v1428, %v1429
  %v1431 = vsel %vm1371, %v1168, 0.0
  %v1432 = vadd.f32 %v1430, %v1431
  %v1433 = vsel %vm1371, %v1170, 0.0
  %v1434 = vadd.f32 %v1432, %v1433
  %v1435 = vsel %vm1371, %v1178, 0.0
  %v1436 = vadd.f32 %v1434, %v1435
  %v1437 = vsel %vm1371, %v1186, 0.0
  %v1438 = vadd.f32 %v1436, %v1437
  %v1439 = vsel %vm1371, %v1185, 0.0
  %v1440 = vadd.f32 %v1438, %v1439
  %v1441 = vsel %vm1371, %v1187, 0.0
  %v1442 = vadd.f32 %v1440, %v1441
  %v1443 = vsel %vm1371, %v1195, 0.0
  %v1444 = vadd.f32 %v1442, %v1443
  %v1445 = vsel %vm1371, %v1203, 0.0
  %v1446 = vadd.f32 %v1444, %v1445
  %v1447 = vsel %vm1371, %v1202, 0.0
  %v1448 = vadd.f32 %v1446, %v1447
  %v1449 = vsel %vm1371, %v1204, 0.0
  %v1450 = vadd.f32 %v1448, %v1449
  %v1451 = vsel %vm1371, %v1212, 0.0
  %v1452 = vadd.f32 %v1450, %v1451
  %v1453 = vsel %vm1371, %v1220, 0.0
  %v1454 = vadd.f32 %v1452, %v1453
  %v1455 = vsel %vm1371, %v1219, 0.0
  %v1456 = vadd.f32 %v1454, %v1455
  %v1457 = vsel %vm1371, %v1221, 0.0
  %v1458 = vadd.f32 %v1456, %v1457
  %v1459 = vsel %vm1371, %v1229, 0.0
  %v1460 = vadd.f32 %v1458, %v1459
  %v1461 = vsel %vm1371, %v1237, 0.0
  %v1462 = vadd.f32 %v1460, %v1461
  %v1463 = vsel %vm1371, %v1236, 0.0
  %v1464 = vadd.f32 %v1462, %v1463
  %v1465 = vsel %vm1371, %v1238, 0.0
  %v1466 = vadd.f32 %v1464, %v1465
  %v1467 = vsel %vm1371, %v1246, 0.0
  %v1468 = vadd.f32 %v1466, %v1467
  %v1469 = vsel %vm1371, %v1254, 0.0
  %v1470 = vadd.f32 %v1468, %v1469
  %v1471 = vsel %vm1371, %v1253, 0.0
  %v1472 = vadd.f32 %v1470, %v1471
  %v1473 = vsel %vm1371, %v1255, 0.0
  %v1474 = vadd.f32 %v1472, %v1473
  %v1475 = vsel %vm1371, %v1263, 0.0
  %v1476 = vadd.f32 %v1474, %v1475
  %v1477 = vsel %vm1371, %v1271, 0.0
  %v1478 = vadd.f32 %v1476, %v1477
  %v1479 = vsel %vm1371, %v1270, 0.0
  %v1480 = vadd.f32 %v1478, %v1479
  %v1481 = vsel %vm1371, %v1272, 0.0
  %v1482 = vadd.f32 %v1480, %v1481
  %v1483 = vsel %vm1371, %v1280, 0.0
  %v1484 = vadd.f32 %v1482, %v1483
  %v1485 = vsel %vm1371, %v1288, 0.0
  %v1486 = vadd.f32 %v1484, %v1485
  %v1487 = vsel %vm1371, %v1287, 0.0
  %v1488 = vadd.f32 %v1486, %v1487
  %v1489 = vsel %vm1371, %v1289, 0.0
  %v1490 = vadd.f32 %v1488, %v1489
  %v1491 = vsel %vm1371, %v1297, 0.0
  %v1492 = vadd.f32 %v1490, %v1491
  %v1493 = vsel %vm1371, %v1305, 0.0
  %v1494 = vadd.f32 %v1492, %v1493
  %v1495 = vsel %vm1371, %v1304, 0.0
  %v1496 = vadd.f32 %v1494, %v1495
  %v1497 = vsel %vm1371, %v1306, 0.0
  %v1498 = vadd.f32 %v1496, %v1497
  %1499 = vadd.xlane.f32.xlu0 %v1498
  %v1500 = vpop.xlane.xlu0 %1499
  %v1501 = vsub.f32 0.0, %v1500
  %v1502 = vmul.f32 %v1501, 1.442695
  %v1503 = vpow.pop %v1502
  %v1504 = vadd.f32 %v1503, 1.0
  %v1505 = vrcp.pop %v1504
  %v1506 = vmul.f32 1.0, %v1505
  %vm1507 = vcmask 1024
  %1508 = vst.msk [vmem:[%s2] sm:$0x3] %vm1507, %v1506
  // Predicated region
  $region10: #{discriminator_forward.11} parent=0 // pred_check
    _
  $region11: #{discriminator_forward.11} parent=0 // pred_check_branch
    %1510 = sbr.rel (0) target = $region13
  $region12: #{discriminator_forward.11} parent=0 // pred_region
    _
  $region13: #{discriminator_forward.11} parent=0 // pred_fallthru
    _
  // Predicated region
  $region14: #{discriminator_forward.11} parent=0 // pred_check
    _
  $region15: #{discriminator_forward.11} parent=0 // pred_check_branch
    %1512 = sbr.rel (0) target = $region17
  $region16: #{discriminator_forward.11} parent=0 // pred_region
    _
  $region17: #{discriminator_forward.11} parent=0 // pred_fallthru
    _

</llo_original>
